<compile_context>
chip_gen: v7x
topology: tpu7x:2x2x1
jax: 0.10.0
libtpu: 0.0.40
codegen_flags: <defaults>
</compile_context>

<pallas_src>
import functools
import math

import jax
import jax.numpy as jnp
from jax.experimental import pallas as pl
from jax.experimental.pallas import tpu as pltpu

# bf16 inputs / f32 accumulation for every MXU matmul (per perf review for
# v6e / v7x).  Set to jnp.float32 for exact f32 matmul numerics.
MXU_DTYPE = jnp.bfloat16

LN_EPS = 1e-12


# -------------------- tile pickers --------------------

def _pick_tile(dim, unit, cap):
    """Largest multiple of `unit` dividing `dim`, <= cap; else the full dim."""
    best = None
    t = unit
    lim = min(dim, cap)
    while t <= lim:
        if dim % t == 0:
            best = t
        t += unit
    return best if best is not None else dim


def _pick_row_tile(M, lane_width, cap=256, budget=4 << 20):
    # keep a single streamed block (tm, lane_width) f32 within ~budget bytes
    cap = min(cap, max(8, budget // max(lane_width * 4, 1)))
    return _pick_tile(M, 8, cap)


def _pick_lane_tile(N, cap=512):
    return _pick_tile(N, 128, cap)


def _pick_group_tile(G, per_group_bytes, cap=256, budget=4 << 20):
    lim = min(cap, max(1, budget // max(per_group_bytes, 1)))
    best = 1
    for t in range(1, G + 1):
        if G % t == 0 and t <= lim:
            best = t
    return best


# -------------------- Pallas kernels --------------------

def _add3_ln_kernel(a_ref, b_ref, c_ref, g_ref, be_ref, o_ref):
    x = a_ref[...] + b_ref[...] + c_ref[...]
    mu = jnp.mean(x, axis=-1, keepdims=True)
    var = jnp.mean((x - mu) ** 2, axis=-1, keepdims=True)
    xn = (x - mu) * jax.lax.rsqrt(var + LN_EPS)
    o_ref[...] = (xn * g_ref[...] + be_ref[...]).astype(o_ref.dtype)


def add3_layernorm(a, b, c, gamma, beta):
    M, D = a.shape
    tm = _pick_row_tile(M, D)
    return pl.pallas_call(
        _add3_ln_kernel,
        out_shape=jax.ShapeDtypeStruct((M, D), a.dtype),
        grid=(M // tm,),
        in_specs=[pl.BlockSpec((tm, D), lambda i: (i, 0)),
                  pl.BlockSpec((tm, D), lambda i: (i, 0)),
                  pl.BlockSpec((tm, D), lambda i: (i, 0)),
                  pl.BlockSpec((1, D), lambda i: (0, 0)),
                  pl.BlockSpec((1, D), lambda i: (0, 0))],
        out_specs=pl.BlockSpec((tm, D), lambda i: (i, 0)),
        compiler_params=pltpu.CompilerParams(
            dimension_semantics=("parallel",)),
    )(a, b, c, gamma.reshape(1, D), beta.reshape(1, D))


def _matmul_kernel(x_ref, w_ref, o_ref, acc_ref):
    k = pl.program_id(2)

    @pl.when(k == 0)
    def _():
        acc_ref[...] = jnp.zeros_like(acc_ref)

    acc_ref[...] += jnp.dot(x_ref[...].astype(MXU_DTYPE),
                            w_ref[...].astype(MXU_DTYPE),
                            preferred_element_type=jnp.float32)

    @pl.when(k == pl.num_programs(2) - 1)
    def _():
        o_ref[...] = acc_ref[...].astype(o_ref.dtype)


def matmul(x, w):
    M, K = x.shape
    _, N = w.shape
    tk = _pick_lane_tile(K)
    tn = _pick_lane_tile(N)
    tm = _pick_row_tile(M, max(tk, tn))
    return pl.pallas_call(
        _matmul_kernel,
        out_shape=jax.ShapeDtypeStruct((M, N), x.dtype),
        grid=(M // tm, N // tn, K // tk),
        in_specs=[pl.BlockSpec((tm, tk), lambda i, j, k: (i, k)),
                  pl.BlockSpec((tk, tn), lambda i, j, k: (k, j))],
        out_specs=pl.BlockSpec((tm, tn), lambda i, j, k: (i, j)),
        scratch_shapes=[pltpu.VMEM((tm, tn), jnp.float32)],
        compiler_params=pltpu.CompilerParams(
            dimension_semantics=("parallel", "parallel", "arbitrary")),
    )(x, w)


def _linear_ln_kernel(x_ref, w_ref, b_ref, g_ref, be_ref, o_ref, acc_ref):
    k = pl.program_id(1)

    @pl.when(k == 0)
    def _():
        acc_ref[...] = jnp.zeros_like(acc_ref)

    acc_ref[...] += jnp.dot(x_ref[...].astype(MXU_DTYPE),
                            w_ref[...].astype(MXU_DTYPE),
                            preferred_element_type=jnp.float32)

    @pl.when(k == pl.num_programs(1) - 1)
    def _():
        y = acc_ref[...] + b_ref[...]
        mu = jnp.mean(y, axis=-1, keepdims=True)
        var = jnp.mean((y - mu) ** 2, axis=-1, keepdims=True)
        yn = (y - mu) * jax.lax.rsqrt(var + LN_EPS)
        o_ref[...] = (yn * g_ref[...] + be_ref[...]).astype(o_ref.dtype)


def linear_layernorm(x, w, b, gamma, beta):
    # Fused Linear(+bias) -> LayerNorm.  N kept whole (LN needs the full row),
    # K tiled with a resident f32 accumulator.
    M, K = x.shape
    _, N = w.shape
    tk = _pick_lane_tile(K)
    tm = _pick_row_tile(M, N)
    return pl.pallas_call(
        _linear_ln_kernel,
        out_shape=jax.ShapeDtypeStruct((M, N), x.dtype),
        grid=(M // tm, K // tk),
        in_specs=[pl.BlockSpec((tm, tk), lambda i, k: (i, k)),
                  pl.BlockSpec((tk, N), lambda i, k: (k, 0)),
                  pl.BlockSpec((1, N), lambda i, k: (0, 0)),
                  pl.BlockSpec((1, N), lambda i, k: (0, 0)),
                  pl.BlockSpec((1, N), lambda i, k: (0, 0))],
        out_specs=pl.BlockSpec((tm, N), lambda i, k: (i, 0)),
        scratch_shapes=[pltpu.VMEM((tm, N), jnp.float32)],
        compiler_params=pltpu.CompilerParams(
            dimension_semantics=("parallel", "arbitrary")),
    )(x, w, b.reshape(1, N), gamma.reshape(1, N), beta.reshape(1, N))


def _linear_tanh_kernel(x_ref, w_ref, b_ref, o_ref):
    y = jnp.dot(x_ref[...].astype(MXU_DTYPE), w_ref[...].astype(MXU_DTYPE),
                preferred_element_type=jnp.float32) + b_ref[...]
    o_ref[...] = jnp.tanh(y).astype(o_ref.dtype)


def linear_tanh(x, w, b):
    M, K = x.shape
    _, N = w.shape
    tm = _pick_row_tile(M, max(K, N))
    return pl.pallas_call(
        _linear_tanh_kernel,
        out_shape=jax.ShapeDtypeStruct((M, N), x.dtype),
        grid=(M // tm,),
        in_specs=[pl.BlockSpec((tm, K), lambda i: (i, 0)),
                  pl.BlockSpec((K, N), lambda i: (0, 0)),
                  pl.BlockSpec((1, N), lambda i: (0, 0))],
        out_specs=pl.BlockSpec((tm, N), lambda i: (i, 0)),
        compiler_params=pltpu.CompilerParams(
            dimension_semantics=("parallel",)),
    )(x, w, b.reshape(1, N))


def _segment_attn_kernel(x_ref, m_ref, o_ref, *, n_head, dp, scale):
    # x_ref: (TG, Ld, D) -- the SAME projected tensor is q, k and v (reference
    #        applies q_proj to all three).
    # m_ref: (TG, 1, Ld) additive key-padding mask (0.0 or -inf).
    # o_ref: (TG, Ld, D) lane-dense output (heads concatenated on the lane axis).
    x = x_ref[...]
    m = m_ref[...]
    outs = []
    for h in range(n_head):                       # static unroll over heads
        xh = x[:, :, h * dp:(h + 1) * dp]
        xh_m = xh.astype(MXU_DTYPE)
        s = jnp.einsum('gqd,gkd->gqk', xh_m, xh_m,
                       preferred_element_type=jnp.float32)
        s = s * scale + m                         # mask broadcast over queries
        row_max = jnp.max(s, axis=-1, keepdims=True)
        row_max = jnp.where(row_max == -jnp.inf, 0.0, row_max)
        e = jnp.exp(s - row_max)
        denom = jnp.sum(e, axis=-1, keepdims=True)
        # softmax; fully-masked rows (denom == 0) -> 0, matching torch
        # softmax -> NaN -> nan_to_num -> 0 without producing NaNs here.
        p = e / jnp.maximum(denom, 1e-30)
        outs.append(jnp.einsum('gqk,gkd->gqd', p.astype(MXU_DTYPE), xh_m,
                               preferred_element_type=jnp.float32))
    o_ref[...] = jnp.concatenate(outs, axis=-1).astype(o_ref.dtype)


def segment_attention(x, add_mask, n_head):
    # x: (G, Ld, D) with G = batch * n_segment ; add_mask: (G, 1, Ld)
    G, Ld, D = x.shape
    dp = D // n_head
    per_group = Ld * D * 4 * 3 + Ld * Ld * 4
    tg = _pick_group_tile(G, per_group)
    kernel = functools.partial(_segment_attn_kernel, n_head=n_head, dp=dp,
                               scale=1.0 / math.sqrt(dp))
    return pl.pallas_call(
        kernel,
        out_shape=jax.ShapeDtypeStruct((G, Ld, D), x.dtype),
        grid=(G // tg,),
        in_specs=[pl.BlockSpec((tg, Ld, D), lambda g: (g, 0, 0)),
                  pl.BlockSpec((tg, 1, Ld), lambda g: (g, 0, 0))],
        out_specs=pl.BlockSpec((tg, Ld, D), lambda g: (g, 0, 0)),
        compiler_params=pltpu.CompilerParams(
            dimension_semantics=("parallel",)),
    )(x, add_mask)


# -------------------- model (glue in plain JAX) --------------------

def build_branch_masks(kpm, segment_sizes, dilated_rates):
    """Per-branch additive key-padding masks; built once per forward."""
    B, T = kpm.shape
    masks = []
    for seg, rate in zip(segment_sizes, dilated_rates):
        if T % seg != 0:
            pad = seg - T % seg
            kpmb = jnp.concatenate([kpm, jnp.zeros((B, pad), kpm.dtype)], axis=1)
            Tp = T + pad
        else:
            kpmb, Tp = kpm, T
        n_seg = Tp // seg
        km = kpmb.reshape(B, n_seg, seg)[:, :, ::rate]        # (B, S, Ld) bool
        Ld = km.shape[2]
        add_mask = jnp.where(km, -jnp.inf, 0.0).astype(jnp.float32)
        masks.append(add_mask.reshape(B * n_seg, 1, Ld))
    return masks


def dilated_mha(x, branch_masks, wq, segment_sizes, dilated_rates, n_head):
    B, T, D = x.shape
    n_branch = len(segment_sizes)
    # Shared q_proj hoisted out of the branch loop: it is a per-token linear
    # with no bias, so it commutes with zero padding and the dilation gather.
    proj = matmul(x.reshape(B * T, D), wq).reshape(B, T, D)
    out = None
    for (seg, rate), add_mask in zip(zip(segment_sizes, dilated_rates),
                                     branch_masks):
        if T % seg != 0:
            pad = seg - T % seg
            Tp = T + pad
            pb = jnp.concatenate([proj, jnp.zeros((B, pad, D), proj.dtype)],
                                 axis=1)
        else:
            Tp, pb = T, proj
        n_seg = Tp // seg
        xg = pb.reshape(B, n_seg, seg, D)[:, :, ::rate, :]     # (B, S, Ld, D)
        Ld = xg.shape[2]
        attn = segment_attention(xg.reshape(B * n_seg, Ld, D), add_mask, n_head)
        attn = attn.reshape(B, n_seg, Ld, D)
        if rate == 1:
            # dilation is a no-op: skip the zeros + strided scatter entirely
            a = attn.reshape(B, Tp, D)
        else:
            # TODO(synk): for rate > 1 the strided scatter could be folded into
            # the attention kernel's output index_map; kept as an XLA scatter.
            resized = jnp.zeros((B, n_seg, seg, D), x.dtype)
            resized = resized.at[:, :, ::rate, :].set(attn)
            a = resized.reshape(B, Tp, D)
        contrib = a[:, :T, :] / n_branch
        out = contrib if out is None else out + contrib
    return out


def longbert_layer(x, branch_masks, lp, config):
    attn = dilated_mha(x, branch_masks, lp['wq'], config['segment_size'],
                       config['dilated_rate'], config['num_attention_heads'])
    B, T, D = attn.shape
    y = linear_layernorm(attn.reshape(B * T, D), lp['wo'], lp['bo'],
                         lp['gamma'], lp['beta'])
    return y.reshape(B, T, D)


def longbert_model(input_ids, attention_mask, token_type_ids, params, config):
    B, T = input_ids.shape
    D = config['hidden_size']
    position_ids = jnp.broadcast_to(jnp.arange(T, dtype=jnp.int32)[None, :],
                                    (B, T))
    we = params['word_emb'][input_ids]
    te = (params['tok_emb'][token_type_ids] if token_type_ids is not None
          else jnp.zeros_like(we))
    pe = params['pos_emb'][position_ids]
    x = add3_layernorm(we.reshape(B * T, D), te.reshape(B * T, D),
                       pe.reshape(B * T, D),
                       params['emb_gamma'], params['emb_beta']).reshape(B, T, D)
    if attention_mask is not None:
        kpm = jnp.logical_not(attention_mask.astype(bool))
    else:
        kpm = jnp.zeros((B, T), bool)
    # masks depend only on kpm / segment config -> build once, reuse per layer
    branch_masks = build_branch_masks(kpm, config['segment_size'],
                                      config['dilated_rate'])
    hidden = x
    hidden_states = ()
    for _ in range(config['num_hidden_layers']):   # clone() => shared weights
        hidden = longbert_layer(hidden, branch_masks, params['layer'], config)
        hidden_states = hidden_states + (hidden,)
    pooled = linear_tanh(hidden[:, 0, :], params['pool_w'], params['pool_b'])
    return {'last_hidden_state': hidden,
            'pooled_output': pooled,
            'hidden_states': hidden_states}


def init_params(key, config):
    D = config['hidden_size']
    ks = jax.random.split(key, 6)
    s = 0.02
    word_emb = jax.random.normal(ks[0], (config['vocab_size'], D), jnp.float32) * s
    word_emb = word_emb.at[0].set(0.0)   # padding_idx=0
    return {
        'word_emb': word_emb,
        'pos_emb': jax.random.normal(ks[1], (config['max_position_embeddings'], D),
                                     jnp.float32) * s,
        'tok_emb': jax.random.normal(ks[2], (2, D), jnp.float32) * s,
        'emb_gamma': jnp.ones((D,), jnp.float32),
        'emb_beta': jnp.zeros((D,), jnp.float32),
        'layer': {
            'wq': jax.random.normal(ks[3], (D, D), jnp.float32) * s,
            'wo': jax.random.normal(ks[4], (D, D), jnp.float32) * s,
            'bo': jnp.zeros((D,), jnp.float32),
            'gamma': jnp.ones((D,), jnp.float32),
            'beta': jnp.zeros((D,), jnp.float32),
        },
        'pool_w': jax.random.normal(ks[5], (D, D), jnp.float32) * s,
        'pool_b': jnp.zeros((D,), jnp.float32),
    }


if __name__ == "__main__":
    config = dict(vocab_size=100, hidden_size=32, max_position_embeddings=64,
                  num_attention_heads=4, segment_size=(8, 4), dilated_rate=(2, 1),
                  num_hidden_layers=2, hidden_dropout_prob=0.1,
                  attention_probs_dropout_prob=0.1)
    key = jax.random.PRNGKey(0)
    pkey, dkey = jax.random.split(key)
    params = init_params(pkey, config)

    B, T = 2, 16
    input_ids = jax.random.randint(dkey, (B, T), 1, config['vocab_size'],
                                   dtype=jnp.int32)
    token_type_ids = jnp.zeros((B, T), jnp.int32)
    attention_mask = jnp.ones((B, T), jnp.int32).at[1, 12:].set(0)

    fwd = jax.jit(lambda ids, am, tt, p: longbert_model(ids, am, tt, p, config))
    out = fwd(input_ids, attention_mask, token_type_ids, params)
    jax.block_until_ready(out['last_hidden_state'])
    jax.block_until_ready(out['pooled_output'])
    assert out['last_hidden_state'].shape == (B, T, config['hidden_size'])
    assert out['pooled_output'].shape == (B, config['hidden_size'])
    assert len(out['hidden_states']) == config['num_hidden_layers']
    print("KERNEL_OK")
</pallas_src>

<mosaic_0001>
module attributes {stable_mosaic.version = 11 : i64} {
  func.func @_matmul_kernel(%arg0: i32, %arg1: i32, %arg2: i32, %arg3: memref<32x32xf32, #tpu.memory_space<vmem>>, %arg4: memref<32x32xf32, #tpu.memory_space<vmem>>, %arg5: memref<32x32xf32, #tpu.memory_space<vmem>>, %arg6: memref<32x32xf32, #tpu.memory_space<vmem>>) attributes {dimension_semantics = [#tpu.dimension_semantics<parallel>, #tpu.dimension_semantics<parallel>, #tpu.dimension_semantics<arbitrary>], iteration_bounds = array<i64: 1, 1, 1>, scalar_prefetch = 0 : i64, scratch_operands = 1 : i64, tpu.core_type = #tpu.core_type<tc>, window_params = [{transform_indices = @transform_0, window_bounds = array<i64: 32, 32>}, {transform_indices = @transform_1, window_bounds = array<i64: 32, 32>}, {transform_indices = @transform_2, window_bounds = array<i64: 32, 32>}]} {
    %c0_i32 = arith.constant 0 : i32
    %0 = arith.cmpi eq, %arg2, %c0_i32 : i32
    %1 = arith.extui %0 : i1 to i32
    %c0_i32_0 = arith.constant 0 : i32
    %2 = arith.cmpi ne, %1, %c0_i32_0 : i32
    scf.if %2 {
      %cst_10 = arith.constant 0.000000e+00 : f32
      %14 = vector.broadcast %cst_10 : f32 to vector<32x32xf32>
      %c0_11 = arith.constant 0 : index
      %c0_12 = arith.constant 0 : index
      %15 = vector.load %arg6[%c0_11, %c0_12] : memref<32x32xf32, #tpu.memory_space<vmem>>, vector<32x32xf32>
      tpu.vector_store %arg6[%c0_11, %c0_12], %14 {strides = array<i32>} : memref<32x32xf32, #tpu.memory_space<vmem>>, vector<32x32xf32>,
    } else {
    }
    %c0 = arith.constant 0 : index
    %c0_1 = arith.constant 0 : index
    %3 = vector.load %arg6[%c0, %c0_1] : memref<32x32xf32, #tpu.memory_space<vmem>>, vector<32x32xf32>
    %c0_2 = arith.constant 0 : index
    %c0_3 = arith.constant 0 : index
    %4 = vector.load %arg3[%c0_2, %c0_3] : memref<32x32xf32, #tpu.memory_space<vmem>>, vector<32x32xf32>
    %5 = arith.truncf %4 : vector<32x32xf32> to vector<32x32xbf16>
    %c0_4 = arith.constant 0 : index
    %c0_5 = arith.constant 0 : index
    %6 = vector.load %arg4[%c0_4, %c0_5] : memref<32x32xf32, #tpu.memory_space<vmem>>, vector<32x32xf32>
    %7 = arith.truncf %6 : vector<32x32xf32> to vector<32x32xbf16>
    %cst = arith.constant dense<0.000000e+00> : vector<32x32xf32>
    %8 = tpu.matmul %5, %7, %cst {dimension_numbers = #tpu.dot_dimension_numbers<[1], [0], [0], [1], [0, 0, 1, 1], [], []>} : vector<32x32xbf16>, vector<32x32xbf16>, vector<32x32xf32> -> vector<32x32xf32>
    %9 = arith.addf %3, %8 : vector<32x32xf32>
    %c0_6 = arith.constant 0 : index
    %c0_7 = arith.constant 0 : index
    %10 = vector.load %arg6[%c0_6, %c0_7] : memref<32x32xf32, #tpu.memory_space<vmem>>, vector<32x32xf32>
    tpu.vector_store %arg6[%c0_6, %c0_7], %9 {strides = array<i32>} : memref<32x32xf32, #tpu.memory_space<vmem>>, vector<32x32xf32>,
    %c0_i32_8 = arith.constant 0 : i32
    %11 = arith.cmpi eq, %arg2, %c0_i32_8 : i32
    %12 = arith.extui %11 : i1 to i32
    %c0_i32_9 = arith.constant 0 : i32
    %13 = arith.cmpi ne, %12, %c0_i32_9 : i32
    scf.if %13 {
      %c0_10 = arith.constant 0 : index
      %c0_11 = arith.constant 0 : index
      %14 = vector.load %arg6[%c0_10, %c0_11] : memref<32x32xf32, #tpu.memory_space<vmem>>, vector<32x32xf32>
      %c0_12 = arith.constant 0 : index
      %c0_13 = arith.constant 0 : index
      %15 = vector.load %arg5[%c0_12, %c0_13] : memref<32x32xf32, #tpu.memory_space<vmem>>, vector<32x32xf32>
      tpu.vector_store %arg5[%c0_12, %c0_13], %14 {strides = array<i32>} : memref<32x32xf32, #tpu.memory_space<vmem>>, vector<32x32xf32>,
    } else {
    }
    return
  }
  func.func @transform_0(%arg0: i32, %arg1: i32, %arg2: i32) -> (i32, i32) {
    %c0_i32 = arith.constant 0 : i32
    return %arg0, %arg2 : i32, i32
  }
  func.func @transform_1(%arg0: i32, %arg1: i32, %arg2: i32) -> (i32, i32) {
    %c0_i32 = arith.constant 0 : i32
    return %arg2, %arg1 : i32, i32
  }
  func.func @transform_2(%arg0: i32, %arg1: i32, %arg2: i32) -> (i32, i32) {
    %c0_i32 = arith.constant 0 : i32
    return %arg0, %arg1 : i32, i32
  }
}

module attributes {stable_mosaic.version = 11 : i64} {
  func.func @_add3_ln_kernel(%arg0: i32, %arg1: memref<32x32xf32, #tpu.memory_space<vmem>>, %arg2: memref<32x32xf32, #tpu.memory_space<vmem>>, %arg3: memref<32x32xf32, #tpu.memory_space<vmem>>, %arg4: memref<1x32xf32, #tpu.memory_space<vmem>>, %arg5: memref<1x32xf32, #tpu.memory_space<vmem>>, %arg6: memref<32x32xf32, #tpu.memory_space<vmem>>) attributes {dimension_semantics = [#tpu.dimension_semantics<parallel>], iteration_bounds = array<i64: 1>, scalar_prefetch = 0 : i64, scratch_operands = 0 : i64, tpu.core_type = #tpu.core_type<tc>, window_params = [{transform_indices = @transform_0, window_bounds = array<i64: 32, 32>}, {transform_indices = @transform_1, window_bounds = array<i64: 32, 32>}, {transform_indices = @transform_2, window_bounds = array<i64: 32, 32>}, {pipeline_mode = #tpu.pipeline_mode<synchronous>, transform_indices = @transform_3, window_bounds = array<i64: 1, 32>}, {pipeline_mode = #tpu.pipeline_mode<synchronous>, transform_indices = @transform_4, window_bounds = array<i64: 1, 32>}, {transform_indices = @transform_5, window_bounds = array<i64: 32, 32>}]} {
    %c0 = arith.constant 0 : index
    %c0_0 = arith.constant 0 : index
    %0 = vector.load %arg1[%c0, %c0_0] : memref<32x32xf32, #tpu.memory_space<vmem>>, vector<32x32xf32>
    %c0_1 = arith.constant 0 : index
    %c0_2 = arith.constant 0 : index
    %1 = vector.load %arg2[%c0_1, %c0_2] : memref<32x32xf32, #tpu.memory_space<vmem>>, vector<32x32xf32>
    %2 = arith.addf %0, %1 : vector<32x32xf32>
    %c0_3 = arith.constant 0 : index
    %c0_4 = arith.constant 0 : index
    %3 = vector.load %arg3[%c0_3, %c0_4] : memref<32x32xf32, #tpu.memory_space<vmem>>, vector<32x32xf32>
    %4 = arith.addf %2, %3 : vector<32x32xf32>
    %cst = arith.constant dense<0.000000e+00> : vector<32xf32>
    %5 = vector.multi_reduction <add>, %4, %cst [1] : vector<32x32xf32> to vector<32xf32>
    %6 = vector.shape_cast %5 : vector<32xf32> to vector<32x1xf32>
    %cst_5 = arith.constant 3.200000e+01 : f32
    %7 = vector.broadcast %cst_5 : f32 to vector<32x1xf32>
    %8 = arith.divf %6, %7 : vector<32x1xf32>
    %9 = vector.broadcast %8 : vector<32x1xf32> to vector<32x32xf32>
    %10 = arith.subf %4, %9 : vector<32x32xf32>
    %11 = arith.mulf %10, %10 : vector<32x32xf32>
    %cst_6 = arith.constant dense<0.000000e+00> : vector<32xf32>
    %12 = vector.multi_reduction <add>, %11, %cst_6 [1] : vector<32x32xf32> to vector<32xf32>
    %13 = vector.shape_cast %12 : vector<32xf32> to vector<32x1xf32>
    %cst_7 = arith.constant 3.200000e+01 : f32
    %14 = vector.broadcast %cst_7 : f32 to vector<32x1xf32>
    %15 = arith.divf %13, %14 : vector<32x1xf32>
    %16 = vector.broadcast %8 : vector<32x1xf32> to vector<32x32xf32>
    %17 = arith.subf %4, %16 : vector<32x32xf32>
    %cst_8 = arith.constant 9.99999996E-13 : f32
    %18 = vector.broadcast %cst_8 : f32 to vector<32x1xf32>
    %19 = arith.addf %15, %18 : vector<32x1xf32>
    %20 = math.rsqrt %19 : vector<32x1xf32>
    %21 = vector.broadcast %20 : vector<32x1xf32> to vector<32x32xf32>
    %22 = arith.mulf %17, %21 : vector<32x32xf32>
    %c0_9 = arith.constant 0 : index
    %c0_10 = arith.constant 0 : index
    %23 = vector.load %arg4[%c0_9, %c0_10] : memref<1x32xf32, #tpu.memory_space<vmem>>, vector<1x32xf32>
    %24 = vector.broadcast %23 : vector<1x32xf32> to vector<32x32xf32>
    %25 = arith.mulf %22, %24 : vector<32x32xf32>
    %c0_11 = arith.constant 0 : index
    %c0_12 = arith.constant 0 : index
    %26 = vector.load %arg5[%c0_11, %c0_12] : memref<1x32xf32, #tpu.memory_space<vmem>>, vector<1x32xf32>
    %27 = vector.broadcast %26 : vector<1x32xf32> to vector<32x32xf32>
    %28 = arith.addf %25, %27 : vector<32x32xf32>
    %c0_13 = arith.constant 0 : index
    %c0_14 = arith.constant 0 : index
    %29 = vector.load %arg6[%c0_13, %c0_14] : memref<32x32xf32, #tpu.memory_space<vmem>>, vector<32x32xf32>
    tpu.vector_store %arg6[%c0_13, %c0_14], %28 {strides = array<i32>} : memref<32x32xf32, #tpu.memory_space<vmem>>, vector<32x32xf32>,
    return
  }
  func.func @transform_0(%arg0: i32) -> (i32, i32) {
    %c0_i32 = arith.constant 0 : i32
    %c0_i32_0 = arith.constant 0 : i32
    return %arg0, %c0_i32 : i32, i32
  }
  func.func @transform_1(%arg0: i32) -> (i32, i32) {
    %c0_i32 = arith.constant 0 : i32
    %c0_i32_0 = arith.constant 0 : i32
    return %arg0, %c0_i32 : i32, i32
  }
  func.func @transform_2(%arg0: i32) -> (i32, i32) {
    %c0_i32 = arith.constant 0 : i32
    %c0_i32_0 = arith.constant 0 : i32
    return %arg0, %c0_i32 : i32, i32
  }
  func.func @transform_3(%arg0: i32) -> (i32, i32) {
    %c0_i32 = arith.constant 0 : i32
    %c0_i32_0 = arith.constant 0 : i32
    %c0_i32_1 = arith.constant 0 : i32
    return %c0_i32, %c0_i32_0 : i32, i32
  }
  func.func @transform_4(%arg0: i32) -> (i32, i32) {
    %c0_i32 = arith.constant 0 : i32
    %c0_i32_0 = arith.constant 0 : i32
    %c0_i32_1 = arith.constant 0 : i32
    return %c0_i32, %c0_i32_0 : i32, i32
  }
  func.func @transform_5(%arg0: i32) -> (i32, i32) {
    %c0_i32 = arith.constant 0 : i32
    %c0_i32_0 = arith.constant 0 : i32
    return %arg0, %c0_i32 : i32, i32
  }
}

module attributes {stable_mosaic.version = 11 : i64} {
  func.func @_segment_attn_kernel(%arg0: i32, %arg1: memref<4x4x32xf32, #tpu.memory_space<vmem>>, %arg2: memref<4x1x4xf32, #tpu.memory_space<vmem>>, %arg3: memref<4x4x32xf32, #tpu.memory_space<vmem>>) attributes {dimension_semantics = [#tpu.dimension_semantics<parallel>], iteration_bounds = array<i64: 1>, scalar_prefetch = 0 : i64, scratch_operands = 0 : i64, tpu.core_type = #tpu.core_type<tc>, window_params = [{transform_indices = @transform_0, window_bounds = array<i64: 4, 4, 32>}, {transform_indices = @transform_1, window_bounds = array<i64: 4, 1, 4>}, {transform_indices = @transform_2, window_bounds = array<i64: 4, 4, 32>}]} {
    %c0 = arith.constant 0 : index
    %c0_0 = arith.constant 0 : index
    %c0_1 = arith.constant 0 : index
    %0 = vector.load %arg1[%c0, %c0_0, %c0_1] : memref<4x4x32xf32, #tpu.memory_space<vmem>>, vector<4x4x32xf32>
    %c0_2 = arith.constant 0 : index
    %c0_3 = arith.constant 0 : index
    %c0_4 = arith.constant 0 : index
    %1 = vector.load %arg2[%c0_2, %c0_3, %c0_4] : memref<4x1x4xf32, #tpu.memory_space<vmem>>, vector<4x1x4xf32>
    %2 = vector.extract_strided_slice %0 {offsets = [0, 0, 0], sizes = [4, 4, 8], strides = [1, 1, 1]} : vector<4x4x32xf32> to vector<4x4x8xf32>
    %3 = arith.truncf %2 : vector<4x4x8xf32> to vector<4x4x8xbf16>
    "tpu.trace_start"() <{level = 10 : i32, message = "gqd,gkd->gqk"}> : () -> ()
    %cst = arith.constant dense<0.000000e+00> : vector<4x4x4xf32>
    %4 = tpu.matmul %3, %3, %cst {dimension_numbers = #tpu.dot_dimension_numbers<[2], [2], [1], [1], [0, 0, 0, 1, 1, 1], [0], [0]>} : vector<4x4x8xbf16>, vector<4x4x8xbf16>, vector<4x4x4xf32> -> vector<4x4x4xf32>
    "tpu.trace_stop"() : () -> ()
    %cst_5 = arith.constant 0.353553385 : f32
    %5 = vector.broadcast %cst_5 : f32 to vector<4x4x4xf32>
    %6 = arith.mulf %4, %5 : vector<4x4x4xf32>
    %7 = vector.broadcast %1 : vector<4x1x4xf32> to vector<4x4x4xf32>
    %8 = arith.addf %6, %7 : vector<4x4x4xf32>
    %cst_6 = arith.constant dense<0xFF800000> : vector<4x4xf32>
    %9 = vector.multi_reduction <maximumf>, %8, %cst_6 [2] : vector<4x4x4xf32> to vector<4x4xf32>
    %10 = vector.shape_cast %9 : vector<4x4xf32> to vector<4x4x1xf32>
    %cst_7 = arith.constant 0xFF800000 : f32
    %11 = vector.broadcast %cst_7 : f32 to vector<4x4x1xf32>
    %12 = arith.cmpf oeq, %10, %11 : vector<4x4x1xf32>
    %cst_8 = arith.constant 0.000000e+00 : f32
    %13 = vector.broadcast %cst_8 : f32 to vector<4x4x1xf32>
    %14 = arith.select %12, %13, %10 : vector<4x4x1xi1>, vector<4x4x1xf32>
    %15 = vector.broadcast %14 : vector<4x4x1xf32> to vector<4x4x4xf32>
    %16 = arith.subf %8, %15 : vector<4x4x4xf32>
    %17 = math.exp %16 : vector<4x4x4xf32>
    %cst_9 = arith.constant dense<0.000000e+00> : vector<4x4xf32>
    %18 = vector.multi_reduction <add>, %17, %cst_9 [2] : vector<4x4x4xf32> to vector<4x4xf32>
    %19 = vector.shape_cast %18 : vector<4x4xf32> to vector<4x4x1xf32>
    %cst_10 = arith.constant 1.000000e-30 : f32
    %20 = vector.broadcast %cst_10 : f32 to vector<4x4x1xf32>
    %21 = arith.maximumf %19, %20 : vector<4x4x1xf32>
    %22 = vector.broadcast %21 : vector<4x4x1xf32> to vector<4x4x4xf32>
    %23 = arith.divf %17, %22 : vector<4x4x4xf32>
    %24 = arith.truncf %23 : vector<4x4x4xf32> to vector<4x4x4xbf16>
    "tpu.trace_start"() <{level = 10 : i32, message = "gqk,gkd->gqd"}> : () -> ()
    %cst_11 = arith.constant dense<0.000000e+00> : vector<4x4x8xf32>
    %25 = tpu.matmul %24, %3, %cst_11 {dimension_numbers = #tpu.dot_dimension_numbers<[2], [1], [1], [2], [0, 0, 0, 1, 1, 2], [0], [0]>} : vector<4x4x4xbf16>, vector<4x4x8xbf16>, vector<4x4x8xf32> -> vector<4x4x8xf32>
    "tpu.trace_stop"() : () -> ()
    %26 = vector.extract_strided_slice %0 {offsets = [0, 0, 8], sizes = [4, 4, 8], strides = [1, 1, 1]} : vector<4x4x32xf32> to vector<4x4x8xf32>
    %27 = arith.truncf %26 : vector<4x4x8xf32> to vector<4x4x8xbf16>
    "tpu.trace_start"() <{level = 10 : i32, message = "gqd,gkd->gqk"}> : () -> ()
    %cst_12 = arith.constant dense<0.000000e+00> : vector<4x4x4xf32>
    %28 = tpu.matmul %27, %27, %cst_12 {dimension_numbers = #tpu.dot_dimension_numbers<[2], [2], [1], [1], [0, 0, 0, 1, 1, 1], [0], [0]>} : vector<4x4x8xbf16>, vector<4x4x8xbf16>, vector<4x4x4xf32> -> vector<4x4x4xf32>
    "tpu.trace_stop"() : () -> ()
    %cst_13 = arith.constant 0.353553385 : f32
    %29 = vector.broadcast %cst_13 : f32 to vector<4x4x4xf32>
    %30 = arith.mulf %28, %29 : vector<4x4x4xf32>
    %31 = vector.broadcast %1 : vector<4x1x4xf32> to vector<4x4x4xf32>
    %32 = arith.addf %30, %31 : vector<4x4x4xf32>
    %cst_14 = arith.constant dense<0xFF800000> : vector<4x4xf32>
    %33 = vector.multi_reduction <maximumf>, %32, %cst_14 [2] : vector<4x4x4xf32> to vector<4x4xf32>
    %34 = vector.shape_cast %33 : vector<4x4xf32> to vector<4x4x1xf32>
    %cst_15 = arith.constant 0xFF800000 : f32
    %35 = vector.broadcast %cst_15 : f32 to vector<4x4x1xf32>
    %36 = arith.cmpf oeq, %34, %35 : vector<4x4x1xf32>
    %cst_16 = arith.constant 0.000000e+00 : f32
    %37 = vector.broadcast %cst_16 : f32 to vector<4x4x1xf32>
    %38 = arith.select %36, %37, %34 : vector<4x4x1xi1>, vector<4x4x1xf32>
    %39 = vector.broadcast %38 : vector<4x4x1xf32> to vector<4x4x4xf32>
    %40 = arith.subf %32, %39 : vector<4x4x4xf32>
    %41 = math.exp %40 : vector<4x4x4xf32>
    %cst_17 = arith.constant dense<0.000000e+00> : vector<4x4xf32>
    %42 = vector.multi_reduction <add>, %41, %cst_17 [2] : vector<4x4x4xf32> to vector<4x4xf32>
    %43 = vector.shape_cast %42 : vector<4x4xf32> to vector<4x4x1xf32>
    %cst_18 = arith.constant 1.000000e-30 : f32
    %44 = vector.broadcast %cst_18 : f32 to vector<4x4x1xf32>
    %45 = arith.maximumf %43, %44 : vector<4x4x1xf32>
    %46 = vector.broadcast %45 : vector<4x4x1xf32> to vector<4x4x4xf32>
    %47 = arith.divf %41, %46 : vector<4x4x4xf32>
    %48 = arith.truncf %47 : vector<4x4x4xf32> to vector<4x4x4xbf16>
    "tpu.trace_start"() <{level = 10 : i32, message = "gqk,gkd->gqd"}> : () -> ()
    %cst_19 = arith.constant dense<0.000000e+00> : vector<4x4x8xf32>
    %49 = tpu.matmul %48, %27, %cst_19 {dimension_numbers = #tpu.dot_dimension_numbers<[2], [1], [1], [2], [0, 0, 0, 1, 1, 2], [0], [0]>} : vector<4x4x4xbf16>, vector<4x4x8xbf16>, vector<4x4x8xf32> -> vector<4x4x8xf32>
    "tpu.trace_stop"() : () -> ()
    %50 = vector.extract_strided_slice %0 {offsets = [0, 0, 16], sizes = [4, 4, 8], strides = [1, 1, 1]} : vector<4x4x32xf32> to vector<4x4x8xf32>
    %51 = arith.truncf %50 : vector<4x4x8xf32> to vector<4x4x8xbf16>
    "tpu.trace_start"() <{level = 10 : i32, message = "gqd,gkd->gqk"}> : () -> ()
    %cst_20 = arith.constant dense<0.000000e+00> : vector<4x4x4xf32>
    %52 = tpu.matmul %51, %51, %cst_20 {dimension_numbers = #tpu.dot_dimension_numbers<[2], [2], [1], [1], [0, 0, 0, 1, 1, 1], [0], [0]>} : vector<4x4x8xbf16>, vector<4x4x8xbf16>, vector<4x4x4xf32> -> vector<4x4x4xf32>
    "tpu.trace_stop"() : () -> ()
    %cst_21 = arith.constant 0.353553385 : f32
    %53 = vector.broadcast %cst_21 : f32 to vector<4x4x4xf32>
    %54 = arith.mulf %52, %53 : vector<4x4x4xf32>
    %55 = vector.broadcast %1 : vector<4x1x4xf32> to vector<4x4x4xf32>
    %56 = arith.addf %54, %55 : vector<4x4x4xf32>
    %cst_22 = arith.constant dense<0xFF800000> : vector<4x4xf32>
    %57 = vector.multi_reduction <maximumf>, %56, %cst_22 [2] : vector<4x4x4xf32> to vector<4x4xf32>
    %58 = vector.shape_cast %57 : vector<4x4xf32> to vector<4x4x1xf32>
    %cst_23 = arith.constant 0xFF800000 : f32
    %59 = vector.broadcast %cst_23 : f32 to vector<4x4x1xf32>
    %60 = arith.cmpf oeq, %58, %59 : vector<4x4x1xf32>
    %cst_24 = arith.constant 0.000000e+00 : f32
    %61 = vector.broadcast %cst_24 : f32 to vector<4x4x1xf32>
    %62 = arith.select %60, %61, %58 : vector<4x4x1xi1>, vector<4x4x1xf32>
    %63 = vector.broadcast %62 : vector<4x4x1xf32> to vector<4x4x4xf32>
    %64 = arith.subf %56, %63 : vector<4x4x4xf32>
    %65 = math.exp %64 : vector<4x4x4xf32>
    %cst_25 = arith.constant dense<0.000000e+00> : vector<4x4xf32>
    %66 = vector.multi_reduction <add>, %65, %cst_25 [2] : vector<4x4x4xf32> to vector<4x4xf32>
    %67 = vector.shape_cast %66 : vector<4x4xf32> to vector<4x4x1xf32>
    %cst_26 = arith.constant 1.000000e-30 : f32
    %68 = vector.broadcast %cst_26 : f32 to vector<4x4x1xf32>
    %69 = arith.maximumf %67, %68 : vector<4x4x1xf32>
    %70 = vector.broadcast %69 : vector<4x4x1xf32> to vector<4x4x4xf32>
    %71 = arith.divf %65, %70 : vector<4x4x4xf32>
    %72 = arith.truncf %71 : vector<4x4x4xf32> to vector<4x4x4xbf16>
    "tpu.trace_start"() <{level = 10 : i32, message = "gqk,gkd->gqd"}> : () -> ()
    %cst_27 = arith.constant dense<0.000000e+00> : vector<4x4x8xf32>
    %73 = tpu.matmul %72, %51, %cst_27 {dimension_numbers = #tpu.dot_dimension_numbers<[2], [1], [1], [2], [0, 0, 0, 1, 1, 2], [0], [0]>} : vector<4x4x4xbf16>, vector<4x4x8xbf16>, vector<4x4x8xf32> -> vector<4x4x8xf32>
    "tpu.trace_stop"() : () -> ()
    %74 = vector.extract_strided_slice %0 {offsets = [0, 0, 24], sizes = [4, 4, 8], strides = [1, 1, 1]} : vector<4x4x32xf32> to vector<4x4x8xf32>
    %75 = arith.truncf %74 : vector<4x4x8xf32> to vector<4x4x8xbf16>
    "tpu.trace_start"() <{level = 10 : i32, message = "gqd,gkd->gqk"}> : () -> ()
    %cst_28 = arith.constant dense<0.000000e+00> : vector<4x4x4xf32>
    %76 = tpu.matmul %75, %75, %cst_28 {dimension_numbers = #tpu.dot_dimension_numbers<[2], [2], [1], [1], [0, 0, 0, 1, 1, 1], [0], [0]>} : vector<4x4x8xbf16>, vector<4x4x8xbf16>, vector<4x4x4xf32> -> vector<4x4x4xf32>
    "tpu.trace_stop"() : () -> ()
    %cst_29 = arith.constant 0.353553385 : f32
    %77 = vector.broadcast %cst_29 : f32 to vector<4x4x4xf32>
    %78 = arith.mulf %76, %77 : vector<4x4x4xf32>
    %79 = vector.broadcast %1 : vector<4x1x4xf32> to vector<4x4x4xf32>
    %80 = arith.addf %78, %79 : vector<4x4x4xf32>
    %cst_30 = arith.constant dense<0xFF800000> : vector<4x4xf32>
    %81 = vector.multi_reduction <maximumf>, %80, %cst_30 [2] : vector<4x4x4xf32> to vector<4x4xf32>
    %82 = vector.shape_cast %81 : vector<4x4xf32> to vector<4x4x1xf32>
    %cst_31 = arith.constant 0xFF800000 : f32
    %83 = vector.broadcast %cst_31 : f32 to vector<4x4x1xf32>
    %84 = arith.cmpf oeq, %82, %83 : vector<4x4x1xf32>
    %cst_32 = arith.constant 0.000000e+00 : f32
    %85 = vector.broadcast %cst_32 : f32 to vector<4x4x1xf32>
    %86 = arith.select %84, %85, %82 : vector<4x4x1xi1>, vector<4x4x1xf32>
    %87 = vector.broadcast %86 : vector<4x4x1xf32> to vector<4x4x4xf32>
    %88 = arith.subf %80, %87 : vector<4x4x4xf32>
    %89 = math.exp %88 : vector<4x4x4xf32>
    %cst_33 = arith.constant dense<0.000000e+00> : vector<4x4xf32>
    %90 = vector.multi_reduction <add>, %89, %cst_33 [2] : vector<4x4x4xf32> to vector<4x4xf32>
    %91 = vector.shape_cast %90 : vector<4x4xf32> to vector<4x4x1xf32>
    %cst_34 = arith.constant 1.000000e-30 : f32
    %92 = vector.broadcast %cst_34 : f32 to vector<4x4x1xf32>
    %93 = arith.maximumf %91, %92 : vector<4x4x1xf32>
    %94 = vector.broadcast %93 : vector<4x4x1xf32> to vector<4x4x4xf32>
    %95 = arith.divf %89, %94 : vector<4x4x4xf32>
    %96 = arith.truncf %95 : vector<4x4x4xf32> to vector<4x4x4xbf16>
    "tpu.trace_start"() <{level = 10 : i32, message = "gqk,gkd->gqd"}> : () -> ()
    %cst_35 = arith.constant dense<0.000000e+00> : vector<4x4x8xf32>
    %97 = tpu.matmul %96, %75, %cst_35 {dimension_numbers = #tpu.dot_dimension_numbers<[2], [1], [1], [2], [0, 0, 0, 1, 1, 2], [0], [0]>} : vector<4x4x4xbf16>, vector<4x4x8xbf16>, vector<4x4x8xf32> -> vector<4x4x8xf32>
    "tpu.trace_stop"() : () -> ()
    %98 = tpu.concatenate %25, %49, %73, %97 in 2 : vector<4x4x8xf32>, vector<4x4x8xf32>, vector<4x4x8xf32>, vector<4x4x8xf32> -> vector<4x4x32xf32>
    %c0_36 = arith.constant 0 : index
    %c0_37 = arith.constant 0 : index
    %c0_38 = arith.constant 0 : index
    %99 = vector.load %arg3[%c0_36, %c0_37, %c0_38] : memref<4x4x32xf32, #tpu.memory_space<vmem>>, vector<4x4x32xf32>
    tpu.vector_store %arg3[%c0_36, %c0_37, %c0_38], %98 {strides = array<i32>} : memref<4x4x32xf32, #tpu.memory_space<vmem>>, vector<4x4x32xf32>,
    return
  }
  func.func @transform_0(%arg0: i32) -> (i32, i32, i32) {
    %c0_i32 = arith.constant 0 : i32
    %c0_i32_0 = arith.constant 0 : i32
    %c0_i32_1 = arith.constant 0 : i32
    return %arg0, %c0_i32, %c0_i32_0 : i32, i32, i32
  }
  func.func @transform_1(%arg0: i32) -> (i32, i32, i32) {
    %c0_i32 = arith.constant 0 : i32
    %c0_i32_0 = arith.constant 0 : i32
    %c0_i32_1 = arith.constant 0 : i32
    return %arg0, %c0_i32, %c0_i32_0 : i32, i32, i32
  }
  func.func @transform_2(%arg0: i32) -> (i32, i32, i32) {
    %c0_i32 = arith.constant 0 : i32
    %c0_i32_0 = arith.constant 0 : i32
    %c0_i32_1 = arith.constant 0 : i32
    return %arg0, %c0_i32, %c0_i32_0 : i32, i32, i32
  }
}

module attributes {stable_mosaic.version = 11 : i64} {
  func.func @_linear_ln_kernel(%arg0: i32, %arg1: i32, %arg2: memref<32x32xf32, #tpu.memory_space<vmem>>, %arg3: memref<32x32xf32, #tpu.memory_space<vmem>>, %arg4: memref<1x32xf32, #tpu.memory_space<vmem>>, %arg5: memref<1x32xf32, #tpu.memory_space<vmem>>, %arg6: memref<1x32xf32, #tpu.memory_space<vmem>>, %arg7: memref<32x32xf32, #tpu.memory_space<vmem>>, %arg8: memref<32x32xf32, #tpu.memory_space<vmem>>) attributes {dimension_semantics = [#tpu.dimension_semantics<parallel>, #tpu.dimension_semantics<arbitrary>], iteration_bounds = array<i64: 1, 1>, scalar_prefetch = 0 : i64, scratch_operands = 1 : i64, tpu.core_type = #tpu.core_type<tc>, window_params = [{transform_indices = @transform_0, window_bounds = array<i64: 32, 32>}, {transform_indices = @transform_1, window_bounds = array<i64: 32, 32>}, {pipeline_mode = #tpu.pipeline_mode<synchronous>, transform_indices = @transform_2, window_bounds = array<i64: 1, 32>}, {pipeline_mode = #tpu.pipeline_mode<synchronous>, transform_indices = @transform_3, window_bounds = array<i64: 1, 32>}, {pipeline_mode = #tpu.pipeline_mode<synchronous>, transform_indices = @transform_4, window_bounds = array<i64: 1, 32>}, {transform_indices = @transform_5, window_bounds = array<i64: 32, 32>}]} {
    %c0_i32 = arith.constant 0 : i32
    %0 = arith.cmpi eq, %arg1, %c0_i32 : i32
    %1 = arith.extui %0 : i1 to i32
    %c0_i32_0 = arith.constant 0 : i32
    %2 = arith.cmpi ne, %1, %c0_i32_0 : i32
    scf.if %2 {
      %cst_10 = arith.constant 0.000000e+00 : f32
      %14 = vector.broadcast %cst_10 : f32 to vector<32x32xf32>
      %c0_11 = arith.constant 0 : index
      %c0_12 = arith.constant 0 : index
      %15 = vector.load %arg8[%c0_11, %c0_12] : memref<32x32xf32, #tpu.memory_space<vmem>>, vector<32x32xf32>
      tpu.vector_store %arg8[%c0_11, %c0_12], %14 {strides = array<i32>} : memref<32x32xf32, #tpu.memory_space<vmem>>, vector<32x32xf32>,
    } else {
    }
    %c0 = arith.constant 0 : index
    %c0_1 = arith.constant 0 : index
    %3 = vector.load %arg8[%c0, %c0_1] : memref<32x32xf32, #tpu.memory_space<vmem>>, vector<32x32xf32>
    %c0_2 = arith.constant 0 : index
    %c0_3 = arith.constant 0 : index
    %4 = vector.load %arg2[%c0_2, %c0_3] : memref<32x32xf32, #tpu.memory_space<vmem>>, vector<32x32xf32>
    %5 = arith.truncf %4 : vector<32x32xf32> to vector<32x32xbf16>
    %c0_4 = arith.constant 0 : index
    %c0_5 = arith.constant 0 : index
    %6 = vector.load %arg3[%c0_4, %c0_5] : memref<32x32xf32, #tpu.memory_space<vmem>>, vector<32x32xf32>
    %7 = arith.truncf %6 : vector<32x32xf32> to vector<32x32xbf16>
    %cst = arith.constant dense<0.000000e+00> : vector<32x32xf32>
    %8 = tpu.matmul %5, %7, %cst {dimension_numbers = #tpu.dot_dimension_numbers<[1], [0], [0], [1], [0, 0, 1, 1], [], []>} : vector<32x32xbf16>, vector<32x32xbf16>, vector<32x32xf32> -> vector<32x32xf32>
    %9 = arith.addf %3, %8 : vector<32x32xf32>
    %c0_6 = arith.constant 0 : index
    %c0_7 = arith.constant 0 : index
    %10 = vector.load %arg8[%c0_6, %c0_7] : memref<32x32xf32, #tpu.memory_space<vmem>>, vector<32x32xf32>
    tpu.vector_store %arg8[%c0_6, %c0_7], %9 {strides = array<i32>} : memref<32x32xf32, #tpu.memory_space<vmem>>, vector<32x32xf32>,
    %c0_i32_8 = arith.constant 0 : i32
    %11 = arith.cmpi eq, %arg1, %c0_i32_8 : i32
    %12 = arith.extui %11 : i1 to i32
    %c0_i32_9 = arith.constant 0 : i32
    %13 = arith.cmpi ne, %12, %c0_i32_9 : i32
    scf.if %13 {
      %c0_10 = arith.constant 0 : index
      %c0_11 = arith.constant 0 : index
      %14 = vector.load %arg8[%c0_10, %c0_11] : memref<32x32xf32, #tpu.memory_space<vmem>>, vector<32x32xf32>
      %c0_12 = arith.constant 0 : index
      %c0_13 = arith.constant 0 : index
      %15 = vector.load %arg4[%c0_12, %c0_13] : memref<1x32xf32, #tpu.memory_space<vmem>>, vector<1x32xf32>
      %16 = vector.broadcast %15 : vector<1x32xf32> to vector<32x32xf32>
      %17 = arith.addf %14, %16 : vector<32x32xf32>
      %cst_14 = arith.constant dense<0.000000e+00> : vector<32xf32>
      %18 = vector.multi_reduction <add>, %17, %cst_14 [1] : vector<32x32xf32> to vector<32xf32>
      %19 = vector.shape_cast %18 : vector<32xf32> to vector<32x1xf32>
      %cst_15 = arith.constant 3.200000e+01 : f32
      %20 = vector.broadcast %cst_15 : f32 to vector<32x1xf32>
      %21 = arith.divf %19, %20 : vector<32x1xf32>
      %22 = vector.broadcast %21 : vector<32x1xf32> to vector<32x32xf32>
      %23 = arith.subf %17, %22 : vector<32x32xf32>
      %24 = arith.mulf %23, %23 : vector<32x32xf32>
      %cst_16 = arith.constant dense<0.000000e+00> : vector<32xf32>
      %25 = vector.multi_reduction <add>, %24, %cst_16 [1] : vector<32x32xf32> to vector<32xf32>
      %26 = vector.shape_cast %25 : vector<32xf32> to vector<32x1xf32>
      %cst_17 = arith.constant 3.200000e+01 : f32
      %27 = vector.broadcast %cst_17 : f32 to vector<32x1xf32>
      %28 = arith.divf %26, %27 : vector<32x1xf32>
      %29 = vector.broadcast %21 : vector<32x1xf32> to vector<32x32xf32>
      %30 = arith.subf %17, %29 : vector<32x32xf32>
      %cst_18 = arith.constant 9.99999996E-13 : f32
      %31 = vector.broadcast %cst_18 : f32 to vector<32x1xf32>
      %32 = arith.addf %28, %31 : vector<32x1xf32>
      %33 = math.rsqrt %32 : vector<32x1xf32>
      %34 = vector.broadcast %33 : vector<32x1xf32> to vector<32x32xf32>
      %35 = arith.mulf %30, %34 : vector<32x32xf32>
      %c0_19 = arith.constant 0 : index
      %c0_20 = arith.constant 0 : index
      %36 = vector.load %arg5[%c0_19, %c0_20] : memref<1x32xf32, #tpu.memory_space<vmem>>, vector<1x32xf32>
      %37 = vector.broadcast %36 : vector<1x32xf32> to vector<32x32xf32>
      %38 = arith.mulf %35, %37 : vector<32x32xf32>
      %c0_21 = arith.constant 0 : index
      %c0_22 = arith.constant 0 : index
      %39 = vector.load %arg6[%c0_21, %c0_22] : memref<1x32xf32, #tpu.memory_space<vmem>>, vector<1x32xf32>
      %40 = vector.broadcast %39 : vector<1x32xf32> to vector<32x32xf32>
      %41 = arith.addf %38, %40 : vector<32x32xf32>
      %c0_23 = arith.constant 0 : index
      %c0_24 = arith.constant 0 : index
      %42 = vector.load %arg7[%c0_23, %c0_24] : memref<32x32xf32, #tpu.memory_space<vmem>>, vector<32x32xf32>
      tpu.vector_store %arg7[%c0_23, %c0_24], %41 {strides = array<i32>} : memref<32x32xf32, #tpu.memory_space<vmem>>, vector<32x32xf32>,
    } else {
    }
    return
  }
  func.func @transform_0(%arg0: i32, %arg1: i32) -> (i32, i32) {
    %c0_i32 = arith.constant 0 : i32
    return %arg0, %arg1 : i32, i32
  }
  func.func @transform_1(%arg0: i32, %arg1: i32) -> (i32, i32) {
    %c0_i32 = arith.constant 0 : i32
    %c0_i32_0 = arith.constant 0 : i32
    return %arg1, %c0_i32 : i32, i32
  }
  func.func @transform_2(%arg0: i32, %arg1: i32) -> (i32, i32) {
    %c0_i32 = arith.constant 0 : i32
    %c0_i32_0 = arith.constant 0 : i32
    %c0_i32_1 = arith.constant 0 : i32
    return %c0_i32, %c0_i32_0 : i32, i32
  }
  func.func @transform_3(%arg0: i32, %arg1: i32) -> (i32, i32) {
    %c0_i32 = arith.constant 0 : i32
    %c0_i32_0 = arith.constant 0 : i32
    %c0_i32_1 = arith.constant 0 : i32
    return %c0_i32, %c0_i32_0 : i32, i32
  }
  func.func @transform_4(%arg0: i32, %arg1: i32) -> (i32, i32) {
    %c0_i32 = arith.constant 0 : i32
    %c0_i32_0 = arith.constant 0 : i32
    %c0_i32_1 = arith.constant 0 : i32
    return %c0_i32, %c0_i32_0 : i32, i32
  }
  func.func @transform_5(%arg0: i32, %arg1: i32) -> (i32, i32) {
    %c0_i32 = arith.constant 0 : i32
    %c0_i32_0 = arith.constant 0 : i32
    return %arg0, %c0_i32 : i32, i32
  }
}

module attributes {stable_mosaic.version = 11 : i64} {
  func.func @_segment_attn_kernel(%arg0: i32, %arg1: memref<8x4x32xf32, #tpu.memory_space<vmem>>, %arg2: memref<8x1x4xf32, #tpu.memory_space<vmem>>, %arg3: memref<8x4x32xf32, #tpu.memory_space<vmem>>) attributes {dimension_semantics = [#tpu.dimension_semantics<parallel>], iteration_bounds = array<i64: 1>, scalar_prefetch = 0 : i64, scratch_operands = 0 : i64, tpu.core_type = #tpu.core_type<tc>, window_params = [{transform_indices = @transform_0, window_bounds = array<i64: 8, 4, 32>}, {transform_indices = @transform_1, window_bounds = array<i64: 8, 1, 4>}, {transform_indices = @transform_2, window_bounds = array<i64: 8, 4, 32>}]} {
    %c0 = arith.constant 0 : index
    %c0_0 = arith.constant 0 : index
    %c0_1 = arith.constant 0 : index
    %0 = vector.load %arg1[%c0, %c0_0, %c0_1] : memref<8x4x32xf32, #tpu.memory_space<vmem>>, vector<8x4x32xf32>
    %c0_2 = arith.constant 0 : index
    %c0_3 = arith.constant 0 : index
    %c0_4 = arith.constant 0 : index
    %1 = vector.load %arg2[%c0_2, %c0_3, %c0_4] : memref<8x1x4xf32, #tpu.memory_space<vmem>>, vector<8x1x4xf32>
    %2 = vector.extract_strided_slice %0 {offsets = [0, 0, 0], sizes = [8, 4, 8], strides = [1, 1, 1]} : vector<8x4x32xf32> to vector<8x4x8xf32>
    %3 = arith.truncf %2 : vector<8x4x8xf32> to vector<8x4x8xbf16>
    "tpu.trace_start"() <{level = 10 : i32, message = "gqd,gkd->gqk"}> : () -> ()
    %cst = arith.constant dense<0.000000e+00> : vector<8x4x4xf32>
    %4 = tpu.matmul %3, %3, %cst {dimension_numbers = #tpu.dot_dimension_numbers<[2], [2], [1], [1], [0, 0, 0, 1, 1, 1], [0], [0]>} : vector<8x4x8xbf16>, vector<8x4x8xbf16>, vector<8x4x4xf32> -> vector<8x4x4xf32>
    "tpu.trace_stop"() : () -> ()
    %cst_5 = arith.constant 0.353553385 : f32
    %5 = vector.broadcast %cst_5 : f32 to vector<8x4x4xf32>
    %6 = arith.mulf %4, %5 : vector<8x4x4xf32>
    %7 = vector.broadcast %1 : vector<8x1x4xf32> to vector<8x4x4xf32>
    %8 = arith.addf %6, %7 : vector<8x4x4xf32>
    %cst_6 = arith.constant dense<0xFF800000> : vector<8x4xf32>
    %9 = vector.multi_reduction <maximumf>, %8, %cst_6 [2] : vector<8x4x4xf32> to vector<8x4xf32>
    %10 = vector.shape_cast %9 : vector<8x4xf32> to vector<8x4x1xf32>
    %cst_7 = arith.constant 0xFF800000 : f32
    %11 = vector.broadcast %cst_7 : f32 to vector<8x4x1xf32>
    %12 = arith.cmpf oeq, %10, %11 : vector<8x4x1xf32>
    %cst_8 = arith.constant 0.000000e+00 : f32
    %13 = vector.broadcast %cst_8 : f32 to vector<8x4x1xf32>
    %14 = arith.select %12, %13, %10 : vector<8x4x1xi1>, vector<8x4x1xf32>
    %15 = vector.broadcast %14 : vector<8x4x1xf32> to vector<8x4x4xf32>
    %16 = arith.subf %8, %15 : vector<8x4x4xf32>
    %17 = math.exp %16 : vector<8x4x4xf32>
    %cst_9 = arith.constant dense<0.000000e+00> : vector<8x4xf32>
    %18 = vector.multi_reduction <add>, %17, %cst_9 [2] : vector<8x4x4xf32> to vector<8x4xf32>
    %19 = vector.shape_cast %18 : vector<8x4xf32> to vector<8x4x1xf32>
    %cst_10 = arith.constant 1.000000e-30 : f32
    %20 = vector.broadcast %cst_10 : f32 to vector<8x4x1xf32>
    %21 = arith.maximumf %19, %20 : vector<8x4x1xf32>
    %22 = vector.broadcast %21 : vector<8x4x1xf32> to vector<8x4x4xf32>
    %23 = arith.divf %17, %22 : vector<8x4x4xf32>
    %24 = arith.truncf %23 : vector<8x4x4xf32> to vector<8x4x4xbf16>
    "tpu.trace_start"() <{level = 10 : i32, message = "gqk,gkd->gqd"}> : () -> ()
    %cst_11 = arith.constant dense<0.000000e+00> : vector<8x4x8xf32>
    %25 = tpu.matmul %24, %3, %cst_11 {dimension_numbers = #tpu.dot_dimension_numbers<[2], [1], [1], [2], [0, 0, 0, 1, 1, 2], [0], [0]>} : vector<8x4x4xbf16>, vector<8x4x8xbf16>, vector<8x4x8xf32> -> vector<8x4x8xf32>
    "tpu.trace_stop"() : () -> ()
    %26 = vector.extract_strided_slice %0 {offsets = [0, 0, 8], sizes = [8, 4, 8], strides = [1, 1, 1]} : vector<8x4x32xf32> to vector<8x4x8xf32>
    %27 = arith.truncf %26 : vector<8x4x8xf32> to vector<8x4x8xbf16>
    "tpu.trace_start"() <{level = 10 : i32, message = "gqd,gkd->gqk"}> : () -> ()
    %cst_12 = arith.constant dense<0.000000e+00> : vector<8x4x4xf32>
    %28 = tpu.matmul %27, %27, %cst_12 {dimension_numbers = #tpu.dot_dimension_numbers<[2], [2], [1], [1], [0, 0, 0, 1, 1, 1], [0], [0]>} : vector<8x4x8xbf16>, vector<8x4x8xbf16>, vector<8x4x4xf32> -> vector<8x4x4xf32>
    "tpu.trace_stop"() : () -> ()
    %cst_13 = arith.constant 0.353553385 : f32
    %29 = vector.broadcast %cst_13 : f32 to vector<8x4x4xf32>
    %30 = arith.mulf %28, %29 : vector<8x4x4xf32>
    %31 = vector.broadcast %1 : vector<8x1x4xf32> to vector<8x4x4xf32>
    %32 = arith.addf %30, %31 : vector<8x4x4xf32>
    %cst_14 = arith.constant dense<0xFF800000> : vector<8x4xf32>
    %33 = vector.multi_reduction <maximumf>, %32, %cst_14 [2] : vector<8x4x4xf32> to vector<8x4xf32>
    %34 = vector.shape_cast %33 : vector<8x4xf32> to vector<8x4x1xf32>
    %cst_15 = arith.constant 0xFF800000 : f32
    %35 = vector.broadcast %cst_15 : f32 to vector<8x4x1xf32>
    %36 = arith.cmpf oeq, %34, %35 : vector<8x4x1xf32>
    %cst_16 = arith.constant 0.000000e+00 : f32
    %37 = vector.broadcast %cst_16 : f32 to vector<8x4x1xf32>
    %38 = arith.select %36, %37, %34 : vector<8x4x1xi1>, vector<8x4x1xf32>
    %39 = vector.broadcast %38 : vector<8x4x1xf32> to vector<8x4x4xf32>
    %40 = arith.subf %32, %39 : vector<8x4x4xf32>
    %41 = math.exp %40 : vector<8x4x4xf32>
    %cst_17 = arith.constant dense<0.000000e+00> : vector<8x4xf32>
    %42 = vector.multi_reduction <add>, %41, %cst_17 [2] : vector<8x4x4xf32> to vector<8x4xf32>
    %43 = vector.shape_cast %42 : vector<8x4xf32> to vector<8x4x1xf32>
    %cst_18 = arith.constant 1.000000e-30 : f32
    %44 = vector.broadcast %cst_18 : f32 to vector<8x4x1xf32>
    %45 = arith.maximumf %43, %44 : vector<8x4x1xf32>
    %46 = vector.broadcast %45 : vector<8x4x1xf32> to vector<8x4x4xf32>
    %47 = arith.divf %41, %46 : vector<8x4x4xf32>
    %48 = arith.truncf %47 : vector<8x4x4xf32> to vector<8x4x4xbf16>
    "tpu.trace_start"() <{level = 10 : i32, message = "gqk,gkd->gqd"}> : () -> ()
    %cst_19 = arith.constant dense<0.000000e+00> : vector<8x4x8xf32>
    %49 = tpu.matmul %48, %27, %cst_19 {dimension_numbers = #tpu.dot_dimension_numbers<[2], [1], [1], [2], [0, 0, 0, 1, 1, 2], [0], [0]>} : vector<8x4x4xbf16>, vector<8x4x8xbf16>, vector<8x4x8xf32> -> vector<8x4x8xf32>
    "tpu.trace_stop"() : () -> ()
    %50 = vector.extract_strided_slice %0 {offsets = [0, 0, 16], sizes = [8, 4, 8], strides = [1, 1, 1]} : vector<8x4x32xf32> to vector<8x4x8xf32>
    %51 = arith.truncf %50 : vector<8x4x8xf32> to vector<8x4x8xbf16>
    "tpu.trace_start"() <{level = 10 : i32, message = "gqd,gkd->gqk"}> : () -> ()
    %cst_20 = arith.constant dense<0.000000e+00> : vector<8x4x4xf32>
    %52 = tpu.matmul %51, %51, %cst_20 {dimension_numbers = #tpu.dot_dimension_numbers<[2], [2], [1], [1], [0, 0, 0, 1, 1, 1], [0], [0]>} : vector<8x4x8xbf16>, vector<8x4x8xbf16>, vector<8x4x4xf32> -> vector<8x4x4xf32>
    "tpu.trace_stop"() : () -> ()
    %cst_21 = arith.constant 0.353553385 : f32
    %53 = vector.broadcast %cst_21 : f32 to vector<8x4x4xf32>
    %54 = arith.mulf %52, %53 : vector<8x4x4xf32>
    %55 = vector.broadcast %1 : vector<8x1x4xf32> to vector<8x4x4xf32>
    %56 = arith.addf %54, %55 : vector<8x4x4xf32>
    %cst_22 = arith.constant dense<0xFF800000> : vector<8x4xf32>
    %57 = vector.multi_reduction <maximumf>, %56, %cst_22 [2] : vector<8x4x4xf32> to vector<8x4xf32>
    %58 = vector.shape_cast %57 : vector<8x4xf32> to vector<8x4x1xf32>
    %cst_23 = arith.constant 0xFF800000 : f32
    %59 = vector.broadcast %cst_23 : f32 to vector<8x4x1xf32>
    %60 = arith.cmpf oeq, %58, %59 : vector<8x4x1xf32>
    %cst_24 = arith.constant 0.000000e+00 : f32
    %61 = vector.broadcast %cst_24 : f32 to vector<8x4x1xf32>
    %62 = arith.select %60, %61, %58 : vector<8x4x1xi1>, vector<8x4x1xf32>
    %63 = vector.broadcast %62 : vector<8x4x1xf32> to vector<8x4x4xf32>
    %64 = arith.subf %56, %63 : vector<8x4x4xf32>
    %65 = math.exp %64 : vector<8x4x4xf32>
    %cst_25 = arith.constant dense<0.000000e+00> : vector<8x4xf32>
    %66 = vector.multi_reduction <add>, %65, %cst_25 [2] : vector<8x4x4xf32> to vector<8x4xf32>
    %67 = vector.shape_cast %66 : vector<8x4xf32> to vector<8x4x1xf32>
    %cst_26 = arith.constant 1.000000e-30 : f32
    %68 = vector.broadcast %cst_26 : f32 to vector<8x4x1xf32>
    %69 = arith.maximumf %67, %68 : vector<8x4x1xf32>
    %70 = vector.broadcast %69 : vector<8x4x1xf32> to vector<8x4x4xf32>
    %71 = arith.divf %65, %70 : vector<8x4x4xf32>
    %72 = arith.truncf %71 : vector<8x4x4xf32> to vector<8x4x4xbf16>
    "tpu.trace_start"() <{level = 10 : i32, message = "gqk,gkd->gqd"}> : () -> ()
    %cst_27 = arith.constant dense<0.000000e+00> : vector<8x4x8xf32>
    %73 = tpu.matmul %72, %51, %cst_27 {dimension_numbers = #tpu.dot_dimension_numbers<[2], [1], [1], [2], [0, 0, 0, 1, 1, 2], [0], [0]>} : vector<8x4x4xbf16>, vector<8x4x8xbf16>, vector<8x4x8xf32> -> vector<8x4x8xf32>
    "tpu.trace_stop"() : () -> ()
    %74 = vector.extract_strided_slice %0 {offsets = [0, 0, 24], sizes = [8, 4, 8], strides = [1, 1, 1]} : vector<8x4x32xf32> to vector<8x4x8xf32>
    %75 = arith.truncf %74 : vector<8x4x8xf32> to vector<8x4x8xbf16>
    "tpu.trace_start"() <{level = 10 : i32, message = "gqd,gkd->gqk"}> : () -> ()
    %cst_28 = arith.constant dense<0.000000e+00> : vector<8x4x4xf32>
    %76 = tpu.matmul %75, %75, %cst_28 {dimension_numbers = #tpu.dot_dimension_numbers<[2], [2], [1], [1], [0, 0, 0, 1, 1, 1], [0], [0]>} : vector<8x4x8xbf16>, vector<8x4x8xbf16>, vector<8x4x4xf32> -> vector<8x4x4xf32>
    "tpu.trace_stop"() : () -> ()
    %cst_29 = arith.constant 0.353553385 : f32
    %77 = vector.broadcast %cst_29 : f32 to vector<8x4x4xf32>
    %78 = arith.mulf %76, %77 : vector<8x4x4xf32>
    %79 = vector.broadcast %1 : vector<8x1x4xf32> to vector<8x4x4xf32>
    %80 = arith.addf %78, %79 : vector<8x4x4xf32>
    %cst_30 = arith.constant dense<0xFF800000> : vector<8x4xf32>
    %81 = vector.multi_reduction <maximumf>, %80, %cst_30 [2] : vector<8x4x4xf32> to vector<8x4xf32>
    %82 = vector.shape_cast %81 : vector<8x4xf32> to vector<8x4x1xf32>
    %cst_31 = arith.constant 0xFF800000 : f32
    %83 = vector.broadcast %cst_31 : f32 to vector<8x4x1xf32>
    %84 = arith.cmpf oeq, %82, %83 : vector<8x4x1xf32>
    %cst_32 = arith.constant 0.000000e+00 : f32
    %85 = vector.broadcast %cst_32 : f32 to vector<8x4x1xf32>
    %86 = arith.select %84, %85, %82 : vector<8x4x1xi1>, vector<8x4x1xf32>
    %87 = vector.broadcast %86 : vector<8x4x1xf32> to vector<8x4x4xf32>
    %88 = arith.subf %80, %87 : vector<8x4x4xf32>
    %89 = math.exp %88 : vector<8x4x4xf32>
    %cst_33 = arith.constant dense<0.000000e+00> : vector<8x4xf32>
    %90 = vector.multi_reduction <add>, %89, %cst_33 [2] : vector<8x4x4xf32> to vector<8x4xf32>
    %91 = vector.shape_cast %90 : vector<8x4xf32> to vector<8x4x1xf32>
    %cst_34 = arith.constant 1.000000e-30 : f32
    %92 = vector.broadcast %cst_34 : f32 to vector<8x4x1xf32>
    %93 = arith.maximumf %91, %92 : vector<8x4x1xf32>
    %94 = vector.broadcast %93 : vector<8x4x1xf32> to vector<8x4x4xf32>
    %95 = arith.divf %89, %94 : vector<8x4x4xf32>
    %96 = arith.truncf %95 : vector<8x4x4xf32> to vector<8x4x4xbf16>
    "tpu.trace_start"() <{level = 10 : i32, message = "gqk,gkd->gqd"}> : () -> ()
    %cst_35 = arith.constant dense<0.000000e+00> : vector<8x4x8xf32>
    %97 = tpu.matmul %96, %75, %cst_35 {dimension_numbers = #tpu.dot_dimension_numbers<[2], [1], [1], [2], [0, 0, 0, 1, 1, 2], [0], [0]>} : vector<8x4x4xbf16>, vector<8x4x8xbf16>, vector<8x4x8xf32> -> vector<8x4x8xf32>
    "tpu.trace_stop"() : () -> ()
    %98 = tpu.concatenate %25, %49, %73, %97 in 2 : vector<8x4x8xf32>, vector<8x4x8xf32>, vector<8x4x8xf32>, vector<8x4x8xf32> -> vector<8x4x32xf32>
    %c0_36 = arith.constant 0 : index
    %c0_37 = arith.constant 0 : index
    %c0_38 = arith.constant 0 : index
    %99 = vector.load %arg3[%c0_36, %c0_37, %c0_38] : memref<8x4x32xf32, #tpu.memory_space<vmem>>, vector<8x4x32xf32>
    tpu.vector_store %arg3[%c0_36, %c0_37, %c0_38], %98 {strides = array<i32>} : memref<8x4x32xf32, #tpu.memory_space<vmem>>, vector<8x4x32xf32>,
    return
  }
  func.func @transform_0(%arg0: i32) -> (i32, i32, i32) {
    %c0_i32 = arith.constant 0 : i32
    %c0_i32_0 = arith.constant 0 : i32
    %c0_i32_1 = arith.constant 0 : i32
    return %arg0, %c0_i32, %c0_i32_0 : i32, i32, i32
  }
  func.func @transform_1(%arg0: i32) -> (i32, i32, i32) {
    %c0_i32 = arith.constant 0 : i32
    %c0_i32_0 = arith.constant 0 : i32
    %c0_i32_1 = arith.constant 0 : i32
    return %arg0, %c0_i32, %c0_i32_0 : i32, i32, i32
  }
  func.func @transform_2(%arg0: i32) -> (i32, i32, i32) {
    %c0_i32 = arith.constant 0 : i32
    %c0_i32_0 = arith.constant 0 : i32
    %c0_i32_1 = arith.constant 0 : i32
    return %arg0, %c0_i32, %c0_i32_0 : i32, i32, i32
  }
}

module attributes {stable_mosaic.version = 11 : i64} {
  func.func @_linear_tanh_kernel(%arg0: i32, %arg1: memref<2x32xf32, #tpu.memory_space<vmem>>, %arg2: memref<32x32xf32, #tpu.memory_space<vmem>>, %arg3: memref<1x32xf32, #tpu.memory_space<vmem>>, %arg4: memref<2x32xf32, #tpu.memory_space<vmem>>) attributes {dimension_semantics = [#tpu.dimension_semantics<parallel>], iteration_bounds = array<i64: 1>, scalar_prefetch = 0 : i64, scratch_operands = 0 : i64, tpu.core_type = #tpu.core_type<tc>, window_params = [{transform_indices = @transform_0, window_bounds = array<i64: 2, 32>}, {pipeline_mode = #tpu.pipeline_mode<synchronous>, transform_indices = @transform_1, window_bounds = array<i64: 32, 32>}, {pipeline_mode = #tpu.pipeline_mode<synchronous>, transform_indices = @transform_2, window_bounds = array<i64: 1, 32>}, {transform_indices = @transform_3, window_bounds = array<i64: 2, 32>}]} {
    %c0 = arith.constant 0 : index
    %c0_0 = arith.constant 0 : index
    %0 = vector.load %arg1[%c0, %c0_0] : memref<2x32xf32, #tpu.memory_space<vmem>>, vector<2x32xf32>
    %1 = arith.truncf %0 : vector<2x32xf32> to vector<2x32xbf16>
    %c0_1 = arith.constant 0 : index
    %c0_2 = arith.constant 0 : index
    %2 = vector.load %arg2[%c0_1, %c0_2] : memref<32x32xf32, #tpu.memory_space<vmem>>, vector<32x32xf32>
    %3 = arith.truncf %2 : vector<32x32xf32> to vector<32x32xbf16>
    %cst = arith.constant dense<0.000000e+00> : vector<2x32xf32>
    %4 = tpu.matmul %1, %3, %cst {dimension_numbers = #tpu.dot_dimension_numbers<[1], [0], [0], [1], [0, 0, 1, 1], [], []>} : vector<2x32xbf16>, vector<32x32xbf16>, vector<2x32xf32> -> vector<2x32xf32>
    %c0_3 = arith.constant 0 : index
    %c0_4 = arith.constant 0 : index
    %5 = vector.load %arg3[%c0_3, %c0_4] : memref<1x32xf32, #tpu.memory_space<vmem>>, vector<1x32xf32>
    %6 = vector.broadcast %5 : vector<1x32xf32> to vector<2x32xf32>
    %7 = arith.addf %4, %6 : vector<2x32xf32>
    %8 = math.tanh %7 : vector<2x32xf32>
    %c0_5 = arith.constant 0 : index
    %c0_6 = arith.constant 0 : index
    %9 = vector.load %arg4[%c0_5, %c0_6] : memref<2x32xf32, #tpu.memory_space<vmem>>, vector<2x32xf32>
    tpu.vector_store %arg4[%c0_5, %c0_6], %8 {strides = array<i32>} : memref<2x32xf32, #tpu.memory_space<vmem>>, vector<2x32xf32>,
    return
  }
  func.func @transform_0(%arg0: i32) -> (i32, i32) {
    %c0_i32 = arith.constant 0 : i32
    %c0_i32_0 = arith.constant 0 : i32
    return %arg0, %c0_i32 : i32, i32
  }
  func.func @transform_1(%arg0: i32) -> (i32, i32) {
    %c0_i32 = arith.constant 0 : i32
    %c0_i32_0 = arith.constant 0 : i32
    %c0_i32_1 = arith.constant 0 : i32
    return %c0_i32, %c0_i32_0 : i32, i32
  }
  func.func @transform_2(%arg0: i32) -> (i32, i32) {
    %c0_i32 = arith.constant 0 : i32
    %c0_i32_0 = arith.constant 0 : i32
    %c0_i32_1 = arith.constant 0 : i32
    return %c0_i32, %c0_i32_0 : i32, i32
  }
  func.func @transform_3(%arg0: i32) -> (i32, i32) {
    %c0_i32 = arith.constant 0 : i32
    %c0_i32_0 = arith.constant 0 : i32
    return %arg0, %c0_i32 : i32, i32
  }
}

</mosaic_0001>

<llo_original>
// kernel: _lambda_.11
$region0: #{_lambda_.11}
  #allocation0 [shape = 'u32[]', space=smem, size = 0x4, offset = 0x4, fixed_abs, tag = 'smem constant byte address 0x4 - core index']
  #allocation1 [shape = 'u32[144,128]{1,0:T(1,128)}', space=vmem, size = 0x12000, scoped, tag = 'internal scratch']
  #allocation2 [shape = 'f32[32,32]{1,0:T(8,128)}', space=vmem, size = 0x4000, scoped, tag = 'scratch operand']
  %s0 = inlined_call_operand.vmem [shape: f32[32,32], index: 0, kind: input, shape index: {}]
  %s1 = inlined_call_operand.vmem [shape: f32[32,32], index: 1, kind: input, shape index: {}]
  %s2 = inlined_call_operand.vmem [shape: f32[32,32], index: 2, kind: output, shape index: {}]
  %s3 = sld [smem:[#allocation0]]
  $region26: #{_lambda_.11} parent=0
    _
  %s5 = ssub.s32 1, %s3
  %s6 = scalar_select 0, %s5, %s3
  // Predicated region
  $region2: #{_lambda_.11} parent=0 // pred_check
    _
  $region3: #{_lambda_.11} parent=0 // pred_check_branch
    %8 = sbr.rel (0) target = $region5
  $region4: #{_lambda_.11} parent=0 // pred_region
    _
  $region5: #{_lambda_.11} parent=0 // pred_fallthru
    _
  // Predicated region
  $region6: #{_lambda_.11} parent=0 // pred_check
    _
  $region7: #{_lambda_.11} parent=0 // pred_check_branch
    %10 = sbr.rel (0) target = $region9
  $region8: #{_lambda_.11} parent=0 // pred_region
    _
  $region9: #{_lambda_.11} parent=0 // pred_fallthru
    _
  %p12 = scmp.eq.s32.totalorder 0, 0
  // Predicated region
  $region10: #{_lambda_.11} parent=0 // pred_check
    %p13 = pneg %p12
  $region11: #{_lambda_.11} parent=0 // pred_check_branch
    %15 = sbr.rel (%p13) target = $region13
  $region12: #{_lambda_.11} parent=0 // pred_region
    %vm16 = vcmask 261120
    %17 = vst.msk [vmem:[#allocation2] sm:$0xff] %vm16, 0.0
    %18 = vst.msk [vmem:[#allocation2 + $0x8] sm:$0xff] %vm16, 0.0
    %19 = vst.msk [vmem:[#allocation2 + $0x10] sm:$0xff] %vm16, 0.0
    %20 = vst.msk [vmem:[#allocation2 + $0x18] sm:$0xff] %vm16, 0.0
  $region13: #{_lambda_.11} parent=0 // pred_fallthru
    _
  %v21 = vld [vmem:[#allocation2] sm:$0xff]
  %v22 = vld [vmem:[#allocation2 + $0x8] sm:$0xff]
  %v23 = vld [vmem:[#allocation2 + $0x10] sm:$0xff]
  %v24 = vld [vmem:[#allocation2 + $0x18] sm:$0xff]
  %v25 = vld [vmem:[%s0] sm:$0xff]
  %v26 = vld [vmem:[%s0 + $0x8] sm:$0xff]
  %v27 = vld [vmem:[%s0 + $0x10] sm:$0xff]
  %v28 = vld [vmem:[%s0 + $0x18] sm:$0xff]
  %v29 = vpack.c.bf16 %v26, %v25
  %v30 = vpack.c.bf16 %v28, %v27
  %v31 = vld [vmem:[%s1] sm:$0xff]
  %v32 = vld [vmem:[%s1 + $0x8] sm:$0xff]
  %v33 = vld [vmem:[%s1 + $0x10] sm:$0xff]
  %v34 = vld [vmem:[%s1 + $0x18] sm:$0xff]
  %v35 = vpack.c.bf16 %v32, %v31
  %v36 = vpack.c.bf16 %v34, %v33
  %vm37 = vcmask 261120
  %v39 = vsel %vm37, %v29, 0
  %v42 = vsel %vm37, %v30, 0
  %44 = vmatprep.subr.bf16.mxu0 0
  %45 = vmatpush1.bf16.msra.mxu0 %v35
  %46 = vmatprep.subr.bf16.mxu0 0
  %47 = vmatpush1.bf16.msra.mxu0 %v36
  %48 = vmatprep.subr.bf16.mxu0 0
  %49 = vmatpush1.bf16.msra.mxu0 0
  %50 = vmatprep.subr.bf16.mxu0 0
  %51 = vmatpush1.bf16.msra.mxu0 0
  %52 = vmatprep.subr.bf16.mxu0 0
  %53 = vmatpush1.bf16.msra.mxu0 0
  %54 = vmatprep.subr.bf16.mxu0 0
  %55 = vmatpush1.bf16.msra.mxu0 0
  %56 = vmatprep.subr.bf16.mxu0 0
  %57 = vmatpush1.bf16.msra.mxu0 0
  %58 = vmatprep.subr.bf16.mxu0 0
  %59 = vmatpush1.bf16.msra.mxu0 0
  %60 = vmatprep.subr.bf16.mxu0 0
  %61 = vmatpush1.bf16.msra.mxu0 0
  %62 = vmatprep.subr.bf16.mxu0 0
  %63 = vmatpush1.bf16.msra.mxu0 0
  %64 = vmatprep.subr.bf16.mxu0 0
  %65 = vmatpush1.bf16.msra.mxu0 0
  %66 = vmatprep.subr.bf16.mxu0 0
  %67 = vmatpush1.bf16.msra.mxu0 0
  %68 = vmatprep.subr.bf16.mxu0 0
  %69 = vmatpush1.bf16.msra.mxu0 0
  %70 = vmatprep.subr.bf16.mxu0 0
  %71 = vmatpush1.bf16.msra.mxu0 0
  %72 = vmatprep.subr.bf16.mxu0 0
  %73 = vmatpush1.bf16.msra.mxu0 0
  %74 = vmatprep.subr.bf16.mxu0 0
  %75 = vmatpush1.bf16.msra.mxu0 0
  %76 = vmatprep.mubr.bf16.mxu0 0
  %77 = vmatmul.mubr.bf16.gmra.mrb[0].mxu0 %v39
  %v78 = vpop.f32.mrb[0].mxu0
  %v79 = vadd.f32 0.0, %v78
  %v80 = vpop.f32.mrb[0].mxu0
  %v81 = vpop.f32.mrb[0].mxu0
  %v82 = vadd.f32 0.0, %v81
  %v83 = vpop.f32.mrb[0].mxu0
  %84 = vmatprep.mubr.bf16.mxu0 0
  %85 = vmatmul.mubr.bf16.gmra.mrb[0].mxu0 %v42
  %v86 = vpop.f32.mrb[0].mxu0
  %v87 = vadd.f32 0.0, %v86
  %v88 = vpop.f32.mrb[0].mxu0
  %v89 = vpop.f32.mrb[0].mxu0
  %v90 = vadd.f32 0.0, %v89
  %v91 = vpop.f32.mrb[0].mxu0
  %92 = vdwg.mxu0
  %v93 = vadd.f32 %v21, %v79
  %v94 = vadd.f32 %v22, %v82
  %v95 = vadd.f32 %v23, %v87
  %v96 = vadd.f32 %v24, %v90
  %97 = vst.msk [vmem:[#allocation2] sm:$0xff] %vm37, %v93
  %98 = vst.msk [vmem:[#allocation2 + $0x8] sm:$0xff] %vm37, %v94
  %99 = vst.msk [vmem:[#allocation2 + $0x10] sm:$0xff] %vm37, %v95
  %100 = vst.msk [vmem:[#allocation2 + $0x18] sm:$0xff] %vm37, %v96
  // Predicated region
  $region14: #{_lambda_.11} parent=0 // pred_check
    %p101 = pneg %p12
  $region15: #{_lambda_.11} parent=0 // pred_check_branch
    %103 = sbr.rel (%p101) target = $region17
  $region16: #{_lambda_.11} parent=0 // pred_region
    %v104 = vld [vmem:[#allocation2] sm:$0xff]
    %v105 = vld [vmem:[#allocation2 + $0x8] sm:$0xff]
    %v106 = vld [vmem:[#allocation2 + $0x10] sm:$0xff]
    %v107 = vld [vmem:[#allocation2 + $0x18] sm:$0xff]
    %108 = vst.msk [vmem:[%s2] sm:$0xff] %vm37, %v104
    %109 = vst.msk [vmem:[%s2 + $0x8] sm:$0xff] %vm37, %v105
    %110 = vst.msk [vmem:[%s2 + $0x10] sm:$0xff] %vm37, %v106
    %111 = vst.msk [vmem:[%s2 + $0x18] sm:$0xff] %vm37, %v107
  $region17: #{_lambda_.11} parent=0 // pred_fallthru
    _
  // Predicated region
  $region18: #{_lambda_.11} parent=0 // pred_check
    _
  $region19: #{_lambda_.11} parent=0 // pred_check_branch
    %113 = sbr.rel (0) target = $region21
  $region20: #{_lambda_.11} parent=0 // pred_region
    _
  $region21: #{_lambda_.11} parent=0 // pred_fallthru
    _
  // Predicated region
  $region22: #{_lambda_.11} parent=0 // pred_check
    _
  $region23: #{_lambda_.11} parent=0 // pred_check_branch
    %115 = sbr.rel (0) target = $region25
  $region24: #{_lambda_.11} parent=0 // pred_region
    _
  $region25: #{_lambda_.11} parent=0 // pred_fallthru
    _

// kernel: _lambda_.10
$region0: #{_lambda_.10}
  #allocation0 [shape = 'u32[]', space=smem, size = 0x4, offset = 0x4, fixed_abs, tag = 'smem constant byte address 0x4 - core index']
  #allocation1 [shape = 'u32[144,128]{1,0:T(1,128)}', space=vmem, size = 0x12000, scoped, tag = 'internal scratch']
  %s0 = inlined_call_operand.vmem [shape: f32[32,32], index: 0, kind: input, shape index: {}]
  %s1 = inlined_call_operand.vmem [shape: f32[32,32], index: 1, kind: input, shape index: {}]
  %s2 = inlined_call_operand.vmem [shape: f32[32,32], index: 2, kind: input, shape index: {}]
  %s3 = inlined_call_operand.vmem [shape: f32[1,32], index: 3, kind: input, shape index: {}]
  %s4 = inlined_call_operand.vmem [shape: f32[1,32], index: 4, kind: input, shape index: {}]
  %s5 = inlined_call_operand.vmem [shape: f32[32,32], index: 5, kind: output, shape index: {}]
  %s6 = sld [smem:[#allocation0]]
  $region30: #{_lambda_.10} parent=0
    _
  %s8 = ssub.s32 1, %s6
  %s9 = scalar_select 0, %s8, %s6
  // Predicated region
  $region2: #{_lambda_.10} parent=0 // pred_check
    _
  $region3: #{_lambda_.10} parent=0 // pred_check_branch
    %11 = sbr.rel (0) target = $region5
  $region4: #{_lambda_.10} parent=0 // pred_region
    _
  $region5: #{_lambda_.10} parent=0 // pred_fallthru
    _
  // Predicated region
  $region6: #{_lambda_.10} parent=0 // pred_check
    _
  $region7: #{_lambda_.10} parent=0 // pred_check_branch
    %13 = sbr.rel (0) target = $region9
  $region8: #{_lambda_.10} parent=0 // pred_region
    _
  $region9: #{_lambda_.10} parent=0 // pred_fallthru
    _
  // Predicated region
  $region10: #{_lambda_.10} parent=0 // pred_check
    _
  $region11: #{_lambda_.10} parent=0 // pred_check_branch
    %15 = sbr.rel (0) target = $region13
  $region12: #{_lambda_.10} parent=0 // pred_region
    _
  $region13: #{_lambda_.10} parent=0 // pred_fallthru
    _
  // Predicated region
  $region14: #{_lambda_.10} parent=0 // pred_check
    _
  $region15: #{_lambda_.10} parent=0 // pred_check_branch
    %17 = sbr.rel (0) target = $region17
  $region16: #{_lambda_.10} parent=0 // pred_region
    _
  $region17: #{_lambda_.10} parent=0 // pred_fallthru
    _
  // Predicated region
  $region18: #{_lambda_.10} parent=0 // pred_check
    _
  $region19: #{_lambda_.10} parent=0 // pred_check_branch
    %19 = sbr.rel (0) target = $region21
  $region20: #{_lambda_.10} parent=0 // pred_region
    _
  $region21: #{_lambda_.10} parent=0 // pred_fallthru
    _
  %v20 = vld [vmem:[%s0] sm:$0xff]
  %v21 = vld [vmem:[%s0 + $0x8] sm:$0xff]
  %v22 = vld [vmem:[%s0 + $0x10] sm:$0xff]
  %v23 = vld [vmem:[%s0 + $0x18] sm:$0xff]
  %v24 = vld [vmem:[%s1] sm:$0xff]
  %v25 = vld [vmem:[%s1 + $0x8] sm:$0xff]
  %v26 = vld [vmem:[%s1 + $0x10] sm:$0xff]
  %v27 = vld [vmem:[%s1 + $0x18] sm:$0xff]
  %v28 = vadd.f32 %v20, %v24
  %v29 = vadd.f32 %v21, %v25
  %v30 = vadd.f32 %v22, %v26
  %v31 = vadd.f32 %v23, %v27
  %v32 = vld [vmem:[%s2] sm:$0xff]
  %v33 = vld [vmem:[%s2 + $0x8] sm:$0xff]
  %v34 = vld [vmem:[%s2 + $0x10] sm:$0xff]
  %v35 = vld [vmem:[%s2 + $0x18] sm:$0xff]
  %v36 = vadd.f32 %v28, %v32
  %v37 = vadd.f32 %v29, %v33
  %v38 = vadd.f32 %v30, %v34
  %v39 = vadd.f32 %v31, %v35
  %vm40 = vcmask 261120
  %v41 = vsel %vm40, %v36, 0.0
  %42 = vadd.xlane.f32.xlu0 %v41
  %v43 = vpop.xlane.xlu0 %42
  %v44 = vsel %vm40, %v37, 0.0
  %45 = vadd.xlane.f32.xlu0 %v44
  %v46 = vpop.xlane.xlu0 %45
  %v47 = vsel %vm40, %v38, 0.0
  %48 = vadd.xlane.f32.xlu0 %v47
  %v49 = vpop.xlane.xlu0 %48
  %v50 = vsel %vm40, %v39, 0.0
  %51 = vadd.xlane.f32.xlu0 %v50
  %v52 = vpop.xlane.xlu0 %51
  %v53 = vrcp.pop 32.0
  %v54 = vmul.f32 %v43, %v53
  %v55 = vmul.f32 %v46, %v53
  %v56 = vmul.f32 %v49, %v53
  %v57 = vmul.f32 %v52, %v53
  %v58 = vsub.f32 %v36, %v54
  %v59 = vsub.f32 %v37, %v55
  %v60 = vsub.f32 %v38, %v56
  %v61 = vsub.f32 %v39, %v57
  %v62 = vmul.f32 %v58, %v58
  %v63 = vmul.f32 %v59, %v59
  %v64 = vmul.f32 %v60, %v60
  %v65 = vmul.f32 %v61, %v61
  %v66 = vsel %vm40, %v62, 0.0
  %67 = vadd.xlane.f32.xlu0 %v66
  %v68 = vpop.xlane.xlu0 %67
  %v69 = vsel %vm40, %v63, 0.0
  %70 = vadd.xlane.f32.xlu0 %v69
  %v71 = vpop.xlane.xlu0 %70
  %v72 = vsel %vm40, %v64, 0.0
  %73 = vadd.xlane.f32.xlu0 %v72
  %v74 = vpop.xlane.xlu0 %73
  %v75 = vsel %vm40, %v65, 0.0
  %76 = vadd.xlane.f32.xlu0 %v75
  %v77 = vpop.xlane.xlu0 %76
  %v78 = vmul.f32 %v68, %v53
  %v79 = vmul.f32 %v71, %v53
  %v80 = vmul.f32 %v74, %v53
  %v81 = vmul.f32 %v77, %v53
  %v82 = vadd.f32 %v78, 1e-12
  %v83 = vadd.f32 %v79, 1e-12
  %v84 = vadd.f32 %v80, 1e-12
  %v85 = vadd.f32 %v81, 1e-12
  %v86 = vrsqrt.pop %v82
  %v87 = vrsqrt.pop %v83
  %v88 = vrsqrt.pop %v84
  %v89 = vrsqrt.pop %v85
  %v90 = vmul.f32 %v58, %v86
  %v91 = vmul.f32 %v59, %v87
  %v92 = vmul.f32 %v60, %v88
  %v93 = vmul.f32 %v61, %v89
  %v94 = vld [vmem:[%s3] sm:$0x1]
  %v96 = vlaneseq
  %v97 = vshrl.u32 %v96, 7
  %v98 = vsub.s32 0, %v97
  %v99 = vrot.slane %v94, %v98
  %v101 = vmul.f32 %v90, %v99
  %v102 = vmul.f32 %v91, %v99
  %v103 = vmul.f32 %v92, %v99
  %v104 = vmul.f32 %v93, %v99
  %v105 = vld [vmem:[%s4] sm:$0x1]
  %v107 = vlaneseq
  %v108 = vshrl.u32 %v107, 7
  %v109 = vsub.s32 0, %v108
  %v110 = vrot.slane %v105, %v109
  %v112 = vadd.f32 %v101, %v110
  %v113 = vadd.f32 %v102, %v110
  %v114 = vadd.f32 %v103, %v110
  %v115 = vadd.f32 %v104, %v110
  %116 = vst.msk [vmem:[%s5] sm:$0xff] %vm40, %v112
  %117 = vst.msk [vmem:[%s5 + $0x8] sm:$0xff] %vm40, %v113
  %118 = vst.msk [vmem:[%s5 + $0x10] sm:$0xff] %vm40, %v114
  %119 = vst.msk [vmem:[%s5 + $0x18] sm:$0xff] %vm40, %v115
  // Predicated region
  $region22: #{_lambda_.10} parent=0 // pred_check
    _
  $region23: #{_lambda_.10} parent=0 // pred_check_branch
    %121 = sbr.rel (0) target = $region25
  $region24: #{_lambda_.10} parent=0 // pred_region
    _
  $region25: #{_lambda_.10} parent=0 // pred_fallthru
    _
  // Predicated region
  $region26: #{_lambda_.10} parent=0 // pred_check
    _
  $region27: #{_lambda_.10} parent=0 // pred_check_branch
    %123 = sbr.rel (0) target = $region29
  $region28: #{_lambda_.10} parent=0 // pred_region
    _
  $region29: #{_lambda_.10} parent=0 // pred_fallthru
    _

// kernel: _lambda_.19
$region0: #{_lambda_.19}
  #allocation0 [shape = 'u32[]', space=smem, size = 0x4, offset = 0x4, fixed_abs, tag = 'smem constant byte address 0x4 - core index']
  #allocation1 [shape = 'u32[144,128]{1,0:T(1,128)}', space=vmem, size = 0x12000, scoped, tag = 'internal scratch']
  %s0 = inlined_call_operand.vmem [shape: f32[2,32], index: 0, kind: input, shape index: {}]
  %s1 = inlined_call_operand.vmem [shape: f32[32,32], index: 1, kind: input, shape index: {}]
  %s2 = inlined_call_operand.vmem [shape: f32[1,32], index: 2, kind: input, shape index: {}]
  %s3 = inlined_call_operand.hbm [shape: f32[2,32], index: 3, kind: output, shape index: {}]
  %s4 = sld [smem:[#allocation0]]
  $region22: #{_lambda_.19} parent=0
    _
  %s6 = ssub.s32 1, %s4
  %s7 = scalar_select 0, %s6, %s4
  $region1: #{_lambda_.19} parent=0
    #allocation2 [shape = 'u8[1024]{0}', space=vmem, size = 0x400, scoped, tag = 'output window, operand 0, single buffered']
    #allocation3 [shape = 's32[1]{0}', space=sflag, size = 0x4, scoped, tag = 'scoped memory for _lambda_.19']
    %8 = vsyncpa [#allocation3], 0
    // Predicated region
    $region2: #{_lambda_.19} parent=1 // pred_check
      _
    $region3: #{_lambda_.19} parent=1 // pred_check_branch
      %10 = sbr.rel (0) target = $region5
    $region4: #{_lambda_.19} parent=1 // pred_region
      _
    $region5: #{_lambda_.19} parent=1 // pred_fallthru
      _
    // Predicated region
    $region6: #{_lambda_.19} parent=1 // pred_check
      _
    $region7: #{_lambda_.19} parent=1 // pred_check_branch
      %12 = sbr.rel (0) target = $region9
    $region8: #{_lambda_.19} parent=1 // pred_region
      _
    $region9: #{_lambda_.19} parent=1 // pred_fallthru
      _
    // Predicated region
    $region10: #{_lambda_.19} parent=1 // pred_check
      _
    $region11: #{_lambda_.19} parent=1 // pred_check_branch
      %14 = sbr.rel (0) target = $region13
    $region12: #{_lambda_.19} parent=1 // pred_region
      _
    $region13: #{_lambda_.19} parent=1 // pred_fallthru
      _
    %v16 = vld [vmem:[%s0] sm:$0x3]
    %v17 = vpack.c.bf16 %v16, %v16
    %v18 = vld [vmem:[%s1] sm:$0xff]
    %v19 = vld [vmem:[%s1 + $0x8] sm:$0xff]
    %v20 = vld [vmem:[%s1 + $0x10] sm:$0xff]
    %v21 = vld [vmem:[%s1 + $0x18] sm:$0xff]
    %v22 = vpack.c.bf16 %v19, %v18
    %v23 = vpack.c.bf16 %v21, %v20
    %v24 = vld [vmem:[%s2] sm:$0x1]
    %v26 = vlaneseq
    %v27 = vshrl.u32 %v26, 7
    %v28 = vsub.s32 0, %v27
    %v29 = vrot.slane %v24, %v28
    %vm31 = vcmask 261120
    %v33 = vsel %vm31, %v17, 0
    %35 = vmatprep.subr.bf16.mxu0 0
    %36 = vmatpush1.bf16.msra.mxu0 %v22
    %37 = vmatprep.subr.bf16.mxu0 0
    %38 = vmatpush1.bf16.msra.mxu0 %v23
    %39 = vmatprep.subr.bf16.mxu0 0
    %40 = vmatpush1.bf16.msra.mxu0 0
    %41 = vmatprep.subr.bf16.mxu0 0
    %42 = vmatpush1.bf16.msra.mxu0 0
    %43 = vmatprep.subr.bf16.mxu0 0
    %44 = vmatpush1.bf16.msra.mxu0 0
    %45 = vmatprep.subr.bf16.mxu0 0
    %46 = vmatpush1.bf16.msra.mxu0 0
    %47 = vmatprep.subr.bf16.mxu0 0
    %48 = vmatpush1.bf16.msra.mxu0 0
    %49 = vmatprep.subr.bf16.mxu0 0
    %50 = vmatpush1.bf16.msra.mxu0 0
    %51 = vmatprep.subr.bf16.mxu0 0
    %52 = vmatpush1.bf16.msra.mxu0 0
    %53 = vmatprep.subr.bf16.mxu0 0
    %54 = vmatpush1.bf16.msra.mxu0 0
    %55 = vmatprep.subr.bf16.mxu0 0
    %56 = vmatpush1.bf16.msra.mxu0 0
    %57 = vmatprep.subr.bf16.mxu0 0
    %58 = vmatpush1.bf16.msra.mxu0 0
    %59 = vmatprep.subr.bf16.mxu0 0
    %60 = vmatpush1.bf16.msra.mxu0 0
    %61 = vmatprep.subr.bf16.mxu0 0
    %62 = vmatpush1.bf16.msra.mxu0 0
    %63 = vmatprep.subr.bf16.mxu0 0
    %64 = vmatpush1.bf16.msra.mxu0 0
    %65 = vmatprep.subr.bf16.mxu0 0
    %66 = vmatpush1.bf16.msra.mxu0 0
    %67 = vmatprep.mubr.bf16.mxu0 0
    %68 = vmatmul.mubr.bf16.gmra.mrb[0].mxu0 %v33
    %v69 = vpop.f32.mrb[0].mxu0
    %v70 = vadd.f32 %v29, %v69
    %v71 = vpop.f32.mrb[0].mxu0
    %v72 = vpop.f32.mrb[0].mxu0
    %v73 = vpop.f32.mrb[0].mxu0
    %74 = vdwg.mxu0
    %v75 = vtanh.pop %v70
    %vm76 = vcmask 254976
    %77 = vst.msk [vmem:[#allocation2] sm:$0x3] %vm76, %v75
    // Predicated region
    $region14: #{_lambda_.19} parent=1 // pred_check
      _
    $region15: #{_lambda_.19} parent=1 // pred_check_branch
      %79 = sbr.rel (0) target = $region17
    $region16: #{_lambda_.19} parent=1 // pred_region
      %s81 = ssub.s32 32, 32
      %82 = vsyncadd [#allocation3], %s81
      %s84 = sshll.u32 [#allocation2], 4
      %s85 = int_to_ptr.vmem [resolvable:$true] %s84
      %87 = dma.vmem_to_hbm [thread:$0]  %s85, 32, %s3, [#allocation3]
    $region17: #{_lambda_.19} parent=1 // pred_fallthru
      _
    // Predicated region
    $region18: #{_lambda_.19} parent=1 // pred_check
      _
    $region19: #{_lambda_.19} parent=1 // pred_check_branch
      %89 = sbr.rel (0) target = $region21
    $region20: #{_lambda_.19} parent=1 // pred_region
      %90 = dma.done [#allocation3], 32
    $region21: #{_lambda_.19} parent=1 // pred_fallthru
      _
    %91 = vsyncpa [#allocation3], 1

// kernel: _lambda_.14
$region0: #{_lambda_.14}
  #allocation0 [shape = 'u32[]', space=smem, size = 0x4, offset = 0x4, fixed_abs, tag = 'smem constant byte address 0x4 - core index']
  #allocation1 [shape = 'u32[144,128]{1,0:T(1,128)}', space=vmem, size = 0x12000, scoped, tag = 'internal scratch']
  #allocation2 [shape = 'f32[32,32]{1,0:T(8,128)}', space=vmem, size = 0x4000, scoped, tag = 'scratch operand']
  %s0 = inlined_call_operand.vmem [shape: f32[32,32], index: 0, kind: input, shape index: {}]
  %s1 = inlined_call_operand.vmem [shape: f32[32,32], index: 1, kind: input, shape index: {}]
  %s2 = inlined_call_operand.vmem [shape: f32[1,32], index: 2, kind: input, shape index: {}]
  %s3 = inlined_call_operand.vmem [shape: f32[1,32], index: 3, kind: input, shape index: {}]
  %s4 = inlined_call_operand.vmem [shape: f32[1,32], index: 4, kind: input, shape index: {}]
  %s5 = inlined_call_operand.vmem [shape: f32[32,32], index: 5, kind: output, shape index: {}]
  %s6 = sld [smem:[#allocation0]]
  $region38: #{_lambda_.14} parent=0
    _
  %s8 = ssub.s32 1, %s6
  %s9 = scalar_select 0, %s8, %s6
  // Predicated region
  $region2: #{_lambda_.14} parent=0 // pred_check
    _
  $region3: #{_lambda_.14} parent=0 // pred_check_branch
    %11 = sbr.rel (0) target = $region5
  $region4: #{_lambda_.14} parent=0 // pred_region
    _
  $region5: #{_lambda_.14} parent=0 // pred_fallthru
    _
  // Predicated region
  $region6: #{_lambda_.14} parent=0 // pred_check
    _
  $region7: #{_lambda_.14} parent=0 // pred_check_branch
    %13 = sbr.rel (0) target = $region9
  $region8: #{_lambda_.14} parent=0 // pred_region
    _
  $region9: #{_lambda_.14} parent=0 // pred_fallthru
    _
  // Predicated region
  $region10: #{_lambda_.14} parent=0 // pred_check
    _
  $region11: #{_lambda_.14} parent=0 // pred_check_branch
    %15 = sbr.rel (0) target = $region13
  $region12: #{_lambda_.14} parent=0 // pred_region
    _
  $region13: #{_lambda_.14} parent=0 // pred_fallthru
    _
  // Predicated region
  $region14: #{_lambda_.14} parent=0 // pred_check
    _
  $region15: #{_lambda_.14} parent=0 // pred_check_branch
    %17 = sbr.rel (0) target = $region17
  $region16: #{_lambda_.14} parent=0 // pred_region
    _
  $region17: #{_lambda_.14} parent=0 // pred_fallthru
    _
  // Predicated region
  $region18: #{_lambda_.14} parent=0 // pred_check
    _
  $region19: #{_lambda_.14} parent=0 // pred_check_branch
    %19 = sbr.rel (0) target = $region21
  $region20: #{_lambda_.14} parent=0 // pred_region
    _
  $region21: #{_lambda_.14} parent=0 // pred_fallthru
    _
  %p21 = scmp.eq.s32.totalorder 0, 0
  // Predicated region
  $region22: #{_lambda_.14} parent=0 // pred_check
    %p22 = pneg %p21
  $region23: #{_lambda_.14} parent=0 // pred_check_branch
    %24 = sbr.rel (%p22) target = $region25
  $region24: #{_lambda_.14} parent=0 // pred_region
    %vm25 = vcmask 261120
    %26 = vst.msk [vmem:[#allocation2] sm:$0xff] %vm25, 0.0
    %27 = vst.msk [vmem:[#allocation2 + $0x8] sm:$0xff] %vm25, 0.0
    %28 = vst.msk [vmem:[#allocation2 + $0x10] sm:$0xff] %vm25, 0.0
    %29 = vst.msk [vmem:[#allocation2 + $0x18] sm:$0xff] %vm25, 0.0
  $region25: #{_lambda_.14} parent=0 // pred_fallthru
    _
  %v30 = vld [vmem:[#allocation2] sm:$0xff]
  %v31 = vld [vmem:[#allocation2 + $0x8] sm:$0xff]
  %v32 = vld [vmem:[#allocation2 + $0x10] sm:$0xff]
  %v33 = vld [vmem:[#allocation2 + $0x18] sm:$0xff]
  %v34 = vld [vmem:[%s0] sm:$0xff]
  %v35 = vld [vmem:[%s0 + $0x8] sm:$0xff]
  %v36 = vld [vmem:[%s0 + $0x10] sm:$0xff]
  %v37 = vld [vmem:[%s0 + $0x18] sm:$0xff]
  %v38 = vpack.c.bf16 %v35, %v34
  %v39 = vpack.c.bf16 %v37, %v36
  %v40 = vld [vmem:[%s1] sm:$0xff]
  %v41 = vld [vmem:[%s1 + $0x8] sm:$0xff]
  %v42 = vld [vmem:[%s1 + $0x10] sm:$0xff]
  %v43 = vld [vmem:[%s1 + $0x18] sm:$0xff]
  %v44 = vpack.c.bf16 %v41, %v40
  %v45 = vpack.c.bf16 %v43, %v42
  %vm46 = vcmask 261120
  %v48 = vsel %vm46, %v38, 0
  %v51 = vsel %vm46, %v39, 0
  %53 = vmatprep.subr.bf16.mxu0 0
  %54 = vmatpush1.bf16.msra.mxu0 %v44
  %55 = vmatprep.subr.bf16.mxu0 0
  %56 = vmatpush1.bf16.msra.mxu0 %v45
  %57 = vmatprep.subr.bf16.mxu0 0
  %58 = vmatpush1.bf16.msra.mxu0 0
  %59 = vmatprep.subr.bf16.mxu0 0
  %60 = vmatpush1.bf16.msra.mxu0 0
  %61 = vmatprep.subr.bf16.mxu0 0
  %62 = vmatpush1.bf16.msra.mxu0 0
  %63 = vmatprep.subr.bf16.mxu0 0
  %64 = vmatpush1.bf16.msra.mxu0 0
  %65 = vmatprep.subr.bf16.mxu0 0
  %66 = vmatpush1.bf16.msra.mxu0 0
  %67 = vmatprep.subr.bf16.mxu0 0
  %68 = vmatpush1.bf16.msra.mxu0 0
  %69 = vmatprep.subr.bf16.mxu0 0
  %70 = vmatpush1.bf16.msra.mxu0 0
  %71 = vmatprep.subr.bf16.mxu0 0
  %72 = vmatpush1.bf16.msra.mxu0 0
  %73 = vmatprep.subr.bf16.mxu0 0
  %74 = vmatpush1.bf16.msra.mxu0 0
  %75 = vmatprep.subr.bf16.mxu0 0
  %76 = vmatpush1.bf16.msra.mxu0 0
  %77 = vmatprep.subr.bf16.mxu0 0
  %78 = vmatpush1.bf16.msra.mxu0 0
  %79 = vmatprep.subr.bf16.mxu0 0
  %80 = vmatpush1.bf16.msra.mxu0 0
  %81 = vmatprep.subr.bf16.mxu0 0
  %82 = vmatpush1.bf16.msra.mxu0 0
  %83 = vmatprep.subr.bf16.mxu0 0
  %84 = vmatpush1.bf16.msra.mxu0 0
  %85 = vmatprep.mubr.bf16.mxu0 0
  %86 = vmatmul.mubr.bf16.gmra.mrb[0].mxu0 %v48
  %v87 = vpop.f32.mrb[0].mxu0
  %v88 = vadd.f32 0.0, %v87
  %v89 = vpop.f32.mrb[0].mxu0
  %v90 = vpop.f32.mrb[0].mxu0
  %v91 = vadd.f32 0.0, %v90
  %v92 = vpop.f32.mrb[0].mxu0
  %93 = vmatprep.mubr.bf16.mxu0 0
  %94 = vmatmul.mubr.bf16.gmra.mrb[0].mxu0 %v51
  %v95 = vpop.f32.mrb[0].mxu0
  %v96 = vadd.f32 0.0, %v95
  %v97 = vpop.f32.mrb[0].mxu0
  %v98 = vpop.f32.mrb[0].mxu0
  %v99 = vadd.f32 0.0, %v98
  %v100 = vpop.f32.mrb[0].mxu0
  %101 = vdwg.mxu0
  %v102 = vadd.f32 %v30, %v88
  %v103 = vadd.f32 %v31, %v91
  %v104 = vadd.f32 %v32, %v96
  %v105 = vadd.f32 %v33, %v99
  %106 = vst.msk [vmem:[#allocation2] sm:$0xff] %vm46, %v102
  %107 = vst.msk [vmem:[#allocation2 + $0x8] sm:$0xff] %vm46, %v103
  %108 = vst.msk [vmem:[#allocation2 + $0x10] sm:$0xff] %vm46, %v104
  %109 = vst.msk [vmem:[#allocation2 + $0x18] sm:$0xff] %vm46, %v105
  // Predicated region
  $region26: #{_lambda_.14} parent=0 // pred_check
    %p110 = pneg %p21
  $region27: #{_lambda_.14} parent=0 // pred_check_branch
    %112 = sbr.rel (%p110) target = $region29
  $region28: #{_lambda_.14} parent=0 // pred_region
    %v113 = vld [vmem:[#allocation2] sm:$0xff]
    %v114 = vld [vmem:[#allocation2 + $0x8] sm:$0xff]
    %v115 = vld [vmem:[#allocation2 + $0x10] sm:$0xff]
    %v116 = vld [vmem:[#allocation2 + $0x18] sm:$0xff]
    %v117 = vld [vmem:[%s2] sm:$0x1]
    %v119 = vlaneseq
    %v120 = vshrl.u32 %v119, 7
    %v121 = vsub.s32 0, %v120
    %v122 = vrot.slane %v117, %v121
    %v124 = vadd.f32 %v113, %v122
    %v125 = vadd.f32 %v114, %v122
    %v126 = vadd.f32 %v115, %v122
    %v127 = vadd.f32 %v116, %v122
    %v128 = vsel %vm46, %v124, 0.0
    %129 = vadd.xlane.f32.xlu0 %v128
    %v130 = vpop.xlane.xlu0 %129
    %v131 = vsel %vm46, %v125, 0.0
    %132 = vadd.xlane.f32.xlu0 %v131
    %v133 = vpop.xlane.xlu0 %132
    %v134 = vsel %vm46, %v126, 0.0
    %135 = vadd.xlane.f32.xlu0 %v134
    %v136 = vpop.xlane.xlu0 %135
    %v137 = vsel %vm46, %v127, 0.0
    %138 = vadd.xlane.f32.xlu0 %v137
    %v139 = vpop.xlane.xlu0 %138
    %v140 = vrcp.pop 32.0
    %v141 = vmul.f32 %v130, %v140
    %v142 = vmul.f32 %v133, %v140
    %v143 = vmul.f32 %v136, %v140
    %v144 = vmul.f32 %v139, %v140
    %v145 = vsub.f32 %v124, %v141
    %v146 = vsub.f32 %v125, %v142
    %v147 = vsub.f32 %v126, %v143
    %v148 = vsub.f32 %v127, %v144
    %v149 = vmul.f32 %v145, %v145
    %v150 = vmul.f32 %v146, %v146
    %v151 = vmul.f32 %v147, %v147
    %v152 = vmul.f32 %v148, %v148
    %v153 = vsel %vm46, %v149, 0.0
    %154 = vadd.xlane.f32.xlu0 %v153
    %v155 = vpop.xlane.xlu0 %154
    %v156 = vsel %vm46, %v150, 0.0
    %157 = vadd.xlane.f32.xlu0 %v156
    %v158 = vpop.xlane.xlu0 %157
    %v159 = vsel %vm46, %v151, 0.0
    %160 = vadd.xlane.f32.xlu0 %v159
    %v161 = vpop.xlane.xlu0 %160
    %v162 = vsel %vm46, %v152, 0.0
    %163 = vadd.xlane.f32.xlu0 %v162
    %v164 = vpop.xlane.xlu0 %163
    %v165 = vmul.f32 %v155, %v140
    %v166 = vmul.f32 %v158, %v140
    %v167 = vmul.f32 %v161, %v140
    %v168 = vmul.f32 %v164, %v140
    %v169 = vadd.f32 %v165, 1e-12
    %v170 = vadd.f32 %v166, 1e-12
    %v171 = vadd.f32 %v167, 1e-12
    %v172 = vadd.f32 %v168, 1e-12
    %v173 = vrsqrt.pop %v169
    %v174 = vrsqrt.pop %v170
    %v175 = vrsqrt.pop %v171
    %v176 = vrsqrt.pop %v172
    %v177 = vmul.f32 %v145, %v173
    %v178 = vmul.f32 %v146, %v174
    %v179 = vmul.f32 %v147, %v175
    %v180 = vmul.f32 %v148, %v176
    %v181 = vld [vmem:[%s3] sm:$0x1]
    %v183 = vlaneseq
    %v184 = vshrl.u32 %v183, 7
    %v185 = vsub.s32 0, %v184
    %v186 = vrot.slane %v181, %v185
    %v188 = vmul.f32 %v177, %v186
    %v189 = vmul.f32 %v178, %v186
    %v190 = vmul.f32 %v179, %v186
    %v191 = vmul.f32 %v180, %v186
    %v192 = vld [vmem:[%s4] sm:$0x1]
    %v194 = vlaneseq
    %v195 = vshrl.u32 %v194, 7
    %v196 = vsub.s32 0, %v195
    %v197 = vrot.slane %v192, %v196
    %v199 = vadd.f32 %v188, %v197
    %v200 = vadd.f32 %v189, %v197
    %v201 = vadd.f32 %v190, %v197
    %v202 = vadd.f32 %v191, %v197
    %203 = vst.msk [vmem:[%s5] sm:$0xff] %vm46, %v199
    %204 = vst.msk [vmem:[%s5 + $0x8] sm:$0xff] %vm46, %v200
    %205 = vst.msk [vmem:[%s5 + $0x10] sm:$0xff] %vm46, %v201
    %206 = vst.msk [vmem:[%s5 + $0x18] sm:$0xff] %vm46, %v202
  $region29: #{_lambda_.14} parent=0 // pred_fallthru
    _
  // Predicated region
  $region30: #{_lambda_.14} parent=0 // pred_check
    _
  $region31: #{_lambda_.14} parent=0 // pred_check_branch
    %208 = sbr.rel (0) target = $region33
  $region32: #{_lambda_.14} parent=0 // pred_region
    _
  $region33: #{_lambda_.14} parent=0 // pred_fallthru
    _
  // Predicated region
  $region34: #{_lambda_.14} parent=0 // pred_check
    _
  $region35: #{_lambda_.14} parent=0 // pred_check_branch
    %210 = sbr.rel (0) target = $region37
  $region36: #{_lambda_.14} parent=0 // pred_region
    _
  $region37: #{_lambda_.14} parent=0 // pred_fallthru
    _

// kernel: _lambda_.12
$region0: #{_lambda_.12}
  #allocation0 [shape = 'u32[]', space=smem, size = 0x4, offset = 0x4, fixed_abs, tag = 'smem constant byte address 0x4 - core index']
  #allocation1 [shape = 'u32[144,128]{1,0:T(1,128)}', space=vmem, size = 0x12000, scoped, tag = 'internal scratch']
  %s0 = inlined_call_operand.vmem [shape: f32[4,4,32], index: 0, kind: input, shape index: {}]
  %s1 = inlined_call_operand.vmem [shape: f32[4,1,4], index: 1, kind: input, shape index: {}]
  %s2 = inlined_call_operand.vmem [shape: f32[4,4,32], index: 2, kind: output, shape index: {}]
  %s3 = sld [smem:[#allocation0]]
  $region18: #{_lambda_.12} parent=0
    _
  %s5 = ssub.s32 1, %s3
  %s6 = scalar_select 0, %s5, %s3
  // Predicated region
  $region2: #{_lambda_.12} parent=0 // pred_check
    _
  $region3: #{_lambda_.12} parent=0 // pred_check_branch
    %8 = sbr.rel (0) target = $region5
  $region4: #{_lambda_.12} parent=0 // pred_region
    _
  $region5: #{_lambda_.12} parent=0 // pred_fallthru
    _
  // Predicated region
  $region6: #{_lambda_.12} parent=0 // pred_check
    _
  $region7: #{_lambda_.12} parent=0 // pred_check_branch
    %10 = sbr.rel (0) target = $region9
  $region8: #{_lambda_.12} parent=0 // pred_region
    _
  $region9: #{_lambda_.12} parent=0 // pred_fallthru
    _
  %v12 = vld [vmem:[%s0] sm:$0xf]
  %v13 = vld [vmem:[%s0 + $0x4] sm:$0xf]
  %v14 = vld [vmem:[%s0 + $0x8] sm:$0xf]
  %v15 = vld [vmem:[%s0 + $0xc] sm:$0xf]
  %v16 = vld [vmem:[%s1] sm:$0x1]
  %v17 = vld [vmem:[%s1 + $0x1] sm:$0x1]
  %v18 = vld [vmem:[%s1 + $0x2] sm:$0x1]
  %v19 = vld [vmem:[%s1 + $0x3] sm:$0x1]
  %v20 = vpack.c.bf16 %v12, %v12
  %v21 = vpack.c.bf16 %v13, %v13
  %v22 = vpack.c.bf16 %v14, %v14
  %v23 = vpack.c.bf16 %v15, %v15
  %vm24 = vcmask 64512
  %v26 = vsel %vm24, %v20, 0
  %28 = vmatprep.subr.bf16.mxu0 0
  %29 = vmatpush1.bf16.xpose.msra.mxu0 %v26
  %30 = vmatprep.subr.bf16.mxu0 0
  %31 = vmatpush1.bf16.xpose.msra.mxu0 0
  %32 = vmatprep.subr.bf16.mxu0 0
  %33 = vmatpush1.bf16.xpose.msra.mxu0 0
  %34 = vmatprep.subr.bf16.mxu0 0
  %35 = vmatpush1.bf16.xpose.msra.mxu0 0
  %36 = vmatprep.subr.bf16.mxu0 0
  %37 = vmatpush1.bf16.xpose.msra.mxu0 0
  %38 = vmatprep.subr.bf16.mxu0 0
  %39 = vmatpush1.bf16.xpose.msra.mxu0 0
  %40 = vmatprep.subr.bf16.mxu0 0
  %41 = vmatpush1.bf16.xpose.msra.mxu0 0
  %42 = vmatprep.subr.bf16.mxu0 0
  %43 = vmatpush1.bf16.xpose.msra.mxu0 0
  %44 = vmatprep.subr.bf16.mxu0 0
  %45 = vmatpush1.bf16.xpose.msra.mxu0 0
  %46 = vmatprep.subr.bf16.mxu0 0
  %47 = vmatpush1.bf16.xpose.msra.mxu0 0
  %48 = vmatprep.subr.bf16.mxu0 0
  %49 = vmatpush1.bf16.xpose.msra.mxu0 0
  %50 = vmatprep.subr.bf16.mxu0 0
  %51 = vmatpush1.bf16.xpose.msra.mxu0 0
  %52 = vmatprep.subr.bf16.mxu0 0
  %53 = vmatpush1.bf16.xpose.msra.mxu0 0
  %54 = vmatprep.subr.bf16.mxu0 0
  %55 = vmatpush1.bf16.xpose.msra.mxu0 0
  %56 = vmatprep.subr.bf16.mxu0 0
  %57 = vmatpush1.bf16.xpose.msra.mxu0 0
  %58 = vmatprep.subr.bf16.mxu0 0
  %59 = vmatpush1.bf16.xpose.msra.mxu0 0
  %60 = vmatprep.mubr.bf16.mxu0 0
  %61 = vmatmul.mubr.bf16.gmra.mrb[0].mxu0 %v26
  %v62 = vpop.f32.mrb[0].mxu0
  %v63 = vadd.f32 0.0, %v62
  %v64 = vpop.f32.mrb[0].mxu0
  %v65 = vpop.f32.mrb[0].mxu0
  %v66 = vpop.f32.mrb[0].mxu0
  %67 = vdwg.mxu0
  %v69 = vsel %vm24, %v21, 0
  %71 = vmatprep.subr.bf16.mxu0 0
  %72 = vmatpush1.bf16.xpose.msra.mxu0 %v69
  %73 = vmatprep.subr.bf16.mxu0 0
  %74 = vmatpush1.bf16.xpose.msra.mxu0 0
  %75 = vmatprep.subr.bf16.mxu0 0
  %76 = vmatpush1.bf16.xpose.msra.mxu0 0
  %77 = vmatprep.subr.bf16.mxu0 0
  %78 = vmatpush1.bf16.xpose.msra.mxu0 0
  %79 = vmatprep.subr.bf16.mxu0 0
  %80 = vmatpush1.bf16.xpose.msra.mxu0 0
  %81 = vmatprep.subr.bf16.mxu0 0
  %82 = vmatpush1.bf16.xpose.msra.mxu0 0
  %83 = vmatprep.subr.bf16.mxu0 0
  %84 = vmatpush1.bf16.xpose.msra.mxu0 0
  %85 = vmatprep.subr.bf16.mxu0 0
  %86 = vmatpush1.bf16.xpose.msra.mxu0 0
  %87 = vmatprep.subr.bf16.mxu0 0
  %88 = vmatpush1.bf16.xpose.msra.mxu0 0
  %89 = vmatprep.subr.bf16.mxu0 0
  %90 = vmatpush1.bf16.xpose.msra.mxu0 0
  %91 = vmatprep.subr.bf16.mxu0 0
  %92 = vmatpush1.bf16.xpose.msra.mxu0 0
  %93 = vmatprep.subr.bf16.mxu0 0
  %94 = vmatpush1.bf16.xpose.msra.mxu0 0
  %95 = vmatprep.subr.bf16.mxu0 0
  %96 = vmatpush1.bf16.xpose.msra.mxu0 0
  %97 = vmatprep.subr.bf16.mxu0 0
  %98 = vmatpush1.bf16.xpose.msra.mxu0 0
  %99 = vmatprep.subr.bf16.mxu0 0
  %100 = vmatpush1.bf16.xpose.msra.mxu0 0
  %101 = vmatprep.subr.bf16.mxu0 0
  %102 = vmatpush1.bf16.xpose.msra.mxu0 0
  %103 = vmatprep.mubr.bf16.mxu0 0
  %104 = vmatmul.mubr.bf16.gmra.mrb[0].mxu0 %v69
  %v105 = vpop.f32.mrb[0].mxu0
  %v106 = vadd.f32 0.0, %v105
  %v107 = vpop.f32.mrb[0].mxu0
  %v108 = vpop.f32.mrb[0].mxu0
  %v109 = vpop.f32.mrb[0].mxu0
  %110 = vdwg.mxu0
  %v112 = vsel %vm24, %v22, 0
  %114 = vmatprep.subr.bf16.mxu0 0
  %115 = vmatpush1.bf16.xpose.msra.mxu0 %v112
  %116 = vmatprep.subr.bf16.mxu0 0
  %117 = vmatpush1.bf16.xpose.msra.mxu0 0
  %118 = vmatprep.subr.bf16.mxu0 0
  %119 = vmatpush1.bf16.xpose.msra.mxu0 0
  %120 = vmatprep.subr.bf16.mxu0 0
  %121 = vmatpush1.bf16.xpose.msra.mxu0 0
  %122 = vmatprep.subr.bf16.mxu0 0
  %123 = vmatpush1.bf16.xpose.msra.mxu0 0
  %124 = vmatprep.subr.bf16.mxu0 0
  %125 = vmatpush1.bf16.xpose.msra.mxu0 0
  %126 = vmatprep.subr.bf16.mxu0 0
  %127 = vmatpush1.bf16.xpose.msra.mxu0 0
  %128 = vmatprep.subr.bf16.mxu0 0
  %129 = vmatpush1.bf16.xpose.msra.mxu0 0
  %130 = vmatprep.subr.bf16.mxu0 0
  %131 = vmatpush1.bf16.xpose.msra.mxu0 0
  %132 = vmatprep.subr.bf16.mxu0 0
  %133 = vmatpush1.bf16.xpose.msra.mxu0 0
  %134 = vmatprep.subr.bf16.mxu0 0
  %135 = vmatpush1.bf16.xpose.msra.mxu0 0
  %136 = vmatprep.subr.bf16.mxu0 0
  %137 = vmatpush1.bf16.xpose.msra.mxu0 0
  %138 = vmatprep.subr.bf16.mxu0 0
  %139 = vmatpush1.bf16.xpose.msra.mxu0 0
  %140 = vmatprep.subr.bf16.mxu0 0
  %141 = vmatpush1.bf16.xpose.msra.mxu0 0
  %142 = vmatprep.subr.bf16.mxu0 0
  %143 = vmatpush1.bf16.xpose.msra.mxu0 0
  %144 = vmatprep.subr.bf16.mxu0 0
  %145 = vmatpush1.bf16.xpose.msra.mxu0 0
  %146 = vmatprep.mubr.bf16.mxu0 0
  %147 = vmatmul.mubr.bf16.gmra.mrb[0].mxu0 %v112
  %v148 = vpop.f32.mrb[0].mxu0
  %v149 = vadd.f32 0.0, %v148
  %v150 = vpop.f32.mrb[0].mxu0
  %v151 = vpop.f32.mrb[0].mxu0
  %v152 = vpop.f32.mrb[0].mxu0
  %153 = vdwg.mxu0
  %v155 = vsel %vm24, %v23, 0
  %157 = vmatprep.subr.bf16.mxu0 0
  %158 = vmatpush1.bf16.xpose.msra.mxu0 %v155
  %159 = vmatprep.subr.bf16.mxu0 0
  %160 = vmatpush1.bf16.xpose.msra.mxu0 0
  %161 = vmatprep.subr.bf16.mxu0 0
  %162 = vmatpush1.bf16.xpose.msra.mxu0 0
  %163 = vmatprep.subr.bf16.mxu0 0
  %164 = vmatpush1.bf16.xpose.msra.mxu0 0
  %165 = vmatprep.subr.bf16.mxu0 0
  %166 = vmatpush1.bf16.xpose.msra.mxu0 0
  %167 = vmatprep.subr.bf16.mxu0 0
  %168 = vmatpush1.bf16.xpose.msra.mxu0 0
  %169 = vmatprep.subr.bf16.mxu0 0
  %170 = vmatpush1.bf16.xpose.msra.mxu0 0
  %171 = vmatprep.subr.bf16.mxu0 0
  %172 = vmatpush1.bf16.xpose.msra.mxu0 0
  %173 = vmatprep.subr.bf16.mxu0 0
  %174 = vmatpush1.bf16.xpose.msra.mxu0 0
  %175 = vmatprep.subr.bf16.mxu0 0
  %176 = vmatpush1.bf16.xpose.msra.mxu0 0
  %177 = vmatprep.subr.bf16.mxu0 0
  %178 = vmatpush1.bf16.xpose.msra.mxu0 0
  %179 = vmatprep.subr.bf16.mxu0 0
  %180 = vmatpush1.bf16.xpose.msra.mxu0 0
  %181 = vmatprep.subr.bf16.mxu0 0
  %182 = vmatpush1.bf16.xpose.msra.mxu0 0
  %183 = vmatprep.subr.bf16.mxu0 0
  %184 = vmatpush1.bf16.xpose.msra.mxu0 0
  %185 = vmatprep.subr.bf16.mxu0 0
  %186 = vmatpush1.bf16.xpose.msra.mxu0 0
  %187 = vmatprep.subr.bf16.mxu0 0
  %188 = vmatpush1.bf16.xpose.msra.mxu0 0
  %189 = vmatprep.mubr.bf16.mxu0 0
  %190 = vmatmul.mubr.bf16.gmra.mrb[0].mxu0 %v155
  %v191 = vpop.f32.mrb[0].mxu0
  %v192 = vadd.f32 0.0, %v191
  %v193 = vpop.f32.mrb[0].mxu0
  %v194 = vpop.f32.mrb[0].mxu0
  %v195 = vpop.f32.mrb[0].mxu0
  %196 = vdwg.mxu0
  %v197 = vmul.f32 %v63, 0.35355338
  %v198 = vmul.f32 %v106, 0.35355338
  %v199 = vmul.f32 %v149, 0.35355338
  %v200 = vmul.f32 %v192, 0.35355338
  %v205 = vlaneseq
  %v206 = vshrl.u32 %v205, 7
  %v207 = vsub.s32 0, %v206
  %v208 = vrot.slane %v16, %v207
  %v209 = vlaneseq
  %v210 = vshrl.u32 %v209, 7
  %v211 = vsub.s32 0, %v210
  %v212 = vrot.slane %v17, %v211
  %v213 = vlaneseq
  %v214 = vshrl.u32 %v213, 7
  %v215 = vsub.s32 0, %v214
  %v216 = vrot.slane %v18, %v215
  %v217 = vlaneseq
  %v218 = vshrl.u32 %v217, 7
  %v219 = vsub.s32 0, %v218
  %v220 = vrot.slane %v19, %v219
  %v225 = vadd.f32 %v197, %v208
  %v226 = vadd.f32 %v198, %v212
  %v227 = vadd.f32 %v199, %v216
  %v228 = vadd.f32 %v200, %v220
  %vm229 = vcmask 27648
  %v230 = vsel %vm229, %v225, -inf
  %231 = vmax.xlane.f32.xlu0 %v230
  %v232 = vpop.xlane.xlu0 %231
  %v233 = vsel %vm229, %v226, -inf
  %234 = vmax.xlane.f32.xlu0 %v233
  %v235 = vpop.xlane.xlu0 %234
  %v236 = vsel %vm229, %v227, -inf
  %237 = vmax.xlane.f32.xlu0 %v236
  %v238 = vpop.xlane.xlu0 %237
  %v239 = vsel %vm229, %v228, -inf
  %240 = vmax.xlane.f32.xlu0 %v239
  %v241 = vpop.xlane.xlu0 %240
  %vm242 = vcmp.eq.f32.partialorder %v232, -inf
  %vm243 = vcmp.eq.f32.partialorder %v235, -inf
  %vm244 = vcmp.eq.f32.partialorder %v238, -inf
  %vm245 = vcmp.eq.f32.partialorder %v241, -inf
  %v246 = vsel %vm242, 0.0, %v232
  %v247 = vsel %vm243, 0.0, %v235
  %v248 = vsel %vm244, 0.0, %v238
  %v249 = vsel %vm245, 0.0, %v241
  %v250 = vsub.f32 %v225, %v246
  %v251 = vsub.f32 %v226, %v247
  %v252 = vsub.f32 %v227, %v248
  %v253 = vsub.f32 %v228, %v249
  %v254 = vmul.f32 %v250, 1.442695
  %v255 = vpow.pop %v254
  %v256 = vmul.f32 %v251, 1.442695
  %v257 = vpow.pop %v256
  %v258 = vmul.f32 %v252, 1.442695
  %v259 = vpow.pop %v258
  %v260 = vmul.f32 %v253, 1.442695
  %v261 = vpow.pop %v260
  %v262 = vsel %vm229, %v255, 0.0
  %263 = vadd.xlane.f32.xlu0 %v262
  %v264 = vpop.xlane.xlu0 %263
  %v265 = vsel %vm229, %v257, 0.0
  %266 = vadd.xlane.f32.xlu0 %v265
  %v267 = vpop.xlane.xlu0 %266
  %v268 = vsel %vm229, %v259, 0.0
  %269 = vadd.xlane.f32.xlu0 %v268
  %v270 = vpop.xlane.xlu0 %269
  %v271 = vsel %vm229, %v261, 0.0
  %272 = vadd.xlane.f32.xlu0 %v271
  %v273 = vpop.xlane.xlu0 %272
  %v274 = vmax.f32 %v264, 1e-30
  %v275 = vmax.f32 %v267, 1e-30
  %v276 = vmax.f32 %v270, 1e-30
  %v277 = vmax.f32 %v273, 1e-30
  %v278 = vrcp.pop %v274
  %v279 = vmul.f32 %v255, %v278
  %v280 = vrcp.pop %v275
  %v281 = vmul.f32 %v257, %v280
  %v282 = vrcp.pop %v276
  %v283 = vmul.f32 %v259, %v282
  %v284 = vrcp.pop %v277
  %v285 = vmul.f32 %v261, %v284
  %v286 = vpack.c.bf16 %v279, %v279
  %v287 = vpack.c.bf16 %v281, %v281
  %v288 = vpack.c.bf16 %v283, %v283
  %v289 = vpack.c.bf16 %v285, %v285
  %vm290 = vcmask 31744
  %v292 = vsel %vm290, %v286, 0
  %vm294 = vcmask 1041408
  %v295 = vsel %vm294, %v20, 0
  %297 = vmatprep.subr.bf16.mxu0 0
  %298 = vmatpush1.bf16.msra.mxu0 %v295
  %299 = vmatprep.subr.bf16.mxu0 0
  %300 = vmatpush1.bf16.msra.mxu0 0
  %301 = vmatprep.subr.bf16.mxu0 0
  %302 = vmatpush1.bf16.msra.mxu0 0
  %303 = vmatprep.subr.bf16.mxu0 0
  %304 = vmatpush1.bf16.msra.mxu0 0
  %305 = vmatprep.subr.bf16.mxu0 0
  %306 = vmatpush1.bf16.msra.mxu0 0
  %307 = vmatprep.subr.bf16.mxu0 0
  %308 = vmatpush1.bf16.msra.mxu0 0
  %309 = vmatprep.subr.bf16.mxu0 0
  %310 = vmatpush1.bf16.msra.mxu0 0
  %311 = vmatprep.subr.bf16.mxu0 0
  %312 = vmatpush1.bf16.msra.mxu0 0
  %313 = vmatprep.subr.bf16.mxu0 0
  %314 = vmatpush1.bf16.msra.mxu0 0
  %315 = vmatprep.subr.bf16.mxu0 0
  %316 = vmatpush1.bf16.msra.mxu0 0
  %317 = vmatprep.subr.bf16.mxu0 0
  %318 = vmatpush1.bf16.msra.mxu0 0
  %319 = vmatprep.subr.bf16.mxu0 0
  %320 = vmatpush1.bf16.msra.mxu0 0
  %321 = vmatprep.subr.bf16.mxu0 0
  %322 = vmatpush1.bf16.msra.mxu0 0
  %323 = vmatprep.subr.bf16.mxu0 0
  %324 = vmatpush1.bf16.msra.mxu0 0
  %325 = vmatprep.subr.bf16.mxu0 0
  %326 = vmatpush1.bf16.msra.mxu0 0
  %327 = vmatprep.subr.bf16.mxu0 0
  %328 = vmatpush1.bf16.msra.mxu0 0
  %329 = vmatprep.mubr.bf16.mxu0 0
  %330 = vmatmul.mubr.bf16.gmra.mrb[0].mxu0 %v292
  %v331 = vpop.f32.mrb[0].mxu0
  %v332 = vadd.f32 0.0, %v331
  %v333 = vpop.f32.mrb[0].mxu0
  %v334 = vpop.f32.mrb[0].mxu0
  %v335 = vpop.f32.mrb[0].mxu0
  %336 = vdwg.mxu0
  %v338 = vsel %vm290, %v287, 0
  %v340 = vsel %vm294, %v21, 0
  %342 = vmatprep.subr.bf16.mxu0 0
  %343 = vmatpush1.bf16.msra.mxu0 %v340
  %344 = vmatprep.subr.bf16.mxu0 0
  %345 = vmatpush1.bf16.msra.mxu0 0
  %346 = vmatprep.subr.bf16.mxu0 0
  %347 = vmatpush1.bf16.msra.mxu0 0
  %348 = vmatprep.subr.bf16.mxu0 0
  %349 = vmatpush1.bf16.msra.mxu0 0
  %350 = vmatprep.subr.bf16.mxu0 0
  %351 = vmatpush1.bf16.msra.mxu0 0
  %352 = vmatprep.subr.bf16.mxu0 0
  %353 = vmatpush1.bf16.msra.mxu0 0
  %354 = vmatprep.subr.bf16.mxu0 0
  %355 = vmatpush1.bf16.msra.mxu0 0
  %356 = vmatprep.subr.bf16.mxu0 0
  %357 = vmatpush1.bf16.msra.mxu0 0
  %358 = vmatprep.subr.bf16.mxu0 0
  %359 = vmatpush1.bf16.msra.mxu0 0
  %360 = vmatprep.subr.bf16.mxu0 0
  %361 = vmatpush1.bf16.msra.mxu0 0
  %362 = vmatprep.subr.bf16.mxu0 0
  %363 = vmatpush1.bf16.msra.mxu0 0
  %364 = vmatprep.subr.bf16.mxu0 0
  %365 = vmatpush1.bf16.msra.mxu0 0
  %366 = vmatprep.subr.bf16.mxu0 0
  %367 = vmatpush1.bf16.msra.mxu0 0
  %368 = vmatprep.subr.bf16.mxu0 0
  %369 = vmatpush1.bf16.msra.mxu0 0
  %370 = vmatprep.subr.bf16.mxu0 0
  %371 = vmatpush1.bf16.msra.mxu0 0
  %372 = vmatprep.subr.bf16.mxu0 0
  %373 = vmatpush1.bf16.msra.mxu0 0
  %374 = vmatprep.mubr.bf16.mxu0 0
  %375 = vmatmul.mubr.bf16.gmra.mrb[0].mxu0 %v338
  %v376 = vpop.f32.mrb[0].mxu0
  %v377 = vadd.f32 0.0, %v376
  %v378 = vpop.f32.mrb[0].mxu0
  %v379 = vpop.f32.mrb[0].mxu0
  %v380 = vpop.f32.mrb[0].mxu0
  %381 = vdwg.mxu0
  %v383 = vsel %vm290, %v288, 0
  %v385 = vsel %vm294, %v22, 0
  %387 = vmatprep.subr.bf16.mxu0 0
  %388 = vmatpush1.bf16.msra.mxu0 %v385
  %389 = vmatprep.subr.bf16.mxu0 0
  %390 = vmatpush1.bf16.msra.mxu0 0
  %391 = vmatprep.subr.bf16.mxu0 0
  %392 = vmatpush1.bf16.msra.mxu0 0
  %393 = vmatprep.subr.bf16.mxu0 0
  %394 = vmatpush1.bf16.msra.mxu0 0
  %395 = vmatprep.subr.bf16.mxu0 0
  %396 = vmatpush1.bf16.msra.mxu0 0
  %397 = vmatprep.subr.bf16.mxu0 0
  %398 = vmatpush1.bf16.msra.mxu0 0
  %399 = vmatprep.subr.bf16.mxu0 0
  %400 = vmatpush1.bf16.msra.mxu0 0
  %401 = vmatprep.subr.bf16.mxu0 0
  %402 = vmatpush1.bf16.msra.mxu0 0
  %403 = vmatprep.subr.bf16.mxu0 0
  %404 = vmatpush1.bf16.msra.mxu0 0
  %405 = vmatprep.subr.bf16.mxu0 0
  %406 = vmatpush1.bf16.msra.mxu0 0
  %407 = vmatprep.subr.bf16.mxu0 0
  %408 = vmatpush1.bf16.msra.mxu0 0
  %409 = vmatprep.subr.bf16.mxu0 0
  %410 = vmatpush1.bf16.msra.mxu0 0
  %411 = vmatprep.subr.bf16.mxu0 0
  %412 = vmatpush1.bf16.msra.mxu0 0
  %413 = vmatprep.subr.bf16.mxu0 0
  %414 = vmatpush1.bf16.msra.mxu0 0
  %415 = vmatprep.subr.bf16.mxu0 0
  %416 = vmatpush1.bf16.msra.mxu0 0
  %417 = vmatprep.subr.bf16.mxu0 0
  %418 = vmatpush1.bf16.msra.mxu0 0
  %419 = vmatprep.mubr.bf16.mxu0 0
  %420 = vmatmul.mubr.bf16.gmra.mrb[0].mxu0 %v383
  %v421 = vpop.f32.mrb[0].mxu0
  %v422 = vadd.f32 0.0, %v421
  %v423 = vpop.f32.mrb[0].mxu0
  %v424 = vpop.f32.mrb[0].mxu0
  %v425 = vpop.f32.mrb[0].mxu0
  %426 = vdwg.mxu0
  %v428 = vsel %vm290, %v289, 0
  %v430 = vsel %vm294, %v23, 0
  %432 = vmatprep.subr.bf16.mxu0 0
  %433 = vmatpush1.bf16.msra.mxu0 %v430
  %434 = vmatprep.subr.bf16.mxu0 0
  %435 = vmatpush1.bf16.msra.mxu0 0
  %436 = vmatprep.subr.bf16.mxu0 0
  %437 = vmatpush1.bf16.msra.mxu0 0
  %438 = vmatprep.subr.bf16.mxu0 0
  %439 = vmatpush1.bf16.msra.mxu0 0
  %440 = vmatprep.subr.bf16.mxu0 0
  %441 = vmatpush1.bf16.msra.mxu0 0
  %442 = vmatprep.subr.bf16.mxu0 0
  %443 = vmatpush1.bf16.msra.mxu0 0
  %444 = vmatprep.subr.bf16.mxu0 0
  %445 = vmatpush1.bf16.msra.mxu0 0
  %446 = vmatprep.subr.bf16.mxu0 0
  %447 = vmatpush1.bf16.msra.mxu0 0
  %448 = vmatprep.subr.bf16.mxu0 0
  %449 = vmatpush1.bf16.msra.mxu0 0
  %450 = vmatprep.subr.bf16.mxu0 0
  %451 = vmatpush1.bf16.msra.mxu0 0
  %452 = vmatprep.subr.bf16.mxu0 0
  %453 = vmatpush1.bf16.msra.mxu0 0
  %454 = vmatprep.subr.bf16.mxu0 0
  %455 = vmatpush1.bf16.msra.mxu0 0
  %456 = vmatprep.subr.bf16.mxu0 0
  %457 = vmatpush1.bf16.msra.mxu0 0
  %458 = vmatprep.subr.bf16.mxu0 0
  %459 = vmatpush1.bf16.msra.mxu0 0
  %460 = vmatprep.subr.bf16.mxu0 0
  %461 = vmatpush1.bf16.msra.mxu0 0
  %462 = vmatprep.subr.bf16.mxu0 0
  %463 = vmatpush1.bf16.msra.mxu0 0
  %464 = vmatprep.mubr.bf16.mxu0 0
  %465 = vmatmul.mubr.bf16.gmra.mrb[0].mxu0 %v428
  %v466 = vpop.f32.mrb[0].mxu0
  %v467 = vadd.f32 0.0, %v466
  %v468 = vpop.f32.mrb[0].mxu0
  %v469 = vpop.f32.mrb[0].mxu0
  %v470 = vpop.f32.mrb[0].mxu0
  %471 = vdwg.mxu0
  %473 = vrot.lane.b32.xlu0 %v20, 120
  %v474 = vpop.permute.xlu0 %473
  %v476 = vsel %vm24, %v474, 0
  %478 = vmatprep.subr.bf16.mxu0 0
  %479 = vmatpush1.bf16.xpose.msra.mxu0 %v476
  %480 = vmatprep.subr.bf16.mxu0 0
  %481 = vmatpush1.bf16.xpose.msra.mxu0 0
  %482 = vmatprep.subr.bf16.mxu0 0
  %483 = vmatpush1.bf16.xpose.msra.mxu0 0
  %484 = vmatprep.subr.bf16.mxu0 0
  %485 = vmatpush1.bf16.xpose.msra.mxu0 0
  %486 = vmatprep.subr.bf16.mxu0 0
  %487 = vmatpush1.bf16.xpose.msra.mxu0 0
  %488 = vmatprep.subr.bf16.mxu0 0
  %489 = vmatpush1.bf16.xpose.msra.mxu0 0
  %490 = vmatprep.subr.bf16.mxu0 0
  %491 = vmatpush1.bf16.xpose.msra.mxu0 0
  %492 = vmatprep.subr.bf16.mxu0 0
  %493 = vmatpush1.bf16.xpose.msra.mxu0 0
  %494 = vmatprep.subr.bf16.mxu0 0
  %495 = vmatpush1.bf16.xpose.msra.mxu0 0
  %496 = vmatprep.subr.bf16.mxu0 0
  %497 = vmatpush1.bf16.xpose.msra.mxu0 0
  %498 = vmatprep.subr.bf16.mxu0 0
  %499 = vmatpush1.bf16.xpose.msra.mxu0 0
  %500 = vmatprep.subr.bf16.mxu0 0
  %501 = vmatpush1.bf16.xpose.msra.mxu0 0
  %502 = vmatprep.subr.bf16.mxu0 0
  %503 = vmatpush1.bf16.xpose.msra.mxu0 0
  %504 = vmatprep.subr.bf16.mxu0 0
  %505 = vmatpush1.bf16.xpose.msra.mxu0 0
  %506 = vmatprep.subr.bf16.mxu0 0
  %507 = vmatpush1.bf16.xpose.msra.mxu0 0
  %508 = vmatprep.subr.bf16.mxu0 0
  %509 = vmatpush1.bf16.xpose.msra.mxu0 0
  %510 = vmatprep.mubr.bf16.mxu0 0
  %511 = vmatmul.mubr.bf16.gmra.mrb[0].mxu0 %v476
  %v512 = vpop.f32.mrb[0].mxu0
  %v513 = vadd.f32 0.0, %v512
  %v514 = vpop.f32.mrb[0].mxu0
  %v515 = vpop.f32.mrb[0].mxu0
  %v516 = vpop.f32.mrb[0].mxu0
  %517 = vdwg.mxu0
  %519 = vrot.lane.b32.xlu0 %v21, 120
  %v520 = vpop.permute.xlu0 %519
  %v522 = vsel %vm24, %v520, 0
  %524 = vmatprep.subr.bf16.mxu0 0
  %525 = vmatpush1.bf16.xpose.msra.mxu0 %v522
  %526 = vmatprep.subr.bf16.mxu0 0
  %527 = vmatpush1.bf16.xpose.msra.mxu0 0
  %528 = vmatprep.subr.bf16.mxu0 0
  %529 = vmatpush1.bf16.xpose.msra.mxu0 0
  %530 = vmatprep.subr.bf16.mxu0 0
  %531 = vmatpush1.bf16.xpose.msra.mxu0 0
  %532 = vmatprep.subr.bf16.mxu0 0
  %533 = vmatpush1.bf16.xpose.msra.mxu0 0
  %534 = vmatprep.subr.bf16.mxu0 0
  %535 = vmatpush1.bf16.xpose.msra.mxu0 0
  %536 = vmatprep.subr.bf16.mxu0 0
  %537 = vmatpush1.bf16.xpose.msra.mxu0 0
  %538 = vmatprep.subr.bf16.mxu0 0
  %539 = vmatpush1.bf16.xpose.msra.mxu0 0
  %540 = vmatprep.subr.bf16.mxu0 0
  %541 = vmatpush1.bf16.xpose.msra.mxu0 0
  %542 = vmatprep.subr.bf16.mxu0 0
  %543 = vmatpush1.bf16.xpose.msra.mxu0 0
  %544 = vmatprep.subr.bf16.mxu0 0
  %545 = vmatpush1.bf16.xpose.msra.mxu0 0
  %546 = vmatprep.subr.bf16.mxu0 0
  %547 = vmatpush1.bf16.xpose.msra.mxu0 0
  %548 = vmatprep.subr.bf16.mxu0 0
  %549 = vmatpush1.bf16.xpose.msra.mxu0 0
  %550 = vmatprep.subr.bf16.mxu0 0
  %551 = vmatpush1.bf16.xpose.msra.mxu0 0
  %552 = vmatprep.subr.bf16.mxu0 0
  %553 = vmatpush1.bf16.xpose.msra.mxu0 0
  %554 = vmatprep.subr.bf16.mxu0 0
  %555 = vmatpush1.bf16.xpose.msra.mxu0 0
  %556 = vmatprep.mubr.bf16.mxu0 0
  %557 = vmatmul.mubr.bf16.gmra.mrb[0].mxu0 %v522
  %v558 = vpop.f32.mrb[0].mxu0
  %v559 = vadd.f32 0.0, %v558
  %v560 = vpop.f32.mrb[0].mxu0
  %v561 = vpop.f32.mrb[0].mxu0
  %v562 = vpop.f32.mrb[0].mxu0
  %563 = vdwg.mxu0
  %565 = vrot.lane.b32.xlu0 %v22, 120
  %v566 = vpop.permute.xlu0 %565
  %v568 = vsel %vm24, %v566, 0
  %570 = vmatprep.subr.bf16.mxu0 0
  %571 = vmatpush1.bf16.xpose.msra.mxu0 %v568
  %572 = vmatprep.subr.bf16.mxu0 0
  %573 = vmatpush1.bf16.xpose.msra.mxu0 0
  %574 = vmatprep.subr.bf16.mxu0 0
  %575 = vmatpush1.bf16.xpose.msra.mxu0 0
  %576 = vmatprep.subr.bf16.mxu0 0
  %577 = vmatpush1.bf16.xpose.msra.mxu0 0
  %578 = vmatprep.subr.bf16.mxu0 0
  %579 = vmatpush1.bf16.xpose.msra.mxu0 0
  %580 = vmatprep.subr.bf16.mxu0 0
  %581 = vmatpush1.bf16.xpose.msra.mxu0 0
  %582 = vmatprep.subr.bf16.mxu0 0
  %583 = vmatpush1.bf16.xpose.msra.mxu0 0
  %584 = vmatprep.subr.bf16.mxu0 0
  %585 = vmatpush1.bf16.xpose.msra.mxu0 0
  %586 = vmatprep.subr.bf16.mxu0 0
  %587 = vmatpush1.bf16.xpose.msra.mxu0 0
  %588 = vmatprep.subr.bf16.mxu0 0
  %589 = vmatpush1.bf16.xpose.msra.mxu0 0
  %590 = vmatprep.subr.bf16.mxu0 0
  %591 = vmatpush1.bf16.xpose.msra.mxu0 0
  %592 = vmatprep.subr.bf16.mxu0 0
  %593 = vmatpush1.bf16.xpose.msra.mxu0 0
  %594 = vmatprep.subr.bf16.mxu0 0
  %595 = vmatpush1.bf16.xpose.msra.mxu0 0
  %596 = vmatprep.subr.bf16.mxu0 0
  %597 = vmatpush1.bf16.xpose.msra.mxu0 0
  %598 = vmatprep.subr.bf16.mxu0 0
  %599 = vmatpush1.bf16.xpose.msra.mxu0 0
  %600 = vmatprep.subr.bf16.mxu0 0
  %601 = vmatpush1.bf16.xpose.msra.mxu0 0
  %602 = vmatprep.mubr.bf16.mxu0 0
  %603 = vmatmul.mubr.bf16.gmra.mrb[0].mxu0 %v568
  %v604 = vpop.f32.mrb[0].mxu0
  %v605 = vadd.f32 0.0, %v604
  %v606 = vpop.f32.mrb[0].mxu0
  %v607 = vpop.f32.mrb[0].mxu0
  %v608 = vpop.f32.mrb[0].mxu0
  %609 = vdwg.mxu0
  %611 = vrot.lane.b32.xlu0 %v23, 120
  %v612 = vpop.permute.xlu0 %611
  %v614 = vsel %vm24, %v612, 0
  %616 = vmatprep.subr.bf16.mxu0 0
  %617 = vmatpush1.bf16.xpose.msra.mxu0 %v614
  %618 = vmatprep.subr.bf16.mxu0 0
  %619 = vmatpush1.bf16.xpose.msra.mxu0 0
  %620 = vmatprep.subr.bf16.mxu0 0
  %621 = vmatpush1.bf16.xpose.msra.mxu0 0
  %622 = vmatprep.subr.bf16.mxu0 0
  %623 = vmatpush1.bf16.xpose.msra.mxu0 0
  %624 = vmatprep.subr.bf16.mxu0 0
  %625 = vmatpush1.bf16.xpose.msra.mxu0 0
  %626 = vmatprep.subr.bf16.mxu0 0
  %627 = vmatpush1.bf16.xpose.msra.mxu0 0
  %628 = vmatprep.subr.bf16.mxu0 0
  %629 = vmatpush1.bf16.xpose.msra.mxu0 0
  %630 = vmatprep.subr.bf16.mxu0 0
  %631 = vmatpush1.bf16.xpose.msra.mxu0 0
  %632 = vmatprep.subr.bf16.mxu0 0
  %633 = vmatpush1.bf16.xpose.msra.mxu0 0
  %634 = vmatprep.subr.bf16.mxu0 0
  %635 = vmatpush1.bf16.xpose.msra.mxu0 0
  %636 = vmatprep.subr.bf16.mxu0 0
  %637 = vmatpush1.bf16.xpose.msra.mxu0 0
  %638 = vmatprep.subr.bf16.mxu0 0
  %639 = vmatpush1.bf16.xpose.msra.mxu0 0
  %640 = vmatprep.subr.bf16.mxu0 0
  %641 = vmatpush1.bf16.xpose.msra.mxu0 0
  %642 = vmatprep.subr.bf16.mxu0 0
  %643 = vmatpush1.bf16.xpose.msra.mxu0 0
  %644 = vmatprep.subr.bf16.mxu0 0
  %645 = vmatpush1.bf16.xpose.msra.mxu0 0
  %646 = vmatprep.subr.bf16.mxu0 0
  %647 = vmatpush1.bf16.xpose.msra.mxu0 0
  %648 = vmatprep.mubr.bf16.mxu0 0
  %649 = vmatmul.mubr.bf16.gmra.mrb[0].mxu0 %v614
  %v650 = vpop.f32.mrb[0].mxu0
  %v651 = vadd.f32 0.0, %v650
  %v652 = vpop.f32.mrb[0].mxu0
  %v653 = vpop.f32.mrb[0].mxu0
  %v654 = vpop.f32.mrb[0].mxu0
  %655 = vdwg.mxu0
  %v656 = vmul.f32 %v513, 0.35355338
  %v657 = vmul.f32 %v559, 0.35355338
  %v658 = vmul.f32 %v605, 0.35355338
  %v659 = vmul.f32 %v651, 0.35355338
  %v660 = vadd.f32 %v656, %v208
  %v661 = vadd.f32 %v657, %v212
  %v662 = vadd.f32 %v658, %v216
  %v663 = vadd.f32 %v659, %v220
  %v664 = vsel %vm229, %v660, -inf
  %665 = vmax.xlane.f32.xlu0 %v664
  %v666 = vpop.xlane.xlu0 %665
  %v667 = vsel %vm229, %v661, -inf
  %668 = vmax.xlane.f32.xlu0 %v667
  %v669 = vpop.xlane.xlu0 %668
  %v670 = vsel %vm229, %v662, -inf
  %671 = vmax.xlane.f32.xlu0 %v670
  %v672 = vpop.xlane.xlu0 %671
  %v673 = vsel %vm229, %v663, -inf
  %674 = vmax.xlane.f32.xlu0 %v673
  %v675 = vpop.xlane.xlu0 %674
  %vm676 = vcmp.eq.f32.partialorder %v666, -inf
  %vm677 = vcmp.eq.f32.partialorder %v669, -inf
  %vm678 = vcmp.eq.f32.partialorder %v672, -inf
  %vm679 = vcmp.eq.f32.partialorder %v675, -inf
  %v680 = vsel %vm676, 0.0, %v666
  %v681 = vsel %vm677, 0.0, %v669
  %v682 = vsel %vm678, 0.0, %v672
  %v683 = vsel %vm679, 0.0, %v675
  %v684 = vsub.f32 %v660, %v680
  %v685 = vsub.f32 %v661, %v681
  %v686 = vsub.f32 %v662, %v682
  %v687 = vsub.f32 %v663, %v683
  %v688 = vmul.f32 %v684, 1.442695
  %v689 = vpow.pop %v688
  %v690 = vmul.f32 %v685, 1.442695
  %v691 = vpow.pop %v690
  %v692 = vmul.f32 %v686, 1.442695
  %v693 = vpow.pop %v692
  %v694 = vmul.f32 %v687, 1.442695
  %v695 = vpow.pop %v694
  %v696 = vsel %vm229, %v689, 0.0
  %697 = vadd.xlane.f32.xlu0 %v696
  %v698 = vpop.xlane.xlu0 %697
  %v699 = vsel %vm229, %v691, 0.0
  %700 = vadd.xlane.f32.xlu0 %v699
  %v701 = vpop.xlane.xlu0 %700
  %v702 = vsel %vm229, %v693, 0.0
  %703 = vadd.xlane.f32.xlu0 %v702
  %v704 = vpop.xlane.xlu0 %703
  %v705 = vsel %vm229, %v695, 0.0
  %706 = vadd.xlane.f32.xlu0 %v705
  %v707 = vpop.xlane.xlu0 %706
  %v708 = vmax.f32 %v698, 1e-30
  %v709 = vmax.f32 %v701, 1e-30
  %v710 = vmax.f32 %v704, 1e-30
  %v711 = vmax.f32 %v707, 1e-30
  %v712 = vrcp.pop %v708
  %v713 = vmul.f32 %v689, %v712
  %v714 = vrcp.pop %v709
  %v715 = vmul.f32 %v691, %v714
  %v716 = vrcp.pop %v710
  %v717 = vmul.f32 %v693, %v716
  %v718 = vrcp.pop %v711
  %v719 = vmul.f32 %v695, %v718
  %v720 = vpack.c.bf16 %v713, %v713
  %v721 = vpack.c.bf16 %v715, %v715
  %v722 = vpack.c.bf16 %v717, %v717
  %v723 = vpack.c.bf16 %v719, %v719
  %v725 = vsel %vm290, %v720, 0
  %v727 = vsel %vm294, %v474, 0
  %729 = vmatprep.subr.bf16.mxu0 0
  %730 = vmatpush1.bf16.msra.mxu0 %v727
  %731 = vmatprep.subr.bf16.mxu0 0
  %732 = vmatpush1.bf16.msra.mxu0 0
  %733 = vmatprep.subr.bf16.mxu0 0
  %734 = vmatpush1.bf16.msra.mxu0 0
  %735 = vmatprep.subr.bf16.mxu0 0
  %736 = vmatpush1.bf16.msra.mxu0 0
  %737 = vmatprep.subr.bf16.mxu0 0
  %738 = vmatpush1.bf16.msra.mxu0 0
  %739 = vmatprep.subr.bf16.mxu0 0
  %740 = vmatpush1.bf16.msra.mxu0 0
  %741 = vmatprep.subr.bf16.mxu0 0
  %742 = vmatpush1.bf16.msra.mxu0 0
  %743 = vmatprep.subr.bf16.mxu0 0
  %744 = vmatpush1.bf16.msra.mxu0 0
  %745 = vmatprep.subr.bf16.mxu0 0
  %746 = vmatpush1.bf16.msra.mxu0 0
  %747 = vmatprep.subr.bf16.mxu0 0
  %748 = vmatpush1.bf16.msra.mxu0 0
  %749 = vmatprep.subr.bf16.mxu0 0
  %750 = vmatpush1.bf16.msra.mxu0 0
  %751 = vmatprep.subr.bf16.mxu0 0
  %752 = vmatpush1.bf16.msra.mxu0 0
  %753 = vmatprep.subr.bf16.mxu0 0
  %754 = vmatpush1.bf16.msra.mxu0 0
  %755 = vmatprep.subr.bf16.mxu0 0
  %756 = vmatpush1.bf16.msra.mxu0 0
  %757 = vmatprep.subr.bf16.mxu0 0
  %758 = vmatpush1.bf16.msra.mxu0 0
  %759 = vmatprep.subr.bf16.mxu0 0
  %760 = vmatpush1.bf16.msra.mxu0 0
  %761 = vmatprep.mubr.bf16.mxu0 0
  %762 = vmatmul.mubr.bf16.gmra.mrb[0].mxu0 %v725
  %v763 = vpop.f32.mrb[0].mxu0
  %v764 = vadd.f32 0.0, %v763
  %v765 = vpop.f32.mrb[0].mxu0
  %v766 = vpop.f32.mrb[0].mxu0
  %v767 = vpop.f32.mrb[0].mxu0
  %768 = vdwg.mxu0
  %v770 = vsel %vm290, %v721, 0
  %v772 = vsel %vm294, %v520, 0
  %774 = vmatprep.subr.bf16.mxu0 0
  %775 = vmatpush1.bf16.msra.mxu0 %v772
  %776 = vmatprep.subr.bf16.mxu0 0
  %777 = vmatpush1.bf16.msra.mxu0 0
  %778 = vmatprep.subr.bf16.mxu0 0
  %779 = vmatpush1.bf16.msra.mxu0 0
  %780 = vmatprep.subr.bf16.mxu0 0
  %781 = vmatpush1.bf16.msra.mxu0 0
  %782 = vmatprep.subr.bf16.mxu0 0
  %783 = vmatpush1.bf16.msra.mxu0 0
  %784 = vmatprep.subr.bf16.mxu0 0
  %785 = vmatpush1.bf16.msra.mxu0 0
  %786 = vmatprep.subr.bf16.mxu0 0
  %787 = vmatpush1.bf16.msra.mxu0 0
  %788 = vmatprep.subr.bf16.mxu0 0
  %789 = vmatpush1.bf16.msra.mxu0 0
  %790 = vmatprep.subr.bf16.mxu0 0
  %791 = vmatpush1.bf16.msra.mxu0 0
  %792 = vmatprep.subr.bf16.mxu0 0
  %793 = vmatpush1.bf16.msra.mxu0 0
  %794 = vmatprep.subr.bf16.mxu0 0
  %795 = vmatpush1.bf16.msra.mxu0 0
  %796 = vmatprep.subr.bf16.mxu0 0
  %797 = vmatpush1.bf16.msra.mxu0 0
  %798 = vmatprep.subr.bf16.mxu0 0
  %799 = vmatpush1.bf16.msra.mxu0 0
  %800 = vmatprep.subr.bf16.mxu0 0
  %801 = vmatpush1.bf16.msra.mxu0 0
  %802 = vmatprep.subr.bf16.mxu0 0
  %803 = vmatpush1.bf16.msra.mxu0 0
  %804 = vmatprep.subr.bf16.mxu0 0
  %805 = vmatpush1.bf16.msra.mxu0 0
  %806 = vmatprep.mubr.bf16.mxu0 0
  %807 = vmatmul.mubr.bf16.gmra.mrb[0].mxu0 %v770
  %v808 = vpop.f32.mrb[0].mxu0
  %v809 = vadd.f32 0.0, %v808
  %v810 = vpop.f32.mrb[0].mxu0
  %v811 = vpop.f32.mrb[0].mxu0
  %v812 = vpop.f32.mrb[0].mxu0
  %813 = vdwg.mxu0
  %v815 = vsel %vm290, %v722, 0
  %v817 = vsel %vm294, %v566, 0
  %819 = vmatprep.subr.bf16.mxu0 0
  %820 = vmatpush1.bf16.msra.mxu0 %v817
  %821 = vmatprep.subr.bf16.mxu0 0
  %822 = vmatpush1.bf16.msra.mxu0 0
  %823 = vmatprep.subr.bf16.mxu0 0
  %824 = vmatpush1.bf16.msra.mxu0 0
  %825 = vmatprep.subr.bf16.mxu0 0
  %826 = vmatpush1.bf16.msra.mxu0 0
  %827 = vmatprep.subr.bf16.mxu0 0
  %828 = vmatpush1.bf16.msra.mxu0 0
  %829 = vmatprep.subr.bf16.mxu0 0
  %830 = vmatpush1.bf16.msra.mxu0 0
  %831 = vmatprep.subr.bf16.mxu0 0
  %832 = vmatpush1.bf16.msra.mxu0 0
  %833 = vmatprep.subr.bf16.mxu0 0
  %834 = vmatpush1.bf16.msra.mxu0 0
  %835 = vmatprep.subr.bf16.mxu0 0
  %836 = vmatpush1.bf16.msra.mxu0 0
  %837 = vmatprep.subr.bf16.mxu0 0
  %838 = vmatpush1.bf16.msra.mxu0 0
  %839 = vmatprep.subr.bf16.mxu0 0
  %840 = vmatpush1.bf16.msra.mxu0 0
  %841 = vmatprep.subr.bf16.mxu0 0
  %842 = vmatpush1.bf16.msra.mxu0 0
  %843 = vmatprep.subr.bf16.mxu0 0
  %844 = vmatpush1.bf16.msra.mxu0 0
  %845 = vmatprep.subr.bf16.mxu0 0
  %846 = vmatpush1.bf16.msra.mxu0 0
  %847 = vmatprep.subr.bf16.mxu0 0
  %848 = vmatpush1.bf16.msra.mxu0 0
  %849 = vmatprep.subr.bf16.mxu0 0
  %850 = vmatpush1.bf16.msra.mxu0 0
  %851 = vmatprep.mubr.bf16.mxu0 0
  %852 = vmatmul.mubr.bf16.gmra.mrb[0].mxu0 %v815
  %v853 = vpop.f32.mrb[0].mxu0
  %v854 = vadd.f32 0.0, %v853
  %v855 = vpop.f32.mrb[0].mxu0
  %v856 = vpop.f32.mrb[0].mxu0
  %v857 = vpop.f32.mrb[0].mxu0
  %858 = vdwg.mxu0
  %v860 = vsel %vm290, %v723, 0
  %v862 = vsel %vm294, %v612, 0
  %864 = vmatprep.subr.bf16.mxu0 0
  %865 = vmatpush1.bf16.msra.mxu0 %v862
  %866 = vmatprep.subr.bf16.mxu0 0
  %867 = vmatpush1.bf16.msra.mxu0 0
  %868 = vmatprep.subr.bf16.mxu0 0
  %869 = vmatpush1.bf16.msra.mxu0 0
  %870 = vmatprep.subr.bf16.mxu0 0
  %871 = vmatpush1.bf16.msra.mxu0 0
  %872 = vmatprep.subr.bf16.mxu0 0
  %873 = vmatpush1.bf16.msra.mxu0 0
  %874 = vmatprep.subr.bf16.mxu0 0
  %875 = vmatpush1.bf16.msra.mxu0 0
  %876 = vmatprep.subr.bf16.mxu0 0
  %877 = vmatpush1.bf16.msra.mxu0 0
  %878 = vmatprep.subr.bf16.mxu0 0
  %879 = vmatpush1.bf16.msra.mxu0 0
  %880 = vmatprep.subr.bf16.mxu0 0
  %881 = vmatpush1.bf16.msra.mxu0 0
  %882 = vmatprep.subr.bf16.mxu0 0
  %883 = vmatpush1.bf16.msra.mxu0 0
  %884 = vmatprep.subr.bf16.mxu0 0
  %885 = vmatpush1.bf16.msra.mxu0 0
  %886 = vmatprep.subr.bf16.mxu0 0
  %887 = vmatpush1.bf16.msra.mxu0 0
  %888 = vmatprep.subr.bf16.mxu0 0
  %889 = vmatpush1.bf16.msra.mxu0 0
  %890 = vmatprep.subr.bf16.mxu0 0
  %891 = vmatpush1.bf16.msra.mxu0 0
  %892 = vmatprep.subr.bf16.mxu0 0
  %893 = vmatpush1.bf16.msra.mxu0 0
  %894 = vmatprep.subr.bf16.mxu0 0
  %895 = vmatpush1.bf16.msra.mxu0 0
  %896 = vmatprep.mubr.bf16.mxu0 0
  %897 = vmatmul.mubr.bf16.gmra.mrb[0].mxu0 %v860
  %v898 = vpop.f32.mrb[0].mxu0
  %v899 = vadd.f32 0.0, %v898
  %v900 = vpop.f32.mrb[0].mxu0
  %v901 = vpop.f32.mrb[0].mxu0
  %v902 = vpop.f32.mrb[0].mxu0
  %903 = vdwg.mxu0
  %904 = vrot.lane.b32.xlu0 %v20, 112
  %v905 = vpop.permute.xlu0 %904
  %v907 = vsel %vm24, %v905, 0
  %909 = vmatprep.subr.bf16.mxu0 0
  %910 = vmatpush1.bf16.xpose.msra.mxu0 %v907
  %911 = vmatprep.subr.bf16.mxu0 0
  %912 = vmatpush1.bf16.xpose.msra.mxu0 0
  %913 = vmatprep.subr.bf16.mxu0 0
  %914 = vmatpush1.bf16.xpose.msra.mxu0 0
  %915 = vmatprep.subr.bf16.mxu0 0
  %916 = vmatpush1.bf16.xpose.msra.mxu0 0
  %917 = vmatprep.subr.bf16.mxu0 0
  %918 = vmatpush1.bf16.xpose.msra.mxu0 0
  %919 = vmatprep.subr.bf16.mxu0 0
  %920 = vmatpush1.bf16.xpose.msra.mxu0 0
  %921 = vmatprep.subr.bf16.mxu0 0
  %922 = vmatpush1.bf16.xpose.msra.mxu0 0
  %923 = vmatprep.subr.bf16.mxu0 0
  %924 = vmatpush1.bf16.xpose.msra.mxu0 0
  %925 = vmatprep.subr.bf16.mxu0 0
  %926 = vmatpush1.bf16.xpose.msra.mxu0 0
  %927 = vmatprep.subr.bf16.mxu0 0
  %928 = vmatpush1.bf16.xpose.msra.mxu0 0
  %929 = vmatprep.subr.bf16.mxu0 0
  %930 = vmatpush1.bf16.xpose.msra.mxu0 0
  %931 = vmatprep.subr.bf16.mxu0 0
  %932 = vmatpush1.bf16.xpose.msra.mxu0 0
  %933 = vmatprep.subr.bf16.mxu0 0
  %934 = vmatpush1.bf16.xpose.msra.mxu0 0
  %935 = vmatprep.subr.bf16.mxu0 0
  %936 = vmatpush1.bf16.xpose.msra.mxu0 0
  %937 = vmatprep.subr.bf16.mxu0 0
  %938 = vmatpush1.bf16.xpose.msra.mxu0 0
  %939 = vmatprep.subr.bf16.mxu0 0
  %940 = vmatpush1.bf16.xpose.msra.mxu0 0
  %941 = vmatprep.mubr.bf16.mxu0 0
  %942 = vmatmul.mubr.bf16.gmra.mrb[0].mxu0 %v907
  %v943 = vpop.f32.mrb[0].mxu0
  %v944 = vadd.f32 0.0, %v943
  %v945 = vpop.f32.mrb[0].mxu0
  %v946 = vpop.f32.mrb[0].mxu0
  %v947 = vpop.f32.mrb[0].mxu0
  %948 = vdwg.mxu0
  %949 = vrot.lane.b32.xlu0 %v21, 112
  %v950 = vpop.permute.xlu0 %949
  %v952 = vsel %vm24, %v950, 0
  %954 = vmatprep.subr.bf16.mxu0 0
  %955 = vmatpush1.bf16.xpose.msra.mxu0 %v952
  %956 = vmatprep.subr.bf16.mxu0 0
  %957 = vmatpush1.bf16.xpose.msra.mxu0 0
  %958 = vmatprep.subr.bf16.mxu0 0
  %959 = vmatpush1.bf16.xpose.msra.mxu0 0
  %960 = vmatprep.subr.bf16.mxu0 0
  %961 = vmatpush1.bf16.xpose.msra.mxu0 0
  %962 = vmatprep.subr.bf16.mxu0 0
  %963 = vmatpush1.bf16.xpose.msra.mxu0 0
  %964 = vmatprep.subr.bf16.mxu0 0
  %965 = vmatpush1.bf16.xpose.msra.mxu0 0
  %966 = vmatprep.subr.bf16.mxu0 0
  %967 = vmatpush1.bf16.xpose.msra.mxu0 0
  %968 = vmatprep.subr.bf16.mxu0 0
  %969 = vmatpush1.bf16.xpose.msra.mxu0 0
  %970 = vmatprep.subr.bf16.mxu0 0
  %971 = vmatpush1.bf16.xpose.msra.mxu0 0
  %972 = vmatprep.subr.bf16.mxu0 0
  %973 = vmatpush1.bf16.xpose.msra.mxu0 0
  %974 = vmatprep.subr.bf16.mxu0 0
  %975 = vmatpush1.bf16.xpose.msra.mxu0 0
  %976 = vmatprep.subr.bf16.mxu0 0
  %977 = vmatpush1.bf16.xpose.msra.mxu0 0
  %978 = vmatprep.subr.bf16.mxu0 0
  %979 = vmatpush1.bf16.xpose.msra.mxu0 0
  %980 = vmatprep.subr.bf16.mxu0 0
  %981 = vmatpush1.bf16.xpose.msra.mxu0 0
  %982 = vmatprep.subr.bf16.mxu0 0
  %983 = vmatpush1.bf16.xpose.msra.mxu0 0
  %984 = vmatprep.subr.bf16.mxu0 0
  %985 = vmatpush1.bf16.xpose.msra.mxu0 0
  %986 = vmatprep.mubr.bf16.mxu0 0
  %987 = vmatmul.mubr.bf16.gmra.mrb[0].mxu0 %v952
  %v988 = vpop.f32.mrb[0].mxu0
  %v989 = vadd.f32 0.0, %v988
  %v990 = vpop.f32.mrb[0].mxu0
  %v991 = vpop.f32.mrb[0].mxu0
  %v992 = vpop.f32.mrb[0].mxu0
  %993 = vdwg.mxu0
  %994 = vrot.lane.b32.xlu0 %v22, 112
  %v995 = vpop.permute.xlu0 %994
  %v997 = vsel %vm24, %v995, 0
  %999 = vmatprep.subr.bf16.mxu0 0
  %1000 = vmatpush1.bf16.xpose.msra.mxu0 %v997
  %1001 = vmatprep.subr.bf16.mxu0 0
  %1002 = vmatpush1.bf16.xpose.msra.mxu0 0
  %1003 = vmatprep.subr.bf16.mxu0 0
  %1004 = vmatpush1.bf16.xpose.msra.mxu0 0
  %1005 = vmatprep.subr.bf16.mxu0 0
  %1006 = vmatpush1.bf16.xpose.msra.mxu0 0
  %1007 = vmatprep.subr.bf16.mxu0 0
  %1008 = vmatpush1.bf16.xpose.msra.mxu0 0
  %1009 = vmatprep.subr.bf16.mxu0 0
  %1010 = vmatpush1.bf16.xpose.msra.mxu0 0
  %1011 = vmatprep.subr.bf16.mxu0 0
  %1012 = vmatpush1.bf16.xpose.msra.mxu0 0
  %1013 = vmatprep.subr.bf16.mxu0 0
  %1014 = vmatpush1.bf16.xpose.msra.mxu0 0
  %1015 = vmatprep.subr.bf16.mxu0 0
  %1016 = vmatpush1.bf16.xpose.msra.mxu0 0
  %1017 = vmatprep.subr.bf16.mxu0 0
  %1018 = vmatpush1.bf16.xpose.msra.mxu0 0
  %1019 = vmatprep.subr.bf16.mxu0 0
  %1020 = vmatpush1.bf16.xpose.msra.mxu0 0
  %1021 = vmatprep.subr.bf16.mxu0 0
  %1022 = vmatpush1.bf16.xpose.msra.mxu0 0
  %1023 = vmatprep.subr.bf16.mxu0 0
  %1024 = vmatpush1.bf16.xpose.msra.mxu0 0
  %1025 = vmatprep.subr.bf16.mxu0 0
  %1026 = vmatpush1.bf16.xpose.msra.mxu0 0
  %1027 = vmatprep.subr.bf16.mxu0 0
  %1028 = vmatpush1.bf16.xpose.msra.mxu0 0
  %1029 = vmatprep.subr.bf16.mxu0 0
  %1030 = vmatpush1.bf16.xpose.msra.mxu0 0
  %1031 = vmatprep.mubr.bf16.mxu0 0
  %1032 = vmatmul.mubr.bf16.gmra.mrb[0].mxu0 %v997
  %v1033 = vpop.f32.mrb[0].mxu0
  %v1034 = vadd.f32 0.0, %v1033
  %v1035 = vpop.f32.mrb[0].mxu0
  %v1036 = vpop.f32.mrb[0].mxu0
  %v1037 = vpop.f32.mrb[0].mxu0
  %1038 = vdwg.mxu0
  %1039 = vrot.lane.b32.xlu0 %v23, 112
  %v1040 = vpop.permute.xlu0 %1039
  %v1042 = vsel %vm24, %v1040, 0
  %1044 = vmatprep.subr.bf16.mxu0 0
  %1045 = vmatpush1.bf16.xpose.msra.mxu0 %v1042
  %1046 = vmatprep.subr.bf16.mxu0 0
  %1047 = vmatpush1.bf16.xpose.msra.mxu0 0
  %1048 = vmatprep.subr.bf16.mxu0 0
  %1049 = vmatpush1.bf16.xpose.msra.mxu0 0
  %1050 = vmatprep.subr.bf16.mxu0 0
  %1051 = vmatpush1.bf16.xpose.msra.mxu0 0
  %1052 = vmatprep.subr.bf16.mxu0 0
  %1053 = vmatpush1.bf16.xpose.msra.mxu0 0
  %1054 = vmatprep.subr.bf16.mxu0 0
  %1055 = vmatpush1.bf16.xpose.msra.mxu0 0
  %1056 = vmatprep.subr.bf16.mxu0 0
  %1057 = vmatpush1.bf16.xpose.msra.mxu0 0
  %1058 = vmatprep.subr.bf16.mxu0 0
  %1059 = vmatpush1.bf16.xpose.msra.mxu0 0
  %1060 = vmatprep.subr.bf16.mxu0 0
  %1061 = vmatpush1.bf16.xpose.msra.mxu0 0
  %1062 = vmatprep.subr.bf16.mxu0 0
  %1063 = vmatpush1.bf16.xpose.msra.mxu0 0
  %1064 = vmatprep.subr.bf16.mxu0 0
  %1065 = vmatpush1.bf16.xpose.msra.mxu0 0
  %1066 = vmatprep.subr.bf16.mxu0 0
  %1067 = vmatpush1.bf16.xpose.msra.mxu0 0
  %1068 = vmatprep.subr.bf16.mxu0 0
  %1069 = vmatpush1.bf16.xpose.msra.mxu0 0
  %1070 = vmatprep.subr.bf16.mxu0 0
  %1071 = vmatpush1.bf16.xpose.msra.mxu0 0
  %1072 = vmatprep.subr.bf16.mxu0 0
  %1073 = vmatpush1.bf16.xpose.msra.mxu0 0
  %1074 = vmatprep.subr.bf16.mxu0 0
  %1075 = vmatpush1.bf16.xpose.msra.mxu0 0
  %1076 = vmatprep.mubr.bf16.mxu0 0
  %1077 = vmatmul.mubr.bf16.gmra.mrb[0].mxu0 %v1042
  %v1078 = vpop.f32.mrb[0].mxu0
  %v1079 = vadd.f32 0.0, %v1078
  %v1080 = vpop.f32.mrb[0].mxu0
  %v1081 = vpop.f32.mrb[0].mxu0
  %v1082 = vpop.f32.mrb[0].mxu0
  %1083 = vdwg.mxu0
  %v1084 = vmul.f32 %v944, 0.35355338
  %v1085 = vmul.f32 %v989, 0.35355338
  %v1086 = vmul.f32 %v1034, 0.35355338
  %v1087 = vmul.f32 %v1079, 0.35355338
  %v1088 = vadd.f32 %v1084, %v208
  %v1089 = vadd.f32 %v1085, %v212
  %v1090 = vadd.f32 %v1086, %v216
  %v1091 = vadd.f32 %v1087, %v220
  %v1092 = vsel %vm229, %v1088, -inf
  %1093 = vmax.xlane.f32.xlu0 %v1092
  %v1094 = vpop.xlane.xlu0 %1093
  %v1095 = vsel %vm229, %v1089, -inf
  %1096 = vmax.xlane.f32.xlu0 %v1095
  %v1097 = vpop.xlane.xlu0 %1096
  %v1098 = vsel %vm229, %v1090, -inf
  %1099 = vmax.xlane.f32.xlu0 %v1098
  %v1100 = vpop.xlane.xlu0 %1099
  %v1101 = vsel %vm229, %v1091, -inf
  %1102 = vmax.xlane.f32.xlu0 %v1101
  %v1103 = vpop.xlane.xlu0 %1102
  %vm1104 = vcmp.eq.f32.partialorder %v1094, -inf
  %vm1105 = vcmp.eq.f32.partialorder %v1097, -inf
  %vm1106 = vcmp.eq.f32.partialorder %v1100, -inf
  %vm1107 = vcmp.eq.f32.partialorder %v1103, -inf
  %v1108 = vsel %vm1104, 0.0, %v1094
  %v1109 = vsel %vm1105, 0.0, %v1097
  %v1110 = vsel %vm1106, 0.0, %v1100
  %v1111 = vsel %vm1107, 0.0, %v1103
  %v1112 = vsub.f32 %v1088, %v1108
  %v1113 = vsub.f32 %v1089, %v1109
  %v1114 = vsub.f32 %v1090, %v1110
  %v1115 = vsub.f32 %v1091, %v1111
  %v1116 = vmul.f32 %v1112, 1.442695
  %v1117 = vpow.pop %v1116
  %v1118 = vmul.f32 %v1113, 1.442695
  %v1119 = vpow.pop %v1118
  %v1120 = vmul.f32 %v1114, 1.442695
  %v1121 = vpow.pop %v1120
  %v1122 = vmul.f32 %v1115, 1.442695
  %v1123 = vpow.pop %v1122
  %v1124 = vsel %vm229, %v1117, 0.0
  %1125 = vadd.xlane.f32.xlu0 %v1124
  %v1126 = vpop.xlane.xlu0 %1125
  %v1127 = vsel %vm229, %v1119, 0.0
  %1128 = vadd.xlane.f32.xlu0 %v1127
  %v1129 = vpop.xlane.xlu0 %1128
  %v1130 = vsel %vm229, %v1121, 0.0
  %1131 = vadd.xlane.f32.xlu0 %v1130
  %v1132 = vpop.xlane.xlu0 %1131
  %v1133 = vsel %vm229, %v1123, 0.0
  %1134 = vadd.xlane.f32.xlu0 %v1133
  %v1135 = vpop.xlane.xlu0 %1134
  %v1136 = vmax.f32 %v1126, 1e-30
  %v1137 = vmax.f32 %v1129, 1e-30
  %v1138 = vmax.f32 %v1132, 1e-30
  %v1139 = vmax.f32 %v1135, 1e-30
  %v1140 = vrcp.pop %v1136
  %v1141 = vmul.f32 %v1117, %v1140
  %v1142 = vrcp.pop %v1137
  %v1143 = vmul.f32 %v1119, %v1142
  %v1144 = vrcp.pop %v1138
  %v1145 = vmul.f32 %v1121, %v1144
  %v1146 = vrcp.pop %v1139
  %v1147 = vmul.f32 %v1123, %v1146
  %v1148 = vpack.c.bf16 %v1141, %v1141
  %v1149 = vpack.c.bf16 %v1143, %v1143
  %v1150 = vpack.c.bf16 %v1145, %v1145
  %v1151 = vpack.c.bf16 %v1147, %v1147
  %v1153 = vsel %vm290, %v1148, 0
  %v1155 = vsel %vm294, %v905, 0
  %1157 = vmatprep.subr.bf16.mxu0 0
  %1158 = vmatpush1.bf16.msra.mxu0 %v1155
  %1159 = vmatprep.subr.bf16.mxu0 0
  %1160 = vmatpush1.bf16.msra.mxu0 0
  %1161 = vmatprep.subr.bf16.mxu0 0
  %1162 = vmatpush1.bf16.msra.mxu0 0
  %1163 = vmatprep.subr.bf16.mxu0 0
  %1164 = vmatpush1.bf16.msra.mxu0 0
  %1165 = vmatprep.subr.bf16.mxu0 0
  %1166 = vmatpush1.bf16.msra.mxu0 0
  %1167 = vmatprep.subr.bf16.mxu0 0
  %1168 = vmatpush1.bf16.msra.mxu0 0
  %1169 = vmatprep.subr.bf16.mxu0 0
  %1170 = vmatpush1.bf16.msra.mxu0 0
  %1171 = vmatprep.subr.bf16.mxu0 0
  %1172 = vmatpush1.bf16.msra.mxu0 0
  %1173 = vmatprep.subr.bf16.mxu0 0
  %1174 = vmatpush1.bf16.msra.mxu0 0
  %1175 = vmatprep.subr.bf16.mxu0 0
  %1176 = vmatpush1.bf16.msra.mxu0 0
  %1177 = vmatprep.subr.bf16.mxu0 0
  %1178 = vmatpush1.bf16.msra.mxu0 0
  %1179 = vmatprep.subr.bf16.mxu0 0
  %1180 = vmatpush1.bf16.msra.mxu0 0
  %1181 = vmatprep.subr.bf16.mxu0 0
  %1182 = vmatpush1.bf16.msra.mxu0 0
  %1183 = vmatprep.subr.bf16.mxu0 0
  %1184 = vmatpush1.bf16.msra.mxu0 0
  %1185 = vmatprep.subr.bf16.mxu0 0
  %1186 = vmatpush1.bf16.msra.mxu0 0
  %1187 = vmatprep.subr.bf16.mxu0 0
  %1188 = vmatpush1.bf16.msra.mxu0 0
  %1189 = vmatprep.mubr.bf16.mxu0 0
  %1190 = vmatmul.mubr.bf16.gmra.mrb[0].mxu0 %v1153
  %v1191 = vpop.f32.mrb[0].mxu0
  %v1192 = vadd.f32 0.0, %v1191
  %v1193 = vpop.f32.mrb[0].mxu0
  %v1194 = vpop.f32.mrb[0].mxu0
  %v1195 = vpop.f32.mrb[0].mxu0
  %1196 = vdwg.mxu0
  %v1198 = vsel %vm290, %v1149, 0
  %v1200 = vsel %vm294, %v950, 0
  %1202 = vmatprep.subr.bf16.mxu0 0
  %1203 = vmatpush1.bf16.msra.mxu0 %v1200
  %1204 = vmatprep.subr.bf16.mxu0 0
  %1205 = vmatpush1.bf16.msra.mxu0 0
  %1206 = vmatprep.subr.bf16.mxu0 0
  %1207 = vmatpush1.bf16.msra.mxu0 0
  %1208 = vmatprep.subr.bf16.mxu0 0
  %1209 = vmatpush1.bf16.msra.mxu0 0
  %1210 = vmatprep.subr.bf16.mxu0 0
  %1211 = vmatpush1.bf16.msra.mxu0 0
  %1212 = vmatprep.subr.bf16.mxu0 0
  %1213 = vmatpush1.bf16.msra.mxu0 0
  %1214 = vmatprep.subr.bf16.mxu0 0
  %1215 = vmatpush1.bf16.msra.mxu0 0
  %1216 = vmatprep.subr.bf16.mxu0 0
  %1217 = vmatpush1.bf16.msra.mxu0 0
  %1218 = vmatprep.subr.bf16.mxu0 0
  %1219 = vmatpush1.bf16.msra.mxu0 0
  %1220 = vmatprep.subr.bf16.mxu0 0
  %1221 = vmatpush1.bf16.msra.mxu0 0
  %1222 = vmatprep.subr.bf16.mxu0 0
  %1223 = vmatpush1.bf16.msra.mxu0 0
  %1224 = vmatprep.subr.bf16.mxu0 0
  %1225 = vmatpush1.bf16.msra.mxu0 0
  %1226 = vmatprep.subr.bf16.mxu0 0
  %1227 = vmatpush1.bf16.msra.mxu0 0
  %1228 = vmatprep.subr.bf16.mxu0 0
  %1229 = vmatpush1.bf16.msra.mxu0 0
  %1230 = vmatprep.subr.bf16.mxu0 0
  %1231 = vmatpush1.bf16.msra.mxu0 0
  %1232 = vmatprep.subr.bf16.mxu0 0
  %1233 = vmatpush1.bf16.msra.mxu0 0
  %1234 = vmatprep.mubr.bf16.mxu0 0
  %1235 = vmatmul.mubr.bf16.gmra.mrb[0].mxu0 %v1198
  %v1236 = vpop.f32.mrb[0].mxu0
  %v1237 = vadd.f32 0.0, %v1236
  %v1238 = vpop.f32.mrb[0].mxu0
  %v1239 = vpop.f32.mrb[0].mxu0
  %v1240 = vpop.f32.mrb[0].mxu0
  %1241 = vdwg.mxu0
  %v1243 = vsel %vm290, %v1150, 0
  %v1245 = vsel %vm294, %v995, 0
  %1247 = vmatprep.subr.bf16.mxu0 0
  %1248 = vmatpush1.bf16.msra.mxu0 %v1245
  %1249 = vmatprep.subr.bf16.mxu0 0
  %1250 = vmatpush1.bf16.msra.mxu0 0
  %1251 = vmatprep.subr.bf16.mxu0 0
  %1252 = vmatpush1.bf16.msra.mxu0 0
  %1253 = vmatprep.subr.bf16.mxu0 0
  %1254 = vmatpush1.bf16.msra.mxu0 0
  %1255 = vmatprep.subr.bf16.mxu0 0
  %1256 = vmatpush1.bf16.msra.mxu0 0
  %1257 = vmatprep.subr.bf16.mxu0 0
  %1258 = vmatpush1.bf16.msra.mxu0 0
  %1259 = vmatprep.subr.bf16.mxu0 0
  %1260 = vmatpush1.bf16.msra.mxu0 0
  %1261 = vmatprep.subr.bf16.mxu0 0
  %1262 = vmatpush1.bf16.msra.mxu0 0
  %1263 = vmatprep.subr.bf16.mxu0 0
  %1264 = vmatpush1.bf16.msra.mxu0 0
  %1265 = vmatprep.subr.bf16.mxu0 0
  %1266 = vmatpush1.bf16.msra.mxu0 0
  %1267 = vmatprep.subr.bf16.mxu0 0
  %1268 = vmatpush1.bf16.msra.mxu0 0
  %1269 = vmatprep.subr.bf16.mxu0 0
  %1270 = vmatpush1.bf16.msra.mxu0 0
  %1271 = vmatprep.subr.bf16.mxu0 0
  %1272 = vmatpush1.bf16.msra.mxu0 0
  %1273 = vmatprep.subr.bf16.mxu0 0
  %1274 = vmatpush1.bf16.msra.mxu0 0
  %1275 = vmatprep.subr.bf16.mxu0 0
  %1276 = vmatpush1.bf16.msra.mxu0 0
  %1277 = vmatprep.subr.bf16.mxu0 0
  %1278 = vmatpush1.bf16.msra.mxu0 0
  %1279 = vmatprep.mubr.bf16.mxu0 0
  %1280 = vmatmul.mubr.bf16.gmra.mrb[0].mxu0 %v1243
  %v1281 = vpop.f32.mrb[0].mxu0
  %v1282 = vadd.f32 0.0, %v1281
  %v1283 = vpop.f32.mrb[0].mxu0
  %v1284 = vpop.f32.mrb[0].mxu0
  %v1285 = vpop.f32.mrb[0].mxu0
  %1286 = vdwg.mxu0
  %v1288 = vsel %vm290, %v1151, 0
  %v1290 = vsel %vm294, %v1040, 0
  %1292 = vmatprep.subr.bf16.mxu0 0
  %1293 = vmatpush1.bf16.msra.mxu0 %v1290
  %1294 = vmatprep.subr.bf16.mxu0 0
  %1295 = vmatpush1.bf16.msra.mxu0 0
  %1296 = vmatprep.subr.bf16.mxu0 0
  %1297 = vmatpush1.bf16.msra.mxu0 0
  %1298 = vmatprep.subr.bf16.mxu0 0
  %1299 = vmatpush1.bf16.msra.mxu0 0
  %1300 = vmatprep.subr.bf16.mxu0 0
  %1301 = vmatpush1.bf16.msra.mxu0 0
  %1302 = vmatprep.subr.bf16.mxu0 0
  %1303 = vmatpush1.bf16.msra.mxu0 0
  %1304 = vmatprep.subr.bf16.mxu0 0
  %1305 = vmatpush1.bf16.msra.mxu0 0
  %1306 = vmatprep.subr.bf16.mxu0 0
  %1307 = vmatpush1.bf16.msra.mxu0 0
  %1308 = vmatprep.subr.bf16.mxu0 0
  %1309 = vmatpush1.bf16.msra.mxu0 0
  %1310 = vmatprep.subr.bf16.mxu0 0
  %1311 = vmatpush1.bf16.msra.mxu0 0
  %1312 = vmatprep.subr.bf16.mxu0 0
  %1313 = vmatpush1.bf16.msra.mxu0 0
  %1314 = vmatprep.subr.bf16.mxu0 0
  %1315 = vmatpush1.bf16.msra.mxu0 0
  %1316 = vmatprep.subr.bf16.mxu0 0
  %1317 = vmatpush1.bf16.msra.mxu0 0
  %1318 = vmatprep.subr.bf16.mxu0 0
  %1319 = vmatpush1.bf16.msra.mxu0 0
  %1320 = vmatprep.subr.bf16.mxu0 0
  %1321 = vmatpush1.bf16.msra.mxu0 0
  %1322 = vmatprep.subr.bf16.mxu0 0
  %1323 = vmatpush1.bf16.msra.mxu0 0
  %1324 = vmatprep.mubr.bf16.mxu0 0
  %1325 = vmatmul.mubr.bf16.gmra.mrb[0].mxu0 %v1288
  %v1326 = vpop.f32.mrb[0].mxu0
  %v1327 = vadd.f32 0.0, %v1326
  %v1328 = vpop.f32.mrb[0].mxu0
  %v1329 = vpop.f32.mrb[0].mxu0
  %v1330 = vpop.f32.mrb[0].mxu0
  %1331 = vdwg.mxu0
  %1332 = vrot.lane.b32.xlu0 %v20, 104
  %v1333 = vpop.permute.xlu0 %1332
  %v1335 = vsel %vm24, %v1333, 0
  %1337 = vmatprep.subr.bf16.mxu0 0
  %1338 = vmatpush1.bf16.xpose.msra.mxu0 %v1335
  %1339 = vmatprep.subr.bf16.mxu0 0
  %1340 = vmatpush1.bf16.xpose.msra.mxu0 0
  %1341 = vmatprep.subr.bf16.mxu0 0
  %1342 = vmatpush1.bf16.xpose.msra.mxu0 0
  %1343 = vmatprep.subr.bf16.mxu0 0
  %1344 = vmatpush1.bf16.xpose.msra.mxu0 0
  %1345 = vmatprep.subr.bf16.mxu0 0
  %1346 = vmatpush1.bf16.xpose.msra.mxu0 0
  %1347 = vmatprep.subr.bf16.mxu0 0
  %1348 = vmatpush1.bf16.xpose.msra.mxu0 0
  %1349 = vmatprep.subr.bf16.mxu0 0
  %1350 = vmatpush1.bf16.xpose.msra.mxu0 0
  %1351 = vmatprep.subr.bf16.mxu0 0
  %1352 = vmatpush1.bf16.xpose.msra.mxu0 0
  %1353 = vmatprep.subr.bf16.mxu0 0
  %1354 = vmatpush1.bf16.xpose.msra.mxu0 0
  %1355 = vmatprep.subr.bf16.mxu0 0
  %1356 = vmatpush1.bf16.xpose.msra.mxu0 0
  %1357 = vmatprep.subr.bf16.mxu0 0
  %1358 = vmatpush1.bf16.xpose.msra.mxu0 0
  %1359 = vmatprep.subr.bf16.mxu0 0
  %1360 = vmatpush1.bf16.xpose.msra.mxu0 0
  %1361 = vmatprep.subr.bf16.mxu0 0
  %1362 = vmatpush1.bf16.xpose.msra.mxu0 0
  %1363 = vmatprep.subr.bf16.mxu0 0
  %1364 = vmatpush1.bf16.xpose.msra.mxu0 0
  %1365 = vmatprep.subr.bf16.mxu0 0
  %1366 = vmatpush1.bf16.xpose.msra.mxu0 0
  %1367 = vmatprep.subr.bf16.mxu0 0
  %1368 = vmatpush1.bf16.xpose.msra.mxu0 0
  %1369 = vmatprep.mubr.bf16.mxu0 0
  %1370 = vmatmul.mubr.bf16.gmra.mrb[0].mxu0 %v1335
  %v1371 = vpop.f32.mrb[0].mxu0
  %v1372 = vadd.f32 0.0, %v1371
  %v1373 = vpop.f32.mrb[0].mxu0
  %v1374 = vpop.f32.mrb[0].mxu0
  %v1375 = vpop.f32.mrb[0].mxu0
  %1376 = vdwg.mxu0
  %1377 = vrot.lane.b32.xlu0 %v21, 104
  %v1378 = vpop.permute.xlu0 %1377
  %v1380 = vsel %vm24, %v1378, 0
  %1382 = vmatprep.subr.bf16.mxu0 0
  %1383 = vmatpush1.bf16.xpose.msra.mxu0 %v1380
  %1384 = vmatprep.subr.bf16.mxu0 0
  %1385 = vmatpush1.bf16.xpose.msra.mxu0 0
  %1386 = vmatprep.subr.bf16.mxu0 0
  %1387 = vmatpush1.bf16.xpose.msra.mxu0 0
  %1388 = vmatprep.subr.bf16.mxu0 0
  %1389 = vmatpush1.bf16.xpose.msra.mxu0 0
  %1390 = vmatprep.subr.bf16.mxu0 0
  %1391 = vmatpush1.bf16.xpose.msra.mxu0 0
  %1392 = vmatprep.subr.bf16.mxu0 0
  %1393 = vmatpush1.bf16.xpose.msra.mxu0 0
  %1394 = vmatprep.subr.bf16.mxu0 0
  %1395 = vmatpush1.bf16.xpose.msra.mxu0 0
  %1396 = vmatprep.subr.bf16.mxu0 0
  %1397 = vmatpush1.bf16.xpose.msra.mxu0 0
  %1398 = vmatprep.subr.bf16.mxu0 0
  %1399 = vmatpush1.bf16.xpose.msra.mxu0 0
  %1400 = vmatprep.subr.bf16.mxu0 0
  %1401 = vmatpush1.bf16.xpose.msra.mxu0 0
  %1402 = vmatprep.subr.bf16.mxu0 0
  %1403 = vmatpush1.bf16.xpose.msra.mxu0 0
  %1404 = vmatprep.subr.bf16.mxu0 0
  %1405 = vmatpush1.bf16.xpose.msra.mxu0 0
  %1406 = vmatprep.subr.bf16.mxu0 0
  %1407 = vmatpush1.bf16.xpose.msra.mxu0 0
  %1408 = vmatprep.subr.bf16.mxu0 0
  %1409 = vmatpush1.bf16.xpose.msra.mxu0 0
  %1410 = vmatprep.subr.bf16.mxu0 0
  %1411 = vmatpush1.bf16.xpose.msra.mxu0 0
  %1412 = vmatprep.subr.bf16.mxu0 0
  %1413 = vmatpush1.bf16.xpose.msra.mxu0 0
  %1414 = vmatprep.mubr.bf16.mxu0 0
  %1415 = vmatmul.mubr.bf16.gmra.mrb[0].mxu0 %v1380
  %v1416 = vpop.f32.mrb[0].mxu0
  %v1417 = vadd.f32 0.0, %v1416
  %v1418 = vpop.f32.mrb[0].mxu0
  %v1419 = vpop.f32.mrb[0].mxu0
  %v1420 = vpop.f32.mrb[0].mxu0
  %1421 = vdwg.mxu0
  %1422 = vrot.lane.b32.xlu0 %v22, 104
  %v1423 = vpop.permute.xlu0 %1422
  %v1425 = vsel %vm24, %v1423, 0
  %1427 = vmatprep.subr.bf16.mxu0 0
  %1428 = vmatpush1.bf16.xpose.msra.mxu0 %v1425
  %1429 = vmatprep.subr.bf16.mxu0 0
  %1430 = vmatpush1.bf16.xpose.msra.mxu0 0
  %1431 = vmatprep.subr.bf16.mxu0 0
  %1432 = vmatpush1.bf16.xpose.msra.mxu0 0
  %1433 = vmatprep.subr.bf16.mxu0 0
  %1434 = vmatpush1.bf16.xpose.msra.mxu0 0
  %1435 = vmatprep.subr.bf16.mxu0 0
  %1436 = vmatpush1.bf16.xpose.msra.mxu0 0
  %1437 = vmatprep.subr.bf16.mxu0 0
  %1438 = vmatpush1.bf16.xpose.msra.mxu0 0
  %1439 = vmatprep.subr.bf16.mxu0 0
  %1440 = vmatpush1.bf16.xpose.msra.mxu0 0
  %1441 = vmatprep.subr.bf16.mxu0 0
  %1442 = vmatpush1.bf16.xpose.msra.mxu0 0
  %1443 = vmatprep.subr.bf16.mxu0 0
  %1444 = vmatpush1.bf16.xpose.msra.mxu0 0
  %1445 = vmatprep.subr.bf16.mxu0 0
  %1446 = vmatpush1.bf16.xpose.msra.mxu0 0
  %1447 = vmatprep.subr.bf16.mxu0 0
  %1448 = vmatpush1.bf16.xpose.msra.mxu0 0
  %1449 = vmatprep.subr.bf16.mxu0 0
  %1450 = vmatpush1.bf16.xpose.msra.mxu0 0
  %1451 = vmatprep.subr.bf16.mxu0 0
  %1452 = vmatpush1.bf16.xpose.msra.mxu0 0
  %1453 = vmatprep.subr.bf16.mxu0 0
  %1454 = vmatpush1.bf16.xpose.msra.mxu0 0
  %1455 = vmatprep.subr.bf16.mxu0 0
  %1456 = vmatpush1.bf16.xpose.msra.mxu0 0
  %1457 = vmatprep.subr.bf16.mxu0 0
  %1458 = vmatpush1.bf16.xpose.msra.mxu0 0
  %1459 = vmatprep.mubr.bf16.mxu0 0
  %1460 = vmatmul.mubr.bf16.gmra.mrb[0].mxu0 %v1425
  %v1461 = vpop.f32.mrb[0].mxu0
  %v1462 = vadd.f32 0.0, %v1461
  %v1463 = vpop.f32.mrb[0].mxu0
  %v1464 = vpop.f32.mrb[0].mxu0
  %v1465 = vpop.f32.mrb[0].mxu0
  %1466 = vdwg.mxu0
  %1467 = vrot.lane.b32.xlu0 %v23, 104
  %v1468 = vpop.permute.xlu0 %1467
  %v1470 = vsel %vm24, %v1468, 0
  %1472 = vmatprep.subr.bf16.mxu0 0
  %1473 = vmatpush1.bf16.xpose.msra.mxu0 %v1470
  %1474 = vmatprep.subr.bf16.mxu0 0
  %1475 = vmatpush1.bf16.xpose.msra.mxu0 0
  %1476 = vmatprep.subr.bf16.mxu0 0
  %1477 = vmatpush1.bf16.xpose.msra.mxu0 0
  %1478 = vmatprep.subr.bf16.mxu0 0
  %1479 = vmatpush1.bf16.xpose.msra.mxu0 0
  %1480 = vmatprep.subr.bf16.mxu0 0
  %1481 = vmatpush1.bf16.xpose.msra.mxu0 0
  %1482 = vmatprep.subr.bf16.mxu0 0
  %1483 = vmatpush1.bf16.xpose.msra.mxu0 0
  %1484 = vmatprep.subr.bf16.mxu0 0
  %1485 = vmatpush1.bf16.xpose.msra.mxu0 0
  %1486 = vmatprep.subr.bf16.mxu0 0
  %1487 = vmatpush1.bf16.xpose.msra.mxu0 0
  %1488 = vmatprep.subr.bf16.mxu0 0
  %1489 = vmatpush1.bf16.xpose.msra.mxu0 0
  %1490 = vmatprep.subr.bf16.mxu0 0
  %1491 = vmatpush1.bf16.xpose.msra.mxu0 0
  %1492 = vmatprep.subr.bf16.mxu0 0
  %1493 = vmatpush1.bf16.xpose.msra.mxu0 0
  %1494 = vmatprep.subr.bf16.mxu0 0
  %1495 = vmatpush1.bf16.xpose.msra.mxu0 0
  %1496 = vmatprep.subr.bf16.mxu0 0
  %1497 = vmatpush1.bf16.xpose.msra.mxu0 0
  %1498 = vmatprep.subr.bf16.mxu0 0
  %1499 = vmatpush1.bf16.xpose.msra.mxu0 0
  %1500 = vmatprep.subr.bf16.mxu0 0
  %1501 = vmatpush1.bf16.xpose.msra.mxu0 0
  %1502 = vmatprep.subr.bf16.mxu0 0
  %1503 = vmatpush1.bf16.xpose.msra.mxu0 0
  %1504 = vmatprep.mubr.bf16.mxu0 0
  %1505 = vmatmul.mubr.bf16.gmra.mrb[0].mxu0 %v1470
  %v1506 = vpop.f32.mrb[0].mxu0
  %v1507 = vadd.f32 0.0, %v1506
  %v1508 = vpop.f32.mrb[0].mxu0
  %v1509 = vpop.f32.mrb[0].mxu0
  %v1510 = vpop.f32.mrb[0].mxu0
  %1511 = vdwg.mxu0
  %v1512 = vmul.f32 %v1372, 0.35355338
  %v1513 = vmul.f32 %v1417, 0.35355338
  %v1514 = vmul.f32 %v1462, 0.35355338
  %v1515 = vmul.f32 %v1507, 0.35355338
  %v1516 = vadd.f32 %v1512, %v208
  %v1517 = vadd.f32 %v1513, %v212
  %v1518 = vadd.f32 %v1514, %v216
  %v1519 = vadd.f32 %v1515, %v220
  %v1520 = vsel %vm229, %v1516, -inf
  %1521 = vmax.xlane.f32.xlu0 %v1520
  %v1522 = vpop.xlane.xlu0 %1521
  %v1523 = vsel %vm229, %v1517, -inf
  %1524 = vmax.xlane.f32.xlu0 %v1523
  %v1525 = vpop.xlane.xlu0 %1524
  %v1526 = vsel %vm229, %v1518, -inf
  %1527 = vmax.xlane.f32.xlu0 %v1526
  %v1528 = vpop.xlane.xlu0 %1527
  %v1529 = vsel %vm229, %v1519, -inf
  %1530 = vmax.xlane.f32.xlu0 %v1529
  %v1531 = vpop.xlane.xlu0 %1530
  %vm1532 = vcmp.eq.f32.partialorder %v1522, -inf
  %vm1533 = vcmp.eq.f32.partialorder %v1525, -inf
  %vm1534 = vcmp.eq.f32.partialorder %v1528, -inf
  %vm1535 = vcmp.eq.f32.partialorder %v1531, -inf
  %v1536 = vsel %vm1532, 0.0, %v1522
  %v1537 = vsel %vm1533, 0.0, %v1525
  %v1538 = vsel %vm1534, 0.0, %v1528
  %v1539 = vsel %vm1535, 0.0, %v1531
  %v1540 = vsub.f32 %v1516, %v1536
  %v1541 = vsub.f32 %v1517, %v1537
  %v1542 = vsub.f32 %v1518, %v1538
  %v1543 = vsub.f32 %v1519, %v1539
  %v1544 = vmul.f32 %v1540, 1.442695
  %v1545 = vpow.pop %v1544
  %v1546 = vmul.f32 %v1541, 1.442695
  %v1547 = vpow.pop %v1546
  %v1548 = vmul.f32 %v1542, 1.442695
  %v1549 = vpow.pop %v1548
  %v1550 = vmul.f32 %v1543, 1.442695
  %v1551 = vpow.pop %v1550
  %v1552 = vsel %vm229, %v1545, 0.0
  %1553 = vadd.xlane.f32.xlu0 %v1552
  %v1554 = vpop.xlane.xlu0 %1553
  %v1555 = vsel %vm229, %v1547, 0.0
  %1556 = vadd.xlane.f32.xlu0 %v1555
  %v1557 = vpop.xlane.xlu0 %1556
  %v1558 = vsel %vm229, %v1549, 0.0
  %1559 = vadd.xlane.f32.xlu0 %v1558
  %v1560 = vpop.xlane.xlu0 %1559
  %v1561 = vsel %vm229, %v1551, 0.0
  %1562 = vadd.xlane.f32.xlu0 %v1561
  %v1563 = vpop.xlane.xlu0 %1562
  %v1564 = vmax.f32 %v1554, 1e-30
  %v1565 = vmax.f32 %v1557, 1e-30
  %v1566 = vmax.f32 %v1560, 1e-30
  %v1567 = vmax.f32 %v1563, 1e-30
  %v1568 = vrcp.pop %v1564
  %v1569 = vmul.f32 %v1545, %v1568
  %v1570 = vrcp.pop %v1565
  %v1571 = vmul.f32 %v1547, %v1570
  %v1572 = vrcp.pop %v1566
  %v1573 = vmul.f32 %v1549, %v1572
  %v1574 = vrcp.pop %v1567
  %v1575 = vmul.f32 %v1551, %v1574
  %v1576 = vpack.c.bf16 %v1569, %v1569
  %v1577 = vpack.c.bf16 %v1571, %v1571
  %v1578 = vpack.c.bf16 %v1573, %v1573
  %v1579 = vpack.c.bf16 %v1575, %v1575
  %v1581 = vsel %vm290, %v1576, 0
  %v1583 = vsel %vm294, %v1333, 0
  %1585 = vmatprep.subr.bf16.mxu0 0
  %1586 = vmatpush1.bf16.msra.mxu0 %v1583
  %1587 = vmatprep.subr.bf16.mxu0 0
  %1588 = vmatpush1.bf16.msra.mxu0 0
  %1589 = vmatprep.subr.bf16.mxu0 0
  %1590 = vmatpush1.bf16.msra.mxu0 0
  %1591 = vmatprep.subr.bf16.mxu0 0
  %1592 = vmatpush1.bf16.msra.mxu0 0
  %1593 = vmatprep.subr.bf16.mxu0 0
  %1594 = vmatpush1.bf16.msra.mxu0 0
  %1595 = vmatprep.subr.bf16.mxu0 0
  %1596 = vmatpush1.bf16.msra.mxu0 0
  %1597 = vmatprep.subr.bf16.mxu0 0
  %1598 = vmatpush1.bf16.msra.mxu0 0
  %1599 = vmatprep.subr.bf16.mxu0 0
  %1600 = vmatpush1.bf16.msra.mxu0 0
  %1601 = vmatprep.subr.bf16.mxu0 0
  %1602 = vmatpush1.bf16.msra.mxu0 0
  %1603 = vmatprep.subr.bf16.mxu0 0
  %1604 = vmatpush1.bf16.msra.mxu0 0
  %1605 = vmatprep.subr.bf16.mxu0 0
  %1606 = vmatpush1.bf16.msra.mxu0 0
  %1607 = vmatprep.subr.bf16.mxu0 0
  %1608 = vmatpush1.bf16.msra.mxu0 0
  %1609 = vmatprep.subr.bf16.mxu0 0
  %1610 = vmatpush1.bf16.msra.mxu0 0
  %1611 = vmatprep.subr.bf16.mxu0 0
  %1612 = vmatpush1.bf16.msra.mxu0 0
  %1613 = vmatprep.subr.bf16.mxu0 0
  %1614 = vmatpush1.bf16.msra.mxu0 0
  %1615 = vmatprep.subr.bf16.mxu0 0
  %1616 = vmatpush1.bf16.msra.mxu0 0
  %1617 = vmatprep.mubr.bf16.mxu0 0
  %1618 = vmatmul.mubr.bf16.gmra.mrb[0].mxu0 %v1581
  %v1619 = vpop.f32.mrb[0].mxu0
  %v1620 = vadd.f32 0.0, %v1619
  %v1621 = vpop.f32.mrb[0].mxu0
  %v1622 = vpop.f32.mrb[0].mxu0
  %v1623 = vpop.f32.mrb[0].mxu0
  %1624 = vdwg.mxu0
  %v1626 = vsel %vm290, %v1577, 0
  %v1628 = vsel %vm294, %v1378, 0
  %1630 = vmatprep.subr.bf16.mxu0 0
  %1631 = vmatpush1.bf16.msra.mxu0 %v1628
  %1632 = vmatprep.subr.bf16.mxu0 0
  %1633 = vmatpush1.bf16.msra.mxu0 0
  %1634 = vmatprep.subr.bf16.mxu0 0
  %1635 = vmatpush1.bf16.msra.mxu0 0
  %1636 = vmatprep.subr.bf16.mxu0 0
  %1637 = vmatpush1.bf16.msra.mxu0 0
  %1638 = vmatprep.subr.bf16.mxu0 0
  %1639 = vmatpush1.bf16.msra.mxu0 0
  %1640 = vmatprep.subr.bf16.mxu0 0
  %1641 = vmatpush1.bf16.msra.mxu0 0
  %1642 = vmatprep.subr.bf16.mxu0 0
  %1643 = vmatpush1.bf16.msra.mxu0 0
  %1644 = vmatprep.subr.bf16.mxu0 0
  %1645 = vmatpush1.bf16.msra.mxu0 0
  %1646 = vmatprep.subr.bf16.mxu0 0
  %1647 = vmatpush1.bf16.msra.mxu0 0
  %1648 = vmatprep.subr.bf16.mxu0 0
  %1649 = vmatpush1.bf16.msra.mxu0 0
  %1650 = vmatprep.subr.bf16.mxu0 0
  %1651 = vmatpush1.bf16.msra.mxu0 0
  %1652 = vmatprep.subr.bf16.mxu0 0
  %1653 = vmatpush1.bf16.msra.mxu0 0
  %1654 = vmatprep.subr.bf16.mxu0 0
  %1655 = vmatpush1.bf16.msra.mxu0 0
  %1656 = vmatprep.subr.bf16.mxu0 0
  %1657 = vmatpush1.bf16.msra.mxu0 0
  %1658 = vmatprep.subr.bf16.mxu0 0
  %1659 = vmatpush1.bf16.msra.mxu0 0
  %1660 = vmatprep.subr.bf16.mxu0 0
  %1661 = vmatpush1.bf16.msra.mxu0 0
  %1662 = vmatprep.mubr.bf16.mxu0 0
  %1663 = vmatmul.mubr.bf16.gmra.mrb[0].mxu0 %v1626
  %v1664 = vpop.f32.mrb[0].mxu0
  %v1665 = vadd.f32 0.0, %v1664
  %v1666 = vpop.f32.mrb[0].mxu0
  %v1667 = vpop.f32.mrb[0].mxu0
  %v1668 = vpop.f32.mrb[0].mxu0
  %1669 = vdwg.mxu0
  %v1671 = vsel %vm290, %v1578, 0
  %v1673 = vsel %vm294, %v1423, 0
  %1675 = vmatprep.subr.bf16.mxu0 0
  %1676 = vmatpush1.bf16.msra.mxu0 %v1673
  %1677 = vmatprep.subr.bf16.mxu0 0
  %1678 = vmatpush1.bf16.msra.mxu0 0
  %1679 = vmatprep.subr.bf16.mxu0 0
  %1680 = vmatpush1.bf16.msra.mxu0 0
  %1681 = vmatprep.subr.bf16.mxu0 0
  %1682 = vmatpush1.bf16.msra.mxu0 0
  %1683 = vmatprep.subr.bf16.mxu0 0
  %1684 = vmatpush1.bf16.msra.mxu0 0
  %1685 = vmatprep.subr.bf16.mxu0 0
  %1686 = vmatpush1.bf16.msra.mxu0 0
  %1687 = vmatprep.subr.bf16.mxu0 0
  %1688 = vmatpush1.bf16.msra.mxu0 0
  %1689 = vmatprep.subr.bf16.mxu0 0
  %1690 = vmatpush1.bf16.msra.mxu0 0
  %1691 = vmatprep.subr.bf16.mxu0 0
  %1692 = vmatpush1.bf16.msra.mxu0 0
  %1693 = vmatprep.subr.bf16.mxu0 0
  %1694 = vmatpush1.bf16.msra.mxu0 0
  %1695 = vmatprep.subr.bf16.mxu0 0
  %1696 = vmatpush1.bf16.msra.mxu0 0
  %1697 = vmatprep.subr.bf16.mxu0 0
  %1698 = vmatpush1.bf16.msra.mxu0 0
  %1699 = vmatprep.subr.bf16.mxu0 0
  %1700 = vmatpush1.bf16.msra.mxu0 0
  %1701 = vmatprep.subr.bf16.mxu0 0
  %1702 = vmatpush1.bf16.msra.mxu0 0
  %1703 = vmatprep.subr.bf16.mxu0 0
  %1704 = vmatpush1.bf16.msra.mxu0 0
  %1705 = vmatprep.subr.bf16.mxu0 0
  %1706 = vmatpush1.bf16.msra.mxu0 0
  %1707 = vmatprep.mubr.bf16.mxu0 0
  %1708 = vmatmul.mubr.bf16.gmra.mrb[0].mxu0 %v1671
  %v1709 = vpop.f32.mrb[0].mxu0
  %v1710 = vadd.f32 0.0, %v1709
  %v1711 = vpop.f32.mrb[0].mxu0
  %v1712 = vpop.f32.mrb[0].mxu0
  %v1713 = vpop.f32.mrb[0].mxu0
  %1714 = vdwg.mxu0
  %v1716 = vsel %vm290, %v1579, 0
  %v1718 = vsel %vm294, %v1468, 0
  %1720 = vmatprep.subr.bf16.mxu0 0
  %1721 = vmatpush1.bf16.msra.mxu0 %v1718
  %1722 = vmatprep.subr.bf16.mxu0 0
  %1723 = vmatpush1.bf16.msra.mxu0 0
  %1724 = vmatprep.subr.bf16.mxu0 0
  %1725 = vmatpush1.bf16.msra.mxu0 0
  %1726 = vmatprep.subr.bf16.mxu0 0
  %1727 = vmatpush1.bf16.msra.mxu0 0
  %1728 = vmatprep.subr.bf16.mxu0 0
  %1729 = vmatpush1.bf16.msra.mxu0 0
  %1730 = vmatprep.subr.bf16.mxu0 0
  %1731 = vmatpush1.bf16.msra.mxu0 0
  %1732 = vmatprep.subr.bf16.mxu0 0
  %1733 = vmatpush1.bf16.msra.mxu0 0
  %1734 = vmatprep.subr.bf16.mxu0 0
  %1735 = vmatpush1.bf16.msra.mxu0 0
  %1736 = vmatprep.subr.bf16.mxu0 0
  %1737 = vmatpush1.bf16.msra.mxu0 0
  %1738 = vmatprep.subr.bf16.mxu0 0
  %1739 = vmatpush1.bf16.msra.mxu0 0
  %1740 = vmatprep.subr.bf16.mxu0 0
  %1741 = vmatpush1.bf16.msra.mxu0 0
  %1742 = vmatprep.subr.bf16.mxu0 0
  %1743 = vmatpush1.bf16.msra.mxu0 0
  %1744 = vmatprep.subr.bf16.mxu0 0
  %1745 = vmatpush1.bf16.msra.mxu0 0
  %1746 = vmatprep.subr.bf16.mxu0 0
  %1747 = vmatpush1.bf16.msra.mxu0 0
  %1748 = vmatprep.subr.bf16.mxu0 0
  %1749 = vmatpush1.bf16.msra.mxu0 0
  %1750 = vmatprep.subr.bf16.mxu0 0
  %1751 = vmatpush1.bf16.msra.mxu0 0
  %1752 = vmatprep.mubr.bf16.mxu0 0
  %1753 = vmatmul.mubr.bf16.gmra.mrb[0].mxu0 %v1716
  %v1754 = vpop.f32.mrb[0].mxu0
  %v1755 = vadd.f32 0.0, %v1754
  %v1756 = vpop.f32.mrb[0].mxu0
  %v1757 = vpop.f32.mrb[0].mxu0
  %v1758 = vpop.f32.mrb[0].mxu0
  %1759 = vdwg.mxu0
  %1764 = vrot.lane.b32.xlu0 %v764, 8
  %v1765 = vpop.permute.xlu0 %1764
  %1766 = vrot.lane.b32.xlu0 %v809, 8
  %v1767 = vpop.permute.xlu0 %1766
  %1768 = vrot.lane.b32.xlu0 %v854, 8
  %v1769 = vpop.permute.xlu0 %1768
  %1770 = vrot.lane.b32.xlu0 %v899, 8
  %v1771 = vpop.permute.xlu0 %1770
  %1780 = vrot.lane.b32.xlu0 %v1192, 16
  %v1781 = vpop.permute.xlu0 %1780
  %1782 = vrot.lane.b32.xlu0 %v1237, 16
  %v1783 = vpop.permute.xlu0 %1782
  %1784 = vrot.lane.b32.xlu0 %v1282, 16
  %v1785 = vpop.permute.xlu0 %1784
  %1786 = vrot.lane.b32.xlu0 %v1327, 16
  %v1787 = vpop.permute.xlu0 %1786
  %1796 = vrot.lane.b32.xlu0 %v1620, 24
  %v1797 = vpop.permute.xlu0 %1796
  %1798 = vrot.lane.b32.xlu0 %v1665, 24
  %v1799 = vpop.permute.xlu0 %1798
  %1800 = vrot.lane.b32.xlu0 %v1710, 24
  %v1801 = vpop.permute.xlu0 %1800
  %1802 = vrot.lane.b32.xlu0 %v1755, 24
  %v1803 = vpop.permute.xlu0 %1802
  %v1808 = vsel %vm24, %v332, %v1765
  %v1809 = vsel %vm24, %v377, %v1767
  %v1810 = vsel %vm24, %v422, %v1769
  %v1811 = vsel %vm24, %v467, %v1771
  %vm1812 = vcmask 130048
  %v1813 = vsel %vm1812, %v1808, %v1781
  %v1814 = vsel %vm1812, %v1809, %v1783
  %v1815 = vsel %vm1812, %v1810, %v1785
  %v1816 = vsel %vm1812, %v1811, %v1787
  %vm1817 = vcmask 195584
  %v1818 = vsel %vm1817, %v1813, %v1797
  %v1819 = vsel %vm1817, %v1814, %v1799
  %v1820 = vsel %vm1817, %v1815, %v1801
  %v1821 = vsel %vm1817, %v1816, %v1803
  %vm1822 = vcmask 257024
  %1823 = vst.msk [vmem:[%s2] sm:$0xf] %vm1822, %v1818
  %1824 = vst.msk [vmem:[%s2 + $0x4] sm:$0xf] %vm1822, %v1819
  %1825 = vst.msk [vmem:[%s2 + $0x8] sm:$0xf] %vm1822, %v1820
  %1826 = vst.msk [vmem:[%s2 + $0xc] sm:$0xf] %vm1822, %v1821
  // Predicated region
  $region10: #{_lambda_.12} parent=0 // pred_check
    _
  $region11: #{_lambda_.12} parent=0 // pred_check_branch
    %1828 = sbr.rel (0) target = $region13
  $region12: #{_lambda_.12} parent=0 // pred_region
    _
  $region13: #{_lambda_.12} parent=0 // pred_fallthru
    _
  // Predicated region
  $region14: #{_lambda_.12} parent=0 // pred_check
    _
  $region15: #{_lambda_.12} parent=0 // pred_check_branch
    %1830 = sbr.rel (0) target = $region17
  $region16: #{_lambda_.12} parent=0 // pred_region
    _
  $region17: #{_lambda_.12} parent=0 // pred_fallthru
    _

// kernel: _lambda_.13
$region0: #{_lambda_.13}
  #allocation0 [shape = 'u32[]', space=smem, size = 0x4, offset = 0x4, fixed_abs, tag = 'smem constant byte address 0x4 - core index']
  #allocation1 [shape = 'u32[144,128]{1,0:T(1,128)}', space=vmem, size = 0x12000, scoped, tag = 'internal scratch']
  %s0 = inlined_call_operand.vmem [shape: f32[8,4,32], index: 0, kind: input, shape index: {}]
  %s1 = inlined_call_operand.vmem [shape: f32[8,1,4], index: 1, kind: input, shape index: {}]
  %s2 = inlined_call_operand.vmem [shape: f32[8,4,32], index: 2, kind: output, shape index: {}]
  %s3 = sld [smem:[#allocation0]]
  $region18: #{_lambda_.13} parent=0
    _
  %s5 = ssub.s32 1, %s3
  %s6 = scalar_select 0, %s5, %s3
  // Predicated region
  $region2: #{_lambda_.13} parent=0 // pred_check
    _
  $region3: #{_lambda_.13} parent=0 // pred_check_branch
    %8 = sbr.rel (0) target = $region5
  $region4: #{_lambda_.13} parent=0 // pred_region
    _
  $region5: #{_lambda_.13} parent=0 // pred_fallthru
    _
  // Predicated region
  $region6: #{_lambda_.13} parent=0 // pred_check
    _
  $region7: #{_lambda_.13} parent=0 // pred_check_branch
    %10 = sbr.rel (0) target = $region9
  $region8: #{_lambda_.13} parent=0 // pred_region
    _
  $region9: #{_lambda_.13} parent=0 // pred_fallthru
    _
  %v12 = vld [vmem:[%s0] sm:$0xf]
  %v13 = vld [vmem:[%s0 + $0x4] sm:$0xf]
  %v14 = vld [vmem:[%s0 + $0x8] sm:$0xf]
  %v15 = vld [vmem:[%s0 + $0xc] sm:$0xf]
  %v16 = vld [vmem:[%s0 + $0x10] sm:$0xf]
  %v17 = vld [vmem:[%s0 + $0x14] sm:$0xf]
  %v18 = vld [vmem:[%s0 + $0x18] sm:$0xf]
  %v19 = vld [vmem:[%s0 + $0x1c] sm:$0xf]
  %v20 = vld [vmem:[%s1] sm:$0x1]
  %v21 = vld [vmem:[%s1 + $0x1] sm:$0x1]
  %v22 = vld [vmem:[%s1 + $0x2] sm:$0x1]
  %v23 = vld [vmem:[%s1 + $0x3] sm:$0x1]
  %v24 = vld [vmem:[%s1 + $0x4] sm:$0x1]
  %v25 = vld [vmem:[%s1 + $0x5] sm:$0x1]
  %v26 = vld [vmem:[%s1 + $0x6] sm:$0x1]
  %v27 = vld [vmem:[%s1 + $0x7] sm:$0x1]
  %v28 = vpack.c.bf16 %v12, %v12
  %v29 = vpack.c.bf16 %v13, %v13
  %v30 = vpack.c.bf16 %v14, %v14
  %v31 = vpack.c.bf16 %v15, %v15
  %v32 = vpack.c.bf16 %v16, %v16
  %v33 = vpack.c.bf16 %v17, %v17
  %v34 = vpack.c.bf16 %v18, %v18
  %v35 = vpack.c.bf16 %v19, %v19
  %vm36 = vcmask 64512
  %v38 = vsel %vm36, %v28, 0
  %40 = vmatprep.subr.bf16.mxu0 0
  %41 = vmatpush1.bf16.xpose.msra.mxu0 %v38
  %42 = vmatprep.subr.bf16.mxu0 0
  %43 = vmatpush1.bf16.xpose.msra.mxu0 0
  %44 = vmatprep.subr.bf16.mxu0 0
  %45 = vmatpush1.bf16.xpose.msra.mxu0 0
  %46 = vmatprep.subr.bf16.mxu0 0
  %47 = vmatpush1.bf16.xpose.msra.mxu0 0
  %48 = vmatprep.subr.bf16.mxu0 0
  %49 = vmatpush1.bf16.xpose.msra.mxu0 0
  %50 = vmatprep.subr.bf16.mxu0 0
  %51 = vmatpush1.bf16.xpose.msra.mxu0 0
  %52 = vmatprep.subr.bf16.mxu0 0
  %53 = vmatpush1.bf16.xpose.msra.mxu0 0
  %54 = vmatprep.subr.bf16.mxu0 0
  %55 = vmatpush1.bf16.xpose.msra.mxu0 0
  %56 = vmatprep.subr.bf16.mxu0 0
  %57 = vmatpush1.bf16.xpose.msra.mxu0 0
  %58 = vmatprep.subr.bf16.mxu0 0
  %59 = vmatpush1.bf16.xpose.msra.mxu0 0
  %60 = vmatprep.subr.bf16.mxu0 0
  %61 = vmatpush1.bf16.xpose.msra.mxu0 0
  %62 = vmatprep.subr.bf16.mxu0 0
  %63 = vmatpush1.bf16.xpose.msra.mxu0 0
  %64 = vmatprep.subr.bf16.mxu0 0
  %65 = vmatpush1.bf16.xpose.msra.mxu0 0
  %66 = vmatprep.subr.bf16.mxu0 0
  %67 = vmatpush1.bf16.xpose.msra.mxu0 0
  %68 = vmatprep.subr.bf16.mxu0 0
  %69 = vmatpush1.bf16.xpose.msra.mxu0 0
  %70 = vmatprep.subr.bf16.mxu0 0
  %71 = vmatpush1.bf16.xpose.msra.mxu0 0
  %72 = vmatprep.mubr.bf16.mxu0 0
  %73 = vmatmul.mubr.bf16.gmra.mrb[0].mxu0 %v38
  %v74 = vpop.f32.mrb[0].mxu0
  %v75 = vadd.f32 0.0, %v74
  %v76 = vpop.f32.mrb[0].mxu0
  %v77 = vpop.f32.mrb[0].mxu0
  %v78 = vpop.f32.mrb[0].mxu0
  %79 = vdwg.mxu0
  %v81 = vsel %vm36, %v29, 0
  %83 = vmatprep.subr.bf16.mxu0 0
  %84 = vmatpush1.bf16.xpose.msra.mxu0 %v81
  %85 = vmatprep.subr.bf16.mxu0 0
  %86 = vmatpush1.bf16.xpose.msra.mxu0 0
  %87 = vmatprep.subr.bf16.mxu0 0
  %88 = vmatpush1.bf16.xpose.msra.mxu0 0
  %89 = vmatprep.subr.bf16.mxu0 0
  %90 = vmatpush1.bf16.xpose.msra.mxu0 0
  %91 = vmatprep.subr.bf16.mxu0 0
  %92 = vmatpush1.bf16.xpose.msra.mxu0 0
  %93 = vmatprep.subr.bf16.mxu0 0
  %94 = vmatpush1.bf16.xpose.msra.mxu0 0
  %95 = vmatprep.subr.bf16.mxu0 0
  %96 = vmatpush1.bf16.xpose.msra.mxu0 0
  %97 = vmatprep.subr.bf16.mxu0 0
  %98 = vmatpush1.bf16.xpose.msra.mxu0 0
  %99 = vmatprep.subr.bf16.mxu0 0
  %100 = vmatpush1.bf16.xpose.msra.mxu0 0
  %101 = vmatprep.subr.bf16.mxu0 0
  %102 = vmatpush1.bf16.xpose.msra.mxu0 0
  %103 = vmatprep.subr.bf16.mxu0 0
  %104 = vmatpush1.bf16.xpose.msra.mxu0 0
  %105 = vmatprep.subr.bf16.mxu0 0
  %106 = vmatpush1.bf16.xpose.msra.mxu0 0
  %107 = vmatprep.subr.bf16.mxu0 0
  %108 = vmatpush1.bf16.xpose.msra.mxu0 0
  %109 = vmatprep.subr.bf16.mxu0 0
  %110 = vmatpush1.bf16.xpose.msra.mxu0 0
  %111 = vmatprep.subr.bf16.mxu0 0
  %112 = vmatpush1.bf16.xpose.msra.mxu0 0
  %113 = vmatprep.subr.bf16.mxu0 0
  %114 = vmatpush1.bf16.xpose.msra.mxu0 0
  %115 = vmatprep.mubr.bf16.mxu0 0
  %116 = vmatmul.mubr.bf16.gmra.mrb[0].mxu0 %v81
  %v117 = vpop.f32.mrb[0].mxu0
  %v118 = vadd.f32 0.0, %v117
  %v119 = vpop.f32.mrb[0].mxu0
  %v120 = vpop.f32.mrb[0].mxu0
  %v121 = vpop.f32.mrb[0].mxu0
  %122 = vdwg.mxu0
  %v124 = vsel %vm36, %v30, 0
  %126 = vmatprep.subr.bf16.mxu0 0
  %127 = vmatpush1.bf16.xpose.msra.mxu0 %v124
  %128 = vmatprep.subr.bf16.mxu0 0
  %129 = vmatpush1.bf16.xpose.msra.mxu0 0
  %130 = vmatprep.subr.bf16.mxu0 0
  %131 = vmatpush1.bf16.xpose.msra.mxu0 0
  %132 = vmatprep.subr.bf16.mxu0 0
  %133 = vmatpush1.bf16.xpose.msra.mxu0 0
  %134 = vmatprep.subr.bf16.mxu0 0
  %135 = vmatpush1.bf16.xpose.msra.mxu0 0
  %136 = vmatprep.subr.bf16.mxu0 0
  %137 = vmatpush1.bf16.xpose.msra.mxu0 0
  %138 = vmatprep.subr.bf16.mxu0 0
  %139 = vmatpush1.bf16.xpose.msra.mxu0 0
  %140 = vmatprep.subr.bf16.mxu0 0
  %141 = vmatpush1.bf16.xpose.msra.mxu0 0
  %142 = vmatprep.subr.bf16.mxu0 0
  %143 = vmatpush1.bf16.xpose.msra.mxu0 0
  %144 = vmatprep.subr.bf16.mxu0 0
  %145 = vmatpush1.bf16.xpose.msra.mxu0 0
  %146 = vmatprep.subr.bf16.mxu0 0
  %147 = vmatpush1.bf16.xpose.msra.mxu0 0
  %148 = vmatprep.subr.bf16.mxu0 0
  %149 = vmatpush1.bf16.xpose.msra.mxu0 0
  %150 = vmatprep.subr.bf16.mxu0 0
  %151 = vmatpush1.bf16.xpose.msra.mxu0 0
  %152 = vmatprep.subr.bf16.mxu0 0
  %153 = vmatpush1.bf16.xpose.msra.mxu0 0
  %154 = vmatprep.subr.bf16.mxu0 0
  %155 = vmatpush1.bf16.xpose.msra.mxu0 0
  %156 = vmatprep.subr.bf16.mxu0 0
  %157 = vmatpush1.bf16.xpose.msra.mxu0 0
  %158 = vmatprep.mubr.bf16.mxu0 0
  %159 = vmatmul.mubr.bf16.gmra.mrb[0].mxu0 %v124
  %v160 = vpop.f32.mrb[0].mxu0
  %v161 = vadd.f32 0.0, %v160
  %v162 = vpop.f32.mrb[0].mxu0
  %v163 = vpop.f32.mrb[0].mxu0
  %v164 = vpop.f32.mrb[0].mxu0
  %165 = vdwg.mxu0
  %v167 = vsel %vm36, %v31, 0
  %169 = vmatprep.subr.bf16.mxu0 0
  %170 = vmatpush1.bf16.xpose.msra.mxu0 %v167
  %171 = vmatprep.subr.bf16.mxu0 0
  %172 = vmatpush1.bf16.xpose.msra.mxu0 0
  %173 = vmatprep.subr.bf16.mxu0 0
  %174 = vmatpush1.bf16.xpose.msra.mxu0 0
  %175 = vmatprep.subr.bf16.mxu0 0
  %176 = vmatpush1.bf16.xpose.msra.mxu0 0
  %177 = vmatprep.subr.bf16.mxu0 0
  %178 = vmatpush1.bf16.xpose.msra.mxu0 0
  %179 = vmatprep.subr.bf16.mxu0 0
  %180 = vmatpush1.bf16.xpose.msra.mxu0 0
  %181 = vmatprep.subr.bf16.mxu0 0
  %182 = vmatpush1.bf16.xpose.msra.mxu0 0
  %183 = vmatprep.subr.bf16.mxu0 0
  %184 = vmatpush1.bf16.xpose.msra.mxu0 0
  %185 = vmatprep.subr.bf16.mxu0 0
  %186 = vmatpush1.bf16.xpose.msra.mxu0 0
  %187 = vmatprep.subr.bf16.mxu0 0
  %188 = vmatpush1.bf16.xpose.msra.mxu0 0
  %189 = vmatprep.subr.bf16.mxu0 0
  %190 = vmatpush1.bf16.xpose.msra.mxu0 0
  %191 = vmatprep.subr.bf16.mxu0 0
  %192 = vmatpush1.bf16.xpose.msra.mxu0 0
  %193 = vmatprep.subr.bf16.mxu0 0
  %194 = vmatpush1.bf16.xpose.msra.mxu0 0
  %195 = vmatprep.subr.bf16.mxu0 0
  %196 = vmatpush1.bf16.xpose.msra.mxu0 0
  %197 = vmatprep.subr.bf16.mxu0 0
  %198 = vmatpush1.bf16.xpose.msra.mxu0 0
  %199 = vmatprep.subr.bf16.mxu0 0
  %200 = vmatpush1.bf16.xpose.msra.mxu0 0
  %201 = vmatprep.mubr.bf16.mxu0 0
  %202 = vmatmul.mubr.bf16.gmra.mrb[0].mxu0 %v167
  %v203 = vpop.f32.mrb[0].mxu0
  %v204 = vadd.f32 0.0, %v203
  %v205 = vpop.f32.mrb[0].mxu0
  %v206 = vpop.f32.mrb[0].mxu0
  %v207 = vpop.f32.mrb[0].mxu0
  %208 = vdwg.mxu0
  %v210 = vsel %vm36, %v32, 0
  %212 = vmatprep.subr.bf16.mxu0 0
  %213 = vmatpush1.bf16.xpose.msra.mxu0 %v210
  %214 = vmatprep.subr.bf16.mxu0 0
  %215 = vmatpush1.bf16.xpose.msra.mxu0 0
  %216 = vmatprep.subr.bf16.mxu0 0
  %217 = vmatpush1.bf16.xpose.msra.mxu0 0
  %218 = vmatprep.subr.bf16.mxu0 0
  %219 = vmatpush1.bf16.xpose.msra.mxu0 0
  %220 = vmatprep.subr.bf16.mxu0 0
  %221 = vmatpush1.bf16.xpose.msra.mxu0 0
  %222 = vmatprep.subr.bf16.mxu0 0
  %223 = vmatpush1.bf16.xpose.msra.mxu0 0
  %224 = vmatprep.subr.bf16.mxu0 0
  %225 = vmatpush1.bf16.xpose.msra.mxu0 0
  %226 = vmatprep.subr.bf16.mxu0 0
  %227 = vmatpush1.bf16.xpose.msra.mxu0 0
  %228 = vmatprep.subr.bf16.mxu0 0
  %229 = vmatpush1.bf16.xpose.msra.mxu0 0
  %230 = vmatprep.subr.bf16.mxu0 0
  %231 = vmatpush1.bf16.xpose.msra.mxu0 0
  %232 = vmatprep.subr.bf16.mxu0 0
  %233 = vmatpush1.bf16.xpose.msra.mxu0 0
  %234 = vmatprep.subr.bf16.mxu0 0
  %235 = vmatpush1.bf16.xpose.msra.mxu0 0
  %236 = vmatprep.subr.bf16.mxu0 0
  %237 = vmatpush1.bf16.xpose.msra.mxu0 0
  %238 = vmatprep.subr.bf16.mxu0 0
  %239 = vmatpush1.bf16.xpose.msra.mxu0 0
  %240 = vmatprep.subr.bf16.mxu0 0
  %241 = vmatpush1.bf16.xpose.msra.mxu0 0
  %242 = vmatprep.subr.bf16.mxu0 0
  %243 = vmatpush1.bf16.xpose.msra.mxu0 0
  %244 = vmatprep.mubr.bf16.mxu0 0
  %245 = vmatmul.mubr.bf16.gmra.mrb[0].mxu0 %v210
  %v246 = vpop.f32.mrb[0].mxu0
  %v247 = vadd.f32 0.0, %v246
  %v248 = vpop.f32.mrb[0].mxu0
  %v249 = vpop.f32.mrb[0].mxu0
  %v250 = vpop.f32.mrb[0].mxu0
  %251 = vdwg.mxu0
  %v253 = vsel %vm36, %v33, 0
  %255 = vmatprep.subr.bf16.mxu0 0
  %256 = vmatpush1.bf16.xpose.msra.mxu0 %v253
  %257 = vmatprep.subr.bf16.mxu0 0
  %258 = vmatpush1.bf16.xpose.msra.mxu0 0
  %259 = vmatprep.subr.bf16.mxu0 0
  %260 = vmatpush1.bf16.xpose.msra.mxu0 0
  %261 = vmatprep.subr.bf16.mxu0 0
  %262 = vmatpush1.bf16.xpose.msra.mxu0 0
  %263 = vmatprep.subr.bf16.mxu0 0
  %264 = vmatpush1.bf16.xpose.msra.mxu0 0
  %265 = vmatprep.subr.bf16.mxu0 0
  %266 = vmatpush1.bf16.xpose.msra.mxu0 0
  %267 = vmatprep.subr.bf16.mxu0 0
  %268 = vmatpush1.bf16.xpose.msra.mxu0 0
  %269 = vmatprep.subr.bf16.mxu0 0
  %270 = vmatpush1.bf16.xpose.msra.mxu0 0
  %271 = vmatprep.subr.bf16.mxu0 0
  %272 = vmatpush1.bf16.xpose.msra.mxu0 0
  %273 = vmatprep.subr.bf16.mxu0 0
  %274 = vmatpush1.bf16.xpose.msra.mxu0 0
  %275 = vmatprep.subr.bf16.mxu0 0
  %276 = vmatpush1.bf16.xpose.msra.mxu0 0
  %277 = vmatprep.subr.bf16.mxu0 0
  %278 = vmatpush1.bf16.xpose.msra.mxu0 0
  %279 = vmatprep.subr.bf16.mxu0 0
  %280 = vmatpush1.bf16.xpose.msra.mxu0 0
  %281 = vmatprep.subr.bf16.mxu0 0
  %282 = vmatpush1.bf16.xpose.msra.mxu0 0
  %283 = vmatprep.subr.bf16.mxu0 0
  %284 = vmatpush1.bf16.xpose.msra.mxu0 0
  %285 = vmatprep.subr.bf16.mxu0 0
  %286 = vmatpush1.bf16.xpose.msra.mxu0 0
  %287 = vmatprep.mubr.bf16.mxu0 0
  %288 = vmatmul.mubr.bf16.gmra.mrb[0].mxu0 %v253
  %v289 = vpop.f32.mrb[0].mxu0
  %v290 = vadd.f32 0.0, %v289
  %v291 = vpop.f32.mrb[0].mxu0
  %v292 = vpop.f32.mrb[0].mxu0
  %v293 = vpop.f32.mrb[0].mxu0
  %294 = vdwg.mxu0
  %v296 = vsel %vm36, %v34, 0
  %298 = vmatprep.subr.bf16.mxu0 0
  %299 = vmatpush1.bf16.xpose.msra.mxu0 %v296
  %300 = vmatprep.subr.bf16.mxu0 0
  %301 = vmatpush1.bf16.xpose.msra.mxu0 0
  %302 = vmatprep.subr.bf16.mxu0 0
  %303 = vmatpush1.bf16.xpose.msra.mxu0 0
  %304 = vmatprep.subr.bf16.mxu0 0
  %305 = vmatpush1.bf16.xpose.msra.mxu0 0
  %306 = vmatprep.subr.bf16.mxu0 0
  %307 = vmatpush1.bf16.xpose.msra.mxu0 0
  %308 = vmatprep.subr.bf16.mxu0 0
  %309 = vmatpush1.bf16.xpose.msra.mxu0 0
  %310 = vmatprep.subr.bf16.mxu0 0
  %311 = vmatpush1.bf16.xpose.msra.mxu0 0
  %312 = vmatprep.subr.bf16.mxu0 0
  %313 = vmatpush1.bf16.xpose.msra.mxu0 0
  %314 = vmatprep.subr.bf16.mxu0 0
  %315 = vmatpush1.bf16.xpose.msra.mxu0 0
  %316 = vmatprep.subr.bf16.mxu0 0
  %317 = vmatpush1.bf16.xpose.msra.mxu0 0
  %318 = vmatprep.subr.bf16.mxu0 0
  %319 = vmatpush1.bf16.xpose.msra.mxu0 0
  %320 = vmatprep.subr.bf16.mxu0 0
  %321 = vmatpush1.bf16.xpose.msra.mxu0 0
  %322 = vmatprep.subr.bf16.mxu0 0
  %323 = vmatpush1.bf16.xpose.msra.mxu0 0
  %324 = vmatprep.subr.bf16.mxu0 0
  %325 = vmatpush1.bf16.xpose.msra.mxu0 0
  %326 = vmatprep.subr.bf16.mxu0 0
  %327 = vmatpush1.bf16.xpose.msra.mxu0 0
  %328 = vmatprep.subr.bf16.mxu0 0
  %329 = vmatpush1.bf16.xpose.msra.mxu0 0
  %330 = vmatprep.mubr.bf16.mxu0 0
  %331 = vmatmul.mubr.bf16.gmra.mrb[0].mxu0 %v296
  %v332 = vpop.f32.mrb[0].mxu0
  %v333 = vadd.f32 0.0, %v332
  %v334 = vpop.f32.mrb[0].mxu0
  %v335 = vpop.f32.mrb[0].mxu0
  %v336 = vpop.f32.mrb[0].mxu0
  %337 = vdwg.mxu0
  %v339 = vsel %vm36, %v35, 0
  %341 = vmatprep.subr.bf16.mxu0 0
  %342 = vmatpush1.bf16.xpose.msra.mxu0 %v339
  %343 = vmatprep.subr.bf16.mxu0 0
  %344 = vmatpush1.bf16.xpose.msra.mxu0 0
  %345 = vmatprep.subr.bf16.mxu0 0
  %346 = vmatpush1.bf16.xpose.msra.mxu0 0
  %347 = vmatprep.subr.bf16.mxu0 0
  %348 = vmatpush1.bf16.xpose.msra.mxu0 0
  %349 = vmatprep.subr.bf16.mxu0 0
  %350 = vmatpush1.bf16.xpose.msra.mxu0 0
  %351 = vmatprep.subr.bf16.mxu0 0
  %352 = vmatpush1.bf16.xpose.msra.mxu0 0
  %353 = vmatprep.subr.bf16.mxu0 0
  %354 = vmatpush1.bf16.xpose.msra.mxu0 0
  %355 = vmatprep.subr.bf16.mxu0 0
  %356 = vmatpush1.bf16.xpose.msra.mxu0 0
  %357 = vmatprep.subr.bf16.mxu0 0
  %358 = vmatpush1.bf16.xpose.msra.mxu0 0
  %359 = vmatprep.subr.bf16.mxu0 0
  %360 = vmatpush1.bf16.xpose.msra.mxu0 0
  %361 = vmatprep.subr.bf16.mxu0 0
  %362 = vmatpush1.bf16.xpose.msra.mxu0 0
  %363 = vmatprep.subr.bf16.mxu0 0
  %364 = vmatpush1.bf16.xpose.msra.mxu0 0
  %365 = vmatprep.subr.bf16.mxu0 0
  %366 = vmatpush1.bf16.xpose.msra.mxu0 0
  %367 = vmatprep.subr.bf16.mxu0 0
  %368 = vmatpush1.bf16.xpose.msra.mxu0 0
  %369 = vmatprep.subr.bf16.mxu0 0
  %370 = vmatpush1.bf16.xpose.msra.mxu0 0
  %371 = vmatprep.subr.bf16.mxu0 0
  %372 = vmatpush1.bf16.xpose.msra.mxu0 0
  %373 = vmatprep.mubr.bf16.mxu0 0
  %374 = vmatmul.mubr.bf16.gmra.mrb[0].mxu0 %v339
  %v375 = vpop.f32.mrb[0].mxu0
  %v376 = vadd.f32 0.0, %v375
  %v377 = vpop.f32.mrb[0].mxu0
  %v378 = vpop.f32.mrb[0].mxu0
  %v379 = vpop.f32.mrb[0].mxu0
  %380 = vdwg.mxu0
  %v381 = vmul.f32 %v75, 0.35355338
  %v382 = vmul.f32 %v118, 0.35355338
  %v383 = vmul.f32 %v161, 0.35355338
  %v384 = vmul.f32 %v204, 0.35355338
  %v385 = vmul.f32 %v247, 0.35355338
  %v386 = vmul.f32 %v290, 0.35355338
  %v387 = vmul.f32 %v333, 0.35355338
  %v388 = vmul.f32 %v376, 0.35355338
  %v397 = vlaneseq
  %v398 = vshrl.u32 %v397, 7
  %v399 = vsub.s32 0, %v398
  %v400 = vrot.slane %v20, %v399
  %v401 = vlaneseq
  %v402 = vshrl.u32 %v401, 7
  %v403 = vsub.s32 0, %v402
  %v404 = vrot.slane %v21, %v403
  %v405 = vlaneseq
  %v406 = vshrl.u32 %v405, 7
  %v407 = vsub.s32 0, %v406
  %v408 = vrot.slane %v22, %v407
  %v409 = vlaneseq
  %v410 = vshrl.u32 %v409, 7
  %v411 = vsub.s32 0, %v410
  %v412 = vrot.slane %v23, %v411
  %v413 = vlaneseq
  %v414 = vshrl.u32 %v413, 7
  %v415 = vsub.s32 0, %v414
  %v416 = vrot.slane %v24, %v415
  %v417 = vlaneseq
  %v418 = vshrl.u32 %v417, 7
  %v419 = vsub.s32 0, %v418
  %v420 = vrot.slane %v25, %v419
  %v421 = vlaneseq
  %v422 = vshrl.u32 %v421, 7
  %v423 = vsub.s32 0, %v422
  %v424 = vrot.slane %v26, %v423
  %v425 = vlaneseq
  %v426 = vshrl.u32 %v425, 7
  %v427 = vsub.s32 0, %v426
  %v428 = vrot.slane %v27, %v427
  %v437 = vadd.f32 %v381, %v400
  %v438 = vadd.f32 %v382, %v404
  %v439 = vadd.f32 %v383, %v408
  %v440 = vadd.f32 %v384, %v412
  %v441 = vadd.f32 %v385, %v416
  %v442 = vadd.f32 %v386, %v420
  %v443 = vadd.f32 %v387, %v424
  %v444 = vadd.f32 %v388, %v428
  %vm445 = vcmask 27648
  %v446 = vsel %vm445, %v437, -inf
  %447 = vmax.xlane.f32.xlu0 %v446
  %v448 = vpop.xlane.xlu0 %447
  %v449 = vsel %vm445, %v438, -inf
  %450 = vmax.xlane.f32.xlu0 %v449
  %v451 = vpop.xlane.xlu0 %450
  %v452 = vsel %vm445, %v439, -inf
  %453 = vmax.xlane.f32.xlu0 %v452
  %v454 = vpop.xlane.xlu0 %453
  %v455 = vsel %vm445, %v440, -inf
  %456 = vmax.xlane.f32.xlu0 %v455
  %v457 = vpop.xlane.xlu0 %456
  %v458 = vsel %vm445, %v441, -inf
  %459 = vmax.xlane.f32.xlu0 %v458
  %v460 = vpop.xlane.xlu0 %459
  %v461 = vsel %vm445, %v442, -inf
  %462 = vmax.xlane.f32.xlu0 %v461
  %v463 = vpop.xlane.xlu0 %462
  %v464 = vsel %vm445, %v443, -inf
  %465 = vmax.xlane.f32.xlu0 %v464
  %v466 = vpop.xlane.xlu0 %465
  %v467 = vsel %vm445, %v444, -inf
  %468 = vmax.xlane.f32.xlu0 %v467
  %v469 = vpop.xlane.xlu0 %468
  %vm470 = vcmp.eq.f32.partialorder %v448, -inf
  %vm471 = vcmp.eq.f32.partialorder %v451, -inf
  %vm472 = vcmp.eq.f32.partialorder %v454, -inf
  %vm473 = vcmp.eq.f32.partialorder %v457, -inf
  %vm474 = vcmp.eq.f32.partialorder %v460, -inf
  %vm475 = vcmp.eq.f32.partialorder %v463, -inf
  %vm476 = vcmp.eq.f32.partialorder %v466, -inf
  %vm477 = vcmp.eq.f32.partialorder %v469, -inf
  %v478 = vsel %vm470, 0.0, %v448
  %v479 = vsel %vm471, 0.0, %v451
  %v480 = vsel %vm472, 0.0, %v454
  %v481 = vsel %vm473, 0.0, %v457
  %v482 = vsel %vm474, 0.0, %v460
  %v483 = vsel %vm475, 0.0, %v463
  %v484 = vsel %vm476, 0.0, %v466
  %v485 = vsel %vm477, 0.0, %v469
  %v486 = vsub.f32 %v437, %v478
  %v487 = vsub.f32 %v438, %v479
  %v488 = vsub.f32 %v439, %v480
  %v489 = vsub.f32 %v440, %v481
  %v490 = vsub.f32 %v441, %v482
  %v491 = vsub.f32 %v442, %v483
  %v492 = vsub.f32 %v443, %v484
  %v493 = vsub.f32 %v444, %v485
  %v494 = vmul.f32 %v486, 1.442695
  %v495 = vpow.pop %v494
  %v496 = vmul.f32 %v487, 1.442695
  %v497 = vpow.pop %v496
  %v498 = vmul.f32 %v488, 1.442695
  %v499 = vpow.pop %v498
  %v500 = vmul.f32 %v489, 1.442695
  %v501 = vpow.pop %v500
  %v502 = vmul.f32 %v490, 1.442695
  %v503 = vpow.pop %v502
  %v504 = vmul.f32 %v491, 1.442695
  %v505 = vpow.pop %v504
  %v506 = vmul.f32 %v492, 1.442695
  %v507 = vpow.pop %v506
  %v508 = vmul.f32 %v493, 1.442695
  %v509 = vpow.pop %v508
  %v510 = vsel %vm445, %v495, 0.0
  %511 = vadd.xlane.f32.xlu0 %v510
  %v512 = vpop.xlane.xlu0 %511
  %v513 = vsel %vm445, %v497, 0.0
  %514 = vadd.xlane.f32.xlu0 %v513
  %v515 = vpop.xlane.xlu0 %514
  %v516 = vsel %vm445, %v499, 0.0
  %517 = vadd.xlane.f32.xlu0 %v516
  %v518 = vpop.xlane.xlu0 %517
  %v519 = vsel %vm445, %v501, 0.0
  %520 = vadd.xlane.f32.xlu0 %v519
  %v521 = vpop.xlane.xlu0 %520
  %v522 = vsel %vm445, %v503, 0.0
  %523 = vadd.xlane.f32.xlu0 %v522
  %v524 = vpop.xlane.xlu0 %523
  %v525 = vsel %vm445, %v505, 0.0
  %526 = vadd.xlane.f32.xlu0 %v525
  %v527 = vpop.xlane.xlu0 %526
  %v528 = vsel %vm445, %v507, 0.0
  %529 = vadd.xlane.f32.xlu0 %v528
  %v530 = vpop.xlane.xlu0 %529
  %v531 = vsel %vm445, %v509, 0.0
  %532 = vadd.xlane.f32.xlu0 %v531
  %v533 = vpop.xlane.xlu0 %532
  %v534 = vmax.f32 %v512, 1e-30
  %v535 = vmax.f32 %v515, 1e-30
  %v536 = vmax.f32 %v518, 1e-30
  %v537 = vmax.f32 %v521, 1e-30
  %v538 = vmax.f32 %v524, 1e-30
  %v539 = vmax.f32 %v527, 1e-30
  %v540 = vmax.f32 %v530, 1e-30
  %v541 = vmax.f32 %v533, 1e-30
  %v542 = vrcp.pop %v534
  %v543 = vmul.f32 %v495, %v542
  %v544 = vrcp.pop %v535
  %v545 = vmul.f32 %v497, %v544
  %v546 = vrcp.pop %v536
  %v547 = vmul.f32 %v499, %v546
  %v548 = vrcp.pop %v537
  %v549 = vmul.f32 %v501, %v548
  %v550 = vrcp.pop %v538
  %v551 = vmul.f32 %v503, %v550
  %v552 = vrcp.pop %v539
  %v553 = vmul.f32 %v505, %v552
  %v554 = vrcp.pop %v540
  %v555 = vmul.f32 %v507, %v554
  %v556 = vrcp.pop %v541
  %v557 = vmul.f32 %v509, %v556
  %v558 = vpack.c.bf16 %v543, %v543
  %v559 = vpack.c.bf16 %v545, %v545
  %v560 = vpack.c.bf16 %v547, %v547
  %v561 = vpack.c.bf16 %v549, %v549
  %v562 = vpack.c.bf16 %v551, %v551
  %v563 = vpack.c.bf16 %v553, %v553
  %v564 = vpack.c.bf16 %v555, %v555
  %v565 = vpack.c.bf16 %v557, %v557
  %vm566 = vcmask 31744
  %v568 = vsel %vm566, %v558, 0
  %vm570 = vcmask 1041408
  %v571 = vsel %vm570, %v28, 0
  %573 = vmatprep.subr.bf16.mxu0 0
  %574 = vmatpush1.bf16.msra.mxu0 %v571
  %575 = vmatprep.subr.bf16.mxu0 0
  %576 = vmatpush1.bf16.msra.mxu0 0
  %577 = vmatprep.subr.bf16.mxu0 0
  %578 = vmatpush1.bf16.msra.mxu0 0
  %579 = vmatprep.subr.bf16.mxu0 0
  %580 = vmatpush1.bf16.msra.mxu0 0
  %581 = vmatprep.subr.bf16.mxu0 0
  %582 = vmatpush1.bf16.msra.mxu0 0
  %583 = vmatprep.subr.bf16.mxu0 0
  %584 = vmatpush1.bf16.msra.mxu0 0
  %585 = vmatprep.subr.bf16.mxu0 0
  %586 = vmatpush1.bf16.msra.mxu0 0
  %587 = vmatprep.subr.bf16.mxu0 0
  %588 = vmatpush1.bf16.msra.mxu0 0
  %589 = vmatprep.subr.bf16.mxu0 0
  %590 = vmatpush1.bf16.msra.mxu0 0
  %591 = vmatprep.subr.bf16.mxu0 0
  %592 = vmatpush1.bf16.msra.mxu0 0
  %593 = vmatprep.subr.bf16.mxu0 0
  %594 = vmatpush1.bf16.msra.mxu0 0
  %595 = vmatprep.subr.bf16.mxu0 0
  %596 = vmatpush1.bf16.msra.mxu0 0
  %597 = vmatprep.subr.bf16.mxu0 0
  %598 = vmatpush1.bf16.msra.mxu0 0
  %599 = vmatprep.subr.bf16.mxu0 0
  %600 = vmatpush1.bf16.msra.mxu0 0
  %601 = vmatprep.subr.bf16.mxu0 0
  %602 = vmatpush1.bf16.msra.mxu0 0
  %603 = vmatprep.subr.bf16.mxu0 0
  %604 = vmatpush1.bf16.msra.mxu0 0
  %605 = vmatprep.mubr.bf16.mxu0 0
  %606 = vmatmul.mubr.bf16.gmra.mrb[0].mxu0 %v568
  %v607 = vpop.f32.mrb[0].mxu0
  %v608 = vadd.f32 0.0, %v607
  %v609 = vpop.f32.mrb[0].mxu0
  %v610 = vpop.f32.mrb[0].mxu0
  %v611 = vpop.f32.mrb[0].mxu0
  %612 = vdwg.mxu0
  %v614 = vsel %vm566, %v559, 0
  %v616 = vsel %vm570, %v29, 0
  %618 = vmatprep.subr.bf16.mxu0 0
  %619 = vmatpush1.bf16.msra.mxu0 %v616
  %620 = vmatprep.subr.bf16.mxu0 0
  %621 = vmatpush1.bf16.msra.mxu0 0
  %622 = vmatprep.subr.bf16.mxu0 0
  %623 = vmatpush1.bf16.msra.mxu0 0
  %624 = vmatprep.subr.bf16.mxu0 0
  %625 = vmatpush1.bf16.msra.mxu0 0
  %626 = vmatprep.subr.bf16.mxu0 0
  %627 = vmatpush1.bf16.msra.mxu0 0
  %628 = vmatprep.subr.bf16.mxu0 0
  %629 = vmatpush1.bf16.msra.mxu0 0
  %630 = vmatprep.subr.bf16.mxu0 0
  %631 = vmatpush1.bf16.msra.mxu0 0
  %632 = vmatprep.subr.bf16.mxu0 0
  %633 = vmatpush1.bf16.msra.mxu0 0
  %634 = vmatprep.subr.bf16.mxu0 0
  %635 = vmatpush1.bf16.msra.mxu0 0
  %636 = vmatprep.subr.bf16.mxu0 0
  %637 = vmatpush1.bf16.msra.mxu0 0
  %638 = vmatprep.subr.bf16.mxu0 0
  %639 = vmatpush1.bf16.msra.mxu0 0
  %640 = vmatprep.subr.bf16.mxu0 0
  %641 = vmatpush1.bf16.msra.mxu0 0
  %642 = vmatprep.subr.bf16.mxu0 0
  %643 = vmatpush1.bf16.msra.mxu0 0
  %644 = vmatprep.subr.bf16.mxu0 0
  %645 = vmatpush1.bf16.msra.mxu0 0
  %646 = vmatprep.subr.bf16.mxu0 0
  %647 = vmatpush1.bf16.msra.mxu0 0
  %648 = vmatprep.subr.bf16.mxu0 0
  %649 = vmatpush1.bf16.msra.mxu0 0
  %650 = vmatprep.mubr.bf16.mxu0 0
  %651 = vmatmul.mubr.bf16.gmra.mrb[0].mxu0 %v614
  %v652 = vpop.f32.mrb[0].mxu0
  %v653 = vadd.f32 0.0, %v652
  %v654 = vpop.f32.mrb[0].mxu0
  %v655 = vpop.f32.mrb[0].mxu0
  %v656 = vpop.f32.mrb[0].mxu0
  %657 = vdwg.mxu0
  %v659 = vsel %vm566, %v560, 0
  %v661 = vsel %vm570, %v30, 0
  %663 = vmatprep.subr.bf16.mxu0 0
  %664 = vmatpush1.bf16.msra.mxu0 %v661
  %665 = vmatprep.subr.bf16.mxu0 0
  %666 = vmatpush1.bf16.msra.mxu0 0
  %667 = vmatprep.subr.bf16.mxu0 0
  %668 = vmatpush1.bf16.msra.mxu0 0
  %669 = vmatprep.subr.bf16.mxu0 0
  %670 = vmatpush1.bf16.msra.mxu0 0
  %671 = vmatprep.subr.bf16.mxu0 0
  %672 = vmatpush1.bf16.msra.mxu0 0
  %673 = vmatprep.subr.bf16.mxu0 0
  %674 = vmatpush1.bf16.msra.mxu0 0
  %675 = vmatprep.subr.bf16.mxu0 0
  %676 = vmatpush1.bf16.msra.mxu0 0
  %677 = vmatprep.subr.bf16.mxu0 0
  %678 = vmatpush1.bf16.msra.mxu0 0
  %679 = vmatprep.subr.bf16.mxu0 0
  %680 = vmatpush1.bf16.msra.mxu0 0
  %681 = vmatprep.subr.bf16.mxu0 0
  %682 = vmatpush1.bf16.msra.mxu0 0
  %683 = vmatprep.subr.bf16.mxu0 0
  %684 = vmatpush1.bf16.msra.mxu0 0
  %685 = vmatprep.subr.bf16.mxu0 0
  %686 = vmatpush1.bf16.msra.mxu0 0
  %687 = vmatprep.subr.bf16.mxu0 0
  %688 = vmatpush1.bf16.msra.mxu0 0
  %689 = vmatprep.subr.bf16.mxu0 0
  %690 = vmatpush1.bf16.msra.mxu0 0
  %691 = vmatprep.subr.bf16.mxu0 0
  %692 = vmatpush1.bf16.msra.mxu0 0
  %693 = vmatprep.subr.bf16.mxu0 0
  %694 = vmatpush1.bf16.msra.mxu0 0
  %695 = vmatprep.mubr.bf16.mxu0 0
  %696 = vmatmul.mubr.bf16.gmra.mrb[0].mxu0 %v659
  %v697 = vpop.f32.mrb[0].mxu0
  %v698 = vadd.f32 0.0, %v697
  %v699 = vpop.f32.mrb[0].mxu0
  %v700 = vpop.f32.mrb[0].mxu0
  %v701 = vpop.f32.mrb[0].mxu0
  %702 = vdwg.mxu0
  %v704 = vsel %vm566, %v561, 0
  %v706 = vsel %vm570, %v31, 0
  %708 = vmatprep.subr.bf16.mxu0 0
  %709 = vmatpush1.bf16.msra.mxu0 %v706
  %710 = vmatprep.subr.bf16.mxu0 0
  %711 = vmatpush1.bf16.msra.mxu0 0
  %712 = vmatprep.subr.bf16.mxu0 0
  %713 = vmatpush1.bf16.msra.mxu0 0
  %714 = vmatprep.subr.bf16.mxu0 0
  %715 = vmatpush1.bf16.msra.mxu0 0
  %716 = vmatprep.subr.bf16.mxu0 0
  %717 = vmatpush1.bf16.msra.mxu0 0
  %718 = vmatprep.subr.bf16.mxu0 0
  %719 = vmatpush1.bf16.msra.mxu0 0
  %720 = vmatprep.subr.bf16.mxu0 0
  %721 = vmatpush1.bf16.msra.mxu0 0
  %722 = vmatprep.subr.bf16.mxu0 0
  %723 = vmatpush1.bf16.msra.mxu0 0
  %724 = vmatprep.subr.bf16.mxu0 0
  %725 = vmatpush1.bf16.msra.mxu0 0
  %726 = vmatprep.subr.bf16.mxu0 0
  %727 = vmatpush1.bf16.msra.mxu0 0
  %728 = vmatprep.subr.bf16.mxu0 0
  %729 = vmatpush1.bf16.msra.mxu0 0
  %730 = vmatprep.subr.bf16.mxu0 0
  %731 = vmatpush1.bf16.msra.mxu0 0
  %732 = vmatprep.subr.bf16.mxu0 0
  %733 = vmatpush1.bf16.msra.mxu0 0
  %734 = vmatprep.subr.bf16.mxu0 0
  %735 = vmatpush1.bf16.msra.mxu0 0
  %736 = vmatprep.subr.bf16.mxu0 0
  %737 = vmatpush1.bf16.msra.mxu0 0
  %738 = vmatprep.subr.bf16.mxu0 0
  %739 = vmatpush1.bf16.msra.mxu0 0
  %740 = vmatprep.mubr.bf16.mxu0 0
  %741 = vmatmul.mubr.bf16.gmra.mrb[0].mxu0 %v704
  %v742 = vpop.f32.mrb[0].mxu0
  %v743 = vadd.f32 0.0, %v742
  %v744 = vpop.f32.mrb[0].mxu0
  %v745 = vpop.f32.mrb[0].mxu0
  %v746 = vpop.f32.mrb[0].mxu0
  %747 = vdwg.mxu0
  %v749 = vsel %vm566, %v562, 0
  %v751 = vsel %vm570, %v32, 0
  %753 = vmatprep.subr.bf16.mxu0 0
  %754 = vmatpush1.bf16.msra.mxu0 %v751
  %755 = vmatprep.subr.bf16.mxu0 0
  %756 = vmatpush1.bf16.msra.mxu0 0
  %757 = vmatprep.subr.bf16.mxu0 0
  %758 = vmatpush1.bf16.msra.mxu0 0
  %759 = vmatprep.subr.bf16.mxu0 0
  %760 = vmatpush1.bf16.msra.mxu0 0
  %761 = vmatprep.subr.bf16.mxu0 0
  %762 = vmatpush1.bf16.msra.mxu0 0
  %763 = vmatprep.subr.bf16.mxu0 0
  %764 = vmatpush1.bf16.msra.mxu0 0
  %765 = vmatprep.subr.bf16.mxu0 0
  %766 = vmatpush1.bf16.msra.mxu0 0
  %767 = vmatprep.subr.bf16.mxu0 0
  %768 = vmatpush1.bf16.msra.mxu0 0
  %769 = vmatprep.subr.bf16.mxu0 0
  %770 = vmatpush1.bf16.msra.mxu0 0
  %771 = vmatprep.subr.bf16.mxu0 0
  %772 = vmatpush1.bf16.msra.mxu0 0
  %773 = vmatprep.subr.bf16.mxu0 0
  %774 = vmatpush1.bf16.msra.mxu0 0
  %775 = vmatprep.subr.bf16.mxu0 0
  %776 = vmatpush1.bf16.msra.mxu0 0
  %777 = vmatprep.subr.bf16.mxu0 0
  %778 = vmatpush1.bf16.msra.mxu0 0
  %779 = vmatprep.subr.bf16.mxu0 0
  %780 = vmatpush1.bf16.msra.mxu0 0
  %781 = vmatprep.subr.bf16.mxu0 0
  %782 = vmatpush1.bf16.msra.mxu0 0
  %783 = vmatprep.subr.bf16.mxu0 0
  %784 = vmatpush1.bf16.msra.mxu0 0
  %785 = vmatprep.mubr.bf16.mxu0 0
  %786 = vmatmul.mubr.bf16.gmra.mrb[0].mxu0 %v749
  %v787 = vpop.f32.mrb[0].mxu0
  %v788 = vadd.f32 0.0, %v787
  %v789 = vpop.f32.mrb[0].mxu0
  %v790 = vpop.f32.mrb[0].mxu0
  %v791 = vpop.f32.mrb[0].mxu0
  %792 = vdwg.mxu0
  %v794 = vsel %vm566, %v563, 0
  %v796 = vsel %vm570, %v33, 0
  %798 = vmatprep.subr.bf16.mxu0 0
  %799 = vmatpush1.bf16.msra.mxu0 %v796
  %800 = vmatprep.subr.bf16.mxu0 0
  %801 = vmatpush1.bf16.msra.mxu0 0
  %802 = vmatprep.subr.bf16.mxu0 0
  %803 = vmatpush1.bf16.msra.mxu0 0
  %804 = vmatprep.subr.bf16.mxu0 0
  %805 = vmatpush1.bf16.msra.mxu0 0
  %806 = vmatprep.subr.bf16.mxu0 0
  %807 = vmatpush1.bf16.msra.mxu0 0
  %808 = vmatprep.subr.bf16.mxu0 0
  %809 = vmatpush1.bf16.msra.mxu0 0
  %810 = vmatprep.subr.bf16.mxu0 0
  %811 = vmatpush1.bf16.msra.mxu0 0
  %812 = vmatprep.subr.bf16.mxu0 0
  %813 = vmatpush1.bf16.msra.mxu0 0
  %814 = vmatprep.subr.bf16.mxu0 0
  %815 = vmatpush1.bf16.msra.mxu0 0
  %816 = vmatprep.subr.bf16.mxu0 0
  %817 = vmatpush1.bf16.msra.mxu0 0
  %818 = vmatprep.subr.bf16.mxu0 0
  %819 = vmatpush1.bf16.msra.mxu0 0
  %820 = vmatprep.subr.bf16.mxu0 0
  %821 = vmatpush1.bf16.msra.mxu0 0
  %822 = vmatprep.subr.bf16.mxu0 0
  %823 = vmatpush1.bf16.msra.mxu0 0
  %824 = vmatprep.subr.bf16.mxu0 0
  %825 = vmatpush1.bf16.msra.mxu0 0
  %826 = vmatprep.subr.bf16.mxu0 0
  %827 = vmatpush1.bf16.msra.mxu0 0
  %828 = vmatprep.subr.bf16.mxu0 0
  %829 = vmatpush1.bf16.msra.mxu0 0
  %830 = vmatprep.mubr.bf16.mxu0 0
  %831 = vmatmul.mubr.bf16.gmra.mrb[0].mxu0 %v794
  %v832 = vpop.f32.mrb[0].mxu0
  %v833 = vadd.f32 0.0, %v832
  %v834 = vpop.f32.mrb[0].mxu0
  %v835 = vpop.f32.mrb[0].mxu0
  %v836 = vpop.f32.mrb[0].mxu0
  %837 = vdwg.mxu0
  %v839 = vsel %vm566, %v564, 0
  %v841 = vsel %vm570, %v34, 0
  %843 = vmatprep.subr.bf16.mxu0 0
  %844 = vmatpush1.bf16.msra.mxu0 %v841
  %845 = vmatprep.subr.bf16.mxu0 0
  %846 = vmatpush1.bf16.msra.mxu0 0
  %847 = vmatprep.subr.bf16.mxu0 0
  %848 = vmatpush1.bf16.msra.mxu0 0
  %849 = vmatprep.subr.bf16.mxu0 0
  %850 = vmatpush1.bf16.msra.mxu0 0
  %851 = vmatprep.subr.bf16.mxu0 0
  %852 = vmatpush1.bf16.msra.mxu0 0
  %853 = vmatprep.subr.bf16.mxu0 0
  %854 = vmatpush1.bf16.msra.mxu0 0
  %855 = vmatprep.subr.bf16.mxu0 0
  %856 = vmatpush1.bf16.msra.mxu0 0
  %857 = vmatprep.subr.bf16.mxu0 0
  %858 = vmatpush1.bf16.msra.mxu0 0
  %859 = vmatprep.subr.bf16.mxu0 0
  %860 = vmatpush1.bf16.msra.mxu0 0
  %861 = vmatprep.subr.bf16.mxu0 0
  %862 = vmatpush1.bf16.msra.mxu0 0
  %863 = vmatprep.subr.bf16.mxu0 0
  %864 = vmatpush1.bf16.msra.mxu0 0
  %865 = vmatprep.subr.bf16.mxu0 0
  %866 = vmatpush1.bf16.msra.mxu0 0
  %867 = vmatprep.subr.bf16.mxu0 0
  %868 = vmatpush1.bf16.msra.mxu0 0
  %869 = vmatprep.subr.bf16.mxu0 0
  %870 = vmatpush1.bf16.msra.mxu0 0
  %871 = vmatprep.subr.bf16.mxu0 0
  %872 = vmatpush1.bf16.msra.mxu0 0
  %873 = vmatprep.subr.bf16.mxu0 0
  %874 = vmatpush1.bf16.msra.mxu0 0
  %875 = vmatprep.mubr.bf16.mxu0 0
  %876 = vmatmul.mubr.bf16.gmra.mrb[0].mxu0 %v839
  %v877 = vpop.f32.mrb[0].mxu0
  %v878 = vadd.f32 0.0, %v877
  %v879 = vpop.f32.mrb[0].mxu0
  %v880 = vpop.f32.mrb[0].mxu0
  %v881 = vpop.f32.mrb[0].mxu0
  %882 = vdwg.mxu0
  %v884 = vsel %vm566, %v565, 0
  %v886 = vsel %vm570, %v35, 0
  %888 = vmatprep.subr.bf16.mxu0 0
  %889 = vmatpush1.bf16.msra.mxu0 %v886
  %890 = vmatprep.subr.bf16.mxu0 0
  %891 = vmatpush1.bf16.msra.mxu0 0
  %892 = vmatprep.subr.bf16.mxu0 0
  %893 = vmatpush1.bf16.msra.mxu0 0
  %894 = vmatprep.subr.bf16.mxu0 0
  %895 = vmatpush1.bf16.msra.mxu0 0
  %896 = vmatprep.subr.bf16.mxu0 0
  %897 = vmatpush1.bf16.msra.mxu0 0
  %898 = vmatprep.subr.bf16.mxu0 0
  %899 = vmatpush1.bf16.msra.mxu0 0
  %900 = vmatprep.subr.bf16.mxu0 0
  %901 = vmatpush1.bf16.msra.mxu0 0
  %902 = vmatprep.subr.bf16.mxu0 0
  %903 = vmatpush1.bf16.msra.mxu0 0
  %904 = vmatprep.subr.bf16.mxu0 0
  %905 = vmatpush1.bf16.msra.mxu0 0
  %906 = vmatprep.subr.bf16.mxu0 0
  %907 = vmatpush1.bf16.msra.mxu0 0
  %908 = vmatprep.subr.bf16.mxu0 0
  %909 = vmatpush1.bf16.msra.mxu0 0
  %910 = vmatprep.subr.bf16.mxu0 0
  %911 = vmatpush1.bf16.msra.mxu0 0
  %912 = vmatprep.subr.bf16.mxu0 0
  %913 = vmatpush1.bf16.msra.mxu0 0
  %914 = vmatprep.subr.bf16.mxu0 0
  %915 = vmatpush1.bf16.msra.mxu0 0
  %916 = vmatprep.subr.bf16.mxu0 0
  %917 = vmatpush1.bf16.msra.mxu0 0
  %918 = vmatprep.subr.bf16.mxu0 0
  %919 = vmatpush1.bf16.msra.mxu0 0
  %920 = vmatprep.mubr.bf16.mxu0 0
  %921 = vmatmul.mubr.bf16.gmra.mrb[0].mxu0 %v884
  %v922 = vpop.f32.mrb[0].mxu0
  %v923 = vadd.f32 0.0, %v922
  %v924 = vpop.f32.mrb[0].mxu0
  %v925 = vpop.f32.mrb[0].mxu0
  %v926 = vpop.f32.mrb[0].mxu0
  %927 = vdwg.mxu0
  %929 = vrot.lane.b32.xlu0 %v28, 120
  %v930 = vpop.permute.xlu0 %929
  %v932 = vsel %vm36, %v930, 0
  %934 = vmatprep.subr.bf16.mxu0 0
  %935 = vmatpush1.bf16.xpose.msra.mxu0 %v932
  %936 = vmatprep.subr.bf16.mxu0 0
  %937 = vmatpush1.bf16.xpose.msra.mxu0 0
  %938 = vmatprep.subr.bf16.mxu0 0
  %939 = vmatpush1.bf16.xpose.msra.mxu0 0
  %940 = vmatprep.subr.bf16.mxu0 0
  %941 = vmatpush1.bf16.xpose.msra.mxu0 0
  %942 = vmatprep.subr.bf16.mxu0 0
  %943 = vmatpush1.bf16.xpose.msra.mxu0 0
  %944 = vmatprep.subr.bf16.mxu0 0
  %945 = vmatpush1.bf16.xpose.msra.mxu0 0
  %946 = vmatprep.subr.bf16.mxu0 0
  %947 = vmatpush1.bf16.xpose.msra.mxu0 0
  %948 = vmatprep.subr.bf16.mxu0 0
  %949 = vmatpush1.bf16.xpose.msra.mxu0 0
  %950 = vmatprep.subr.bf16.mxu0 0
  %951 = vmatpush1.bf16.xpose.msra.mxu0 0
  %952 = vmatprep.subr.bf16.mxu0 0
  %953 = vmatpush1.bf16.xpose.msra.mxu0 0
  %954 = vmatprep.subr.bf16.mxu0 0
  %955 = vmatpush1.bf16.xpose.msra.mxu0 0
  %956 = vmatprep.subr.bf16.mxu0 0
  %957 = vmatpush1.bf16.xpose.msra.mxu0 0
  %958 = vmatprep.subr.bf16.mxu0 0
  %959 = vmatpush1.bf16.xpose.msra.mxu0 0
  %960 = vmatprep.subr.bf16.mxu0 0
  %961 = vmatpush1.bf16.xpose.msra.mxu0 0
  %962 = vmatprep.subr.bf16.mxu0 0
  %963 = vmatpush1.bf16.xpose.msra.mxu0 0
  %964 = vmatprep.subr.bf16.mxu0 0
  %965 = vmatpush1.bf16.xpose.msra.mxu0 0
  %966 = vmatprep.mubr.bf16.mxu0 0
  %967 = vmatmul.mubr.bf16.gmra.mrb[0].mxu0 %v932
  %v968 = vpop.f32.mrb[0].mxu0
  %v969 = vadd.f32 0.0, %v968
  %v970 = vpop.f32.mrb[0].mxu0
  %v971 = vpop.f32.mrb[0].mxu0
  %v972 = vpop.f32.mrb[0].mxu0
  %973 = vdwg.mxu0
  %975 = vrot.lane.b32.xlu0 %v29, 120
  %v976 = vpop.permute.xlu0 %975
  %v978 = vsel %vm36, %v976, 0
  %980 = vmatprep.subr.bf16.mxu0 0
  %981 = vmatpush1.bf16.xpose.msra.mxu0 %v978
  %982 = vmatprep.subr.bf16.mxu0 0
  %983 = vmatpush1.bf16.xpose.msra.mxu0 0
  %984 = vmatprep.subr.bf16.mxu0 0
  %985 = vmatpush1.bf16.xpose.msra.mxu0 0
  %986 = vmatprep.subr.bf16.mxu0 0
  %987 = vmatpush1.bf16.xpose.msra.mxu0 0
  %988 = vmatprep.subr.bf16.mxu0 0
  %989 = vmatpush1.bf16.xpose.msra.mxu0 0
  %990 = vmatprep.subr.bf16.mxu0 0
  %991 = vmatpush1.bf16.xpose.msra.mxu0 0
  %992 = vmatprep.subr.bf16.mxu0 0
  %993 = vmatpush1.bf16.xpose.msra.mxu0 0
  %994 = vmatprep.subr.bf16.mxu0 0
  %995 = vmatpush1.bf16.xpose.msra.mxu0 0
  %996 = vmatprep.subr.bf16.mxu0 0
  %997 = vmatpush1.bf16.xpose.msra.mxu0 0
  %998 = vmatprep.subr.bf16.mxu0 0
  %999 = vmatpush1.bf16.xpose.msra.mxu0 0
  %1000 = vmatprep.subr.bf16.mxu0 0
  %1001 = vmatpush1.bf16.xpose.msra.mxu0 0
  %1002 = vmatprep.subr.bf16.mxu0 0
  %1003 = vmatpush1.bf16.xpose.msra.mxu0 0
  %1004 = vmatprep.subr.bf16.mxu0 0
  %1005 = vmatpush1.bf16.xpose.msra.mxu0 0
  %1006 = vmatprep.subr.bf16.mxu0 0
  %1007 = vmatpush1.bf16.xpose.msra.mxu0 0
  %1008 = vmatprep.subr.bf16.mxu0 0
  %1009 = vmatpush1.bf16.xpose.msra.mxu0 0
  %1010 = vmatprep.subr.bf16.mxu0 0
  %1011 = vmatpush1.bf16.xpose.msra.mxu0 0
  %1012 = vmatprep.mubr.bf16.mxu0 0
  %1013 = vmatmul.mubr.bf16.gmra.mrb[0].mxu0 %v978
  %v1014 = vpop.f32.mrb[0].mxu0
  %v1015 = vadd.f32 0.0, %v1014
  %v1016 = vpop.f32.mrb[0].mxu0
  %v1017 = vpop.f32.mrb[0].mxu0
  %v1018 = vpop.f32.mrb[0].mxu0
  %1019 = vdwg.mxu0
  %1021 = vrot.lane.b32.xlu0 %v30, 120
  %v1022 = vpop.permute.xlu0 %1021
  %v1024 = vsel %vm36, %v1022, 0
  %1026 = vmatprep.subr.bf16.mxu0 0
  %1027 = vmatpush1.bf16.xpose.msra.mxu0 %v1024
  %1028 = vmatprep.subr.bf16.mxu0 0
  %1029 = vmatpush1.bf16.xpose.msra.mxu0 0
  %1030 = vmatprep.subr.bf16.mxu0 0
  %1031 = vmatpush1.bf16.xpose.msra.mxu0 0
  %1032 = vmatprep.subr.bf16.mxu0 0
  %1033 = vmatpush1.bf16.xpose.msra.mxu0 0
  %1034 = vmatprep.subr.bf16.mxu0 0
  %1035 = vmatpush1.bf16.xpose.msra.mxu0 0
  %1036 = vmatprep.subr.bf16.mxu0 0
  %1037 = vmatpush1.bf16.xpose.msra.mxu0 0
  %1038 = vmatprep.subr.bf16.mxu0 0
  %1039 = vmatpush1.bf16.xpose.msra.mxu0 0
  %1040 = vmatprep.subr.bf16.mxu0 0
  %1041 = vmatpush1.bf16.xpose.msra.mxu0 0
  %1042 = vmatprep.subr.bf16.mxu0 0
  %1043 = vmatpush1.bf16.xpose.msra.mxu0 0
  %1044 = vmatprep.subr.bf16.mxu0 0
  %1045 = vmatpush1.bf16.xpose.msra.mxu0 0
  %1046 = vmatprep.subr.bf16.mxu0 0
  %1047 = vmatpush1.bf16.xpose.msra.mxu0 0
  %1048 = vmatprep.subr.bf16.mxu0 0
  %1049 = vmatpush1.bf16.xpose.msra.mxu0 0
  %1050 = vmatprep.subr.bf16.mxu0 0
  %1051 = vmatpush1.bf16.xpose.msra.mxu0 0
  %1052 = vmatprep.subr.bf16.mxu0 0
  %1053 = vmatpush1.bf16.xpose.msra.mxu0 0
  %1054 = vmatprep.subr.bf16.mxu0 0
  %1055 = vmatpush1.bf16.xpose.msra.mxu0 0
  %1056 = vmatprep.subr.bf16.mxu0 0
  %1057 = vmatpush1.bf16.xpose.msra.mxu0 0
  %1058 = vmatprep.mubr.bf16.mxu0 0
  %1059 = vmatmul.mubr.bf16.gmra.mrb[0].mxu0 %v1024
  %v1060 = vpop.f32.mrb[0].mxu0
  %v1061 = vadd.f32 0.0, %v1060
  %v1062 = vpop.f32.mrb[0].mxu0
  %v1063 = vpop.f32.mrb[0].mxu0
  %v1064 = vpop.f32.mrb[0].mxu0
  %1065 = vdwg.mxu0
  %1067 = vrot.lane.b32.xlu0 %v31, 120
  %v1068 = vpop.permute.xlu0 %1067
  %v1070 = vsel %vm36, %v1068, 0
  %1072 = vmatprep.subr.bf16.mxu0 0
  %1073 = vmatpush1.bf16.xpose.msra.mxu0 %v1070
  %1074 = vmatprep.subr.bf16.mxu0 0
  %1075 = vmatpush1.bf16.xpose.msra.mxu0 0
  %1076 = vmatprep.subr.bf16.mxu0 0
  %1077 = vmatpush1.bf16.xpose.msra.mxu0 0
  %1078 = vmatprep.subr.bf16.mxu0 0
  %1079 = vmatpush1.bf16.xpose.msra.mxu0 0
  %1080 = vmatprep.subr.bf16.mxu0 0
  %1081 = vmatpush1.bf16.xpose.msra.mxu0 0
  %1082 = vmatprep.subr.bf16.mxu0 0
  %1083 = vmatpush1.bf16.xpose.msra.mxu0 0
  %1084 = vmatprep.subr.bf16.mxu0 0
  %1085 = vmatpush1.bf16.xpose.msra.mxu0 0
  %1086 = vmatprep.subr.bf16.mxu0 0
  %1087 = vmatpush1.bf16.xpose.msra.mxu0 0
  %1088 = vmatprep.subr.bf16.mxu0 0
  %1089 = vmatpush1.bf16.xpose.msra.mxu0 0
  %1090 = vmatprep.subr.bf16.mxu0 0
  %1091 = vmatpush1.bf16.xpose.msra.mxu0 0
  %1092 = vmatprep.subr.bf16.mxu0 0
  %1093 = vmatpush1.bf16.xpose.msra.mxu0 0
  %1094 = vmatprep.subr.bf16.mxu0 0
  %1095 = vmatpush1.bf16.xpose.msra.mxu0 0
  %1096 = vmatprep.subr.bf16.mxu0 0
  %1097 = vmatpush1.bf16.xpose.msra.mxu0 0
  %1098 = vmatprep.subr.bf16.mxu0 0
  %1099 = vmatpush1.bf16.xpose.msra.mxu0 0
  %1100 = vmatprep.subr.bf16.mxu0 0
  %1101 = vmatpush1.bf16.xpose.msra.mxu0 0
  %1102 = vmatprep.subr.bf16.mxu0 0
  %1103 = vmatpush1.bf16.xpose.msra.mxu0 0
  %1104 = vmatprep.mubr.bf16.mxu0 0
  %1105 = vmatmul.mubr.bf16.gmra.mrb[0].mxu0 %v1070
  %v1106 = vpop.f32.mrb[0].mxu0
  %v1107 = vadd.f32 0.0, %v1106
  %v1108 = vpop.f32.mrb[0].mxu0
  %v1109 = vpop.f32.mrb[0].mxu0
  %v1110 = vpop.f32.mrb[0].mxu0
  %1111 = vdwg.mxu0
  %1113 = vrot.lane.b32.xlu0 %v32, 120
  %v1114 = vpop.permute.xlu0 %1113
  %v1116 = vsel %vm36, %v1114, 0
  %1118 = vmatprep.subr.bf16.mxu0 0
  %1119 = vmatpush1.bf16.xpose.msra.mxu0 %v1116
  %1120 = vmatprep.subr.bf16.mxu0 0
  %1121 = vmatpush1.bf16.xpose.msra.mxu0 0
  %1122 = vmatprep.subr.bf16.mxu0 0
  %1123 = vmatpush1.bf16.xpose.msra.mxu0 0
  %1124 = vmatprep.subr.bf16.mxu0 0
  %1125 = vmatpush1.bf16.xpose.msra.mxu0 0
  %1126 = vmatprep.subr.bf16.mxu0 0
  %1127 = vmatpush1.bf16.xpose.msra.mxu0 0
  %1128 = vmatprep.subr.bf16.mxu0 0
  %1129 = vmatpush1.bf16.xpose.msra.mxu0 0
  %1130 = vmatprep.subr.bf16.mxu0 0
  %1131 = vmatpush1.bf16.xpose.msra.mxu0 0
  %1132 = vmatprep.subr.bf16.mxu0 0
  %1133 = vmatpush1.bf16.xpose.msra.mxu0 0
  %1134 = vmatprep.subr.bf16.mxu0 0
  %1135 = vmatpush1.bf16.xpose.msra.mxu0 0
  %1136 = vmatprep.subr.bf16.mxu0 0
  %1137 = vmatpush1.bf16.xpose.msra.mxu0 0
  %1138 = vmatprep.subr.bf16.mxu0 0
  %1139 = vmatpush1.bf16.xpose.msra.mxu0 0
  %1140 = vmatprep.subr.bf16.mxu0 0
  %1141 = vmatpush1.bf16.xpose.msra.mxu0 0
  %1142 = vmatprep.subr.bf16.mxu0 0
  %1143 = vmatpush1.bf16.xpose.msra.mxu0 0
  %1144 = vmatprep.subr.bf16.mxu0 0
  %1145 = vmatpush1.bf16.xpose.msra.mxu0 0
  %1146 = vmatprep.subr.bf16.mxu0 0
  %1147 = vmatpush1.bf16.xpose.msra.mxu0 0
  %1148 = vmatprep.subr.bf16.mxu0 0
  %1149 = vmatpush1.bf16.xpose.msra.mxu0 0
  %1150 = vmatprep.mubr.bf16.mxu0 0
  %1151 = vmatmul.mubr.bf16.gmra.mrb[0].mxu0 %v1116
  %v1152 = vpop.f32.mrb[0].mxu0
  %v1153 = vadd.f32 0.0, %v1152
  %v1154 = vpop.f32.mrb[0].mxu0
  %v1155 = vpop.f32.mrb[0].mxu0
  %v1156 = vpop.f32.mrb[0].mxu0
  %1157 = vdwg.mxu0
  %1159 = vrot.lane.b32.xlu0 %v33, 120
  %v1160 = vpop.permute.xlu0 %1159
  %v1162 = vsel %vm36, %v1160, 0
  %1164 = vmatprep.subr.bf16.mxu0 0
  %1165 = vmatpush1.bf16.xpose.msra.mxu0 %v1162
  %1166 = vmatprep.subr.bf16.mxu0 0
  %1167 = vmatpush1.bf16.xpose.msra.mxu0 0
  %1168 = vmatprep.subr.bf16.mxu0 0
  %1169 = vmatpush1.bf16.xpose.msra.mxu0 0
  %1170 = vmatprep.subr.bf16.mxu0 0
  %1171 = vmatpush1.bf16.xpose.msra.mxu0 0
  %1172 = vmatprep.subr.bf16.mxu0 0
  %1173 = vmatpush1.bf16.xpose.msra.mxu0 0
  %1174 = vmatprep.subr.bf16.mxu0 0
  %1175 = vmatpush1.bf16.xpose.msra.mxu0 0
  %1176 = vmatprep.subr.bf16.mxu0 0
  %1177 = vmatpush1.bf16.xpose.msra.mxu0 0
  %1178 = vmatprep.subr.bf16.mxu0 0
  %1179 = vmatpush1.bf16.xpose.msra.mxu0 0
  %1180 = vmatprep.subr.bf16.mxu0 0
  %1181 = vmatpush1.bf16.xpose.msra.mxu0 0
  %1182 = vmatprep.subr.bf16.mxu0 0
  %1183 = vmatpush1.bf16.xpose.msra.mxu0 0
  %1184 = vmatprep.subr.bf16.mxu0 0
  %1185 = vmatpush1.bf16.xpose.msra.mxu0 0
  %1186 = vmatprep.subr.bf16.mxu0 0
  %1187 = vmatpush1.bf16.xpose.msra.mxu0 0
  %1188 = vmatprep.subr.bf16.mxu0 0
  %1189 = vmatpush1.bf16.xpose.msra.mxu0 0
  %1190 = vmatprep.subr.bf16.mxu0 0
  %1191 = vmatpush1.bf16.xpose.msra.mxu0 0
  %1192 = vmatprep.subr.bf16.mxu0 0
  %1193 = vmatpush1.bf16.xpose.msra.mxu0 0
  %1194 = vmatprep.subr.bf16.mxu0 0
  %1195 = vmatpush1.bf16.xpose.msra.mxu0 0
  %1196 = vmatprep.mubr.bf16.mxu0 0
  %1197 = vmatmul.mubr.bf16.gmra.mrb[0].mxu0 %v1162
  %v1198 = vpop.f32.mrb[0].mxu0
  %v1199 = vadd.f32 0.0, %v1198
  %v1200 = vpop.f32.mrb[0].mxu0
  %v1201 = vpop.f32.mrb[0].mxu0
  %v1202 = vpop.f32.mrb[0].mxu0
  %1203 = vdwg.mxu0
  %1205 = vrot.lane.b32.xlu0 %v34, 120
  %v1206 = vpop.permute.xlu0 %1205
  %v1208 = vsel %vm36, %v1206, 0
  %1210 = vmatprep.subr.bf16.mxu0 0
  %1211 = vmatpush1.bf16.xpose.msra.mxu0 %v1208
  %1212 = vmatprep.subr.bf16.mxu0 0
  %1213 = vmatpush1.bf16.xpose.msra.mxu0 0
  %1214 = vmatprep.subr.bf16.mxu0 0
  %1215 = vmatpush1.bf16.xpose.msra.mxu0 0
  %1216 = vmatprep.subr.bf16.mxu0 0
  %1217 = vmatpush1.bf16.xpose.msra.mxu0 0
  %1218 = vmatprep.subr.bf16.mxu0 0
  %1219 = vmatpush1.bf16.xpose.msra.mxu0 0
  %1220 = vmatprep.subr.bf16.mxu0 0
  %1221 = vmatpush1.bf16.xpose.msra.mxu0 0
  %1222 = vmatprep.subr.bf16.mxu0 0
  %1223 = vmatpush1.bf16.xpose.msra.mxu0 0
  %1224 = vmatprep.subr.bf16.mxu0 0
  %1225 = vmatpush1.bf16.xpose.msra.mxu0 0
  %1226 = vmatprep.subr.bf16.mxu0 0
  %1227 = vmatpush1.bf16.xpose.msra.mxu0 0
  %1228 = vmatprep.subr.bf16.mxu0 0
  %1229 = vmatpush1.bf16.xpose.msra.mxu0 0
  %1230 = vmatprep.subr.bf16.mxu0 0
  %1231 = vmatpush1.bf16.xpose.msra.mxu0 0
  %1232 = vmatprep.subr.bf16.mxu0 0
  %1233 = vmatpush1.bf16.xpose.msra.mxu0 0
  %1234 = vmatprep.subr.bf16.mxu0 0
  %1235 = vmatpush1.bf16.xpose.msra.mxu0 0
  %1236 = vmatprep.subr.bf16.mxu0 0
  %1237 = vmatpush1.bf16.xpose.msra.mxu0 0
  %1238 = vmatprep.subr.bf16.mxu0 0
  %1239 = vmatpush1.bf16.xpose.msra.mxu0 0
  %1240 = vmatprep.subr.bf16.mxu0 0
  %1241 = vmatpush1.bf16.xpose.msra.mxu0 0
  %1242 = vmatprep.mubr.bf16.mxu0 0
  %1243 = vmatmul.mubr.bf16.gmra.mrb[0].mxu0 %v1208
  %v1244 = vpop.f32.mrb[0].mxu0
  %v1245 = vadd.f32 0.0, %v1244
  %v1246 = vpop.f32.mrb[0].mxu0
  %v1247 = vpop.f32.mrb[0].mxu0
  %v1248 = vpop.f32.mrb[0].mxu0
  %1249 = vdwg.mxu0
  %1251 = vrot.lane.b32.xlu0 %v35, 120
  %v1252 = vpop.permute.xlu0 %1251
  %v1254 = vsel %vm36, %v1252, 0
  %1256 = vmatprep.subr.bf16.mxu0 0
  %1257 = vmatpush1.bf16.xpose.msra.mxu0 %v1254
  %1258 = vmatprep.subr.bf16.mxu0 0
  %1259 = vmatpush1.bf16.xpose.msra.mxu0 0
  %1260 = vmatprep.subr.bf16.mxu0 0
  %1261 = vmatpush1.bf16.xpose.msra.mxu0 0
  %1262 = vmatprep.subr.bf16.mxu0 0
  %1263 = vmatpush1.bf16.xpose.msra.mxu0 0
  %1264 = vmatprep.subr.bf16.mxu0 0
  %1265 = vmatpush1.bf16.xpose.msra.mxu0 0
  %1266 = vmatprep.subr.bf16.mxu0 0
  %1267 = vmatpush1.bf16.xpose.msra.mxu0 0
  %1268 = vmatprep.subr.bf16.mxu0 0
  %1269 = vmatpush1.bf16.xpose.msra.mxu0 0
  %1270 = vmatprep.subr.bf16.mxu0 0
  %1271 = vmatpush1.bf16.xpose.msra.mxu0 0
  %1272 = vmatprep.subr.bf16.mxu0 0
  %1273 = vmatpush1.bf16.xpose.msra.mxu0 0
  %1274 = vmatprep.subr.bf16.mxu0 0
  %1275 = vmatpush1.bf16.xpose.msra.mxu0 0
  %1276 = vmatprep.subr.bf16.mxu0 0
  %1277 = vmatpush1.bf16.xpose.msra.mxu0 0
  %1278 = vmatprep.subr.bf16.mxu0 0
  %1279 = vmatpush1.bf16.xpose.msra.mxu0 0
  %1280 = vmatprep.subr.bf16.mxu0 0
  %1281 = vmatpush1.bf16.xpose.msra.mxu0 0
  %1282 = vmatprep.subr.bf16.mxu0 0
  %1283 = vmatpush1.bf16.xpose.msra.mxu0 0
  %1284 = vmatprep.subr.bf16.mxu0 0
  %1285 = vmatpush1.bf16.xpose.msra.mxu0 0
  %1286 = vmatprep.subr.bf16.mxu0 0
  %1287 = vmatpush1.bf16.xpose.msra.mxu0 0
  %1288 = vmatprep.mubr.bf16.mxu0 0
  %1289 = vmatmul.mubr.bf16.gmra.mrb[0].mxu0 %v1254
  %v1290 = vpop.f32.mrb[0].mxu0
  %v1291 = vadd.f32 0.0, %v1290
  %v1292 = vpop.f32.mrb[0].mxu0
  %v1293 = vpop.f32.mrb[0].mxu0
  %v1294 = vpop.f32.mrb[0].mxu0
  %1295 = vdwg.mxu0
  %v1296 = vmul.f32 %v969, 0.35355338
  %v1297 = vmul.f32 %v1015, 0.35355338
  %v1298 = vmul.f32 %v1061, 0.35355338
  %v1299 = vmul.f32 %v1107, 0.35355338
  %v1300 = vmul.f32 %v1153, 0.35355338
  %v1301 = vmul.f32 %v1199, 0.35355338
  %v1302 = vmul.f32 %v1245, 0.35355338
  %v1303 = vmul.f32 %v1291, 0.35355338
  %v1304 = vadd.f32 %v1296, %v400
  %v1305 = vadd.f32 %v1297, %v404
  %v1306 = vadd.f32 %v1298, %v408
  %v1307 = vadd.f32 %v1299, %v412
  %v1308 = vadd.f32 %v1300, %v416
  %v1309 = vadd.f32 %v1301, %v420
  %v1310 = vadd.f32 %v1302, %v424
  %v1311 = vadd.f32 %v1303, %v428
  %v1312 = vsel %vm445, %v1304, -inf
  %1313 = vmax.xlane.f32.xlu0 %v1312
  %v1314 = vpop.xlane.xlu0 %1313
  %v1315 = vsel %vm445, %v1305, -inf
  %1316 = vmax.xlane.f32.xlu0 %v1315
  %v1317 = vpop.xlane.xlu0 %1316
  %v1318 = vsel %vm445, %v1306, -inf
  %1319 = vmax.xlane.f32.xlu0 %v1318
  %v1320 = vpop.xlane.xlu0 %1319
  %v1321 = vsel %vm445, %v1307, -inf
  %1322 = vmax.xlane.f32.xlu0 %v1321
  %v1323 = vpop.xlane.xlu0 %1322
  %v1324 = vsel %vm445, %v1308, -inf
  %1325 = vmax.xlane.f32.xlu0 %v1324
  %v1326 = vpop.xlane.xlu0 %1325
  %v1327 = vsel %vm445, %v1309, -inf
  %1328 = vmax.xlane.f32.xlu0 %v1327
  %v1329 = vpop.xlane.xlu0 %1328
  %v1330 = vsel %vm445, %v1310, -inf
  %1331 = vmax.xlane.f32.xlu0 %v1330
  %v1332 = vpop.xlane.xlu0 %1331
  %v1333 = vsel %vm445, %v1311, -inf
  %1334 = vmax.xlane.f32.xlu0 %v1333
  %v1335 = vpop.xlane.xlu0 %1334
  %vm1336 = vcmp.eq.f32.partialorder %v1314, -inf
  %vm1337 = vcmp.eq.f32.partialorder %v1317, -inf
  %vm1338 = vcmp.eq.f32.partialorder %v1320, -inf
  %vm1339 = vcmp.eq.f32.partialorder %v1323, -inf
  %vm1340 = vcmp.eq.f32.partialorder %v1326, -inf
  %vm1341 = vcmp.eq.f32.partialorder %v1329, -inf
  %vm1342 = vcmp.eq.f32.partialorder %v1332, -inf
  %vm1343 = vcmp.eq.f32.partialorder %v1335, -inf
  %v1344 = vsel %vm1336, 0.0, %v1314
  %v1345 = vsel %vm1337, 0.0, %v1317
  %v1346 = vsel %vm1338, 0.0, %v1320
  %v1347 = vsel %vm1339, 0.0, %v1323
  %v1348 = vsel %vm1340, 0.0, %v1326
  %v1349 = vsel %vm1341, 0.0, %v1329
  %v1350 = vsel %vm1342, 0.0, %v1332
  %v1351 = vsel %vm1343, 0.0, %v1335
  %v1352 = vsub.f32 %v1304, %v1344
  %v1353 = vsub.f32 %v1305, %v1345
  %v1354 = vsub.f32 %v1306, %v1346
  %v1355 = vsub.f32 %v1307, %v1347
  %v1356 = vsub.f32 %v1308, %v1348
  %v1357 = vsub.f32 %v1309, %v1349
  %v1358 = vsub.f32 %v1310, %v1350
  %v1359 = vsub.f32 %v1311, %v1351
  %v1360 = vmul.f32 %v1352, 1.442695
  %v1361 = vpow.pop %v1360
  %v1362 = vmul.f32 %v1353, 1.442695
  %v1363 = vpow.pop %v1362
  %v1364 = vmul.f32 %v1354, 1.442695
  %v1365 = vpow.pop %v1364
  %v1366 = vmul.f32 %v1355, 1.442695
  %v1367 = vpow.pop %v1366
  %v1368 = vmul.f32 %v1356, 1.442695
  %v1369 = vpow.pop %v1368
  %v1370 = vmul.f32 %v1357, 1.442695
  %v1371 = vpow.pop %v1370
  %v1372 = vmul.f32 %v1358, 1.442695
  %v1373 = vpow.pop %v1372
  %v1374 = vmul.f32 %v1359, 1.442695
  %v1375 = vpow.pop %v1374
  %v1376 = vsel %vm445, %v1361, 0.0
  %1377 = vadd.xlane.f32.xlu0 %v1376
  %v1378 = vpop.xlane.xlu0 %1377
  %v1379 = vsel %vm445, %v1363, 0.0
  %1380 = vadd.xlane.f32.xlu0 %v1379
  %v1381 = vpop.xlane.xlu0 %1380
  %v1382 = vsel %vm445, %v1365, 0.0
  %1383 = vadd.xlane.f32.xlu0 %v1382
  %v1384 = vpop.xlane.xlu0 %1383
  %v1385 = vsel %vm445, %v1367, 0.0
  %1386 = vadd.xlane.f32.xlu0 %v1385
  %v1387 = vpop.xlane.xlu0 %1386
  %v1388 = vsel %vm445, %v1369, 0.0
  %1389 = vadd.xlane.f32.xlu0 %v1388
  %v1390 = vpop.xlane.xlu0 %1389
  %v1391 = vsel %vm445, %v1371, 0.0
  %1392 = vadd.xlane.f32.xlu0 %v1391
  %v1393 = vpop.xlane.xlu0 %1392
  %v1394 = vsel %vm445, %v1373, 0.0
  %1395 = vadd.xlane.f32.xlu0 %v1394
  %v1396 = vpop.xlane.xlu0 %1395
  %v1397 = vsel %vm445, %v1375, 0.0
  %1398 = vadd.xlane.f32.xlu0 %v1397
  %v1399 = vpop.xlane.xlu0 %1398
  %v1400 = vmax.f32 %v1378, 1e-30
  %v1401 = vmax.f32 %v1381, 1e-30
  %v1402 = vmax.f32 %v1384, 1e-30
  %v1403 = vmax.f32 %v1387, 1e-30
  %v1404 = vmax.f32 %v1390, 1e-30
  %v1405 = vmax.f32 %v1393, 1e-30
  %v1406 = vmax.f32 %v1396, 1e-30
  %v1407 = vmax.f32 %v1399, 1e-30
  %v1408 = vrcp.pop %v1400
  %v1409 = vmul.f32 %v1361, %v1408
  %v1410 = vrcp.pop %v1401
  %v1411 = vmul.f32 %v1363, %v1410
  %v1412 = vrcp.pop %v1402
  %v1413 = vmul.f32 %v1365, %v1412
  %v1414 = vrcp.pop %v1403
  %v1415 = vmul.f32 %v1367, %v1414
  %v1416 = vrcp.pop %v1404
  %v1417 = vmul.f32 %v1369, %v1416
  %v1418 = vrcp.pop %v1405
  %v1419 = vmul.f32 %v1371, %v1418
  %v1420 = vrcp.pop %v1406
  %v1421 = vmul.f32 %v1373, %v1420
  %v1422 = vrcp.pop %v1407
  %v1423 = vmul.f32 %v1375, %v1422
  %v1424 = vpack.c.bf16 %v1409, %v1409
  %v1425 = vpack.c.bf16 %v1411, %v1411
  %v1426 = vpack.c.bf16 %v1413, %v1413
  %v1427 = vpack.c.bf16 %v1415, %v1415
  %v1428 = vpack.c.bf16 %v1417, %v1417
  %v1429 = vpack.c.bf16 %v1419, %v1419
  %v1430 = vpack.c.bf16 %v1421, %v1421
  %v1431 = vpack.c.bf16 %v1423, %v1423
  %v1433 = vsel %vm566, %v1424, 0
  %v1435 = vsel %vm570, %v930, 0
  %1437 = vmatprep.subr.bf16.mxu0 0
  %1438 = vmatpush1.bf16.msra.mxu0 %v1435
  %1439 = vmatprep.subr.bf16.mxu0 0
  %1440 = vmatpush1.bf16.msra.mxu0 0
  %1441 = vmatprep.subr.bf16.mxu0 0
  %1442 = vmatpush1.bf16.msra.mxu0 0
  %1443 = vmatprep.subr.bf16.mxu0 0
  %1444 = vmatpush1.bf16.msra.mxu0 0
  %1445 = vmatprep.subr.bf16.mxu0 0
  %1446 = vmatpush1.bf16.msra.mxu0 0
  %1447 = vmatprep.subr.bf16.mxu0 0
  %1448 = vmatpush1.bf16.msra.mxu0 0
  %1449 = vmatprep.subr.bf16.mxu0 0
  %1450 = vmatpush1.bf16.msra.mxu0 0
  %1451 = vmatprep.subr.bf16.mxu0 0
  %1452 = vmatpush1.bf16.msra.mxu0 0
  %1453 = vmatprep.subr.bf16.mxu0 0
  %1454 = vmatpush1.bf16.msra.mxu0 0
  %1455 = vmatprep.subr.bf16.mxu0 0
  %1456 = vmatpush1.bf16.msra.mxu0 0
  %1457 = vmatprep.subr.bf16.mxu0 0
  %1458 = vmatpush1.bf16.msra.mxu0 0
  %1459 = vmatprep.subr.bf16.mxu0 0
  %1460 = vmatpush1.bf16.msra.mxu0 0
  %1461 = vmatprep.subr.bf16.mxu0 0
  %1462 = vmatpush1.bf16.msra.mxu0 0
  %1463 = vmatprep.subr.bf16.mxu0 0
  %1464 = vmatpush1.bf16.msra.mxu0 0
  %1465 = vmatprep.subr.bf16.mxu0 0
  %1466 = vmatpush1.bf16.msra.mxu0 0
  %1467 = vmatprep.subr.bf16.mxu0 0
  %1468 = vmatpush1.bf16.msra.mxu0 0
  %1469 = vmatprep.mubr.bf16.mxu0 0
  %1470 = vmatmul.mubr.bf16.gmra.mrb[0].mxu0 %v1433
  %v1471 = vpop.f32.mrb[0].mxu0
  %v1472 = vadd.f32 0.0, %v1471
  %v1473 = vpop.f32.mrb[0].mxu0
  %v1474 = vpop.f32.mrb[0].mxu0
  %v1475 = vpop.f32.mrb[0].mxu0
  %1476 = vdwg.mxu0
  %v1478 = vsel %vm566, %v1425, 0
  %v1480 = vsel %vm570, %v976, 0
  %1482 = vmatprep.subr.bf16.mxu0 0
  %1483 = vmatpush1.bf16.msra.mxu0 %v1480
  %1484 = vmatprep.subr.bf16.mxu0 0
  %1485 = vmatpush1.bf16.msra.mxu0 0
  %1486 = vmatprep.subr.bf16.mxu0 0
  %1487 = vmatpush1.bf16.msra.mxu0 0
  %1488 = vmatprep.subr.bf16.mxu0 0
  %1489 = vmatpush1.bf16.msra.mxu0 0
  %1490 = vmatprep.subr.bf16.mxu0 0
  %1491 = vmatpush1.bf16.msra.mxu0 0
  %1492 = vmatprep.subr.bf16.mxu0 0
  %1493 = vmatpush1.bf16.msra.mxu0 0
  %1494 = vmatprep.subr.bf16.mxu0 0
  %1495 = vmatpush1.bf16.msra.mxu0 0
  %1496 = vmatprep.subr.bf16.mxu0 0
  %1497 = vmatpush1.bf16.msra.mxu0 0
  %1498 = vmatprep.subr.bf16.mxu0 0
  %1499 = vmatpush1.bf16.msra.mxu0 0
  %1500 = vmatprep.subr.bf16.mxu0 0
  %1501 = vmatpush1.bf16.msra.mxu0 0
  %1502 = vmatprep.subr.bf16.mxu0 0
  %1503 = vmatpush1.bf16.msra.mxu0 0
  %1504 = vmatprep.subr.bf16.mxu0 0
  %1505 = vmatpush1.bf16.msra.mxu0 0
  %1506 = vmatprep.subr.bf16.mxu0 0
  %1507 = vmatpush1.bf16.msra.mxu0 0
  %1508 = vmatprep.subr.bf16.mxu0 0
  %1509 = vmatpush1.bf16.msra.mxu0 0
  %1510 = vmatprep.subr.bf16.mxu0 0
  %1511 = vmatpush1.bf16.msra.mxu0 0
  %1512 = vmatprep.subr.bf16.mxu0 0
  %1513 = vmatpush1.bf16.msra.mxu0 0
  %1514 = vmatprep.mubr.bf16.mxu0 0
  %1515 = vmatmul.mubr.bf16.gmra.mrb[0].mxu0 %v1478
  %v1516 = vpop.f32.mrb[0].mxu0
  %v1517 = vadd.f32 0.0, %v1516
  %v1518 = vpop.f32.mrb[0].mxu0
  %v1519 = vpop.f32.mrb[0].mxu0
  %v1520 = vpop.f32.mrb[0].mxu0
  %1521 = vdwg.mxu0
  %v1523 = vsel %vm566, %v1426, 0
  %v1525 = vsel %vm570, %v1022, 0
  %1527 = vmatprep.subr.bf16.mxu0 0
  %1528 = vmatpush1.bf16.msra.mxu0 %v1525
  %1529 = vmatprep.subr.bf16.mxu0 0
  %1530 = vmatpush1.bf16.msra.mxu0 0
  %1531 = vmatprep.subr.bf16.mxu0 0
  %1532 = vmatpush1.bf16.msra.mxu0 0
  %1533 = vmatprep.subr.bf16.mxu0 0
  %1534 = vmatpush1.bf16.msra.mxu0 0
  %1535 = vmatprep.subr.bf16.mxu0 0
  %1536 = vmatpush1.bf16.msra.mxu0 0
  %1537 = vmatprep.subr.bf16.mxu0 0
  %1538 = vmatpush1.bf16.msra.mxu0 0
  %1539 = vmatprep.subr.bf16.mxu0 0
  %1540 = vmatpush1.bf16.msra.mxu0 0
  %1541 = vmatprep.subr.bf16.mxu0 0
  %1542 = vmatpush1.bf16.msra.mxu0 0
  %1543 = vmatprep.subr.bf16.mxu0 0
  %1544 = vmatpush1.bf16.msra.mxu0 0
  %1545 = vmatprep.subr.bf16.mxu0 0
  %1546 = vmatpush1.bf16.msra.mxu0 0
  %1547 = vmatprep.subr.bf16.mxu0 0
  %1548 = vmatpush1.bf16.msra.mxu0 0
  %1549 = vmatprep.subr.bf16.mxu0 0
  %1550 = vmatpush1.bf16.msra.mxu0 0
  %1551 = vmatprep.subr.bf16.mxu0 0
  %1552 = vmatpush1.bf16.msra.mxu0 0
  %1553 = vmatprep.subr.bf16.mxu0 0
  %1554 = vmatpush1.bf16.msra.mxu0 0
  %1555 = vmatprep.subr.bf16.mxu0 0
  %1556 = vmatpush1.bf16.msra.mxu0 0
  %1557 = vmatprep.subr.bf16.mxu0 0
  %1558 = vmatpush1.bf16.msra.mxu0 0
  %1559 = vmatprep.mubr.bf16.mxu0 0
  %1560 = vmatmul.mubr.bf16.gmra.mrb[0].mxu0 %v1523
  %v1561 = vpop.f32.mrb[0].mxu0
  %v1562 = vadd.f32 0.0, %v1561
  %v1563 = vpop.f32.mrb[0].mxu0
  %v1564 = vpop.f32.mrb[0].mxu0
  %v1565 = vpop.f32.mrb[0].mxu0
  %1566 = vdwg.mxu0
  %v1568 = vsel %vm566, %v1427, 0
  %v1570 = vsel %vm570, %v1068, 0
  %1572 = vmatprep.subr.bf16.mxu0 0
  %1573 = vmatpush1.bf16.msra.mxu0 %v1570
  %1574 = vmatprep.subr.bf16.mxu0 0
  %1575 = vmatpush1.bf16.msra.mxu0 0
  %1576 = vmatprep.subr.bf16.mxu0 0
  %1577 = vmatpush1.bf16.msra.mxu0 0
  %1578 = vmatprep.subr.bf16.mxu0 0
  %1579 = vmatpush1.bf16.msra.mxu0 0
  %1580 = vmatprep.subr.bf16.mxu0 0
  %1581 = vmatpush1.bf16.msra.mxu0 0
  %1582 = vmatprep.subr.bf16.mxu0 0
  %1583 = vmatpush1.bf16.msra.mxu0 0
  %1584 = vmatprep.subr.bf16.mxu0 0
  %1585 = vmatpush1.bf16.msra.mxu0 0
  %1586 = vmatprep.subr.bf16.mxu0 0
  %1587 = vmatpush1.bf16.msra.mxu0 0
  %1588 = vmatprep.subr.bf16.mxu0 0
  %1589 = vmatpush1.bf16.msra.mxu0 0
  %1590 = vmatprep.subr.bf16.mxu0 0
  %1591 = vmatpush1.bf16.msra.mxu0 0
  %1592 = vmatprep.subr.bf16.mxu0 0
  %1593 = vmatpush1.bf16.msra.mxu0 0
  %1594 = vmatprep.subr.bf16.mxu0 0
  %1595 = vmatpush1.bf16.msra.mxu0 0
  %1596 = vmatprep.subr.bf16.mxu0 0
  %1597 = vmatpush1.bf16.msra.mxu0 0
  %1598 = vmatprep.subr.bf16.mxu0 0
  %1599 = vmatpush1.bf16.msra.mxu0 0
  %1600 = vmatprep.subr.bf16.mxu0 0
  %1601 = vmatpush1.bf16.msra.mxu0 0
  %1602 = vmatprep.subr.bf16.mxu0 0
  %1603 = vmatpush1.bf16.msra.mxu0 0
  %1604 = vmatprep.mubr.bf16.mxu0 0
  %1605 = vmatmul.mubr.bf16.gmra.mrb[0].mxu0 %v1568
  %v1606 = vpop.f32.mrb[0].mxu0
  %v1607 = vadd.f32 0.0, %v1606
  %v1608 = vpop.f32.mrb[0].mxu0
  %v1609 = vpop.f32.mrb[0].mxu0
  %v1610 = vpop.f32.mrb[0].mxu0
  %1611 = vdwg.mxu0
  %v1613 = vsel %vm566, %v1428, 0
  %v1615 = vsel %vm570, %v1114, 0
  %1617 = vmatprep.subr.bf16.mxu0 0
  %1618 = vmatpush1.bf16.msra.mxu0 %v1615
  %1619 = vmatprep.subr.bf16.mxu0 0
  %1620 = vmatpush1.bf16.msra.mxu0 0
  %1621 = vmatprep.subr.bf16.mxu0 0
  %1622 = vmatpush1.bf16.msra.mxu0 0
  %1623 = vmatprep.subr.bf16.mxu0 0
  %1624 = vmatpush1.bf16.msra.mxu0 0
  %1625 = vmatprep.subr.bf16.mxu0 0
  %1626 = vmatpush1.bf16.msra.mxu0 0
  %1627 = vmatprep.subr.bf16.mxu0 0
  %1628 = vmatpush1.bf16.msra.mxu0 0
  %1629 = vmatprep.subr.bf16.mxu0 0
  %1630 = vmatpush1.bf16.msra.mxu0 0
  %1631 = vmatprep.subr.bf16.mxu0 0
  %1632 = vmatpush1.bf16.msra.mxu0 0
  %1633 = vmatprep.subr.bf16.mxu0 0
  %1634 = vmatpush1.bf16.msra.mxu0 0
  %1635 = vmatprep.subr.bf16.mxu0 0
  %1636 = vmatpush1.bf16.msra.mxu0 0
  %1637 = vmatprep.subr.bf16.mxu0 0
  %1638 = vmatpush1.bf16.msra.mxu0 0
  %1639 = vmatprep.subr.bf16.mxu0 0
  %1640 = vmatpush1.bf16.msra.mxu0 0
  %1641 = vmatprep.subr.bf16.mxu0 0
  %1642 = vmatpush1.bf16.msra.mxu0 0
  %1643 = vmatprep.subr.bf16.mxu0 0
  %1644 = vmatpush1.bf16.msra.mxu0 0
  %1645 = vmatprep.subr.bf16.mxu0 0
  %1646 = vmatpush1.bf16.msra.mxu0 0
  %1647 = vmatprep.subr.bf16.mxu0 0
  %1648 = vmatpush1.bf16.msra.mxu0 0
  %1649 = vmatprep.mubr.bf16.mxu0 0
  %1650 = vmatmul.mubr.bf16.gmra.mrb[0].mxu0 %v1613
  %v1651 = vpop.f32.mrb[0].mxu0
  %v1652 = vadd.f32 0.0, %v1651
  %v1653 = vpop.f32.mrb[0].mxu0
  %v1654 = vpop.f32.mrb[0].mxu0
  %v1655 = vpop.f32.mrb[0].mxu0
  %1656 = vdwg.mxu0
  %v1658 = vsel %vm566, %v1429, 0
  %v1660 = vsel %vm570, %v1160, 0
  %1662 = vmatprep.subr.bf16.mxu0 0
  %1663 = vmatpush1.bf16.msra.mxu0 %v1660
  %1664 = vmatprep.subr.bf16.mxu0 0
  %1665 = vmatpush1.bf16.msra.mxu0 0
  %1666 = vmatprep.subr.bf16.mxu0 0
  %1667 = vmatpush1.bf16.msra.mxu0 0
  %1668 = vmatprep.subr.bf16.mxu0 0
  %1669 = vmatpush1.bf16.msra.mxu0 0
  %1670 = vmatprep.subr.bf16.mxu0 0
  %1671 = vmatpush1.bf16.msra.mxu0 0
  %1672 = vmatprep.subr.bf16.mxu0 0
  %1673 = vmatpush1.bf16.msra.mxu0 0
  %1674 = vmatprep.subr.bf16.mxu0 0
  %1675 = vmatpush1.bf16.msra.mxu0 0
  %1676 = vmatprep.subr.bf16.mxu0 0
  %1677 = vmatpush1.bf16.msra.mxu0 0
  %1678 = vmatprep.subr.bf16.mxu0 0
  %1679 = vmatpush1.bf16.msra.mxu0 0
  %1680 = vmatprep.subr.bf16.mxu0 0
  %1681 = vmatpush1.bf16.msra.mxu0 0
  %1682 = vmatprep.subr.bf16.mxu0 0
  %1683 = vmatpush1.bf16.msra.mxu0 0
  %1684 = vmatprep.subr.bf16.mxu0 0
  %1685 = vmatpush1.bf16.msra.mxu0 0
  %1686 = vmatprep.subr.bf16.mxu0 0
  %1687 = vmatpush1.bf16.msra.mxu0 0
  %1688 = vmatprep.subr.bf16.mxu0 0
  %1689 = vmatpush1.bf16.msra.mxu0 0
  %1690 = vmatprep.subr.bf16.mxu0 0
  %1691 = vmatpush1.bf16.msra.mxu0 0
  %1692 = vmatprep.subr.bf16.mxu0 0
  %1693 = vmatpush1.bf16.msra.mxu0 0
  %1694 = vmatprep.mubr.bf16.mxu0 0
  %1695 = vmatmul.mubr.bf16.gmra.mrb[0].mxu0 %v1658
  %v1696 = vpop.f32.mrb[0].mxu0
  %v1697 = vadd.f32 0.0, %v1696
  %v1698 = vpop.f32.mrb[0].mxu0
  %v1699 = vpop.f32.mrb[0].mxu0
  %v1700 = vpop.f32.mrb[0].mxu0
  %1701 = vdwg.mxu0
  %v1703 = vsel %vm566, %v1430, 0
  %v1705 = vsel %vm570, %v1206, 0
  %1707 = vmatprep.subr.bf16.mxu0 0
  %1708 = vmatpush1.bf16.msra.mxu0 %v1705
  %1709 = vmatprep.subr.bf16.mxu0 0
  %1710 = vmatpush1.bf16.msra.mxu0 0
  %1711 = vmatprep.subr.bf16.mxu0 0
  %1712 = vmatpush1.bf16.msra.mxu0 0
  %1713 = vmatprep.subr.bf16.mxu0 0
  %1714 = vmatpush1.bf16.msra.mxu0 0
  %1715 = vmatprep.subr.bf16.mxu0 0
  %1716 = vmatpush1.bf16.msra.mxu0 0
  %1717 = vmatprep.subr.bf16.mxu0 0
  %1718 = vmatpush1.bf16.msra.mxu0 0
  %1719 = vmatprep.subr.bf16.mxu0 0
  %1720 = vmatpush1.bf16.msra.mxu0 0
  %1721 = vmatprep.subr.bf16.mxu0 0
  %1722 = vmatpush1.bf16.msra.mxu0 0
  %1723 = vmatprep.subr.bf16.mxu0 0
  %1724 = vmatpush1.bf16.msra.mxu0 0
  %1725 = vmatprep.subr.bf16.mxu0 0
  %1726 = vmatpush1.bf16.msra.mxu0 0
  %1727 = vmatprep.subr.bf16.mxu0 0
  %1728 = vmatpush1.bf16.msra.mxu0 0
  %1729 = vmatprep.subr.bf16.mxu0 0
  %1730 = vmatpush1.bf16.msra.mxu0 0
  %1731 = vmatprep.subr.bf16.mxu0 0
  %1732 = vmatpush1.bf16.msra.mxu0 0
  %1733 = vmatprep.subr.bf16.mxu0 0
  %1734 = vmatpush1.bf16.msra.mxu0 0
  %1735 = vmatprep.subr.bf16.mxu0 0
  %1736 = vmatpush1.bf16.msra.mxu0 0
  %1737 = vmatprep.subr.bf16.mxu0 0
  %1738 = vmatpush1.bf16.msra.mxu0 0
  %1739 = vmatprep.mubr.bf16.mxu0 0
  %1740 = vmatmul.mubr.bf16.gmra.mrb[0].mxu0 %v1703
  %v1741 = vpop.f32.mrb[0].mxu0
  %v1742 = vadd.f32 0.0, %v1741
  %v1743 = vpop.f32.mrb[0].mxu0
  %v1744 = vpop.f32.mrb[0].mxu0
  %v1745 = vpop.f32.mrb[0].mxu0
  %1746 = vdwg.mxu0
  %v1748 = vsel %vm566, %v1431, 0
  %v1750 = vsel %vm570, %v1252, 0
  %1752 = vmatprep.subr.bf16.mxu0 0
  %1753 = vmatpush1.bf16.msra.mxu0 %v1750
  %1754 = vmatprep.subr.bf16.mxu0 0
  %1755 = vmatpush1.bf16.msra.mxu0 0
  %1756 = vmatprep.subr.bf16.mxu0 0
  %1757 = vmatpush1.bf16.msra.mxu0 0
  %1758 = vmatprep.subr.bf16.mxu0 0
  %1759 = vmatpush1.bf16.msra.mxu0 0
  %1760 = vmatprep.subr.bf16.mxu0 0
  %1761 = vmatpush1.bf16.msra.mxu0 0
  %1762 = vmatprep.subr.bf16.mxu0 0
  %1763 = vmatpush1.bf16.msra.mxu0 0
  %1764 = vmatprep.subr.bf16.mxu0 0
  %1765 = vmatpush1.bf16.msra.mxu0 0
  %1766 = vmatprep.subr.bf16.mxu0 0
  %1767 = vmatpush1.bf16.msra.mxu0 0
  %1768 = vmatprep.subr.bf16.mxu0 0
  %1769 = vmatpush1.bf16.msra.mxu0 0
  %1770 = vmatprep.subr.bf16.mxu0 0
  %1771 = vmatpush1.bf16.msra.mxu0 0
  %1772 = vmatprep.subr.bf16.mxu0 0
  %1773 = vmatpush1.bf16.msra.mxu0 0
  %1774 = vmatprep.subr.bf16.mxu0 0
  %1775 = vmatpush1.bf16.msra.mxu0 0
  %1776 = vmatprep.subr.bf16.mxu0 0
  %1777 = vmatpush1.bf16.msra.mxu0 0
  %1778 = vmatprep.subr.bf16.mxu0 0
  %1779 = vmatpush1.bf16.msra.mxu0 0
  %1780 = vmatprep.subr.bf16.mxu0 0
  %1781 = vmatpush1.bf16.msra.mxu0 0
  %1782 = vmatprep.subr.bf16.mxu0 0
  %1783 = vmatpush1.bf16.msra.mxu0 0
  %1784 = vmatprep.mubr.bf16.mxu0 0
  %1785 = vmatmul.mubr.bf16.gmra.mrb[0].mxu0 %v1748
  %v1786 = vpop.f32.mrb[0].mxu0
  %v1787 = vadd.f32 0.0, %v1786
  %v1788 = vpop.f32.mrb[0].mxu0
  %v1789 = vpop.f32.mrb[0].mxu0
  %v1790 = vpop.f32.mrb[0].mxu0
  %1791 = vdwg.mxu0
  %1792 = vrot.lane.b32.xlu0 %v28, 112
  %v1793 = vpop.permute.xlu0 %1792
  %v1795 = vsel %vm36, %v1793, 0
  %1797 = vmatprep.subr.bf16.mxu0 0
  %1798 = vmatpush1.bf16.xpose.msra.mxu0 %v1795
  %1799 = vmatprep.subr.bf16.mxu0 0
  %1800 = vmatpush1.bf16.xpose.msra.mxu0 0
  %1801 = vmatprep.subr.bf16.mxu0 0
  %1802 = vmatpush1.bf16.xpose.msra.mxu0 0
  %1803 = vmatprep.subr.bf16.mxu0 0
  %1804 = vmatpush1.bf16.xpose.msra.mxu0 0
  %1805 = vmatprep.subr.bf16.mxu0 0
  %1806 = vmatpush1.bf16.xpose.msra.mxu0 0
  %1807 = vmatprep.subr.bf16.mxu0 0
  %1808 = vmatpush1.bf16.xpose.msra.mxu0 0
  %1809 = vmatprep.subr.bf16.mxu0 0
  %1810 = vmatpush1.bf16.xpose.msra.mxu0 0
  %1811 = vmatprep.subr.bf16.mxu0 0
  %1812 = vmatpush1.bf16.xpose.msra.mxu0 0
  %1813 = vmatprep.subr.bf16.mxu0 0
  %1814 = vmatpush1.bf16.xpose.msra.mxu0 0
  %1815 = vmatprep.subr.bf16.mxu0 0
  %1816 = vmatpush1.bf16.xpose.msra.mxu0 0
  %1817 = vmatprep.subr.bf16.mxu0 0
  %1818 = vmatpush1.bf16.xpose.msra.mxu0 0
  %1819 = vmatprep.subr.bf16.mxu0 0
  %1820 = vmatpush1.bf16.xpose.msra.mxu0 0
  %1821 = vmatprep.subr.bf16.mxu0 0
  %1822 = vmatpush1.bf16.xpose.msra.mxu0 0
  %1823 = vmatprep.subr.bf16.mxu0 0
  %1824 = vmatpush1.bf16.xpose.msra.mxu0 0
  %1825 = vmatprep.subr.bf16.mxu0 0
  %1826 = vmatpush1.bf16.xpose.msra.mxu0 0
  %1827 = vmatprep.subr.bf16.mxu0 0
  %1828 = vmatpush1.bf16.xpose.msra.mxu0 0
  %1829 = vmatprep.mubr.bf16.mxu0 0
  %1830 = vmatmul.mubr.bf16.gmra.mrb[0].mxu0 %v1795
  %v1831 = vpop.f32.mrb[0].mxu0
  %v1832 = vadd.f32 0.0, %v1831
  %v1833 = vpop.f32.mrb[0].mxu0
  %v1834 = vpop.f32.mrb[0].mxu0
  %v1835 = vpop.f32.mrb[0].mxu0
  %1836 = vdwg.mxu0
  %1837 = vrot.lane.b32.xlu0 %v29, 112
  %v1838 = vpop.permute.xlu0 %1837
  %v1840 = vsel %vm36, %v1838, 0
  %1842 = vmatprep.subr.bf16.mxu0 0
  %1843 = vmatpush1.bf16.xpose.msra.mxu0 %v1840
  %1844 = vmatprep.subr.bf16.mxu0 0
  %1845 = vmatpush1.bf16.xpose.msra.mxu0 0
  %1846 = vmatprep.subr.bf16.mxu0 0
  %1847 = vmatpush1.bf16.xpose.msra.mxu0 0
  %1848 = vmatprep.subr.bf16.mxu0 0
  %1849 = vmatpush1.bf16.xpose.msra.mxu0 0
  %1850 = vmatprep.subr.bf16.mxu0 0
  %1851 = vmatpush1.bf16.xpose.msra.mxu0 0
  %1852 = vmatprep.subr.bf16.mxu0 0
  %1853 = vmatpush1.bf16.xpose.msra.mxu0 0
  %1854 = vmatprep.subr.bf16.mxu0 0
  %1855 = vmatpush1.bf16.xpose.msra.mxu0 0
  %1856 = vmatprep.subr.bf16.mxu0 0
  %1857 = vmatpush1.bf16.xpose.msra.mxu0 0
  %1858 = vmatprep.subr.bf16.mxu0 0
  %1859 = vmatpush1.bf16.xpose.msra.mxu0 0
  %1860 = vmatprep.subr.bf16.mxu0 0
  %1861 = vmatpush1.bf16.xpose.msra.mxu0 0
  %1862 = vmatprep.subr.bf16.mxu0 0
  %1863 = vmatpush1.bf16.xpose.msra.mxu0 0
  %1864 = vmatprep.subr.bf16.mxu0 0
  %1865 = vmatpush1.bf16.xpose.msra.mxu0 0
  %1866 = vmatprep.subr.bf16.mxu0 0
  %1867 = vmatpush1.bf16.xpose.msra.mxu0 0
  %1868 = vmatprep.subr.bf16.mxu0 0
  %1869 = vmatpush1.bf16.xpose.msra.mxu0 0
  %1870 = vmatprep.subr.bf16.mxu0 0
  %1871 = vmatpush1.bf16.xpose.msra.mxu0 0
  %1872 = vmatprep.subr.bf16.mxu0 0
  %1873 = vmatpush1.bf16.xpose.msra.mxu0 0
  %1874 = vmatprep.mubr.bf16.mxu0 0
  %1875 = vmatmul.mubr.bf16.gmra.mrb[0].mxu0 %v1840
  %v1876 = vpop.f32.mrb[0].mxu0
  %v1877 = vadd.f32 0.0, %v1876
  %v1878 = vpop.f32.mrb[0].mxu0
  %v1879 = vpop.f32.mrb[0].mxu0
  %v1880 = vpop.f32.mrb[0].mxu0
  %1881 = vdwg.mxu0
  %1882 = vrot.lane.b32.xlu0 %v30, 112
  %v1883 = vpop.permute.xlu0 %1882
  %v1885 = vsel %vm36, %v1883, 0
  %1887 = vmatprep.subr.bf16.mxu0 0
  %1888 = vmatpush1.bf16.xpose.msra.mxu0 %v1885
  %1889 = vmatprep.subr.bf16.mxu0 0
  %1890 = vmatpush1.bf16.xpose.msra.mxu0 0
  %1891 = vmatprep.subr.bf16.mxu0 0
  %1892 = vmatpush1.bf16.xpose.msra.mxu0 0
  %1893 = vmatprep.subr.bf16.mxu0 0
  %1894 = vmatpush1.bf16.xpose.msra.mxu0 0
  %1895 = vmatprep.subr.bf16.mxu0 0
  %1896 = vmatpush1.bf16.xpose.msra.mxu0 0
  %1897 = vmatprep.subr.bf16.mxu0 0
  %1898 = vmatpush1.bf16.xpose.msra.mxu0 0
  %1899 = vmatprep.subr.bf16.mxu0 0
  %1900 = vmatpush1.bf16.xpose.msra.mxu0 0
  %1901 = vmatprep.subr.bf16.mxu0 0
  %1902 = vmatpush1.bf16.xpose.msra.mxu0 0
  %1903 = vmatprep.subr.bf16.mxu0 0
  %1904 = vmatpush1.bf16.xpose.msra.mxu0 0
  %1905 = vmatprep.subr.bf16.mxu0 0
  %1906 = vmatpush1.bf16.xpose.msra.mxu0 0
  %1907 = vmatprep.subr.bf16.mxu0 0
  %1908 = vmatpush1.bf16.xpose.msra.mxu0 0
  %1909 = vmatprep.subr.bf16.mxu0 0
  %1910 = vmatpush1.bf16.xpose.msra.mxu0 0
  %1911 = vmatprep.subr.bf16.mxu0 0
  %1912 = vmatpush1.bf16.xpose.msra.mxu0 0
  %1913 = vmatprep.subr.bf16.mxu0 0
  %1914 = vmatpush1.bf16.xpose.msra.mxu0 0
  %1915 = vmatprep.subr.bf16.mxu0 0
  %1916 = vmatpush1.bf16.xpose.msra.mxu0 0
  %1917 = vmatprep.subr.bf16.mxu0 0
  %1918 = vmatpush1.bf16.xpose.msra.mxu0 0
  %1919 = vmatprep.mubr.bf16.mxu0 0
  %1920 = vmatmul.mubr.bf16.gmra.mrb[0].mxu0 %v1885
  %v1921 = vpop.f32.mrb[0].mxu0
  %v1922 = vadd.f32 0.0, %v1921
  %v1923 = vpop.f32.mrb[0].mxu0
  %v1924 = vpop.f32.mrb[0].mxu0
  %v1925 = vpop.f32.mrb[0].mxu0
  %1926 = vdwg.mxu0
  %1927 = vrot.lane.b32.xlu0 %v31, 112
  %v1928 = vpop.permute.xlu0 %1927
  %v1930 = vsel %vm36, %v1928, 0
  %1932 = vmatprep.subr.bf16.mxu0 0
  %1933 = vmatpush1.bf16.xpose.msra.mxu0 %v1930
  %1934 = vmatprep.subr.bf16.mxu0 0
  %1935 = vmatpush1.bf16.xpose.msra.mxu0 0
  %1936 = vmatprep.subr.bf16.mxu0 0
  %1937 = vmatpush1.bf16.xpose.msra.mxu0 0
  %1938 = vmatprep.subr.bf16.mxu0 0
  %1939 = vmatpush1.bf16.xpose.msra.mxu0 0
  %1940 = vmatprep.subr.bf16.mxu0 0
  %1941 = vmatpush1.bf16.xpose.msra.mxu0 0
  %1942 = vmatprep.subr.bf16.mxu0 0
  %1943 = vmatpush1.bf16.xpose.msra.mxu0 0
  %1944 = vmatprep.subr.bf16.mxu0 0
  %1945 = vmatpush1.bf16.xpose.msra.mxu0 0
  %1946 = vmatprep.subr.bf16.mxu0 0
  %1947 = vmatpush1.bf16.xpose.msra.mxu0 0
  %1948 = vmatprep.subr.bf16.mxu0 0
  %1949 = vmatpush1.bf16.xpose.msra.mxu0 0
  %1950 = vmatprep.subr.bf16.mxu0 0
  %1951 = vmatpush1.bf16.xpose.msra.mxu0 0
  %1952 = vmatprep.subr.bf16.mxu0 0
  %1953 = vmatpush1.bf16.xpose.msra.mxu0 0
  %1954 = vmatprep.subr.bf16.mxu0 0
  %1955 = vmatpush1.bf16.xpose.msra.mxu0 0
  %1956 = vmatprep.subr.bf16.mxu0 0
  %1957 = vmatpush1.bf16.xpose.msra.mxu0 0
  %1958 = vmatprep.subr.bf16.mxu0 0
  %1959 = vmatpush1.bf16.xpose.msra.mxu0 0
  %1960 = vmatprep.subr.bf16.mxu0 0
  %1961 = vmatpush1.bf16.xpose.msra.mxu0 0
  %1962 = vmatprep.subr.bf16.mxu0 0
  %1963 = vmatpush1.bf16.xpose.msra.mxu0 0
  %1964 = vmatprep.mubr.bf16.mxu0 0
  %1965 = vmatmul.mubr.bf16.gmra.mrb[0].mxu0 %v1930
  %v1966 = vpop.f32.mrb[0].mxu0
  %v1967 = vadd.f32 0.0, %v1966
  %v1968 = vpop.f32.mrb[0].mxu0
  %v1969 = vpop.f32.mrb[0].mxu0
  %v1970 = vpop.f32.mrb[0].mxu0
  %1971 = vdwg.mxu0
  %1972 = vrot.lane.b32.xlu0 %v32, 112
  %v1973 = vpop.permute.xlu0 %1972
  %v1975 = vsel %vm36, %v1973, 0
  %1977 = vmatprep.subr.bf16.mxu0 0
  %1978 = vmatpush1.bf16.xpose.msra.mxu0 %v1975
  %1979 = vmatprep.subr.bf16.mxu0 0
  %1980 = vmatpush1.bf16.xpose.msra.mxu0 0
  %1981 = vmatprep.subr.bf16.mxu0 0
  %1982 = vmatpush1.bf16.xpose.msra.mxu0 0
  %1983 = vmatprep.subr.bf16.mxu0 0
  %1984 = vmatpush1.bf16.xpose.msra.mxu0 0
  %1985 = vmatprep.subr.bf16.mxu0 0
  %1986 = vmatpush1.bf16.xpose.msra.mxu0 0
  %1987 = vmatprep.subr.bf16.mxu0 0
  %1988 = vmatpush1.bf16.xpose.msra.mxu0 0
  %1989 = vmatprep.subr.bf16.mxu0 0
  %1990 = vmatpush1.bf16.xpose.msra.mxu0 0
  %1991 = vmatprep.subr.bf16.mxu0 0
  %1992 = vmatpush1.bf16.xpose.msra.mxu0 0
  %1993 = vmatprep.subr.bf16.mxu0 0
  %1994 = vmatpush1.bf16.xpose.msra.mxu0 0
  %1995 = vmatprep.subr.bf16.mxu0 0
  %1996 = vmatpush1.bf16.xpose.msra.mxu0 0
  %1997 = vmatprep.subr.bf16.mxu0 0
  %1998 = vmatpush1.bf16.xpose.msra.mxu0 0
  %1999 = vmatprep.subr.bf16.mxu0 0
  %2000 = vmatpush1.bf16.xpose.msra.mxu0 0
  %2001 = vmatprep.subr.bf16.mxu0 0
  %2002 = vmatpush1.bf16.xpose.msra.mxu0 0
  %2003 = vmatprep.subr.bf16.mxu0 0
  %2004 = vmatpush1.bf16.xpose.msra.mxu0 0
  %2005 = vmatprep.subr.bf16.mxu0 0
  %2006 = vmatpush1.bf16.xpose.msra.mxu0 0
  %2007 = vmatprep.subr.bf16.mxu0 0
  %2008 = vmatpush1.bf16.xpose.msra.mxu0 0
  %2009 = vmatprep.mubr.bf16.mxu0 0
  %2010 = vmatmul.mubr.bf16.gmra.mrb[0].mxu0 %v1975
  %v2011 = vpop.f32.mrb[0].mxu0
  %v2012 = vadd.f32 0.0, %v2011
  %v2013 = vpop.f32.mrb[0].mxu0
  %v2014 = vpop.f32.mrb[0].mxu0
  %v2015 = vpop.f32.mrb[0].mxu0
  %2016 = vdwg.mxu0
  %2017 = vrot.lane.b32.xlu0 %v33, 112
  %v2018 = vpop.permute.xlu0 %2017
  %v2020 = vsel %vm36, %v2018, 0
  %2022 = vmatprep.subr.bf16.mxu0 0
  %2023 = vmatpush1.bf16.xpose.msra.mxu0 %v2020
  %2024 = vmatprep.subr.bf16.mxu0 0
  %2025 = vmatpush1.bf16.xpose.msra.mxu0 0
  %2026 = vmatprep.subr.bf16.mxu0 0
  %2027 = vmatpush1.bf16.xpose.msra.mxu0 0
  %2028 = vmatprep.subr.bf16.mxu0 0
  %2029 = vmatpush1.bf16.xpose.msra.mxu0 0
  %2030 = vmatprep.subr.bf16.mxu0 0
  %2031 = vmatpush1.bf16.xpose.msra.mxu0 0
  %2032 = vmatprep.subr.bf16.mxu0 0
  %2033 = vmatpush1.bf16.xpose.msra.mxu0 0
  %2034 = vmatprep.subr.bf16.mxu0 0
  %2035 = vmatpush1.bf16.xpose.msra.mxu0 0
  %2036 = vmatprep.subr.bf16.mxu0 0
  %2037 = vmatpush1.bf16.xpose.msra.mxu0 0
  %2038 = vmatprep.subr.bf16.mxu0 0
  %2039 = vmatpush1.bf16.xpose.msra.mxu0 0
  %2040 = vmatprep.subr.bf16.mxu0 0
  %2041 = vmatpush1.bf16.xpose.msra.mxu0 0
  %2042 = vmatprep.subr.bf16.mxu0 0
  %2043 = vmatpush1.bf16.xpose.msra.mxu0 0
  %2044 = vmatprep.subr.bf16.mxu0 0
  %2045 = vmatpush1.bf16.xpose.msra.mxu0 0
  %2046 = vmatprep.subr.bf16.mxu0 0
  %2047 = vmatpush1.bf16.xpose.msra.mxu0 0
  %2048 = vmatprep.subr.bf16.mxu0 0
  %2049 = vmatpush1.bf16.xpose.msra.mxu0 0
  %2050 = vmatprep.subr.bf16.mxu0 0
  %2051 = vmatpush1.bf16.xpose.msra.mxu0 0
  %2052 = vmatprep.subr.bf16.mxu0 0
  %2053 = vmatpush1.bf16.xpose.msra.mxu0 0
  %2054 = vmatprep.mubr.bf16.mxu0 0
  %2055 = vmatmul.mubr.bf16.gmra.mrb[0].mxu0 %v2020
  %v2056 = vpop.f32.mrb[0].mxu0
  %v2057 = vadd.f32 0.0, %v2056
  %v2058 = vpop.f32.mrb[0].mxu0
  %v2059 = vpop.f32.mrb[0].mxu0
  %v2060 = vpop.f32.mrb[0].mxu0
  %2061 = vdwg.mxu0
  %2062 = vrot.lane.b32.xlu0 %v34, 112
  %v2063 = vpop.permute.xlu0 %2062
  %v2065 = vsel %vm36, %v2063, 0
  %2067 = vmatprep.subr.bf16.mxu0 0
  %2068 = vmatpush1.bf16.xpose.msra.mxu0 %v2065
  %2069 = vmatprep.subr.bf16.mxu0 0
  %2070 = vmatpush1.bf16.xpose.msra.mxu0 0
  %2071 = vmatprep.subr.bf16.mxu0 0
  %2072 = vmatpush1.bf16.xpose.msra.mxu0 0
  %2073 = vmatprep.subr.bf16.mxu0 0
  %2074 = vmatpush1.bf16.xpose.msra.mxu0 0
  %2075 = vmatprep.subr.bf16.mxu0 0
  %2076 = vmatpush1.bf16.xpose.msra.mxu0 0
  %2077 = vmatprep.subr.bf16.mxu0 0
  %2078 = vmatpush1.bf16.xpose.msra.mxu0 0
  %2079 = vmatprep.subr.bf16.mxu0 0
  %2080 = vmatpush1.bf16.xpose.msra.mxu0 0
  %2081 = vmatprep.subr.bf16.mxu0 0
  %2082 = vmatpush1.bf16.xpose.msra.mxu0 0
  %2083 = vmatprep.subr.bf16.mxu0 0
  %2084 = vmatpush1.bf16.xpose.msra.mxu0 0
  %2085 = vmatprep.subr.bf16.mxu0 0
  %2086 = vmatpush1.bf16.xpose.msra.mxu0 0
  %2087 = vmatprep.subr.bf16.mxu0 0
  %2088 = vmatpush1.bf16.xpose.msra.mxu0 0
  %2089 = vmatprep.subr.bf16.mxu0 0
  %2090 = vmatpush1.bf16.xpose.msra.mxu0 0
  %2091 = vmatprep.subr.bf16.mxu0 0
  %2092 = vmatpush1.bf16.xpose.msra.mxu0 0
  %2093 = vmatprep.subr.bf16.mxu0 0
  %2094 = vmatpush1.bf16.xpose.msra.mxu0 0
  %2095 = vmatprep.subr.bf16.mxu0 0
  %2096 = vmatpush1.bf16.xpose.msra.mxu0 0
  %2097 = vmatprep.subr.bf16.mxu0 0
  %2098 = vmatpush1.bf16.xpose.msra.mxu0 0
  %2099 = vmatprep.mubr.bf16.mxu0 0
  %2100 = vmatmul.mubr.bf16.gmra.mrb[0].mxu0 %v2065
  %v2101 = vpop.f32.mrb[0].mxu0
  %v2102 = vadd.f32 0.0, %v2101
  %v2103 = vpop.f32.mrb[0].mxu0
  %v2104 = vpop.f32.mrb[0].mxu0
  %v2105 = vpop.f32.mrb[0].mxu0
  %2106 = vdwg.mxu0
  %2107 = vrot.lane.b32.xlu0 %v35, 112
  %v2108 = vpop.permute.xlu0 %2107
  %v2110 = vsel %vm36, %v2108, 0
  %2112 = vmatprep.subr.bf16.mxu0 0
  %2113 = vmatpush1.bf16.xpose.msra.mxu0 %v2110
  %2114 = vmatprep.subr.bf16.mxu0 0
  %2115 = vmatpush1.bf16.xpose.msra.mxu0 0
  %2116 = vmatprep.subr.bf16.mxu0 0
  %2117 = vmatpush1.bf16.xpose.msra.mxu0 0
  %2118 = vmatprep.subr.bf16.mxu0 0
  %2119 = vmatpush1.bf16.xpose.msra.mxu0 0
  %2120 = vmatprep.subr.bf16.mxu0 0
  %2121 = vmatpush1.bf16.xpose.msra.mxu0 0
  %2122 = vmatprep.subr.bf16.mxu0 0
  %2123 = vmatpush1.bf16.xpose.msra.mxu0 0
  %2124 = vmatprep.subr.bf16.mxu0 0
  %2125 = vmatpush1.bf16.xpose.msra.mxu0 0
  %2126 = vmatprep.subr.bf16.mxu0 0
  %2127 = vmatpush1.bf16.xpose.msra.mxu0 0
  %2128 = vmatprep.subr.bf16.mxu0 0
  %2129 = vmatpush1.bf16.xpose.msra.mxu0 0
  %2130 = vmatprep.subr.bf16.mxu0 0
  %2131 = vmatpush1.bf16.xpose.msra.mxu0 0
  %2132 = vmatprep.subr.bf16.mxu0 0
  %2133 = vmatpush1.bf16.xpose.msra.mxu0 0
  %2134 = vmatprep.subr.bf16.mxu0 0
  %2135 = vmatpush1.bf16.xpose.msra.mxu0 0
  %2136 = vmatprep.subr.bf16.mxu0 0
  %2137 = vmatpush1.bf16.xpose.msra.mxu0 0
  %2138 = vmatprep.subr.bf16.mxu0 0
  %2139 = vmatpush1.bf16.xpose.msra.mxu0 0
  %2140 = vmatprep.subr.bf16.mxu0 0
  %2141 = vmatpush1.bf16.xpose.msra.mxu0 0
  %2142 = vmatprep.subr.bf16.mxu0 0
  %2143 = vmatpush1.bf16.xpose.msra.mxu0 0
  %2144 = vmatprep.mubr.bf16.mxu0 0
  %2145 = vmatmul.mubr.bf16.gmra.mrb[0].mxu0 %v2110
  %v2146 = vpop.f32.mrb[0].mxu0
  %v2147 = vadd.f32 0.0, %v2146
  %v2148 = vpop.f32.mrb[0].mxu0
  %v2149 = vpop.f32.mrb[0].mxu0
  %v2150 = vpop.f32.mrb[0].mxu0
  %2151 = vdwg.mxu0
  %v2152 = vmul.f32 %v1832, 0.35355338
  %v2153 = vmul.f32 %v1877, 0.35355338
  %v2154 = vmul.f32 %v1922, 0.35355338
  %v2155 = vmul.f32 %v1967, 0.35355338
  %v2156 = vmul.f32 %v2012, 0.35355338
  %v2157 = vmul.f32 %v2057, 0.35355338
  %v2158 = vmul.f32 %v2102, 0.35355338
  %v2159 = vmul.f32 %v2147, 0.35355338
  %v2160 = vadd.f32 %v2152, %v400
  %v2161 = vadd.f32 %v2153, %v404
  %v2162 = vadd.f32 %v2154, %v408
  %v2163 = vadd.f32 %v2155, %v412
  %v2164 = vadd.f32 %v2156, %v416
  %v2165 = vadd.f32 %v2157, %v420
  %v2166 = vadd.f32 %v2158, %v424
  %v2167 = vadd.f32 %v2159, %v428
  %v2168 = vsel %vm445, %v2160, -inf
  %2169 = vmax.xlane.f32.xlu0 %v2168
  %v2170 = vpop.xlane.xlu0 %2169
  %v2171 = vsel %vm445, %v2161, -inf
  %2172 = vmax.xlane.f32.xlu0 %v2171
  %v2173 = vpop.xlane.xlu0 %2172
  %v2174 = vsel %vm445, %v2162, -inf
  %2175 = vmax.xlane.f32.xlu0 %v2174
  %v2176 = vpop.xlane.xlu0 %2175
  %v2177 = vsel %vm445, %v2163, -inf
  %2178 = vmax.xlane.f32.xlu0 %v2177
  %v2179 = vpop.xlane.xlu0 %2178
  %v2180 = vsel %vm445, %v2164, -inf
  %2181 = vmax.xlane.f32.xlu0 %v2180
  %v2182 = vpop.xlane.xlu0 %2181
  %v2183 = vsel %vm445, %v2165, -inf
  %2184 = vmax.xlane.f32.xlu0 %v2183
  %v2185 = vpop.xlane.xlu0 %2184
  %v2186 = vsel %vm445, %v2166, -inf
  %2187 = vmax.xlane.f32.xlu0 %v2186
  %v2188 = vpop.xlane.xlu0 %2187
  %v2189 = vsel %vm445, %v2167, -inf
  %2190 = vmax.xlane.f32.xlu0 %v2189
  %v2191 = vpop.xlane.xlu0 %2190
  %vm2192 = vcmp.eq.f32.partialorder %v2170, -inf
  %vm2193 = vcmp.eq.f32.partialorder %v2173, -inf
  %vm2194 = vcmp.eq.f32.partialorder %v2176, -inf
  %vm2195 = vcmp.eq.f32.partialorder %v2179, -inf
  %vm2196 = vcmp.eq.f32.partialorder %v2182, -inf
  %vm2197 = vcmp.eq.f32.partialorder %v2185, -inf
  %vm2198 = vcmp.eq.f32.partialorder %v2188, -inf
  %vm2199 = vcmp.eq.f32.partialorder %v2191, -inf
  %v2200 = vsel %vm2192, 0.0, %v2170
  %v2201 = vsel %vm2193, 0.0, %v2173
  %v2202 = vsel %vm2194, 0.0, %v2176
  %v2203 = vsel %vm2195, 0.0, %v2179
  %v2204 = vsel %vm2196, 0.0, %v2182
  %v2205 = vsel %vm2197, 0.0, %v2185
  %v2206 = vsel %vm2198, 0.0, %v2188
  %v2207 = vsel %vm2199, 0.0, %v2191
  %v2208 = vsub.f32 %v2160, %v2200
  %v2209 = vsub.f32 %v2161, %v2201
  %v2210 = vsub.f32 %v2162, %v2202
  %v2211 = vsub.f32 %v2163, %v2203
  %v2212 = vsub.f32 %v2164, %v2204
  %v2213 = vsub.f32 %v2165, %v2205
  %v2214 = vsub.f32 %v2166, %v2206
  %v2215 = vsub.f32 %v2167, %v2207
  %v2216 = vmul.f32 %v2208, 1.442695
  %v2217 = vpow.pop %v2216
  %v2218 = vmul.f32 %v2209, 1.442695
  %v2219 = vpow.pop %v2218
  %v2220 = vmul.f32 %v2210, 1.442695
  %v2221 = vpow.pop %v2220
  %v2222 = vmul.f32 %v2211, 1.442695
  %v2223 = vpow.pop %v2222
  %v2224 = vmul.f32 %v2212, 1.442695
  %v2225 = vpow.pop %v2224
  %v2226 = vmul.f32 %v2213, 1.442695
  %v2227 = vpow.pop %v2226
  %v2228 = vmul.f32 %v2214, 1.442695
  %v2229 = vpow.pop %v2228
  %v2230 = vmul.f32 %v2215, 1.442695
  %v2231 = vpow.pop %v2230
  %v2232 = vsel %vm445, %v2217, 0.0
  %2233 = vadd.xlane.f32.xlu0 %v2232
  %v2234 = vpop.xlane.xlu0 %2233
  %v2235 = vsel %vm445, %v2219, 0.0
  %2236 = vadd.xlane.f32.xlu0 %v2235
  %v2237 = vpop.xlane.xlu0 %2236
  %v2238 = vsel %vm445, %v2221, 0.0
  %2239 = vadd.xlane.f32.xlu0 %v2238
  %v2240 = vpop.xlane.xlu0 %2239
  %v2241 = vsel %vm445, %v2223, 0.0
  %2242 = vadd.xlane.f32.xlu0 %v2241
  %v2243 = vpop.xlane.xlu0 %2242
  %v2244 = vsel %vm445, %v2225, 0.0
  %2245 = vadd.xlane.f32.xlu0 %v2244
  %v2246 = vpop.xlane.xlu0 %2245
  %v2247 = vsel %vm445, %v2227, 0.0
  %2248 = vadd.xlane.f32.xlu0 %v2247
  %v2249 = vpop.xlane.xlu0 %2248
  %v2250 = vsel %vm445, %v2229, 0.0
  %2251 = vadd.xlane.f32.xlu0 %v2250
  %v2252 = vpop.xlane.xlu0 %2251
  %v2253 = vsel %vm445, %v2231, 0.0
  %2254 = vadd.xlane.f32.xlu0 %v2253
  %v2255 = vpop.xlane.xlu0 %2254
  %v2256 = vmax.f32 %v2234, 1e-30
  %v2257 = vmax.f32 %v2237, 1e-30
  %v2258 = vmax.f32 %v2240, 1e-30
  %v2259 = vmax.f32 %v2243, 1e-30
  %v2260 = vmax.f32 %v2246, 1e-30
  %v2261 = vmax.f32 %v2249, 1e-30
  %v2262 = vmax.f32 %v2252, 1e-30
  %v2263 = vmax.f32 %v2255, 1e-30
  %v2264 = vrcp.pop %v2256
  %v2265 = vmul.f32 %v2217, %v2264
  %v2266 = vrcp.pop %v2257
  %v2267 = vmul.f32 %v2219, %v2266
  %v2268 = vrcp.pop %v2258
  %v2269 = vmul.f32 %v2221, %v2268
  %v2270 = vrcp.pop %v2259
  %v2271 = vmul.f32 %v2223, %v2270
  %v2272 = vrcp.pop %v2260
  %v2273 = vmul.f32 %v2225, %v2272
  %v2274 = vrcp.pop %v2261
  %v2275 = vmul.f32 %v2227, %v2274
  %v2276 = vrcp.pop %v2262
  %v2277 = vmul.f32 %v2229, %v2276
  %v2278 = vrcp.pop %v2263
  %v2279 = vmul.f32 %v2231, %v2278
  %v2280 = vpack.c.bf16 %v2265, %v2265
  %v2281 = vpack.c.bf16 %v2267, %v2267
  %v2282 = vpack.c.bf16 %v2269, %v2269
  %v2283 = vpack.c.bf16 %v2271, %v2271
  %v2284 = vpack.c.bf16 %v2273, %v2273
  %v2285 = vpack.c.bf16 %v2275, %v2275
  %v2286 = vpack.c.bf16 %v2277, %v2277
  %v2287 = vpack.c.bf16 %v2279, %v2279
  %v2289 = vsel %vm566, %v2280, 0
  %v2291 = vsel %vm570, %v1793, 0
  %2293 = vmatprep.subr.bf16.mxu0 0
  %2294 = vmatpush1.bf16.msra.mxu0 %v2291
  %2295 = vmatprep.subr.bf16.mxu0 0
  %2296 = vmatpush1.bf16.msra.mxu0 0
  %2297 = vmatprep.subr.bf16.mxu0 0
  %2298 = vmatpush1.bf16.msra.mxu0 0
  %2299 = vmatprep.subr.bf16.mxu0 0
  %2300 = vmatpush1.bf16.msra.mxu0 0
  %2301 = vmatprep.subr.bf16.mxu0 0
  %2302 = vmatpush1.bf16.msra.mxu0 0
  %2303 = vmatprep.subr.bf16.mxu0 0
  %2304 = vmatpush1.bf16.msra.mxu0 0
  %2305 = vmatprep.subr.bf16.mxu0 0
  %2306 = vmatpush1.bf16.msra.mxu0 0
  %2307 = vmatprep.subr.bf16.mxu0 0
  %2308 = vmatpush1.bf16.msra.mxu0 0
  %2309 = vmatprep.subr.bf16.mxu0 0
  %2310 = vmatpush1.bf16.msra.mxu0 0
  %2311 = vmatprep.subr.bf16.mxu0 0
  %2312 = vmatpush1.bf16.msra.mxu0 0
  %2313 = vmatprep.subr.bf16.mxu0 0
  %2314 = vmatpush1.bf16.msra.mxu0 0
  %2315 = vmatprep.subr.bf16.mxu0 0
  %2316 = vmatpush1.bf16.msra.mxu0 0
  %2317 = vmatprep.subr.bf16.mxu0 0
  %2318 = vmatpush1.bf16.msra.mxu0 0
  %2319 = vmatprep.subr.bf16.mxu0 0
  %2320 = vmatpush1.bf16.msra.mxu0 0
  %2321 = vmatprep.subr.bf16.mxu0 0
  %2322 = vmatpush1.bf16.msra.mxu0 0
  %2323 = vmatprep.subr.bf16.mxu0 0
  %2324 = vmatpush1.bf16.msra.mxu0 0
  %2325 = vmatprep.mubr.bf16.mxu0 0
  %2326 = vmatmul.mubr.bf16.gmra.mrb[0].mxu0 %v2289
  %v2327 = vpop.f32.mrb[0].mxu0
  %v2328 = vadd.f32 0.0, %v2327
  %v2329 = vpop.f32.mrb[0].mxu0
  %v2330 = vpop.f32.mrb[0].mxu0
  %v2331 = vpop.f32.mrb[0].mxu0
  %2332 = vdwg.mxu0
  %v2334 = vsel %vm566, %v2281, 0
  %v2336 = vsel %vm570, %v1838, 0
  %2338 = vmatprep.subr.bf16.mxu0 0
  %2339 = vmatpush1.bf16.msra.mxu0 %v2336
  %2340 = vmatprep.subr.bf16.mxu0 0
  %2341 = vmatpush1.bf16.msra.mxu0 0
  %2342 = vmatprep.subr.bf16.mxu0 0
  %2343 = vmatpush1.bf16.msra.mxu0 0
  %2344 = vmatprep.subr.bf16.mxu0 0
  %2345 = vmatpush1.bf16.msra.mxu0 0
  %2346 = vmatprep.subr.bf16.mxu0 0
  %2347 = vmatpush1.bf16.msra.mxu0 0
  %2348 = vmatprep.subr.bf16.mxu0 0
  %2349 = vmatpush1.bf16.msra.mxu0 0
  %2350 = vmatprep.subr.bf16.mxu0 0
  %2351 = vmatpush1.bf16.msra.mxu0 0
  %2352 = vmatprep.subr.bf16.mxu0 0
  %2353 = vmatpush1.bf16.msra.mxu0 0
  %2354 = vmatprep.subr.bf16.mxu0 0
  %2355 = vmatpush1.bf16.msra.mxu0 0
  %2356 = vmatprep.subr.bf16.mxu0 0
  %2357 = vmatpush1.bf16.msra.mxu0 0
  %2358 = vmatprep.subr.bf16.mxu0 0
  %2359 = vmatpush1.bf16.msra.mxu0 0
  %2360 = vmatprep.subr.bf16.mxu0 0
  %2361 = vmatpush1.bf16.msra.mxu0 0
  %2362 = vmatprep.subr.bf16.mxu0 0
  %2363 = vmatpush1.bf16.msra.mxu0 0
  %2364 = vmatprep.subr.bf16.mxu0 0
  %2365 = vmatpush1.bf16.msra.mxu0 0
  %2366 = vmatprep.subr.bf16.mxu0 0
  %2367 = vmatpush1.bf16.msra.mxu0 0
  %2368 = vmatprep.subr.bf16.mxu0 0
  %2369 = vmatpush1.bf16.msra.mxu0 0
  %2370 = vmatprep.mubr.bf16.mxu0 0
  %2371 = vmatmul.mubr.bf16.gmra.mrb[0].mxu0 %v2334
  %v2372 = vpop.f32.mrb[0].mxu0
  %v2373 = vadd.f32 0.0, %v2372
  %v2374 = vpop.f32.mrb[0].mxu0
  %v2375 = vpop.f32.mrb[0].mxu0
  %v2376 = vpop.f32.mrb[0].mxu0
  %2377 = vdwg.mxu0
  %v2379 = vsel %vm566, %v2282, 0
  %v2381 = vsel %vm570, %v1883, 0
  %2383 = vmatprep.subr.bf16.mxu0 0
  %2384 = vmatpush1.bf16.msra.mxu0 %v2381
  %2385 = vmatprep.subr.bf16.mxu0 0
  %2386 = vmatpush1.bf16.msra.mxu0 0
  %2387 = vmatprep.subr.bf16.mxu0 0
  %2388 = vmatpush1.bf16.msra.mxu0 0
  %2389 = vmatprep.subr.bf16.mxu0 0
  %2390 = vmatpush1.bf16.msra.mxu0 0
  %2391 = vmatprep.subr.bf16.mxu0 0
  %2392 = vmatpush1.bf16.msra.mxu0 0
  %2393 = vmatprep.subr.bf16.mxu0 0
  %2394 = vmatpush1.bf16.msra.mxu0 0
  %2395 = vmatprep.subr.bf16.mxu0 0
  %2396 = vmatpush1.bf16.msra.mxu0 0
  %2397 = vmatprep.subr.bf16.mxu0 0
  %2398 = vmatpush1.bf16.msra.mxu0 0
  %2399 = vmatprep.subr.bf16.mxu0 0
  %2400 = vmatpush1.bf16.msra.mxu0 0
  %2401 = vmatprep.subr.bf16.mxu0 0
  %2402 = vmatpush1.bf16.msra.mxu0 0
  %2403 = vmatprep.subr.bf16.mxu0 0
  %2404 = vmatpush1.bf16.msra.mxu0 0
  %2405 = vmatprep.subr.bf16.mxu0 0
  %2406 = vmatpush1.bf16.msra.mxu0 0
  %2407 = vmatprep.subr.bf16.mxu0 0
  %2408 = vmatpush1.bf16.msra.mxu0 0
  %2409 = vmatprep.subr.bf16.mxu0 0
  %2410 = vmatpush1.bf16.msra.mxu0 0
  %2411 = vmatprep.subr.bf16.mxu0 0
  %2412 = vmatpush1.bf16.msra.mxu0 0
  %2413 = vmatprep.subr.bf16.mxu0 0
  %2414 = vmatpush1.bf16.msra.mxu0 0
  %2415 = vmatprep.mubr.bf16.mxu0 0
  %2416 = vmatmul.mubr.bf16.gmra.mrb[0].mxu0 %v2379
  %v2417 = vpop.f32.mrb[0].mxu0
  %v2418 = vadd.f32 0.0, %v2417
  %v2419 = vpop.f32.mrb[0].mxu0
  %v2420 = vpop.f32.mrb[0].mxu0
  %v2421 = vpop.f32.mrb[0].mxu0
  %2422 = vdwg.mxu0
  %v2424 = vsel %vm566, %v2283, 0
  %v2426 = vsel %vm570, %v1928, 0
  %2428 = vmatprep.subr.bf16.mxu0 0
  %2429 = vmatpush1.bf16.msra.mxu0 %v2426
  %2430 = vmatprep.subr.bf16.mxu0 0
  %2431 = vmatpush1.bf16.msra.mxu0 0
  %2432 = vmatprep.subr.bf16.mxu0 0
  %2433 = vmatpush1.bf16.msra.mxu0 0
  %2434 = vmatprep.subr.bf16.mxu0 0
  %2435 = vmatpush1.bf16.msra.mxu0 0
  %2436 = vmatprep.subr.bf16.mxu0 0
  %2437 = vmatpush1.bf16.msra.mxu0 0
  %2438 = vmatprep.subr.bf16.mxu0 0
  %2439 = vmatpush1.bf16.msra.mxu0 0
  %2440 = vmatprep.subr.bf16.mxu0 0
  %2441 = vmatpush1.bf16.msra.mxu0 0
  %2442 = vmatprep.subr.bf16.mxu0 0
  %2443 = vmatpush1.bf16.msra.mxu0 0
  %2444 = vmatprep.subr.bf16.mxu0 0
  %2445 = vmatpush1.bf16.msra.mxu0 0
  %2446 = vmatprep.subr.bf16.mxu0 0
  %2447 = vmatpush1.bf16.msra.mxu0 0
  %2448 = vmatprep.subr.bf16.mxu0 0
  %2449 = vmatpush1.bf16.msra.mxu0 0
  %2450 = vmatprep.subr.bf16.mxu0 0
  %2451 = vmatpush1.bf16.msra.mxu0 0
  %2452 = vmatprep.subr.bf16.mxu0 0
  %2453 = vmatpush1.bf16.msra.mxu0 0
  %2454 = vmatprep.subr.bf16.mxu0 0
  %2455 = vmatpush1.bf16.msra.mxu0 0
  %2456 = vmatprep.subr.bf16.mxu0 0
  %2457 = vmatpush1.bf16.msra.mxu0 0
  %2458 = vmatprep.subr.bf16.mxu0 0
  %2459 = vmatpush1.bf16.msra.mxu0 0
  %2460 = vmatprep.mubr.bf16.mxu0 0
  %2461 = vmatmul.mubr.bf16.gmra.mrb[0].mxu0 %v2424
  %v2462 = vpop.f32.mrb[0].mxu0
  %v2463 = vadd.f32 0.0, %v2462
  %v2464 = vpop.f32.mrb[0].mxu0
  %v2465 = vpop.f32.mrb[0].mxu0
  %v2466 = vpop.f32.mrb[0].mxu0
  %2467 = vdwg.mxu0
  %v2469 = vsel %vm566, %v2284, 0
  %v2471 = vsel %vm570, %v1973, 0
  %2473 = vmatprep.subr.bf16.mxu0 0
  %2474 = vmatpush1.bf16.msra.mxu0 %v2471
  %2475 = vmatprep.subr.bf16.mxu0 0
  %2476 = vmatpush1.bf16.msra.mxu0 0
  %2477 = vmatprep.subr.bf16.mxu0 0
  %2478 = vmatpush1.bf16.msra.mxu0 0
  %2479 = vmatprep.subr.bf16.mxu0 0
  %2480 = vmatpush1.bf16.msra.mxu0 0
  %2481 = vmatprep.subr.bf16.mxu0 0
  %2482 = vmatpush1.bf16.msra.mxu0 0
  %2483 = vmatprep.subr.bf16.mxu0 0
  %2484 = vmatpush1.bf16.msra.mxu0 0
  %2485 = vmatprep.subr.bf16.mxu0 0
  %2486 = vmatpush1.bf16.msra.mxu0 0
  %2487 = vmatprep.subr.bf16.mxu0 0
  %2488 = vmatpush1.bf16.msra.mxu0 0
  %2489 = vmatprep.subr.bf16.mxu0 0
  %2490 = vmatpush1.bf16.msra.mxu0 0
  %2491 = vmatprep.subr.bf16.mxu0 0
  %2492 = vmatpush1.bf16.msra.mxu0 0
  %2493 = vmatprep.subr.bf16.mxu0 0
  %2494 = vmatpush1.bf16.msra.mxu0 0
  %2495 = vmatprep.subr.bf16.mxu0 0
  %2496 = vmatpush1.bf16.msra.mxu0 0
  %2497 = vmatprep.subr.bf16.mxu0 0
  %2498 = vmatpush1.bf16.msra.mxu0 0
  %2499 = vmatprep.subr.bf16.mxu0 0
  %2500 = vmatpush1.bf16.msra.mxu0 0
  %2501 = vmatprep.subr.bf16.mxu0 0
  %2502 = vmatpush1.bf16.msra.mxu0 0
  %2503 = vmatprep.subr.bf16.mxu0 0
  %2504 = vmatpush1.bf16.msra.mxu0 0
  %2505 = vmatprep.mubr.bf16.mxu0 0
  %2506 = vmatmul.mubr.bf16.gmra.mrb[0].mxu0 %v2469
  %v2507 = vpop.f32.mrb[0].mxu0
  %v2508 = vadd.f32 0.0, %v2507
  %v2509 = vpop.f32.mrb[0].mxu0
  %v2510 = vpop.f32.mrb[0].mxu0
  %v2511 = vpop.f32.mrb[0].mxu0
  %2512 = vdwg.mxu0
  %v2514 = vsel %vm566, %v2285, 0
  %v2516 = vsel %vm570, %v2018, 0
  %2518 = vmatprep.subr.bf16.mxu0 0
  %2519 = vmatpush1.bf16.msra.mxu0 %v2516
  %2520 = vmatprep.subr.bf16.mxu0 0
  %2521 = vmatpush1.bf16.msra.mxu0 0
  %2522 = vmatprep.subr.bf16.mxu0 0
  %2523 = vmatpush1.bf16.msra.mxu0 0
  %2524 = vmatprep.subr.bf16.mxu0 0
  %2525 = vmatpush1.bf16.msra.mxu0 0
  %2526 = vmatprep.subr.bf16.mxu0 0
  %2527 = vmatpush1.bf16.msra.mxu0 0
  %2528 = vmatprep.subr.bf16.mxu0 0
  %2529 = vmatpush1.bf16.msra.mxu0 0
  %2530 = vmatprep.subr.bf16.mxu0 0
  %2531 = vmatpush1.bf16.msra.mxu0 0
  %2532 = vmatprep.subr.bf16.mxu0 0
  %2533 = vmatpush1.bf16.msra.mxu0 0
  %2534 = vmatprep.subr.bf16.mxu0 0
  %2535 = vmatpush1.bf16.msra.mxu0 0
  %2536 = vmatprep.subr.bf16.mxu0 0
  %2537 = vmatpush1.bf16.msra.mxu0 0
  %2538 = vmatprep.subr.bf16.mxu0 0
  %2539 = vmatpush1.bf16.msra.mxu0 0
  %2540 = vmatprep.subr.bf16.mxu0 0
  %2541 = vmatpush1.bf16.msra.mxu0 0
  %2542 = vmatprep.subr.bf16.mxu0 0
  %2543 = vmatpush1.bf16.msra.mxu0 0
  %2544 = vmatprep.subr.bf16.mxu0 0
  %2545 = vmatpush1.bf16.msra.mxu0 0
  %2546 = vmatprep.subr.bf16.mxu0 0
  %2547 = vmatpush1.bf16.msra.mxu0 0
  %2548 = vmatprep.subr.bf16.mxu0 0
  %2549 = vmatpush1.bf16.msra.mxu0 0
  %2550 = vmatprep.mubr.bf16.mxu0 0
  %2551 = vmatmul.mubr.bf16.gmra.mrb[0].mxu0 %v2514
  %v2552 = vpop.f32.mrb[0].mxu0
  %v2553 = vadd.f32 0.0, %v2552
  %v2554 = vpop.f32.mrb[0].mxu0
  %v2555 = vpop.f32.mrb[0].mxu0
  %v2556 = vpop.f32.mrb[0].mxu0
  %2557 = vdwg.mxu0
  %v2559 = vsel %vm566, %v2286, 0
  %v2561 = vsel %vm570, %v2063, 0
  %2563 = vmatprep.subr.bf16.mxu0 0
  %2564 = vmatpush1.bf16.msra.mxu0 %v2561
  %2565 = vmatprep.subr.bf16.mxu0 0
  %2566 = vmatpush1.bf16.msra.mxu0 0
  %2567 = vmatprep.subr.bf16.mxu0 0
  %2568 = vmatpush1.bf16.msra.mxu0 0
  %2569 = vmatprep.subr.bf16.mxu0 0
  %2570 = vmatpush1.bf16.msra.mxu0 0
  %2571 = vmatprep.subr.bf16.mxu0 0
  %2572 = vmatpush1.bf16.msra.mxu0 0
  %2573 = vmatprep.subr.bf16.mxu0 0
  %2574 = vmatpush1.bf16.msra.mxu0 0
  %2575 = vmatprep.subr.bf16.mxu0 0
  %2576 = vmatpush1.bf16.msra.mxu0 0
  %2577 = vmatprep.subr.bf16.mxu0 0
  %2578 = vmatpush1.bf16.msra.mxu0 0
  %2579 = vmatprep.subr.bf16.mxu0 0
  %2580 = vmatpush1.bf16.msra.mxu0 0
  %2581 = vmatprep.subr.bf16.mxu0 0
  %2582 = vmatpush1.bf16.msra.mxu0 0
  %2583 = vmatprep.subr.bf16.mxu0 0
  %2584 = vmatpush1.bf16.msra.mxu0 0
  %2585 = vmatprep.subr.bf16.mxu0 0
  %2586 = vmatpush1.bf16.msra.mxu0 0
  %2587 = vmatprep.subr.bf16.mxu0 0
  %2588 = vmatpush1.bf16.msra.mxu0 0
  %2589 = vmatprep.subr.bf16.mxu0 0
  %2590 = vmatpush1.bf16.msra.mxu0 0
  %2591 = vmatprep.subr.bf16.mxu0 0
  %2592 = vmatpush1.bf16.msra.mxu0 0
  %2593 = vmatprep.subr.bf16.mxu0 0
  %2594 = vmatpush1.bf16.msra.mxu0 0
  %2595 = vmatprep.mubr.bf16.mxu0 0
  %2596 = vmatmul.mubr.bf16.gmra.mrb[0].mxu0 %v2559
  %v2597 = vpop.f32.mrb[0].mxu0
  %v2598 = vadd.f32 0.0, %v2597
  %v2599 = vpop.f32.mrb[0].mxu0
  %v2600 = vpop.f32.mrb[0].mxu0
  %v2601 = vpop.f32.mrb[0].mxu0
  %2602 = vdwg.mxu0
  %v2604 = vsel %vm566, %v2287, 0
  %v2606 = vsel %vm570, %v2108, 0
  %2608 = vmatprep.subr.bf16.mxu0 0
  %2609 = vmatpush1.bf16.msra.mxu0 %v2606
  %2610 = vmatprep.subr.bf16.mxu0 0
  %2611 = vmatpush1.bf16.msra.mxu0 0
  %2612 = vmatprep.subr.bf16.mxu0 0
  %2613 = vmatpush1.bf16.msra.mxu0 0
  %2614 = vmatprep.subr.bf16.mxu0 0
  %2615 = vmatpush1.bf16.msra.mxu0 0
  %2616 = vmatprep.subr.bf16.mxu0 0
  %2617 = vmatpush1.bf16.msra.mxu0 0
  %2618 = vmatprep.subr.bf16.mxu0 0
  %2619 = vmatpush1.bf16.msra.mxu0 0
  %2620 = vmatprep.subr.bf16.mxu0 0
  %2621 = vmatpush1.bf16.msra.mxu0 0
  %2622 = vmatprep.subr.bf16.mxu0 0
  %2623 = vmatpush1.bf16.msra.mxu0 0
  %2624 = vmatprep.subr.bf16.mxu0 0
  %2625 = vmatpush1.bf16.msra.mxu0 0
  %2626 = vmatprep.subr.bf16.mxu0 0
  %2627 = vmatpush1.bf16.msra.mxu0 0
  %2628 = vmatprep.subr.bf16.mxu0 0
  %2629 = vmatpush1.bf16.msra.mxu0 0
  %2630 = vmatprep.subr.bf16.mxu0 0
  %2631 = vmatpush1.bf16.msra.mxu0 0
  %2632 = vmatprep.subr.bf16.mxu0 0
  %2633 = vmatpush1.bf16.msra.mxu0 0
  %2634 = vmatprep.subr.bf16.mxu0 0
  %2635 = vmatpush1.bf16.msra.mxu0 0
  %2636 = vmatprep.subr.bf16.mxu0 0
  %2637 = vmatpush1.bf16.msra.mxu0 0
  %2638 = vmatprep.subr.bf16.mxu0 0
  %2639 = vmatpush1.bf16.msra.mxu0 0
  %2640 = vmatprep.mubr.bf16.mxu0 0
  %2641 = vmatmul.mubr.bf16.gmra.mrb[0].mxu0 %v2604
  %v2642 = vpop.f32.mrb[0].mxu0
  %v2643 = vadd.f32 0.0, %v2642
  %v2644 = vpop.f32.mrb[0].mxu0
  %v2645 = vpop.f32.mrb[0].mxu0
  %v2646 = vpop.f32.mrb[0].mxu0
  %2647 = vdwg.mxu0
  %2648 = vrot.lane.b32.xlu0 %v28, 104
  %v2649 = vpop.permute.xlu0 %2648
  %v2651 = vsel %vm36, %v2649, 0
  %2653 = vmatprep.subr.bf16.mxu0 0
  %2654 = vmatpush1.bf16.xpose.msra.mxu0 %v2651
  %2655 = vmatprep.subr.bf16.mxu0 0
  %2656 = vmatpush1.bf16.xpose.msra.mxu0 0
  %2657 = vmatprep.subr.bf16.mxu0 0
  %2658 = vmatpush1.bf16.xpose.msra.mxu0 0
  %2659 = vmatprep.subr.bf16.mxu0 0
  %2660 = vmatpush1.bf16.xpose.msra.mxu0 0
  %2661 = vmatprep.subr.bf16.mxu0 0
  %2662 = vmatpush1.bf16.xpose.msra.mxu0 0
  %2663 = vmatprep.subr.bf16.mxu0 0
  %2664 = vmatpush1.bf16.xpose.msra.mxu0 0
  %2665 = vmatprep.subr.bf16.mxu0 0
  %2666 = vmatpush1.bf16.xpose.msra.mxu0 0
  %2667 = vmatprep.subr.bf16.mxu0 0
  %2668 = vmatpush1.bf16.xpose.msra.mxu0 0
  %2669 = vmatprep.subr.bf16.mxu0 0
  %2670 = vmatpush1.bf16.xpose.msra.mxu0 0
  %2671 = vmatprep.subr.bf16.mxu0 0
  %2672 = vmatpush1.bf16.xpose.msra.mxu0 0
  %2673 = vmatprep.subr.bf16.mxu0 0
  %2674 = vmatpush1.bf16.xpose.msra.mxu0 0
  %2675 = vmatprep.subr.bf16.mxu0 0
  %2676 = vmatpush1.bf16.xpose.msra.mxu0 0
  %2677 = vmatprep.subr.bf16.mxu0 0
  %2678 = vmatpush1.bf16.xpose.msra.mxu0 0
  %2679 = vmatprep.subr.bf16.mxu0 0
  %2680 = vmatpush1.bf16.xpose.msra.mxu0 0
  %2681 = vmatprep.subr.bf16.mxu0 0
  %2682 = vmatpush1.bf16.xpose.msra.mxu0 0
  %2683 = vmatprep.subr.bf16.mxu0 0
  %2684 = vmatpush1.bf16.xpose.msra.mxu0 0
  %2685 = vmatprep.mubr.bf16.mxu0 0
  %2686 = vmatmul.mubr.bf16.gmra.mrb[0].mxu0 %v2651
  %v2687 = vpop.f32.mrb[0].mxu0
  %v2688 = vadd.f32 0.0, %v2687
  %v2689 = vpop.f32.mrb[0].mxu0
  %v2690 = vpop.f32.mrb[0].mxu0
  %v2691 = vpop.f32.mrb[0].mxu0
  %2692 = vdwg.mxu0
  %2693 = vrot.lane.b32.xlu0 %v29, 104
  %v2694 = vpop.permute.xlu0 %2693
  %v2696 = vsel %vm36, %v2694, 0
  %2698 = vmatprep.subr.bf16.mxu0 0
  %2699 = vmatpush1.bf16.xpose.msra.mxu0 %v2696
  %2700 = vmatprep.subr.bf16.mxu0 0
  %2701 = vmatpush1.bf16.xpose.msra.mxu0 0
  %2702 = vmatprep.subr.bf16.mxu0 0
  %2703 = vmatpush1.bf16.xpose.msra.mxu0 0
  %2704 = vmatprep.subr.bf16.mxu0 0
  %2705 = vmatpush1.bf16.xpose.msra.mxu0 0
  %2706 = vmatprep.subr.bf16.mxu0 0
  %2707 = vmatpush1.bf16.xpose.msra.mxu0 0
  %2708 = vmatprep.subr.bf16.mxu0 0
  %2709 = vmatpush1.bf16.xpose.msra.mxu0 0
  %2710 = vmatprep.subr.bf16.mxu0 0
  %2711 = vmatpush1.bf16.xpose.msra.mxu0 0
  %2712 = vmatprep.subr.bf16.mxu0 0
  %2713 = vmatpush1.bf16.xpose.msra.mxu0 0
  %2714 = vmatprep.subr.bf16.mxu0 0
  %2715 = vmatpush1.bf16.xpose.msra.mxu0 0
  %2716 = vmatprep.subr.bf16.mxu0 0
  %2717 = vmatpush1.bf16.xpose.msra.mxu0 0
  %2718 = vmatprep.subr.bf16.mxu0 0
  %2719 = vmatpush1.bf16.xpose.msra.mxu0 0
  %2720 = vmatprep.subr.bf16.mxu0 0
  %2721 = vmatpush1.bf16.xpose.msra.mxu0 0
  %2722 = vmatprep.subr.bf16.mxu0 0
  %2723 = vmatpush1.bf16.xpose.msra.mxu0 0
  %2724 = vmatprep.subr.bf16.mxu0 0
  %2725 = vmatpush1.bf16.xpose.msra.mxu0 0
  %2726 = vmatprep.subr.bf16.mxu0 0
  %2727 = vmatpush1.bf16.xpose.msra.mxu0 0
  %2728 = vmatprep.subr.bf16.mxu0 0
  %2729 = vmatpush1.bf16.xpose.msra.mxu0 0
  %2730 = vmatprep.mubr.bf16.mxu0 0
  %2731 = vmatmul.mubr.bf16.gmra.mrb[0].mxu0 %v2696
  %v2732 = vpop.f32.mrb[0].mxu0
  %v2733 = vadd.f32 0.0, %v2732
  %v2734 = vpop.f32.mrb[0].mxu0
  %v2735 = vpop.f32.mrb[0].mxu0
  %v2736 = vpop.f32.mrb[0].mxu0
  %2737 = vdwg.mxu0
  %2738 = vrot.lane.b32.xlu0 %v30, 104
  %v2739 = vpop.permute.xlu0 %2738
  %v2741 = vsel %vm36, %v2739, 0
  %2743 = vmatprep.subr.bf16.mxu0 0
  %2744 = vmatpush1.bf16.xpose.msra.mxu0 %v2741
  %2745 = vmatprep.subr.bf16.mxu0 0
  %2746 = vmatpush1.bf16.xpose.msra.mxu0 0
  %2747 = vmatprep.subr.bf16.mxu0 0
  %2748 = vmatpush1.bf16.xpose.msra.mxu0 0
  %2749 = vmatprep.subr.bf16.mxu0 0
  %2750 = vmatpush1.bf16.xpose.msra.mxu0 0
  %2751 = vmatprep.subr.bf16.mxu0 0
  %2752 = vmatpush1.bf16.xpose.msra.mxu0 0
  %2753 = vmatprep.subr.bf16.mxu0 0
  %2754 = vmatpush1.bf16.xpose.msra.mxu0 0
  %2755 = vmatprep.subr.bf16.mxu0 0
  %2756 = vmatpush1.bf16.xpose.msra.mxu0 0
  %2757 = vmatprep.subr.bf16.mxu0 0
  %2758 = vmatpush1.bf16.xpose.msra.mxu0 0
  %2759 = vmatprep.subr.bf16.mxu0 0
  %2760 = vmatpush1.bf16.xpose.msra.mxu0 0
  %2761 = vmatprep.subr.bf16.mxu0 0
  %2762 = vmatpush1.bf16.xpose.msra.mxu0 0
  %2763 = vmatprep.subr.bf16.mxu0 0
  %2764 = vmatpush1.bf16.xpose.msra.mxu0 0
  %2765 = vmatprep.subr.bf16.mxu0 0
  %2766 = vmatpush1.bf16.xpose.msra.mxu0 0
  %2767 = vmatprep.subr.bf16.mxu0 0
  %2768 = vmatpush1.bf16.xpose.msra.mxu0 0
  %2769 = vmatprep.subr.bf16.mxu0 0
  %2770 = vmatpush1.bf16.xpose.msra.mxu0 0
  %2771 = vmatprep.subr.bf16.mxu0 0
  %2772 = vmatpush1.bf16.xpose.msra.mxu0 0
  %2773 = vmatprep.subr.bf16.mxu0 0
  %2774 = vmatpush1.bf16.xpose.msra.mxu0 0
  %2775 = vmatprep.mubr.bf16.mxu0 0
  %2776 = vmatmul.mubr.bf16.gmra.mrb[0].mxu0 %v2741
  %v2777 = vpop.f32.mrb[0].mxu0
  %v2778 = vadd.f32 0.0, %v2777
  %v2779 = vpop.f32.mrb[0].mxu0
  %v2780 = vpop.f32.mrb[0].mxu0
  %v2781 = vpop.f32.mrb[0].mxu0
  %2782 = vdwg.mxu0
  %2783 = vrot.lane.b32.xlu0 %v31, 104
  %v2784 = vpop.permute.xlu0 %2783
  %v2786 = vsel %vm36, %v2784, 0
  %2788 = vmatprep.subr.bf16.mxu0 0
  %2789 = vmatpush1.bf16.xpose.msra.mxu0 %v2786
  %2790 = vmatprep.subr.bf16.mxu0 0
  %2791 = vmatpush1.bf16.xpose.msra.mxu0 0
  %2792 = vmatprep.subr.bf16.mxu0 0
  %2793 = vmatpush1.bf16.xpose.msra.mxu0 0
  %2794 = vmatprep.subr.bf16.mxu0 0
  %2795 = vmatpush1.bf16.xpose.msra.mxu0 0
  %2796 = vmatprep.subr.bf16.mxu0 0
  %2797 = vmatpush1.bf16.xpose.msra.mxu0 0
  %2798 = vmatprep.subr.bf16.mxu0 0
  %2799 = vmatpush1.bf16.xpose.msra.mxu0 0
  %2800 = vmatprep.subr.bf16.mxu0 0
  %2801 = vmatpush1.bf16.xpose.msra.mxu0 0
  %2802 = vmatprep.subr.bf16.mxu0 0
  %2803 = vmatpush1.bf16.xpose.msra.mxu0 0
  %2804 = vmatprep.subr.bf16.mxu0 0
  %2805 = vmatpush1.bf16.xpose.msra.mxu0 0
  %2806 = vmatprep.subr.bf16.mxu0 0
  %2807 = vmatpush1.bf16.xpose.msra.mxu0 0
  %2808 = vmatprep.subr.bf16.mxu0 0
  %2809 = vmatpush1.bf16.xpose.msra.mxu0 0
  %2810 = vmatprep.subr.bf16.mxu0 0
  %2811 = vmatpush1.bf16.xpose.msra.mxu0 0
  %2812 = vmatprep.subr.bf16.mxu0 0
  %2813 = vmatpush1.bf16.xpose.msra.mxu0 0
  %2814 = vmatprep.subr.bf16.mxu0 0
  %2815 = vmatpush1.bf16.xpose.msra.mxu0 0
  %2816 = vmatprep.subr.bf16.mxu0 0
  %2817 = vmatpush1.bf16.xpose.msra.mxu0 0
  %2818 = vmatprep.subr.bf16.mxu0 0
  %2819 = vmatpush1.bf16.xpose.msra.mxu0 0
  %2820 = vmatprep.mubr.bf16.mxu0 0
  %2821 = vmatmul.mubr.bf16.gmra.mrb[0].mxu0 %v2786
  %v2822 = vpop.f32.mrb[0].mxu0
  %v2823 = vadd.f32 0.0, %v2822
  %v2824 = vpop.f32.mrb[0].mxu0
  %v2825 = vpop.f32.mrb[0].mxu0
  %v2826 = vpop.f32.mrb[0].mxu0
  %2827 = vdwg.mxu0
  %2828 = vrot.lane.b32.xlu0 %v32, 104
  %v2829 = vpop.permute.xlu0 %2828
  %v2831 = vsel %vm36, %v2829, 0
  %2833 = vmatprep.subr.bf16.mxu0 0
  %2834 = vmatpush1.bf16.xpose.msra.mxu0 %v2831
  %2835 = vmatprep.subr.bf16.mxu0 0
  %2836 = vmatpush1.bf16.xpose.msra.mxu0 0
  %2837 = vmatprep.subr.bf16.mxu0 0
  %2838 = vmatpush1.bf16.xpose.msra.mxu0 0
  %2839 = vmatprep.subr.bf16.mxu0 0
  %2840 = vmatpush1.bf16.xpose.msra.mxu0 0
  %2841 = vmatprep.subr.bf16.mxu0 0
  %2842 = vmatpush1.bf16.xpose.msra.mxu0 0
  %2843 = vmatprep.subr.bf16.mxu0 0
  %2844 = vmatpush1.bf16.xpose.msra.mxu0 0
  %2845 = vmatprep.subr.bf16.mxu0 0
  %2846 = vmatpush1.bf16.xpose.msra.mxu0 0
  %2847 = vmatprep.subr.bf16.mxu0 0
  %2848 = vmatpush1.bf16.xpose.msra.mxu0 0
  %2849 = vmatprep.subr.bf16.mxu0 0
  %2850 = vmatpush1.bf16.xpose.msra.mxu0 0
  %2851 = vmatprep.subr.bf16.mxu0 0
  %2852 = vmatpush1.bf16.xpose.msra.mxu0 0
  %2853 = vmatprep.subr.bf16.mxu0 0
  %2854 = vmatpush1.bf16.xpose.msra.mxu0 0
  %2855 = vmatprep.subr.bf16.mxu0 0
  %2856 = vmatpush1.bf16.xpose.msra.mxu0 0
  %2857 = vmatprep.subr.bf16.mxu0 0
  %2858 = vmatpush1.bf16.xpose.msra.mxu0 0
  %2859 = vmatprep.subr.bf16.mxu0 0
  %2860 = vmatpush1.bf16.xpose.msra.mxu0 0
  %2861 = vmatprep.subr.bf16.mxu0 0
  %2862 = vmatpush1.bf16.xpose.msra.mxu0 0
  %2863 = vmatprep.subr.bf16.mxu0 0
  %2864 = vmatpush1.bf16.xpose.msra.mxu0 0
  %2865 = vmatprep.mubr.bf16.mxu0 0
  %2866 = vmatmul.mubr.bf16.gmra.mrb[0].mxu0 %v2831
  %v2867 = vpop.f32.mrb[0].mxu0
  %v2868 = vadd.f32 0.0, %v2867
  %v2869 = vpop.f32.mrb[0].mxu0
  %v2870 = vpop.f32.mrb[0].mxu0
  %v2871 = vpop.f32.mrb[0].mxu0
  %2872 = vdwg.mxu0
  %2873 = vrot.lane.b32.xlu0 %v33, 104
  %v2874 = vpop.permute.xlu0 %2873
  %v2876 = vsel %vm36, %v2874, 0
  %2878 = vmatprep.subr.bf16.mxu0 0
  %2879 = vmatpush1.bf16.xpose.msra.mxu0 %v2876
  %2880 = vmatprep.subr.bf16.mxu0 0
  %2881 = vmatpush1.bf16.xpose.msra.mxu0 0
  %2882 = vmatprep.subr.bf16.mxu0 0
  %2883 = vmatpush1.bf16.xpose.msra.mxu0 0
  %2884 = vmatprep.subr.bf16.mxu0 0
  %2885 = vmatpush1.bf16.xpose.msra.mxu0 0
  %2886 = vmatprep.subr.bf16.mxu0 0
  %2887 = vmatpush1.bf16.xpose.msra.mxu0 0
  %2888 = vmatprep.subr.bf16.mxu0 0
  %2889 = vmatpush1.bf16.xpose.msra.mxu0 0
  %2890 = vmatprep.subr.bf16.mxu0 0
  %2891 = vmatpush1.bf16.xpose.msra.mxu0 0
  %2892 = vmatprep.subr.bf16.mxu0 0
  %2893 = vmatpush1.bf16.xpose.msra.mxu0 0
  %2894 = vmatprep.subr.bf16.mxu0 0
  %2895 = vmatpush1.bf16.xpose.msra.mxu0 0
  %2896 = vmatprep.subr.bf16.mxu0 0
  %2897 = vmatpush1.bf16.xpose.msra.mxu0 0
  %2898 = vmatprep.subr.bf16.mxu0 0
  %2899 = vmatpush1.bf16.xpose.msra.mxu0 0
  %2900 = vmatprep.subr.bf16.mxu0 0
  %2901 = vmatpush1.bf16.xpose.msra.mxu0 0
  %2902 = vmatprep.subr.bf16.mxu0 0
  %2903 = vmatpush1.bf16.xpose.msra.mxu0 0
  %2904 = vmatprep.subr.bf16.mxu0 0
  %2905 = vmatpush1.bf16.xpose.msra.mxu0 0
  %2906 = vmatprep.subr.bf16.mxu0 0
  %2907 = vmatpush1.bf16.xpose.msra.mxu0 0
  %2908 = vmatprep.subr.bf16.mxu0 0
  %2909 = vmatpush1.bf16.xpose.msra.mxu0 0
  %2910 = vmatprep.mubr.bf16.mxu0 0
  %2911 = vmatmul.mubr.bf16.gmra.mrb[0].mxu0 %v2876
  %v2912 = vpop.f32.mrb[0].mxu0
  %v2913 = vadd.f32 0.0, %v2912
  %v2914 = vpop.f32.mrb[0].mxu0
  %v2915 = vpop.f32.mrb[0].mxu0
  %v2916 = vpop.f32.mrb[0].mxu0
  %2917 = vdwg.mxu0
  %2918 = vrot.lane.b32.xlu0 %v34, 104
  %v2919 = vpop.permute.xlu0 %2918
  %v2921 = vsel %vm36, %v2919, 0
  %2923 = vmatprep.subr.bf16.mxu0 0
  %2924 = vmatpush1.bf16.xpose.msra.mxu0 %v2921
  %2925 = vmatprep.subr.bf16.mxu0 0
  %2926 = vmatpush1.bf16.xpose.msra.mxu0 0
  %2927 = vmatprep.subr.bf16.mxu0 0
  %2928 = vmatpush1.bf16.xpose.msra.mxu0 0
  %2929 = vmatprep.subr.bf16.mxu0 0
  %2930 = vmatpush1.bf16.xpose.msra.mxu0 0
  %2931 = vmatprep.subr.bf16.mxu0 0
  %2932 = vmatpush1.bf16.xpose.msra.mxu0 0
  %2933 = vmatprep.subr.bf16.mxu0 0
  %2934 = vmatpush1.bf16.xpose.msra.mxu0 0
  %2935 = vmatprep.subr.bf16.mxu0 0
  %2936 = vmatpush1.bf16.xpose.msra.mxu0 0
  %2937 = vmatprep.subr.bf16.mxu0 0
  %2938 = vmatpush1.bf16.xpose.msra.mxu0 0
  %2939 = vmatprep.subr.bf16.mxu0 0
  %2940 = vmatpush1.bf16.xpose.msra.mxu0 0
  %2941 = vmatprep.subr.bf16.mxu0 0
  %2942 = vmatpush1.bf16.xpose.msra.mxu0 0
  %2943 = vmatprep.subr.bf16.mxu0 0
  %2944 = vmatpush1.bf16.xpose.msra.mxu0 0
  %2945 = vmatprep.subr.bf16.mxu0 0
  %2946 = vmatpush1.bf16.xpose.msra.mxu0 0
  %2947 = vmatprep.subr.bf16.mxu0 0
  %2948 = vmatpush1.bf16.xpose.msra.mxu0 0
  %2949 = vmatprep.subr.bf16.mxu0 0
  %2950 = vmatpush1.bf16.xpose.msra.mxu0 0
  %2951 = vmatprep.subr.bf16.mxu0 0
  %2952 = vmatpush1.bf16.xpose.msra.mxu0 0
  %2953 = vmatprep.subr.bf16.mxu0 0
  %2954 = vmatpush1.bf16.xpose.msra.mxu0 0
  %2955 = vmatprep.mubr.bf16.mxu0 0
  %2956 = vmatmul.mubr.bf16.gmra.mrb[0].mxu0 %v2921
  %v2957 = vpop.f32.mrb[0].mxu0
  %v2958 = vadd.f32 0.0, %v2957
  %v2959 = vpop.f32.mrb[0].mxu0
  %v2960 = vpop.f32.mrb[0].mxu0
  %v2961 = vpop.f32.mrb[0].mxu0
  %2962 = vdwg.mxu0
  %2963 = vrot.lane.b32.xlu0 %v35, 104
  %v2964 = vpop.permute.xlu0 %2963
  %v2966 = vsel %vm36, %v2964, 0
  %2968 = vmatprep.subr.bf16.mxu0 0
  %2969 = vmatpush1.bf16.xpose.msra.mxu0 %v2966
  %2970 = vmatprep.subr.bf16.mxu0 0
  %2971 = vmatpush1.bf16.xpose.msra.mxu0 0
  %2972 = vmatprep.subr.bf16.mxu0 0
  %2973 = vmatpush1.bf16.xpose.msra.mxu0 0
  %2974 = vmatprep.subr.bf16.mxu0 0
  %2975 = vmatpush1.bf16.xpose.msra.mxu0 0
  %2976 = vmatprep.subr.bf16.mxu0 0
  %2977 = vmatpush1.bf16.xpose.msra.mxu0 0
  %2978 = vmatprep.subr.bf16.mxu0 0
  %2979 = vmatpush1.bf16.xpose.msra.mxu0 0
  %2980 = vmatprep.subr.bf16.mxu0 0
  %2981 = vmatpush1.bf16.xpose.msra.mxu0 0
  %2982 = vmatprep.subr.bf16.mxu0 0
  %2983 = vmatpush1.bf16.xpose.msra.mxu0 0
  %2984 = vmatprep.subr.bf16.mxu0 0
  %2985 = vmatpush1.bf16.xpose.msra.mxu0 0
  %2986 = vmatprep.subr.bf16.mxu0 0
  %2987 = vmatpush1.bf16.xpose.msra.mxu0 0
  %2988 = vmatprep.subr.bf16.mxu0 0
  %2989 = vmatpush1.bf16.xpose.msra.mxu0 0
  %2990 = vmatprep.subr.bf16.mxu0 0
  %2991 = vmatpush1.bf16.xpose.msra.mxu0 0
  %2992 = vmatprep.subr.bf16.mxu0 0
  %2993 = vmatpush1.bf16.xpose.msra.mxu0 0
  %2994 = vmatprep.subr.bf16.mxu0 0
  %2995 = vmatpush1.bf16.xpose.msra.mxu0 0
  %2996 = vmatprep.subr.bf16.mxu0 0
  %2997 = vmatpush1.bf16.xpose.msra.mxu0 0
  %2998 = vmatprep.subr.bf16.mxu0 0
  %2999 = vmatpush1.bf16.xpose.msra.mxu0 0
  %3000 = vmatprep.mubr.bf16.mxu0 0
  %3001 = vmatmul.mubr.bf16.gmra.mrb[0].mxu0 %v2966
  %v3002 = vpop.f32.mrb[0].mxu0
  %v3003 = vadd.f32 0.0, %v3002
  %v3004 = vpop.f32.mrb[0].mxu0
  %v3005 = vpop.f32.mrb[0].mxu0
  %v3006 = vpop.f32.mrb[0].mxu0
  %3007 = vdwg.mxu0
  %v3008 = vmul.f32 %v2688, 0.35355338
  %v3009 = vmul.f32 %v2733, 0.35355338
  %v3010 = vmul.f32 %v2778, 0.35355338
  %v3011 = vmul.f32 %v2823, 0.35355338
  %v3012 = vmul.f32 %v2868, 0.35355338
  %v3013 = vmul.f32 %v2913, 0.35355338
  %v3014 = vmul.f32 %v2958, 0.35355338
  %v3015 = vmul.f32 %v3003, 0.35355338
  %v3016 = vadd.f32 %v3008, %v400
  %v3017 = vadd.f32 %v3009, %v404
  %v3018 = vadd.f32 %v3010, %v408
  %v3019 = vadd.f32 %v3011, %v412
  %v3020 = vadd.f32 %v3012, %v416
  %v3021 = vadd.f32 %v3013, %v420
  %v3022 = vadd.f32 %v3014, %v424
  %v3023 = vadd.f32 %v3015, %v428
  %v3024 = vsel %vm445, %v3016, -inf
  %3025 = vmax.xlane.f32.xlu0 %v3024
  %v3026 = vpop.xlane.xlu0 %3025
  %v3027 = vsel %vm445, %v3017, -inf
  %3028 = vmax.xlane.f32.xlu0 %v3027
  %v3029 = vpop.xlane.xlu0 %3028
  %v3030 = vsel %vm445, %v3018, -inf
  %3031 = vmax.xlane.f32.xlu0 %v3030
  %v3032 = vpop.xlane.xlu0 %3031
  %v3033 = vsel %vm445, %v3019, -inf
  %3034 = vmax.xlane.f32.xlu0 %v3033
  %v3035 = vpop.xlane.xlu0 %3034
  %v3036 = vsel %vm445, %v3020, -inf
  %3037 = vmax.xlane.f32.xlu0 %v3036
  %v3038 = vpop.xlane.xlu0 %3037
  %v3039 = vsel %vm445, %v3021, -inf
  %3040 = vmax.xlane.f32.xlu0 %v3039
  %v3041 = vpop.xlane.xlu0 %3040
  %v3042 = vsel %vm445, %v3022, -inf
  %3043 = vmax.xlane.f32.xlu0 %v3042
  %v3044 = vpop.xlane.xlu0 %3043
  %v3045 = vsel %vm445, %v3023, -inf
  %3046 = vmax.xlane.f32.xlu0 %v3045
  %v3047 = vpop.xlane.xlu0 %3046
  %vm3048 = vcmp.eq.f32.partialorder %v3026, -inf
  %vm3049 = vcmp.eq.f32.partialorder %v3029, -inf
  %vm3050 = vcmp.eq.f32.partialorder %v3032, -inf
  %vm3051 = vcmp.eq.f32.partialorder %v3035, -inf
  %vm3052 = vcmp.eq.f32.partialorder %v3038, -inf
  %vm3053 = vcmp.eq.f32.partialorder %v3041, -inf
  %vm3054 = vcmp.eq.f32.partialorder %v3044, -inf
  %vm3055 = vcmp.eq.f32.partialorder %v3047, -inf
  %v3056 = vsel %vm3048, 0.0, %v3026
  %v3057 = vsel %vm3049, 0.0, %v3029
  %v3058 = vsel %vm3050, 0.0, %v3032
  %v3059 = vsel %vm3051, 0.0, %v3035
  %v3060 = vsel %vm3052, 0.0, %v3038
  %v3061 = vsel %vm3053, 0.0, %v3041
  %v3062 = vsel %vm3054, 0.0, %v3044
  %v3063 = vsel %vm3055, 0.0, %v3047
  %v3064 = vsub.f32 %v3016, %v3056
  %v3065 = vsub.f32 %v3017, %v3057
  %v3066 = vsub.f32 %v3018, %v3058
  %v3067 = vsub.f32 %v3019, %v3059
  %v3068 = vsub.f32 %v3020, %v3060
  %v3069 = vsub.f32 %v3021, %v3061
  %v3070 = vsub.f32 %v3022, %v3062
  %v3071 = vsub.f32 %v3023, %v3063
  %v3072 = vmul.f32 %v3064, 1.442695
  %v3073 = vpow.pop %v3072
  %v3074 = vmul.f32 %v3065, 1.442695
  %v3075 = vpow.pop %v3074
  %v3076 = vmul.f32 %v3066, 1.442695
  %v3077 = vpow.pop %v3076
  %v3078 = vmul.f32 %v3067, 1.442695
  %v3079 = vpow.pop %v3078
  %v3080 = vmul.f32 %v3068, 1.442695
  %v3081 = vpow.pop %v3080
  %v3082 = vmul.f32 %v3069, 1.442695
  %v3083 = vpow.pop %v3082
  %v3084 = vmul.f32 %v3070, 1.442695
  %v3085 = vpow.pop %v3084
  %v3086 = vmul.f32 %v3071, 1.442695
  %v3087 = vpow.pop %v3086
  %v3088 = vsel %vm445, %v3073, 0.0
  %3089 = vadd.xlane.f32.xlu0 %v3088
  %v3090 = vpop.xlane.xlu0 %3089
  %v3091 = vsel %vm445, %v3075, 0.0
  %3092 = vadd.xlane.f32.xlu0 %v3091
  %v3093 = vpop.xlane.xlu0 %3092
  %v3094 = vsel %vm445, %v3077, 0.0
  %3095 = vadd.xlane.f32.xlu0 %v3094
  %v3096 = vpop.xlane.xlu0 %3095
  %v3097 = vsel %vm445, %v3079, 0.0
  %3098 = vadd.xlane.f32.xlu0 %v3097
  %v3099 = vpop.xlane.xlu0 %3098
  %v3100 = vsel %vm445, %v3081, 0.0
  %3101 = vadd.xlane.f32.xlu0 %v3100
  %v3102 = vpop.xlane.xlu0 %3101
  %v3103 = vsel %vm445, %v3083, 0.0
  %3104 = vadd.xlane.f32.xlu0 %v3103
  %v3105 = vpop.xlane.xlu0 %3104
  %v3106 = vsel %vm445, %v3085, 0.0
  %3107 = vadd.xlane.f32.xlu0 %v3106
  %v3108 = vpop.xlane.xlu0 %3107
  %v3109 = vsel %vm445, %v3087, 0.0
  %3110 = vadd.xlane.f32.xlu0 %v3109
  %v3111 = vpop.xlane.xlu0 %3110
  %v3112 = vmax.f32 %v3090, 1e-30
  %v3113 = vmax.f32 %v3093, 1e-30
  %v3114 = vmax.f32 %v3096, 1e-30
  %v3115 = vmax.f32 %v3099, 1e-30
  %v3116 = vmax.f32 %v3102, 1e-30
  %v3117 = vmax.f32 %v3105, 1e-30
  %v3118 = vmax.f32 %v3108, 1e-30
  %v3119 = vmax.f32 %v3111, 1e-30
  %v3120 = vrcp.pop %v3112
  %v3121 = vmul.f32 %v3073, %v3120
  %v3122 = vrcp.pop %v3113
  %v3123 = vmul.f32 %v3075, %v3122
  %v3124 = vrcp.pop %v3114
  %v3125 = vmul.f32 %v3077, %v3124
  %v3126 = vrcp.pop %v3115
  %v3127 = vmul.f32 %v3079, %v3126
  %v3128 = vrcp.pop %v3116
  %v3129 = vmul.f32 %v3081, %v3128
  %v3130 = vrcp.pop %v3117
  %v3131 = vmul.f32 %v3083, %v3130
  %v3132 = vrcp.pop %v3118
  %v3133 = vmul.f32 %v3085, %v3132
  %v3134 = vrcp.pop %v3119
  %v3135 = vmul.f32 %v3087, %v3134
  %v3136 = vpack.c.bf16 %v3121, %v3121
  %v3137 = vpack.c.bf16 %v3123, %v3123
  %v3138 = vpack.c.bf16 %v3125, %v3125
  %v3139 = vpack.c.bf16 %v3127, %v3127
  %v3140 = vpack.c.bf16 %v3129, %v3129
  %v3141 = vpack.c.bf16 %v3131, %v3131
  %v3142 = vpack.c.bf16 %v3133, %v3133
  %v3143 = vpack.c.bf16 %v3135, %v3135
  %v3145 = vsel %vm566, %v3136, 0
  %v3147 = vsel %vm570, %v2649, 0
  %3149 = vmatprep.subr.bf16.mxu0 0
  %3150 = vmatpush1.bf16.msra.mxu0 %v3147
  %3151 = vmatprep.subr.bf16.mxu0 0
  %3152 = vmatpush1.bf16.msra.mxu0 0
  %3153 = vmatprep.subr.bf16.mxu0 0
  %3154 = vmatpush1.bf16.msra.mxu0 0
  %3155 = vmatprep.subr.bf16.mxu0 0
  %3156 = vmatpush1.bf16.msra.mxu0 0
  %3157 = vmatprep.subr.bf16.mxu0 0
  %3158 = vmatpush1.bf16.msra.mxu0 0
  %3159 = vmatprep.subr.bf16.mxu0 0
  %3160 = vmatpush1.bf16.msra.mxu0 0
  %3161 = vmatprep.subr.bf16.mxu0 0
  %3162 = vmatpush1.bf16.msra.mxu0 0
  %3163 = vmatprep.subr.bf16.mxu0 0
  %3164 = vmatpush1.bf16.msra.mxu0 0
  %3165 = vmatprep.subr.bf16.mxu0 0
  %3166 = vmatpush1.bf16.msra.mxu0 0
  %3167 = vmatprep.subr.bf16.mxu0 0
  %3168 = vmatpush1.bf16.msra.mxu0 0
  %3169 = vmatprep.subr.bf16.mxu0 0
  %3170 = vmatpush1.bf16.msra.mxu0 0
  %3171 = vmatprep.subr.bf16.mxu0 0
  %3172 = vmatpush1.bf16.msra.mxu0 0
  %3173 = vmatprep.subr.bf16.mxu0 0
  %3174 = vmatpush1.bf16.msra.mxu0 0
  %3175 = vmatprep.subr.bf16.mxu0 0
  %3176 = vmatpush1.bf16.msra.mxu0 0
  %3177 = vmatprep.subr.bf16.mxu0 0
  %3178 = vmatpush1.bf16.msra.mxu0 0
  %3179 = vmatprep.subr.bf16.mxu0 0
  %3180 = vmatpush1.bf16.msra.mxu0 0
  %3181 = vmatprep.mubr.bf16.mxu0 0
  %3182 = vmatmul.mubr.bf16.gmra.mrb[0].mxu0 %v3145
  %v3183 = vpop.f32.mrb[0].mxu0
  %v3184 = vadd.f32 0.0, %v3183
  %v3185 = vpop.f32.mrb[0].mxu0
  %v3186 = vpop.f32.mrb[0].mxu0
  %v3187 = vpop.f32.mrb[0].mxu0
  %3188 = vdwg.mxu0
  %v3190 = vsel %vm566, %v3137, 0
  %v3192 = vsel %vm570, %v2694, 0
  %3194 = vmatprep.subr.bf16.mxu0 0
  %3195 = vmatpush1.bf16.msra.mxu0 %v3192
  %3196 = vmatprep.subr.bf16.mxu0 0
  %3197 = vmatpush1.bf16.msra.mxu0 0
  %3198 = vmatprep.subr.bf16.mxu0 0
  %3199 = vmatpush1.bf16.msra.mxu0 0
  %3200 = vmatprep.subr.bf16.mxu0 0
  %3201 = vmatpush1.bf16.msra.mxu0 0
  %3202 = vmatprep.subr.bf16.mxu0 0
  %3203 = vmatpush1.bf16.msra.mxu0 0
  %3204 = vmatprep.subr.bf16.mxu0 0
  %3205 = vmatpush1.bf16.msra.mxu0 0
  %3206 = vmatprep.subr.bf16.mxu0 0
  %3207 = vmatpush1.bf16.msra.mxu0 0
  %3208 = vmatprep.subr.bf16.mxu0 0
  %3209 = vmatpush1.bf16.msra.mxu0 0
  %3210 = vmatprep.subr.bf16.mxu0 0
  %3211 = vmatpush1.bf16.msra.mxu0 0
  %3212 = vmatprep.subr.bf16.mxu0 0
  %3213 = vmatpush1.bf16.msra.mxu0 0
  %3214 = vmatprep.subr.bf16.mxu0 0
  %3215 = vmatpush1.bf16.msra.mxu0 0
  %3216 = vmatprep.subr.bf16.mxu0 0
  %3217 = vmatpush1.bf16.msra.mxu0 0
  %3218 = vmatprep.subr.bf16.mxu0 0
  %3219 = vmatpush1.bf16.msra.mxu0 0
  %3220 = vmatprep.subr.bf16.mxu0 0
  %3221 = vmatpush1.bf16.msra.mxu0 0
  %3222 = vmatprep.subr.bf16.mxu0 0
  %3223 = vmatpush1.bf16.msra.mxu0 0
  %3224 = vmatprep.subr.bf16.mxu0 0
  %3225 = vmatpush1.bf16.msra.mxu0 0
  %3226 = vmatprep.mubr.bf16.mxu0 0
  %3227 = vmatmul.mubr.bf16.gmra.mrb[0].mxu0 %v3190
  %v3228 = vpop.f32.mrb[0].mxu0
  %v3229 = vadd.f32 0.0, %v3228
  %v3230 = vpop.f32.mrb[0].mxu0
  %v3231 = vpop.f32.mrb[0].mxu0
  %v3232 = vpop.f32.mrb[0].mxu0
  %3233 = vdwg.mxu0
  %v3235 = vsel %vm566, %v3138, 0
  %v3237 = vsel %vm570, %v2739, 0
  %3239 = vmatprep.subr.bf16.mxu0 0
  %3240 = vmatpush1.bf16.msra.mxu0 %v3237
  %3241 = vmatprep.subr.bf16.mxu0 0
  %3242 = vmatpush1.bf16.msra.mxu0 0
  %3243 = vmatprep.subr.bf16.mxu0 0
  %3244 = vmatpush1.bf16.msra.mxu0 0
  %3245 = vmatprep.subr.bf16.mxu0 0
  %3246 = vmatpush1.bf16.msra.mxu0 0
  %3247 = vmatprep.subr.bf16.mxu0 0
  %3248 = vmatpush1.bf16.msra.mxu0 0
  %3249 = vmatprep.subr.bf16.mxu0 0
  %3250 = vmatpush1.bf16.msra.mxu0 0
  %3251 = vmatprep.subr.bf16.mxu0 0
  %3252 = vmatpush1.bf16.msra.mxu0 0
  %3253 = vmatprep.subr.bf16.mxu0 0
  %3254 = vmatpush1.bf16.msra.mxu0 0
  %3255 = vmatprep.subr.bf16.mxu0 0
  %3256 = vmatpush1.bf16.msra.mxu0 0
  %3257 = vmatprep.subr.bf16.mxu0 0
  %3258 = vmatpush1.bf16.msra.mxu0 0
  %3259 = vmatprep.subr.bf16.mxu0 0
  %3260 = vmatpush1.bf16.msra.mxu0 0
  %3261 = vmatprep.subr.bf16.mxu0 0
  %3262 = vmatpush1.bf16.msra.mxu0 0
  %3263 = vmatprep.subr.bf16.mxu0 0
  %3264 = vmatpush1.bf16.msra.mxu0 0
  %3265 = vmatprep.subr.bf16.mxu0 0
  %3266 = vmatpush1.bf16.msra.mxu0 0
  %3267 = vmatprep.subr.bf16.mxu0 0
  %3268 = vmatpush1.bf16.msra.mxu0 0
  %3269 = vmatprep.subr.bf16.mxu0 0
  %3270 = vmatpush1.bf16.msra.mxu0 0
  %3271 = vmatprep.mubr.bf16.mxu0 0
  %3272 = vmatmul.mubr.bf16.gmra.mrb[0].mxu0 %v3235
  %v3273 = vpop.f32.mrb[0].mxu0
  %v3274 = vadd.f32 0.0, %v3273
  %v3275 = vpop.f32.mrb[0].mxu0
  %v3276 = vpop.f32.mrb[0].mxu0
  %v3277 = vpop.f32.mrb[0].mxu0
  %3278 = vdwg.mxu0
  %v3280 = vsel %vm566, %v3139, 0
  %v3282 = vsel %vm570, %v2784, 0
  %3284 = vmatprep.subr.bf16.mxu0 0
  %3285 = vmatpush1.bf16.msra.mxu0 %v3282
  %3286 = vmatprep.subr.bf16.mxu0 0
  %3287 = vmatpush1.bf16.msra.mxu0 0
  %3288 = vmatprep.subr.bf16.mxu0 0
  %3289 = vmatpush1.bf16.msra.mxu0 0
  %3290 = vmatprep.subr.bf16.mxu0 0
  %3291 = vmatpush1.bf16.msra.mxu0 0
  %3292 = vmatprep.subr.bf16.mxu0 0
  %3293 = vmatpush1.bf16.msra.mxu0 0
  %3294 = vmatprep.subr.bf16.mxu0 0
  %3295 = vmatpush1.bf16.msra.mxu0 0
  %3296 = vmatprep.subr.bf16.mxu0 0
  %3297 = vmatpush1.bf16.msra.mxu0 0
  %3298 = vmatprep.subr.bf16.mxu0 0
  %3299 = vmatpush1.bf16.msra.mxu0 0
  %3300 = vmatprep.subr.bf16.mxu0 0
  %3301 = vmatpush1.bf16.msra.mxu0 0
  %3302 = vmatprep.subr.bf16.mxu0 0
  %3303 = vmatpush1.bf16.msra.mxu0 0
  %3304 = vmatprep.subr.bf16.mxu0 0
  %3305 = vmatpush1.bf16.msra.mxu0 0
  %3306 = vmatprep.subr.bf16.mxu0 0
  %3307 = vmatpush1.bf16.msra.mxu0 0
  %3308 = vmatprep.subr.bf16.mxu0 0
  %3309 = vmatpush1.bf16.msra.mxu0 0
  %3310 = vmatprep.subr.bf16.mxu0 0
  %3311 = vmatpush1.bf16.msra.mxu0 0
  %3312 = vmatprep.subr.bf16.mxu0 0
  %3313 = vmatpush1.bf16.msra.mxu0 0
  %3314 = vmatprep.subr.bf16.mxu0 0
  %3315 = vmatpush1.bf16.msra.mxu0 0
  %3316 = vmatprep.mubr.bf16.mxu0 0
  %3317 = vmatmul.mubr.bf16.gmra.mrb[0].mxu0 %v3280
  %v3318 = vpop.f32.mrb[0].mxu0
  %v3319 = vadd.f32 0.0, %v3318
  %v3320 = vpop.f32.mrb[0].mxu0
  %v3321 = vpop.f32.mrb[0].mxu0
  %v3322 = vpop.f32.mrb[0].mxu0
  %3323 = vdwg.mxu0
  %v3325 = vsel %vm566, %v3140, 0
  %v3327 = vsel %vm570, %v2829, 0
  %3329 = vmatprep.subr.bf16.mxu0 0
  %3330 = vmatpush1.bf16.msra.mxu0 %v3327
  %3331 = vmatprep.subr.bf16.mxu0 0
  %3332 = vmatpush1.bf16.msra.mxu0 0
  %3333 = vmatprep.subr.bf16.mxu0 0
  %3334 = vmatpush1.bf16.msra.mxu0 0
  %3335 = vmatprep.subr.bf16.mxu0 0
  %3336 = vmatpush1.bf16.msra.mxu0 0
  %3337 = vmatprep.subr.bf16.mxu0 0
  %3338 = vmatpush1.bf16.msra.mxu0 0
  %3339 = vmatprep.subr.bf16.mxu0 0
  %3340 = vmatpush1.bf16.msra.mxu0 0
  %3341 = vmatprep.subr.bf16.mxu0 0
  %3342 = vmatpush1.bf16.msra.mxu0 0
  %3343 = vmatprep.subr.bf16.mxu0 0
  %3344 = vmatpush1.bf16.msra.mxu0 0
  %3345 = vmatprep.subr.bf16.mxu0 0
  %3346 = vmatpush1.bf16.msra.mxu0 0
  %3347 = vmatprep.subr.bf16.mxu0 0
  %3348 = vmatpush1.bf16.msra.mxu0 0
  %3349 = vmatprep.subr.bf16.mxu0 0
  %3350 = vmatpush1.bf16.msra.mxu0 0
  %3351 = vmatprep.subr.bf16.mxu0 0
  %3352 = vmatpush1.bf16.msra.mxu0 0
  %3353 = vmatprep.subr.bf16.mxu0 0
  %3354 = vmatpush1.bf16.msra.mxu0 0
  %3355 = vmatprep.subr.bf16.mxu0 0
  %3356 = vmatpush1.bf16.msra.mxu0 0
  %3357 = vmatprep.subr.bf16.mxu0 0
  %3358 = vmatpush1.bf16.msra.mxu0 0
  %3359 = vmatprep.subr.bf16.mxu0 0
  %3360 = vmatpush1.bf16.msra.mxu0 0
  %3361 = vmatprep.mubr.bf16.mxu0 0
  %3362 = vmatmul.mubr.bf16.gmra.mrb[0].mxu0 %v3325
  %v3363 = vpop.f32.mrb[0].mxu0
  %v3364 = vadd.f32 0.0, %v3363
  %v3365 = vpop.f32.mrb[0].mxu0
  %v3366 = vpop.f32.mrb[0].mxu0
  %v3367 = vpop.f32.mrb[0].mxu0
  %3368 = vdwg.mxu0
  %v3370 = vsel %vm566, %v3141, 0
  %v3372 = vsel %vm570, %v2874, 0
  %3374 = vmatprep.subr.bf16.mxu0 0
  %3375 = vmatpush1.bf16.msra.mxu0 %v3372
  %3376 = vmatprep.subr.bf16.mxu0 0
  %3377 = vmatpush1.bf16.msra.mxu0 0
  %3378 = vmatprep.subr.bf16.mxu0 0
  %3379 = vmatpush1.bf16.msra.mxu0 0
  %3380 = vmatprep.subr.bf16.mxu0 0
  %3381 = vmatpush1.bf16.msra.mxu0 0
  %3382 = vmatprep.subr.bf16.mxu0 0
  %3383 = vmatpush1.bf16.msra.mxu0 0
  %3384 = vmatprep.subr.bf16.mxu0 0
  %3385 = vmatpush1.bf16.msra.mxu0 0
  %3386 = vmatprep.subr.bf16.mxu0 0
  %3387 = vmatpush1.bf16.msra.mxu0 0
  %3388 = vmatprep.subr.bf16.mxu0 0
  %3389 = vmatpush1.bf16.msra.mxu0 0
  %3390 = vmatprep.subr.bf16.mxu0 0
  %3391 = vmatpush1.bf16.msra.mxu0 0
  %3392 = vmatprep.subr.bf16.mxu0 0
  %3393 = vmatpush1.bf16.msra.mxu0 0
  %3394 = vmatprep.subr.bf16.mxu0 0
  %3395 = vmatpush1.bf16.msra.mxu0 0
  %3396 = vmatprep.subr.bf16.mxu0 0
  %3397 = vmatpush1.bf16.msra.mxu0 0
  %3398 = vmatprep.subr.bf16.mxu0 0
  %3399 = vmatpush1.bf16.msra.mxu0 0
  %3400 = vmatprep.subr.bf16.mxu0 0
  %3401 = vmatpush1.bf16.msra.mxu0 0
  %3402 = vmatprep.subr.bf16.mxu0 0
  %3403 = vmatpush1.bf16.msra.mxu0 0
  %3404 = vmatprep.subr.bf16.mxu0 0
  %3405 = vmatpush1.bf16.msra.mxu0 0
  %3406 = vmatprep.mubr.bf16.mxu0 0
  %3407 = vmatmul.mubr.bf16.gmra.mrb[0].mxu0 %v3370
  %v3408 = vpop.f32.mrb[0].mxu0
  %v3409 = vadd.f32 0.0, %v3408
  %v3410 = vpop.f32.mrb[0].mxu0
  %v3411 = vpop.f32.mrb[0].mxu0
  %v3412 = vpop.f32.mrb[0].mxu0
  %3413 = vdwg.mxu0
  %v3415 = vsel %vm566, %v3142, 0
  %v3417 = vsel %vm570, %v2919, 0
  %3419 = vmatprep.subr.bf16.mxu0 0
  %3420 = vmatpush1.bf16.msra.mxu0 %v3417
  %3421 = vmatprep.subr.bf16.mxu0 0
  %3422 = vmatpush1.bf16.msra.mxu0 0
  %3423 = vmatprep.subr.bf16.mxu0 0
  %3424 = vmatpush1.bf16.msra.mxu0 0
  %3425 = vmatprep.subr.bf16.mxu0 0
  %3426 = vmatpush1.bf16.msra.mxu0 0
  %3427 = vmatprep.subr.bf16.mxu0 0
  %3428 = vmatpush1.bf16.msra.mxu0 0
  %3429 = vmatprep.subr.bf16.mxu0 0
  %3430 = vmatpush1.bf16.msra.mxu0 0
  %3431 = vmatprep.subr.bf16.mxu0 0
  %3432 = vmatpush1.bf16.msra.mxu0 0
  %3433 = vmatprep.subr.bf16.mxu0 0
  %3434 = vmatpush1.bf16.msra.mxu0 0
  %3435 = vmatprep.subr.bf16.mxu0 0
  %3436 = vmatpush1.bf16.msra.mxu0 0
  %3437 = vmatprep.subr.bf16.mxu0 0
  %3438 = vmatpush1.bf16.msra.mxu0 0
  %3439 = vmatprep.subr.bf16.mxu0 0
  %3440 = vmatpush1.bf16.msra.mxu0 0
  %3441 = vmatprep.subr.bf16.mxu0 0
  %3442 = vmatpush1.bf16.msra.mxu0 0
  %3443 = vmatprep.subr.bf16.mxu0 0
  %3444 = vmatpush1.bf16.msra.mxu0 0
  %3445 = vmatprep.subr.bf16.mxu0 0
  %3446 = vmatpush1.bf16.msra.mxu0 0
  %3447 = vmatprep.subr.bf16.mxu0 0
  %3448 = vmatpush1.bf16.msra.mxu0 0
  %3449 = vmatprep.subr.bf16.mxu0 0
  %3450 = vmatpush1.bf16.msra.mxu0 0
  %3451 = vmatprep.mubr.bf16.mxu0 0
  %3452 = vmatmul.mubr.bf16.gmra.mrb[0].mxu0 %v3415
  %v3453 = vpop.f32.mrb[0].mxu0
  %v3454 = vadd.f32 0.0, %v3453
  %v3455 = vpop.f32.mrb[0].mxu0
  %v3456 = vpop.f32.mrb[0].mxu0
  %v3457 = vpop.f32.mrb[0].mxu0
  %3458 = vdwg.mxu0
  %v3460 = vsel %vm566, %v3143, 0
  %v3462 = vsel %vm570, %v2964, 0
  %3464 = vmatprep.subr.bf16.mxu0 0
  %3465 = vmatpush1.bf16.msra.mxu0 %v3462
  %3466 = vmatprep.subr.bf16.mxu0 0
  %3467 = vmatpush1.bf16.msra.mxu0 0
  %3468 = vmatprep.subr.bf16.mxu0 0
  %3469 = vmatpush1.bf16.msra.mxu0 0
  %3470 = vmatprep.subr.bf16.mxu0 0
  %3471 = vmatpush1.bf16.msra.mxu0 0
  %3472 = vmatprep.subr.bf16.mxu0 0
  %3473 = vmatpush1.bf16.msra.mxu0 0
  %3474 = vmatprep.subr.bf16.mxu0 0
  %3475 = vmatpush1.bf16.msra.mxu0 0
  %3476 = vmatprep.subr.bf16.mxu0 0
  %3477 = vmatpush1.bf16.msra.mxu0 0
  %3478 = vmatprep.subr.bf16.mxu0 0
  %3479 = vmatpush1.bf16.msra.mxu0 0
  %3480 = vmatprep.subr.bf16.mxu0 0
  %3481 = vmatpush1.bf16.msra.mxu0 0
  %3482 = vmatprep.subr.bf16.mxu0 0
  %3483 = vmatpush1.bf16.msra.mxu0 0
  %3484 = vmatprep.subr.bf16.mxu0 0
  %3485 = vmatpush1.bf16.msra.mxu0 0
  %3486 = vmatprep.subr.bf16.mxu0 0
  %3487 = vmatpush1.bf16.msra.mxu0 0
  %3488 = vmatprep.subr.bf16.mxu0 0
  %3489 = vmatpush1.bf16.msra.mxu0 0
  %3490 = vmatprep.subr.bf16.mxu0 0
  %3491 = vmatpush1.bf16.msra.mxu0 0
  %3492 = vmatprep.subr.bf16.mxu0 0
  %3493 = vmatpush1.bf16.msra.mxu0 0
  %3494 = vmatprep.subr.bf16.mxu0 0
  %3495 = vmatpush1.bf16.msra.mxu0 0
  %3496 = vmatprep.mubr.bf16.mxu0 0
  %3497 = vmatmul.mubr.bf16.gmra.mrb[0].mxu0 %v3460
  %v3498 = vpop.f32.mrb[0].mxu0
  %v3499 = vadd.f32 0.0, %v3498
  %v3500 = vpop.f32.mrb[0].mxu0
  %v3501 = vpop.f32.mrb[0].mxu0
  %v3502 = vpop.f32.mrb[0].mxu0
  %3503 = vdwg.mxu0
  %3512 = vrot.lane.b32.xlu0 %v1472, 8
  %v3513 = vpop.permute.xlu0 %3512
  %3514 = vrot.lane.b32.xlu0 %v1517, 8
  %v3515 = vpop.permute.xlu0 %3514
  %3516 = vrot.lane.b32.xlu0 %v1562, 8
  %v3517 = vpop.permute.xlu0 %3516
  %3518 = vrot.lane.b32.xlu0 %v1607, 8
  %v3519 = vpop.permute.xlu0 %3518
  %3520 = vrot.lane.b32.xlu0 %v1652, 8
  %v3521 = vpop.permute.xlu0 %3520
  %3522 = vrot.lane.b32.xlu0 %v1697, 8
  %v3523 = vpop.permute.xlu0 %3522
  %3524 = vrot.lane.b32.xlu0 %v1742, 8
  %v3525 = vpop.permute.xlu0 %3524
  %3526 = vrot.lane.b32.xlu0 %v1787, 8
  %v3527 = vpop.permute.xlu0 %3526
  %3544 = vrot.lane.b32.xlu0 %v2328, 16
  %v3545 = vpop.permute.xlu0 %3544
  %3546 = vrot.lane.b32.xlu0 %v2373, 16
  %v3547 = vpop.permute.xlu0 %3546
  %3548 = vrot.lane.b32.xlu0 %v2418, 16
  %v3549 = vpop.permute.xlu0 %3548
  %3550 = vrot.lane.b32.xlu0 %v2463, 16
  %v3551 = vpop.permute.xlu0 %3550
  %3552 = vrot.lane.b32.xlu0 %v2508, 16
  %v3553 = vpop.permute.xlu0 %3552
  %3554 = vrot.lane.b32.xlu0 %v2553, 16
  %v3555 = vpop.permute.xlu0 %3554
  %3556 = vrot.lane.b32.xlu0 %v2598, 16
  %v3557 = vpop.permute.xlu0 %3556
  %3558 = vrot.lane.b32.xlu0 %v2643, 16
  %v3559 = vpop.permute.xlu0 %3558
  %3576 = vrot.lane.b32.xlu0 %v3184, 24
  %v3577 = vpop.permute.xlu0 %3576
  %3578 = vrot.lane.b32.xlu0 %v3229, 24
  %v3579 = vpop.permute.xlu0 %3578
  %3580 = vrot.lane.b32.xlu0 %v3274, 24
  %v3581 = vpop.permute.xlu0 %3580
  %3582 = vrot.lane.b32.xlu0 %v3319, 24
  %v3583 = vpop.permute.xlu0 %3582
  %3584 = vrot.lane.b32.xlu0 %v3364, 24
  %v3585 = vpop.permute.xlu0 %3584
  %3586 = vrot.lane.b32.xlu0 %v3409, 24
  %v3587 = vpop.permute.xlu0 %3586
  %3588 = vrot.lane.b32.xlu0 %v3454, 24
  %v3589 = vpop.permute.xlu0 %3588
  %3590 = vrot.lane.b32.xlu0 %v3499, 24
  %v3591 = vpop.permute.xlu0 %3590
  %v3600 = vsel %vm36, %v608, %v3513
  %v3601 = vsel %vm36, %v653, %v3515
  %v3602 = vsel %vm36, %v698, %v3517
  %v3603 = vsel %vm36, %v743, %v3519
  %v3604 = vsel %vm36, %v788, %v3521
  %v3605 = vsel %vm36, %v833, %v3523
  %v3606 = vsel %vm36, %v878, %v3525
  %v3607 = vsel %vm36, %v923, %v3527
  %vm3608 = vcmask 130048
  %v3609 = vsel %vm3608, %v3600, %v3545
  %v3610 = vsel %vm3608, %v3601, %v3547
  %v3611 = vsel %vm3608, %v3602, %v3549
  %v3612 = vsel %vm3608, %v3603, %v3551
  %v3613 = vsel %vm3608, %v3604, %v3553
  %v3614 = vsel %vm3608, %v3605, %v3555
  %v3615 = vsel %vm3608, %v3606, %v3557
  %v3616 = vsel %vm3608, %v3607, %v3559
  %vm3617 = vcmask 195584
  %v3618 = vsel %vm3617, %v3609, %v3577
  %v3619 = vsel %vm3617, %v3610, %v3579
  %v3620 = vsel %vm3617, %v3611, %v3581
  %v3621 = vsel %vm3617, %v3612, %v3583
  %v3622 = vsel %vm3617, %v3613, %v3585
  %v3623 = vsel %vm3617, %v3614, %v3587
  %v3624 = vsel %vm3617, %v3615, %v3589
  %v3625 = vsel %vm3617, %v3616, %v3591
  %vm3626 = vcmask 257024
  %3627 = vst.msk [vmem:[%s2] sm:$0xf] %vm3626, %v3618
  %3628 = vst.msk [vmem:[%s2 + $0x4] sm:$0xf] %vm3626, %v3619
  %3629 = vst.msk [vmem:[%s2 + $0x8] sm:$0xf] %vm3626, %v3620
  %3630 = vst.msk [vmem:[%s2 + $0xc] sm:$0xf] %vm3626, %v3621
  %3631 = vst.msk [vmem:[%s2 + $0x10] sm:$0xf] %vm3626, %v3622
  %3632 = vst.msk [vmem:[%s2 + $0x14] sm:$0xf] %vm3626, %v3623
  %3633 = vst.msk [vmem:[%s2 + $0x18] sm:$0xf] %vm3626, %v3624
  %3634 = vst.msk [vmem:[%s2 + $0x1c] sm:$0xf] %vm3626, %v3625
  // Predicated region
  $region10: #{_lambda_.13} parent=0 // pred_check
    _
  $region11: #{_lambda_.13} parent=0 // pred_check_branch
    %3636 = sbr.rel (0) target = $region13
  $region12: #{_lambda_.13} parent=0 // pred_region
    _
  $region13: #{_lambda_.13} parent=0 // pred_fallthru
    _
  // Predicated region
  $region14: #{_lambda_.13} parent=0 // pred_check
    _
  $region15: #{_lambda_.13} parent=0 // pred_check_branch
    %3638 = sbr.rel (0) target = $region17
  $region16: #{_lambda_.13} parent=0 // pred_region
    _
  $region17: #{_lambda_.13} parent=0 // pred_fallthru
    _

</llo_original>
